<compile_context>
chip_gen: v6e
topology: v6e:2x2x1
jax: 0.10.0
libtpu: 0.0.40
codegen_flags: <defaults>
</compile_context>

<pallas_src>
import functools

import jax
import jax.numpy as jnp
from jax import lax
from jax.experimental import pallas as pl
from jax.experimental.pallas import tpu as pltpu

BN_EPS = 1e-5
LANE = 128  # all activations / weights are zero-padded to 128 channels (TPU lane width)

# ------------------------- synthetic small config -------------------------
CONFIG = dict(
    num_channels=4,
    embedding_size=8,
    embedding_kernel_size=3,
    embedding_stride=2,
    embedding_pooling_with_downsample=True,
    hidden_sizes=[16, 32],
    depths=[1, 1],
    layer_type="basic",
    reduction=4,
    downsample_in_first_stage=False,
    downsample_after_stage=False,
)


# ------------------------------ Pallas kernels ------------------------------

def _tap_rows(xr, n_batch, oh, ow, Ho, Wo):
    """Load the (N*Ho*Wo, LANE) tap matrix for one (kh, kw) shift from a phase ref.

    When Wo is sublane-aligned the 4-D -> 2-D collapse is a pure re-tiling; otherwise
    build the row block from plain 2-D strips so only basic slice/concat ops are used.
    """
    if Wo % 8 == 0:
        return xr[:, oh:oh + Ho, ow:ow + Wo, :].reshape(n_batch * Ho * Wo, LANE)
    strips = [xr[n, oh + r, ow:ow + Wo, :]          # (Wo, LANE) strip per (n, ho)
              for n in range(n_batch) for r in range(Ho)]
    return jnp.concatenate(strips, axis=0)


def _make_fused_conv_kernel(k, s, N, Ho, Wo, n_phase, phase_index, relu, with_residual):
    """conv (k*k shifted matmuls) + BatchNorm + (residual) + (ReLU), all in one kernel."""
    M = N * Ho * Wo

    def kernel(*refs):
        phase_refs = refs[:n_phase]
        w_ref, g_ref, b_ref = refs[n_phase:n_phase + 3]
        res_ref = refs[n_phase + 3] if with_residual else None
        o_ref = refs[-1]

        # ---- convolution: accumulate k*k shifted (M, 128) @ (128, 128) MXU matmuls ----
        acc = None
        for kh in range(k):
            for kw in range(k):
                xr = phase_refs[phase_index[(kh % s, kw % s)]]
                x2 = _tap_rows(xr, N, kh // s, kw // s, Ho, Wo)          # (M, LANE)
                contrib = jnp.dot(x2, w_ref[kh * k + kw],
                                  preferred_element_type=jnp.float32)
                acc = contrib if acc is None else acc + contrib

        # ---- BatchNorm2d (training-mode batch stats, biased variance), one pass ----
        mean = jnp.mean(acc, axis=0, keepdims=True)                      # (1, LANE)
        var = jnp.maximum(jnp.mean(acc * acc, axis=0, keepdims=True) - mean * mean, 0.0)
        scale = lax.rsqrt(var + BN_EPS) * g_ref[...]
        shift = b_ref[...] - mean * scale
        y = acc * scale + shift
        if with_residual:
            y = y + res_ref[...]
        if relu:
            y = jnp.maximum(y, 0.0)
        o_ref[...] = y                                                   # lane-dense store

    return kernel


def _make_maxpool_kernel(Ho, Wo):
    """MaxPool2d(3, stride=2, padding=1): max of 9 shifted views of the phase-split input."""
    def kernel(p00, p01, p10, p11, o_ref):
        phases = (p00, p01, p10, p11)
        out = None
        for kh in range(3):
            for kw in range(3):
                xr = phases[(kh % 2) * 2 + (kw % 2)]
                v = xr[:, kh // 2:kh // 2 + Ho, kw // 2:kw // 2 + Wo, :]
                out = v if out is None else jnp.maximum(out, v)
        o_ref[...] = out
    return kernel


def _avgpool_kernel(x_ref, o_ref):
    # (N, H*W, LANE) -> (N, 1, LANE): reduce over sublanes, channels stay on lanes.
    o_ref[...] = jnp.mean(x_ref[...], axis=1, keepdims=True)


# ------------------------------ layer wrappers ------------------------------

def conv_bn_fused(x, w, gamma, beta, *, stride, relu, residual=None):
    """Fused Conv2d(bias=False, padding=k//2) + BatchNorm2d (+residual)(+ReLU).

    x:        (N, H, W, LANE)  NHWC activation, channels zero-padded to 128 lanes.
    w:        (Cout, Cin, k, k) PyTorch-layout conv weight (real channel counts).
    residual: optional (N*Ho*Wo, LANE) tensor added after BN, before ReLU.
    returns:  (N, Ho, Wo, LANE)
    """
    N, H, W, L = x.shape
    assert L == LANE
    Cout, Cin, k, _ = w.shape
    assert Cin <= LANE and Cout <= LANE
    s = stride
    p = k // 2
    Ho = (H + 2 * p - k) // s + 1
    Wo = (W + 2 * p - k) // s + 1

    xp = jnp.pad(x, ((0, 0), (p, p), (p, p), (0, 0))) if p else x
    Hp, Wp = H + 2 * p, W + 2 * p
    if s > 1:
        # Split into s*s stride-phase views (a partition of xp -> same total bytes).
        Hp2, Wp2 = -(-Hp // s) * s, -(-Wp // s) * s
        if (Hp2, Wp2) != (Hp, Wp):
            xp = jnp.pad(xp, ((0, 0), (0, Hp2 - Hp), (0, Wp2 - Wp), (0, 0)))
        needed = sorted({(kh % s, kw % s) for kh in range(k) for kw in range(k)})
        phase_index = {pp: i for i, pp in enumerate(needed)}
        phases = [xp[:, ph::s, pw::s, :] for (ph, pw) in needed]
    else:
        phase_index = {(0, 0): 0}
        phases = [xp]

    # Weight -> (k*k, LANE, LANE), zero-padded on both channel axes so K = N = 128.
    wt = jnp.transpose(w, (2, 3, 1, 0)).reshape(k * k, Cin, Cout)
    wt = jnp.pad(wt, ((0, 0), (0, LANE - Cin), (0, LANE - Cout)))
    g = jnp.pad(gamma, (0, LANE - Cout)).reshape(1, LANE)
    b = jnp.pad(beta, (0, LANE - Cout)).reshape(1, LANE)

    M = N * Ho * Wo
    kern = _make_fused_conv_kernel(k, s, N, Ho, Wo, len(phases), phase_index,
                                   relu, residual is not None)
    args = list(phases) + [wt, g, b]
    if residual is not None:
        args.append(residual)

    out = pl.pallas_call(
        kern,
        out_shape=jax.ShapeDtypeStruct((M, LANE), jnp.float32),
        # tiny working set; explicit limit keeps us comfortably inside v7x's 64 MiB VMEM
        compiler_params=pltpu.CompilerParams(vmem_limit_bytes=32 * 1024 * 1024),
    )(*args)
    return out.reshape(N, Ho, Wo, LANE)


def maxpool_3x3_s2_p1(x):
    """nn.MaxPool2d(kernel_size=3, stride=2, padding=1) on (N, H, W, LANE) input."""
    N, H, W, L = x.shape
    Ho = (H + 2 - 3) // 2 + 1
    Wo = (W + 2 - 3) // 2 + 1
    xp = jnp.pad(x, ((0, 0), (1, 1), (1, 1), (0, 0)), constant_values=-jnp.inf)
    Hp, Wp = H + 2, W + 2
    Hp2, Wp2 = -(-Hp // 2) * 2, -(-Wp // 2) * 2
    if (Hp2, Wp2) != (Hp, Wp):
        xp = jnp.pad(xp, ((0, 0), (0, Hp2 - Hp), (0, Wp2 - Wp), (0, 0)),
                     constant_values=-jnp.inf)
    phases = [xp[:, ph::2, pw::2, :] for ph in range(2) for pw in range(2)]
    return pl.pallas_call(
        _make_maxpool_kernel(Ho, Wo),
        out_shape=jax.ShapeDtypeStruct((N, Ho, Wo, L), jnp.float32),
    )(*phases)


def global_avg_pool(x):
    """nn.AdaptiveAvgPool2d((1, 1)) on (N, H, W, LANE) input -> (N, LANE)."""
    N, H, W, L = x.shape
    x3 = x.reshape(N, H * W, L)                         # free reshape, C stays on lanes
    out = pl.pallas_call(
        _avgpool_kernel,
        out_shape=jax.ShapeDtypeStruct((N, 1, L), jnp.float32),
    )(x3)
    return out.reshape(N, L)


def basic_layer(x, p):
    """ResNetBasicLayer: relu(residual(x) + conv2(conv1(x))) with BN fused into each conv."""
    s = p["stride"]
    if p["residual"] is not None:
        res4 = conv_bn_fused(x, p["residual"]["w"], p["residual"]["gamma"],
                             p["residual"]["beta"], stride=s, relu=False)
    else:
        res4 = x
    res2 = res4.reshape(-1, LANE)                        # free reshape

    h = conv_bn_fused(x, p["conv1"]["w"], p["conv1"]["gamma"], p["conv1"]["beta"],
                      stride=s, relu=True)
    out = conv_bn_fused(h, p["conv2"]["w"], p["conv2"]["gamma"], p["conv2"]["beta"],
                        stride=1, relu=True, residual=res2)
    return out


# ------------------------------ parameters ------------------------------

def _kaiming_conv(key, cout, cin, k):
    # kaiming_normal_(mode='fan_out', nonlinearity='relu'): std = sqrt(2 / (cout * k * k))
    std = (2.0 / (cout * k * k)) ** 0.5
    return std * jax.random.normal(key, (cout, cin, k, k), dtype=jnp.float32)


def _conv_layer_params(key, cin, cout, k, zero_gamma=False):
    gamma = jnp.zeros((cout,), jnp.float32) if zero_gamma else jnp.ones((cout,), jnp.float32)
    return {"w": _kaiming_conv(key, cout, cin, k),
            "gamma": gamma,
            "beta": jnp.zeros((cout,), jnp.float32)}


def init_params(key, cfg):
    keys = jax.random.split(key, 64)
    ki = iter(keys)
    params = {
        "embed": _conv_layer_params(next(ki), cfg["num_channels"], cfg["embedding_size"],
                                    cfg["embedding_kernel_size"]),
    }
    first_stride = 2 if cfg["downsample_in_first_stage"] else 1
    stage_specs = [(cfg["embedding_size"], cfg["hidden_sizes"][0], cfg["depths"][0], first_stride)]
    for (cin, cout), depth in zip(zip(cfg["hidden_sizes"], cfg["hidden_sizes"][1:]),
                                  cfg["depths"][1:]):
        stage_specs.append((cin, cout, depth, 2 if not cfg["downsample_after_stage"] else 1))
    # TODO(synk): downsample_after_stage=True (extra trailing ResNetConvLayer) and the
    #             'bottleneck' layer type are not exercised by this synthetic config.

    stages = []
    for cin, cout, depth, stride in stage_specs:
        layers = []
        for li in range(depth):
            lin = cin if li == 0 else cout
            lst = stride if li == 0 else 1
            need_res = (lin != cout) or (lst != 1)
            layers.append({
                "conv1": _conv_layer_params(next(ki), lin, cout, 3),
                # basic_layer[1].normalization.weight is zero-initialized in ResNetModel.__init__
                "conv2": _conv_layer_params(next(ki), cout, cout, 3, zero_gamma=True),
                "residual": _conv_layer_params(next(ki), lin, cout, 1) if need_res else None,
                "stride": lst,
            })
        stages.append(layers)
    params["stages"] = stages
    return params


# ------------------------------ full model forward ------------------------------

def resnet_forward(pixel_values_nchw, params, cfg):
    # NCHW -> NHWC, then zero-pad channels up to the 128-lane representation.
    x = jnp.transpose(pixel_values_nchw, (0, 2, 3, 1)).astype(jnp.float32)
    N, H, W, Cin = x.shape
    x = jnp.pad(x, ((0, 0), (0, 0), (0, 0), (0, LANE - Cin)))

    # embedder: ResNetConvLayer + (optional) MaxPool2d(3, 2, 1)
    x = conv_bn_fused(x, params["embed"]["w"], params["embed"]["gamma"],
                      params["embed"]["beta"], stride=cfg["embedding_stride"], relu=True)
    if cfg["embedding_pooling_with_downsample"]:
        x = maxpool_3x3_s2_p1(x)

    # encoder stages
    for layers in params["stages"]:
        for lp in layers:
            x = basic_layer(x, lp)

    # pooler: AdaptiveAvgPool2d((1, 1)), returned as NCHW (N, C, 1, 1)
    pooled = global_avg_pool(x)                        # (N, LANE)
    C = cfg["hidden_sizes"][-1]
    return pooled[:, :C].reshape(N, C, 1, 1)


if __name__ == "__main__":
    key = jax.random.PRNGKey(0)
    pkey, xkey = jax.random.split(key)
    params = init_params(pkey, CONFIG)
    pixel_values = jax.random.normal(xkey, (2, CONFIG["num_channels"], 16, 16),
                                     dtype=jnp.float32)

    fwd = jax.jit(functools.partial(resnet_forward, params=params, cfg=CONFIG))
    out = jax.block_until_ready(fwd(pixel_values))

    assert out.shape == (2, CONFIG["hidden_sizes"][-1], 1, 1), out.shape
    assert bool(jnp.all(jnp.isfinite(out)))
    print("KERNEL_OK")
</pallas_src>

<mosaic_0001>
module attributes {stable_mosaic.version = 11 : i64} {
  func.func @kernel(%arg0: memref<2x9x9x128xf32, #tpu.memory_space<vmem>>, %arg1: memref<2x9x9x128xf32, #tpu.memory_space<vmem>>, %arg2: memref<2x9x9x128xf32, #tpu.memory_space<vmem>>, %arg3: memref<2x9x9x128xf32, #tpu.memory_space<vmem>>, %arg4: memref<9x128x128xf32, #tpu.memory_space<vmem>>, %arg5: memref<1x128xf32, #tpu.memory_space<vmem>>, %arg6: memref<1x128xf32, #tpu.memory_space<vmem>>, %arg7: memref<128x128xf32, #tpu.memory_space<vmem>>) attributes {dimension_semantics = [], scalar_prefetch = 0 : i64, scratch_operands = 0 : i64, tpu.core_type = #tpu.core_type<tc>} {
    %c0 = arith.constant 0 : index
    %c0_0 = arith.constant 0 : index
    %c0_1 = arith.constant 0 : index
    %c0_2 = arith.constant 0 : index
    %0 = vector.load %arg0[%c0, %c0_0, %c0_1, %c0_2] : memref<2x9x9x128xf32, #tpu.memory_space<vmem>>, vector<2x8x8x128xf32>
    %1 = vector.shape_cast %0 : vector<2x8x8x128xf32> to vector<128x128xf32>
    %c0_3 = arith.constant 0 : index
    %c0_4 = arith.constant 0 : index
    %c0_5 = arith.constant 0 : index
    %2 = vector.load %arg4[%c0_3, %c0_4, %c0_5] : memref<9x128x128xf32, #tpu.memory_space<vmem>>, vector<1x128x128xf32>
    %3 = vector.shape_cast %2 : vector<1x128x128xf32> to vector<128x128xf32>
    %cst = arith.constant dense<0.000000e+00> : vector<128x128xf32>
    %4 = tpu.matmul %1, %3, %cst {dimension_numbers = #tpu.dot_dimension_numbers<[1], [0], [0], [1], [0, 0, 1, 1], [], []>} : vector<128x128xf32>, vector<128x128xf32>, vector<128x128xf32> -> vector<128x128xf32>
    %c0_6 = arith.constant 0 : index
    %c0_7 = arith.constant 0 : index
    %c0_8 = arith.constant 0 : index
    %c0_9 = arith.constant 0 : index
    %5 = vector.load %arg1[%c0_6, %c0_7, %c0_8, %c0_9] : memref<2x9x9x128xf32, #tpu.memory_space<vmem>>, vector<2x8x8x128xf32>
    %6 = vector.shape_cast %5 : vector<2x8x8x128xf32> to vector<128x128xf32>
    %c1 = arith.constant 1 : index
    %c0_10 = arith.constant 0 : index
    %c0_11 = arith.constant 0 : index
    %7 = vector.load %arg4[%c1, %c0_10, %c0_11] : memref<9x128x128xf32, #tpu.memory_space<vmem>>, vector<1x128x128xf32>
    %8 = vector.shape_cast %7 : vector<1x128x128xf32> to vector<128x128xf32>
    %cst_12 = arith.constant dense<0.000000e+00> : vector<128x128xf32>
    %9 = tpu.matmul %6, %8, %cst_12 {dimension_numbers = #tpu.dot_dimension_numbers<[1], [0], [0], [1], [0, 0, 1, 1], [], []>} : vector<128x128xf32>, vector<128x128xf32>, vector<128x128xf32> -> vector<128x128xf32>
    %10 = arith.addf %4, %9 : vector<128x128xf32>
    %c0_13 = arith.constant 0 : index
    %c0_14 = arith.constant 0 : index
    %c1_15 = arith.constant 1 : index
    %c0_16 = arith.constant 0 : index
    %11 = vector.load %arg0[%c0_13, %c0_14, %c1_15, %c0_16] : memref<2x9x9x128xf32, #tpu.memory_space<vmem>>, vector<2x8x8x128xf32>
    %12 = vector.shape_cast %11 : vector<2x8x8x128xf32> to vector<128x128xf32>
    %c2 = arith.constant 2 : index
    %c0_17 = arith.constant 0 : index
    %c0_18 = arith.constant 0 : index
    %13 = vector.load %arg4[%c2, %c0_17, %c0_18] : memref<9x128x128xf32, #tpu.memory_space<vmem>>, vector<1x128x128xf32>
    %14 = vector.shape_cast %13 : vector<1x128x128xf32> to vector<128x128xf32>
    %cst_19 = arith.constant dense<0.000000e+00> : vector<128x128xf32>
    %15 = tpu.matmul %12, %14, %cst_19 {dimension_numbers = #tpu.dot_dimension_numbers<[1], [0], [0], [1], [0, 0, 1, 1], [], []>} : vector<128x128xf32>, vector<128x128xf32>, vector<128x128xf32> -> vector<128x128xf32>
    %16 = arith.addf %10, %15 : vector<128x128xf32>
    %c0_20 = arith.constant 0 : index
    %c0_21 = arith.constant 0 : index
    %c0_22 = arith.constant 0 : index
    %c0_23 = arith.constant 0 : index
    %17 = vector.load %arg2[%c0_20, %c0_21, %c0_22, %c0_23] : memref<2x9x9x128xf32, #tpu.memory_space<vmem>>, vector<2x8x8x128xf32>
    %18 = vector.shape_cast %17 : vector<2x8x8x128xf32> to vector<128x128xf32>
    %c3 = arith.constant 3 : index
    %c0_24 = arith.constant 0 : index
    %c0_25 = arith.constant 0 : index
    %19 = vector.load %arg4[%c3, %c0_24, %c0_25] : memref<9x128x128xf32, #tpu.memory_space<vmem>>, vector<1x128x128xf32>
    %20 = vector.shape_cast %19 : vector<1x128x128xf32> to vector<128x128xf32>
    %cst_26 = arith.constant dense<0.000000e+00> : vector<128x128xf32>
    %21 = tpu.matmul %18, %20, %cst_26 {dimension_numbers = #tpu.dot_dimension_numbers<[1], [0], [0], [1], [0, 0, 1, 1], [], []>} : vector<128x128xf32>, vector<128x128xf32>, vector<128x128xf32> -> vector<128x128xf32>
    %22 = arith.addf %16, %21 : vector<128x128xf32>
    %c0_27 = arith.constant 0 : index
    %c0_28 = arith.constant 0 : index
    %c0_29 = arith.constant 0 : index
    %c0_30 = arith.constant 0 : index
    %23 = vector.load %arg3[%c0_27, %c0_28, %c0_29, %c0_30] : memref<2x9x9x128xf32, #tpu.memory_space<vmem>>, vector<2x8x8x128xf32>
    %24 = vector.shape_cast %23 : vector<2x8x8x128xf32> to vector<128x128xf32>
    %c4 = arith.constant 4 : index
    %c0_31 = arith.constant 0 : index
    %c0_32 = arith.constant 0 : index
    %25 = vector.load %arg4[%c4, %c0_31, %c0_32] : memref<9x128x128xf32, #tpu.memory_space<vmem>>, vector<1x128x128xf32>
    %26 = vector.shape_cast %25 : vector<1x128x128xf32> to vector<128x128xf32>
    %cst_33 = arith.constant dense<0.000000e+00> : vector<128x128xf32>
    %27 = tpu.matmul %24, %26, %cst_33 {dimension_numbers = #tpu.dot_dimension_numbers<[1], [0], [0], [1], [0, 0, 1, 1], [], []>} : vector<128x128xf32>, vector<128x128xf32>, vector<128x128xf32> -> vector<128x128xf32>
    %28 = arith.addf %22, %27 : vector<128x128xf32>
    %c0_34 = arith.constant 0 : index
    %c0_35 = arith.constant 0 : index
    %c1_36 = arith.constant 1 : index
    %c0_37 = arith.constant 0 : index
    %29 = vector.load %arg2[%c0_34, %c0_35, %c1_36, %c0_37] : memref<2x9x9x128xf32, #tpu.memory_space<vmem>>, vector<2x8x8x128xf32>
    %30 = vector.shape_cast %29 : vector<2x8x8x128xf32> to vector<128x128xf32>
    %c5 = arith.constant 5 : index
    %c0_38 = arith.constant 0 : index
    %c0_39 = arith.constant 0 : index
    %31 = vector.load %arg4[%c5, %c0_38, %c0_39] : memref<9x128x128xf32, #tpu.memory_space<vmem>>, vector<1x128x128xf32>
    %32 = vector.shape_cast %31 : vector<1x128x128xf32> to vector<128x128xf32>
    %cst_40 = arith.constant dense<0.000000e+00> : vector<128x128xf32>
    %33 = tpu.matmul %30, %32, %cst_40 {dimension_numbers = #tpu.dot_dimension_numbers<[1], [0], [0], [1], [0, 0, 1, 1], [], []>} : vector<128x128xf32>, vector<128x128xf32>, vector<128x128xf32> -> vector<128x128xf32>
    %34 = arith.addf %28, %33 : vector<128x128xf32>
    %c0_41 = arith.constant 0 : index
    %c1_42 = arith.constant 1 : index
    %c0_43 = arith.constant 0 : index
    %c0_44 = arith.constant 0 : index
    %35 = vector.load %arg0[%c0_41, %c1_42, %c0_43, %c0_44] : memref<2x9x9x128xf32, #tpu.memory_space<vmem>>, vector<2x8x8x128xf32>
    %36 = vector.shape_cast %35 : vector<2x8x8x128xf32> to vector<128x128xf32>
    %c6 = arith.constant 6 : index
    %c0_45 = arith.constant 0 : index
    %c0_46 = arith.constant 0 : index
    %37 = vector.load %arg4[%c6, %c0_45, %c0_46] : memref<9x128x128xf32, #tpu.memory_space<vmem>>, vector<1x128x128xf32>
    %38 = vector.shape_cast %37 : vector<1x128x128xf32> to vector<128x128xf32>
    %cst_47 = arith.constant dense<0.000000e+00> : vector<128x128xf32>
    %39 = tpu.matmul %36, %38, %cst_47 {dimension_numbers = #tpu.dot_dimension_numbers<[1], [0], [0], [1], [0, 0, 1, 1], [], []>} : vector<128x128xf32>, vector<128x128xf32>, vector<128x128xf32> -> vector<128x128xf32>
    %40 = arith.addf %34, %39 : vector<128x128xf32>
    %c0_48 = arith.constant 0 : index
    %c1_49 = arith.constant 1 : index
    %c0_50 = arith.constant 0 : index
    %c0_51 = arith.constant 0 : index
    %41 = vector.load %arg1[%c0_48, %c1_49, %c0_50, %c0_51] : memref<2x9x9x128xf32, #tpu.memory_space<vmem>>, vector<2x8x8x128xf32>
    %42 = vector.shape_cast %41 : vector<2x8x8x128xf32> to vector<128x128xf32>
    %c7 = arith.constant 7 : index
    %c0_52 = arith.constant 0 : index
    %c0_53 = arith.constant 0 : index
    %43 = vector.load %arg4[%c7, %c0_52, %c0_53] : memref<9x128x128xf32, #tpu.memory_space<vmem>>, vector<1x128x128xf32>
    %44 = vector.shape_cast %43 : vector<1x128x128xf32> to vector<128x128xf32>
    %cst_54 = arith.constant dense<0.000000e+00> : vector<128x128xf32>
    %45 = tpu.matmul %42, %44, %cst_54 {dimension_numbers = #tpu.dot_dimension_numbers<[1], [0], [0], [1], [0, 0, 1, 1], [], []>} : vector<128x128xf32>, vector<128x128xf32>, vector<128x128xf32> -> vector<128x128xf32>
    %46 = arith.addf %40, %45 : vector<128x128xf32>
    %c0_55 = arith.constant 0 : index
    %c1_56 = arith.constant 1 : index
    %c1_57 = arith.constant 1 : index
    %c0_58 = arith.constant 0 : index
    %47 = vector.load %arg0[%c0_55, %c1_56, %c1_57, %c0_58] : memref<2x9x9x128xf32, #tpu.memory_space<vmem>>, vector<2x8x8x128xf32>
    %48 = vector.shape_cast %47 : vector<2x8x8x128xf32> to vector<128x128xf32>
    %c8 = arith.constant 8 : index
    %c0_59 = arith.constant 0 : index
    %c0_60 = arith.constant 0 : index
    %49 = vector.load %arg4[%c8, %c0_59, %c0_60] : memref<9x128x128xf32, #tpu.memory_space<vmem>>, vector<1x128x128xf32>
    %50 = vector.shape_cast %49 : vector<1x128x128xf32> to vector<128x128xf32>
    %cst_61 = arith.constant dense<0.000000e+00> : vector<128x128xf32>
    %51 = tpu.matmul %48, %50, %cst_61 {dimension_numbers = #tpu.dot_dimension_numbers<[1], [0], [0], [1], [0, 0, 1, 1], [], []>} : vector<128x128xf32>, vector<128x128xf32>, vector<128x128xf32> -> vector<128x128xf32>
    %52 = arith.addf %46, %51 : vector<128x128xf32>
    %cst_62 = arith.constant dense<0.000000e+00> : vector<128xf32>
    %53 = vector.multi_reduction <add>, %52, %cst_62 [0] : vector<128x128xf32> to vector<128xf32>
    %54 = vector.shape_cast %53 : vector<128xf32> to vector<1x128xf32>
    %cst_63 = arith.constant 1.280000e+02 : f32
    %55 = vector.broadcast %cst_63 : f32 to vector<1x128xf32>
    %56 = arith.divf %54, %55 : vector<1x128xf32>
    %57 = arith.mulf %52, %52 : vector<128x128xf32>
    %cst_64 = arith.constant dense<0.000000e+00> : vector<128xf32>
    %58 = vector.multi_reduction <add>, %57, %cst_64 [0] : vector<128x128xf32> to vector<128xf32>
    %59 = vector.shape_cast %58 : vector<128xf32> to vector<1x128xf32>
    %cst_65 = arith.constant 1.280000e+02 : f32
    %60 = vector.broadcast %cst_65 : f32 to vector<1x128xf32>
    %61 = arith.divf %59, %60 : vector<1x128xf32>
    %62 = arith.mulf %56, %56 : vector<1x128xf32>
    %63 = arith.subf %61, %62 : vector<1x128xf32>
    %cst_66 = arith.constant 0.000000e+00 : f32
    %64 = vector.broadcast %cst_66 : f32 to vector<1x128xf32>
    %65 = arith.maximumf %63, %64 : vector<1x128xf32>
    %cst_67 = arith.constant 9.99999974E-6 : f32
    %66 = vector.broadcast %cst_67 : f32 to vector<1x128xf32>
    %67 = arith.addf %65, %66 : vector<1x128xf32>
    %68 = math.rsqrt %67 : vector<1x128xf32>
    %c0_68 = arith.constant 0 : index
    %c0_69 = arith.constant 0 : index
    %69 = vector.load %arg5[%c0_68, %c0_69] : memref<1x128xf32, #tpu.memory_space<vmem>>, vector<1x128xf32>
    %70 = arith.mulf %68, %69 : vector<1x128xf32>
    %c0_70 = arith.constant 0 : index
    %c0_71 = arith.constant 0 : index
    %71 = vector.load %arg6[%c0_70, %c0_71] : memref<1x128xf32, #tpu.memory_space<vmem>>, vector<1x128xf32>
    %72 = arith.mulf %56, %70 : vector<1x128xf32>
    %73 = arith.subf %71, %72 : vector<1x128xf32>
    %74 = vector.broadcast %70 : vector<1x128xf32> to vector<128x128xf32>
    %75 = arith.mulf %52, %74 : vector<128x128xf32>
    %76 = vector.broadcast %73 : vector<1x128xf32> to vector<128x128xf32>
    %77 = arith.addf %75, %76 : vector<128x128xf32>
    %cst_72 = arith.constant 0.000000e+00 : f32
    %78 = vector.broadcast %cst_72 : f32 to vector<128x128xf32>
    %79 = arith.maximumf %77, %78 : vector<128x128xf32>
    %c0_73 = arith.constant 0 : index
    %c0_74 = arith.constant 0 : index
    %80 = vector.load %arg7[%c0_73, %c0_74] : memref<128x128xf32, #tpu.memory_space<vmem>>, vector<128x128xf32>
    tpu.vector_store %arg7[%c0_73, %c0_74], %79 {strides = array<i32>} : memref<128x128xf32, #tpu.memory_space<vmem>>, vector<128x128xf32>,
    return
  }
}

module attributes {stable_mosaic.version = 11 : i64} {
  func.func @kernel(%arg0: memref<2x5x5x128xf32, #tpu.memory_space<vmem>>, %arg1: memref<2x5x5x128xf32, #tpu.memory_space<vmem>>, %arg2: memref<2x5x5x128xf32, #tpu.memory_space<vmem>>, %arg3: memref<2x5x5x128xf32, #tpu.memory_space<vmem>>, %arg4: memref<2x4x4x128xf32, #tpu.memory_space<vmem>>) attributes {dimension_semantics = [], scalar_prefetch = 0 : i64, scratch_operands = 0 : i64, tpu.core_type = #tpu.core_type<tc>} {
    %c0 = arith.constant 0 : index
    %c0_0 = arith.constant 0 : index
    %c0_1 = arith.constant 0 : index
    %c0_2 = arith.constant 0 : index
    %0 = vector.load %arg0[%c0, %c0_0, %c0_1, %c0_2] : memref<2x5x5x128xf32, #tpu.memory_space<vmem>>, vector<2x4x4x128xf32>
    %c0_3 = arith.constant 0 : index
    %c0_4 = arith.constant 0 : index
    %c0_5 = arith.constant 0 : index
    %c0_6 = arith.constant 0 : index
    %1 = vector.load %arg1[%c0_3, %c0_4, %c0_5, %c0_6] : memref<2x5x5x128xf32, #tpu.memory_space<vmem>>, vector<2x4x4x128xf32>
    %2 = arith.maximumf %0, %1 : vector<2x4x4x128xf32>
    %c0_7 = arith.constant 0 : index
    %c0_8 = arith.constant 0 : index
    %c1 = arith.constant 1 : index
    %c0_9 = arith.constant 0 : index
    %3 = vector.load %arg0[%c0_7, %c0_8, %c1, %c0_9] : memref<2x5x5x128xf32, #tpu.memory_space<vmem>>, vector<2x4x4x128xf32>
    %4 = arith.maximumf %2, %3 : vector<2x4x4x128xf32>
    %c0_10 = arith.constant 0 : index
    %c0_11 = arith.constant 0 : index
    %c0_12 = arith.constant 0 : index
    %c0_13 = arith.constant 0 : index
    %5 = vector.load %arg2[%c0_10, %c0_11, %c0_12, %c0_13] : memref<2x5x5x128xf32, #tpu.memory_space<vmem>>, vector<2x4x4x128xf32>
    %6 = arith.maximumf %4, %5 : vector<2x4x4x128xf32>
    %c0_14 = arith.constant 0 : index
    %c0_15 = arith.constant 0 : index
    %c0_16 = arith.constant 0 : index
    %c0_17 = arith.constant 0 : index
    %7 = vector.load %arg3[%c0_14, %c0_15, %c0_16, %c0_17] : memref<2x5x5x128xf32, #tpu.memory_space<vmem>>, vector<2x4x4x128xf32>
    %8 = arith.maximumf %6, %7 : vector<2x4x4x128xf32>
    %c0_18 = arith.constant 0 : index
    %c0_19 = arith.constant 0 : index
    %c1_20 = arith.constant 1 : index
    %c0_21 = arith.constant 0 : index
    %9 = vector.load %arg2[%c0_18, %c0_19, %c1_20, %c0_21] : memref<2x5x5x128xf32, #tpu.memory_space<vmem>>, vector<2x4x4x128xf32>
    %10 = arith.maximumf %8, %9 : vector<2x4x4x128xf32>
    %c0_22 = arith.constant 0 : index
    %c1_23 = arith.constant 1 : index
    %c0_24 = arith.constant 0 : index
    %c0_25 = arith.constant 0 : index
    %11 = vector.load %arg0[%c0_22, %c1_23, %c0_24, %c0_25] : memref<2x5x5x128xf32, #tpu.memory_space<vmem>>, vector<2x4x4x128xf32>
    %12 = arith.maximumf %10, %11 : vector<2x4x4x128xf32>
    %c0_26 = arith.constant 0 : index
    %c1_27 = arith.constant 1 : index
    %c0_28 = arith.constant 0 : index
    %c0_29 = arith.constant 0 : index
    %13 = vector.load %arg1[%c0_26, %c1_27, %c0_28, %c0_29] : memref<2x5x5x128xf32, #tpu.memory_space<vmem>>, vector<2x4x4x128xf32>
    %14 = arith.maximumf %12, %13 : vector<2x4x4x128xf32>
    %c0_30 = arith.constant 0 : index
    %c1_31 = arith.constant 1 : index
    %c1_32 = arith.constant 1 : index
    %c0_33 = arith.constant 0 : index
    %15 = vector.load %arg0[%c0_30, %c1_31, %c1_32, %c0_33] : memref<2x5x5x128xf32, #tpu.memory_space<vmem>>, vector<2x4x4x128xf32>
    %16 = arith.maximumf %14, %15 : vector<2x4x4x128xf32>
    %c0_34 = arith.constant 0 : index
    %c0_35 = arith.constant 0 : index
    %c0_36 = arith.constant 0 : index
    %c0_37 = arith.constant 0 : index
    %17 = vector.load %arg4[%c0_34, %c0_35, %c0_36, %c0_37] : memref<2x4x4x128xf32, #tpu.memory_space<vmem>>, vector<2x4x4x128xf32>
    tpu.vector_store %arg4[%c0_34, %c0_35, %c0_36, %c0_37], %16 {strides = array<i32>} : memref<2x4x4x128xf32, #tpu.memory_space<vmem>>, vector<2x4x4x128xf32>,
    return
  }
}

module attributes {stable_mosaic.version = 11 : i64} {
  func.func @kernel(%arg0: memref<2x4x4x128xf32, #tpu.memory_space<vmem>>, %arg1: memref<1x128x128xf32, #tpu.memory_space<vmem>>, %arg2: memref<1x128xf32, #tpu.memory_space<vmem>>, %arg3: memref<1x128xf32, #tpu.memory_space<vmem>>, %arg4: memref<32x128xf32, #tpu.memory_space<vmem>>) attributes {dimension_semantics = [], scalar_prefetch = 0 : i64, scratch_operands = 0 : i64, tpu.core_type = #tpu.core_type<tc>} {
    %c0 = arith.constant 0 : index
    %c0_0 = arith.constant 0 : index
    %c0_1 = arith.constant 0 : index
    %c0_2 = arith.constant 0 : index
    %0 = vector.load %arg0[%c0, %c0_0, %c0_1, %c0_2] : memref<2x4x4x128xf32, #tpu.memory_space<vmem>>, vector<1x1x4x128xf32>
    %1 = vector.shape_cast %0 : vector<1x1x4x128xf32> to vector<4x128xf32>
    %c0_3 = arith.constant 0 : index
    %c1 = arith.constant 1 : index
    %c0_4 = arith.constant 0 : index
    %c0_5 = arith.constant 0 : index
    %2 = vector.load %arg0[%c0_3, %c1, %c0_4, %c0_5] : memref<2x4x4x128xf32, #tpu.memory_space<vmem>>, vector<1x1x4x128xf32>
    %3 = vector.shape_cast %2 : vector<1x1x4x128xf32> to vector<4x128xf32>
    %c0_6 = arith.constant 0 : index
    %c2 = arith.constant 2 : index
    %c0_7 = arith.constant 0 : index
    %c0_8 = arith.constant 0 : index
    %4 = vector.load %arg0[%c0_6, %c2, %c0_7, %c0_8] : memref<2x4x4x128xf32, #tpu.memory_space<vmem>>, vector<1x1x4x128xf32>
    %5 = vector.shape_cast %4 : vector<1x1x4x128xf32> to vector<4x128xf32>
    %c0_9 = arith.constant 0 : index
    %c3 = arith.constant 3 : index
    %c0_10 = arith.constant 0 : index
    %c0_11 = arith.constant 0 : index
    %6 = vector.load %arg0[%c0_9, %c3, %c0_10, %c0_11] : memref<2x4x4x128xf32, #tpu.memory_space<vmem>>, vector<1x1x4x128xf32>
    %7 = vector.shape_cast %6 : vector<1x1x4x128xf32> to vector<4x128xf32>
    %c1_12 = arith.constant 1 : index
    %c0_13 = arith.constant 0 : index
    %c0_14 = arith.constant 0 : index
    %c0_15 = arith.constant 0 : index
    %8 = vector.load %arg0[%c1_12, %c0_13, %c0_14, %c0_15] : memref<2x4x4x128xf32, #tpu.memory_space<vmem>>, vector<1x1x4x128xf32>
    %9 = vector.shape_cast %8 : vector<1x1x4x128xf32> to vector<4x128xf32>
    %c1_16 = arith.constant 1 : index
    %c1_17 = arith.constant 1 : index
    %c0_18 = arith.constant 0 : index
    %c0_19 = arith.constant 0 : index
    %10 = vector.load %arg0[%c1_16, %c1_17, %c0_18, %c0_19] : memref<2x4x4x128xf32, #tpu.memory_space<vmem>>, vector<1x1x4x128xf32>
    %11 = vector.shape_cast %10 : vector<1x1x4x128xf32> to vector<4x128xf32>
    %c1_20 = arith.constant 1 : index
    %c2_21 = arith.constant 2 : index
    %c0_22 = arith.constant 0 : index
    %c0_23 = arith.constant 0 : index
    %12 = vector.load %arg0[%c1_20, %c2_21, %c0_22, %c0_23] : memref<2x4x4x128xf32, #tpu.memory_space<vmem>>, vector<1x1x4x128xf32>
    %13 = vector.shape_cast %12 : vector<1x1x4x128xf32> to vector<4x128xf32>
    %c1_24 = arith.constant 1 : index
    %c3_25 = arith.constant 3 : index
    %c0_26 = arith.constant 0 : index
    %c0_27 = arith.constant 0 : index
    %14 = vector.load %arg0[%c1_24, %c3_25, %c0_26, %c0_27] : memref<2x4x4x128xf32, #tpu.memory_space<vmem>>, vector<1x1x4x128xf32>
    %15 = vector.shape_cast %14 : vector<1x1x4x128xf32> to vector<4x128xf32>
    %16 = tpu.concatenate %1, %3, %5, %7, %9, %11, %13, %15 in 0 : vector<4x128xf32>, vector<4x128xf32>, vector<4x128xf32>, vector<4x128xf32>, vector<4x128xf32>, vector<4x128xf32>, vector<4x128xf32>, vector<4x128xf32> -> vector<32x128xf32>
    %c0_28 = arith.constant 0 : index
    %c0_29 = arith.constant 0 : index
    %c0_30 = arith.constant 0 : index
    %17 = vector.load %arg1[%c0_28, %c0_29, %c0_30] : memref<1x128x128xf32, #tpu.memory_space<vmem>>, vector<1x128x128xf32>
    %18 = vector.shape_cast %17 : vector<1x128x128xf32> to vector<128x128xf32>
    %cst = arith.constant dense<0.000000e+00> : vector<32x128xf32>
    %19 = tpu.matmul %16, %18, %cst {dimension_numbers = #tpu.dot_dimension_numbers<[1], [0], [0], [1], [0, 0, 1, 1], [], []>} : vector<32x128xf32>, vector<128x128xf32>, vector<32x128xf32> -> vector<32x128xf32>
    %cst_31 = arith.constant dense<0.000000e+00> : vector<128xf32>
    %20 = vector.multi_reduction <add>, %19, %cst_31 [0] : vector<32x128xf32> to vector<128xf32>
    %21 = vector.shape_cast %20 : vector<128xf32> to vector<1x128xf32>
    %cst_32 = arith.constant 3.200000e+01 : f32
    %22 = vector.broadcast %cst_32 : f32 to vector<1x128xf32>
    %23 = arith.divf %21, %22 : vector<1x128xf32>
    %24 = arith.mulf %19, %19 : vector<32x128xf32>
    %cst_33 = arith.constant dense<0.000000e+00> : vector<128xf32>
    %25 = vector.multi_reduction <add>, %24, %cst_33 [0] : vector<32x128xf32> to vector<128xf32>
    %26 = vector.shape_cast %25 : vector<128xf32> to vector<1x128xf32>
    %cst_34 = arith.constant 3.200000e+01 : f32
    %27 = vector.broadcast %cst_34 : f32 to vector<1x128xf32>
    %28 = arith.divf %26, %27 : vector<1x128xf32>
    %29 = arith.mulf %23, %23 : vector<1x128xf32>
    %30 = arith.subf %28, %29 : vector<1x128xf32>
    %cst_35 = arith.constant 0.000000e+00 : f32
    %31 = vector.broadcast %cst_35 : f32 to vector<1x128xf32>
    %32 = arith.maximumf %30, %31 : vector<1x128xf32>
    %cst_36 = arith.constant 9.99999974E-6 : f32
    %33 = vector.broadcast %cst_36 : f32 to vector<1x128xf32>
    %34 = arith.addf %32, %33 : vector<1x128xf32>
    %35 = math.rsqrt %34 : vector<1x128xf32>
    %c0_37 = arith.constant 0 : index
    %c0_38 = arith.constant 0 : index
    %36 = vector.load %arg2[%c0_37, %c0_38] : memref<1x128xf32, #tpu.memory_space<vmem>>, vector<1x128xf32>
    %37 = arith.mulf %35, %36 : vector<1x128xf32>
    %c0_39 = arith.constant 0 : index
    %c0_40 = arith.constant 0 : index
    %38 = vector.load %arg3[%c0_39, %c0_40] : memref<1x128xf32, #tpu.memory_space<vmem>>, vector<1x128xf32>
    %39 = arith.mulf %23, %37 : vector<1x128xf32>
    %40 = arith.subf %38, %39 : vector<1x128xf32>
    %41 = vector.broadcast %37 : vector<1x128xf32> to vector<32x128xf32>
    %42 = arith.mulf %19, %41 : vector<32x128xf32>
    %43 = vector.broadcast %40 : vector<1x128xf32> to vector<32x128xf32>
    %44 = arith.addf %42, %43 : vector<32x128xf32>
    %c0_41 = arith.constant 0 : index
    %c0_42 = arith.constant 0 : index
    %45 = vector.load %arg4[%c0_41, %c0_42] : memref<32x128xf32, #tpu.memory_space<vmem>>, vector<32x128xf32>
    tpu.vector_store %arg4[%c0_41, %c0_42], %44 {strides = array<i32>} : memref<32x128xf32, #tpu.memory_space<vmem>>, vector<32x128xf32>,
    return
  }
}

module attributes {stable_mosaic.version = 11 : i64} {
  func.func @kernel(%arg0: memref<2x6x6x128xf32, #tpu.memory_space<vmem>>, %arg1: memref<9x128x128xf32, #tpu.memory_space<vmem>>, %arg2: memref<1x128xf32, #tpu.memory_space<vmem>>, %arg3: memref<1x128xf32, #tpu.memory_space<vmem>>, %arg4: memref<32x128xf32, #tpu.memory_space<vmem>>) attributes {dimension_semantics = [], scalar_prefetch = 0 : i64, scratch_operands = 0 : i64, tpu.core_type = #tpu.core_type<tc>} {
    %c0 = arith.constant 0 : index
    %c0_0 = arith.constant 0 : index
    %c0_1 = arith.constant 0 : index
    %c0_2 = arith.constant 0 : index
    %0 = vector.load %arg0[%c0, %c0_0, %c0_1, %c0_2] : memref<2x6x6x128xf32, #tpu.memory_space<vmem>>, vector<1x1x4x128xf32>
    %1 = vector.shape_cast %0 : vector<1x1x4x128xf32> to vector<4x128xf32>
    %c0_3 = arith.constant 0 : index
    %c1 = arith.constant 1 : index
    %c0_4 = arith.constant 0 : index
    %c0_5 = arith.constant 0 : index
    %2 = vector.load %arg0[%c0_3, %c1, %c0_4, %c0_5] : memref<2x6x6x128xf32, #tpu.memory_space<vmem>>, vector<1x1x4x128xf32>
    %3 = vector.shape_cast %2 : vector<1x1x4x128xf32> to vector<4x128xf32>
    %c0_6 = arith.constant 0 : index
    %c2 = arith.constant 2 : index
    %c0_7 = arith.constant 0 : index
    %c0_8 = arith.constant 0 : index
    %4 = vector.load %arg0[%c0_6, %c2, %c0_7, %c0_8] : memref<2x6x6x128xf32, #tpu.memory_space<vmem>>, vector<1x1x4x128xf32>
    %5 = vector.shape_cast %4 : vector<1x1x4x128xf32> to vector<4x128xf32>
    %c0_9 = arith.constant 0 : index
    %c3 = arith.constant 3 : index
    %c0_10 = arith.constant 0 : index
    %c0_11 = arith.constant 0 : index
    %6 = vector.load %arg0[%c0_9, %c3, %c0_10, %c0_11] : memref<2x6x6x128xf32, #tpu.memory_space<vmem>>, vector<1x1x4x128xf32>
    %7 = vector.shape_cast %6 : vector<1x1x4x128xf32> to vector<4x128xf32>
    %c1_12 = arith.constant 1 : index
    %c0_13 = arith.constant 0 : index
    %c0_14 = arith.constant 0 : index
    %c0_15 = arith.constant 0 : index
    %8 = vector.load %arg0[%c1_12, %c0_13, %c0_14, %c0_15] : memref<2x6x6x128xf32, #tpu.memory_space<vmem>>, vector<1x1x4x128xf32>
    %9 = vector.shape_cast %8 : vector<1x1x4x128xf32> to vector<4x128xf32>
    %c1_16 = arith.constant 1 : index
    %c1_17 = arith.constant 1 : index
    %c0_18 = arith.constant 0 : index
    %c0_19 = arith.constant 0 : index
    %10 = vector.load %arg0[%c1_16, %c1_17, %c0_18, %c0_19] : memref<2x6x6x128xf32, #tpu.memory_space<vmem>>, vector<1x1x4x128xf32>
    %11 = vector.shape_cast %10 : vector<1x1x4x128xf32> to vector<4x128xf32>
    %c1_20 = arith.constant 1 : index
    %c2_21 = arith.constant 2 : index
    %c0_22 = arith.constant 0 : index
    %c0_23 = arith.constant 0 : index
    %12 = vector.load %arg0[%c1_20, %c2_21, %c0_22, %c0_23] : memref<2x6x6x128xf32, #tpu.memory_space<vmem>>, vector<1x1x4x128xf32>
    %13 = vector.shape_cast %12 : vector<1x1x4x128xf32> to vector<4x128xf32>
    %c1_24 = arith.constant 1 : index
    %c3_25 = arith.constant 3 : index
    %c0_26 = arith.constant 0 : index
    %c0_27 = arith.constant 0 : index
    %14 = vector.load %arg0[%c1_24, %c3_25, %c0_26, %c0_27] : memref<2x6x6x128xf32, #tpu.memory_space<vmem>>, vector<1x1x4x128xf32>
    %15 = vector.shape_cast %14 : vector<1x1x4x128xf32> to vector<4x128xf32>
    %16 = tpu.concatenate %1, %3, %5, %7, %9, %11, %13, %15 in 0 : vector<4x128xf32>, vector<4x128xf32>, vector<4x128xf32>, vector<4x128xf32>, vector<4x128xf32>, vector<4x128xf32>, vector<4x128xf32>, vector<4x128xf32> -> vector<32x128xf32>
    %c0_28 = arith.constant 0 : index
    %c0_29 = arith.constant 0 : index
    %c0_30 = arith.constant 0 : index
    %17 = vector.load %arg1[%c0_28, %c0_29, %c0_30] : memref<9x128x128xf32, #tpu.memory_space<vmem>>, vector<1x128x128xf32>
    %18 = vector.shape_cast %17 : vector<1x128x128xf32> to vector<128x128xf32>
    %cst = arith.constant dense<0.000000e+00> : vector<32x128xf32>
    %19 = tpu.matmul %16, %18, %cst {dimension_numbers = #tpu.dot_dimension_numbers<[1], [0], [0], [1], [0, 0, 1, 1], [], []>} : vector<32x128xf32>, vector<128x128xf32>, vector<32x128xf32> -> vector<32x128xf32>
    %c0_31 = arith.constant 0 : index
    %c0_32 = arith.constant 0 : index
    %c1_33 = arith.constant 1 : index
    %c0_34 = arith.constant 0 : index
    %20 = vector.load %arg0[%c0_31, %c0_32, %c1_33, %c0_34] : memref<2x6x6x128xf32, #tpu.memory_space<vmem>>, vector<1x1x4x128xf32>
    %21 = vector.shape_cast %20 : vector<1x1x4x128xf32> to vector<4x128xf32>
    %c0_35 = arith.constant 0 : index
    %c1_36 = arith.constant 1 : index
    %c1_37 = arith.constant 1 : index
    %c0_38 = arith.constant 0 : index
    %22 = vector.load %arg0[%c0_35, %c1_36, %c1_37, %c0_38] : memref<2x6x6x128xf32, #tpu.memory_space<vmem>>, vector<1x1x4x128xf32>
    %23 = vector.shape_cast %22 : vector<1x1x4x128xf32> to vector<4x128xf32>
    %c0_39 = arith.constant 0 : index
    %c2_40 = arith.constant 2 : index
    %c1_41 = arith.constant 1 : index
    %c0_42 = arith.constant 0 : index
    %24 = vector.load %arg0[%c0_39, %c2_40, %c1_41, %c0_42] : memref<2x6x6x128xf32, #tpu.memory_space<vmem>>, vector<1x1x4x128xf32>
    %25 = vector.shape_cast %24 : vector<1x1x4x128xf32> to vector<4x128xf32>
    %c0_43 = arith.constant 0 : index
    %c3_44 = arith.constant 3 : index
    %c1_45 = arith.constant 1 : index
    %c0_46 = arith.constant 0 : index
    %26 = vector.load %arg0[%c0_43, %c3_44, %c1_45, %c0_46] : memref<2x6x6x128xf32, #tpu.memory_space<vmem>>, vector<1x1x4x128xf32>
    %27 = vector.shape_cast %26 : vector<1x1x4x128xf32> to vector<4x128xf32>
    %c1_47 = arith.constant 1 : index
    %c0_48 = arith.constant 0 : index
    %c1_49 = arith.constant 1 : index
    %c0_50 = arith.constant 0 : index
    %28 = vector.load %arg0[%c1_47, %c0_48, %c1_49, %c0_50] : memref<2x6x6x128xf32, #tpu.memory_space<vmem>>, vector<1x1x4x128xf32>
    %29 = vector.shape_cast %28 : vector<1x1x4x128xf32> to vector<4x128xf32>
    %c1_51 = arith.constant 1 : index
    %c1_52 = arith.constant 1 : index
    %c1_53 = arith.constant 1 : index
    %c0_54 = arith.constant 0 : index
    %30 = vector.load %arg0[%c1_51, %c1_52, %c1_53, %c0_54] : memref<2x6x6x128xf32, #tpu.memory_space<vmem>>, vector<1x1x4x128xf32>
    %31 = vector.shape_cast %30 : vector<1x1x4x128xf32> to vector<4x128xf32>
    %c1_55 = arith.constant 1 : index
    %c2_56 = arith.constant 2 : index
    %c1_57 = arith.constant 1 : index
    %c0_58 = arith.constant 0 : index
    %32 = vector.load %arg0[%c1_55, %c2_56, %c1_57, %c0_58] : memref<2x6x6x128xf32, #tpu.memory_space<vmem>>, vector<1x1x4x128xf32>
    %33 = vector.shape_cast %32 : vector<1x1x4x128xf32> to vector<4x128xf32>
    %c1_59 = arith.constant 1 : index
    %c3_60 = arith.constant 3 : index
    %c1_61 = arith.constant 1 : index
    %c0_62 = arith.constant 0 : index
    %34 = vector.load %arg0[%c1_59, %c3_60, %c1_61, %c0_62] : memref<2x6x6x128xf32, #tpu.memory_space<vmem>>, vector<1x1x4x128xf32>
    %35 = vector.shape_cast %34 : vector<1x1x4x128xf32> to vector<4x128xf32>
    %36 = tpu.concatenate %21, %23, %25, %27, %29, %31, %33, %35 in 0 : vector<4x128xf32>, vector<4x128xf32>, vector<4x128xf32>, vector<4x128xf32>, vector<4x128xf32>, vector<4x128xf32>, vector<4x128xf32>, vector<4x128xf32> -> vector<32x128xf32>
    %c1_63 = arith.constant 1 : index
    %c0_64 = arith.constant 0 : index
    %c0_65 = arith.constant 0 : index
    %37 = vector.load %arg1[%c1_63, %c0_64, %c0_65] : memref<9x128x128xf32, #tpu.memory_space<vmem>>, vector<1x128x128xf32>
    %38 = vector.shape_cast %37 : vector<1x128x128xf32> to vector<128x128xf32>
    %cst_66 = arith.constant dense<0.000000e+00> : vector<32x128xf32>
    %39 = tpu.matmul %36, %38, %cst_66 {dimension_numbers = #tpu.dot_dimension_numbers<[1], [0], [0], [1], [0, 0, 1, 1], [], []>} : vector<32x128xf32>, vector<128x128xf32>, vector<32x128xf32> -> vector<32x128xf32>
    %40 = arith.addf %19, %39 : vector<32x128xf32>
    %c0_67 = arith.constant 0 : index
    %c0_68 = arith.constant 0 : index
    %c2_69 = arith.constant 2 : index
    %c0_70 = arith.constant 0 : index
    %41 = vector.load %arg0[%c0_67, %c0_68, %c2_69, %c0_70] : memref<2x6x6x128xf32, #tpu.memory_space<vmem>>, vector<1x1x4x128xf32>
    %42 = vector.shape_cast %41 : vector<1x1x4x128xf32> to vector<4x128xf32>
    %c0_71 = arith.constant 0 : index
    %c1_72 = arith.constant 1 : index
    %c2_73 = arith.constant 2 : index
    %c0_74 = arith.constant 0 : index
    %43 = vector.load %arg0[%c0_71, %c1_72, %c2_73, %c0_74] : memref<2x6x6x128xf32, #tpu.memory_space<vmem>>, vector<1x1x4x128xf32>
    %44 = vector.shape_cast %43 : vector<1x1x4x128xf32> to vector<4x128xf32>
    %c0_75 = arith.constant 0 : index
    %c2_76 = arith.constant 2 : index
    %c2_77 = arith.constant 2 : index
    %c0_78 = arith.constant 0 : index
    %45 = vector.load %arg0[%c0_75, %c2_76, %c2_77, %c0_78] : memref<2x6x6x128xf32, #tpu.memory_space<vmem>>, vector<1x1x4x128xf32>
    %46 = vector.shape_cast %45 : vector<1x1x4x128xf32> to vector<4x128xf32>
    %c0_79 = arith.constant 0 : index
    %c3_80 = arith.constant 3 : index
    %c2_81 = arith.constant 2 : index
    %c0_82 = arith.constant 0 : index
    %47 = vector.load %arg0[%c0_79, %c3_80, %c2_81, %c0_82] : memref<2x6x6x128xf32, #tpu.memory_space<vmem>>, vector<1x1x4x128xf32>
    %48 = vector.shape_cast %47 : vector<1x1x4x128xf32> to vector<4x128xf32>
    %c1_83 = arith.constant 1 : index
    %c0_84 = arith.constant 0 : index
    %c2_85 = arith.constant 2 : index
    %c0_86 = arith.constant 0 : index
    %49 = vector.load %arg0[%c1_83, %c0_84, %c2_85, %c0_86] : memref<2x6x6x128xf32, #tpu.memory_space<vmem>>, vector<1x1x4x128xf32>
    %50 = vector.shape_cast %49 : vector<1x1x4x128xf32> to vector<4x128xf32>
    %c1_87 = arith.constant 1 : index
    %c1_88 = arith.constant 1 : index
    %c2_89 = arith.constant 2 : index
    %c0_90 = arith.constant 0 : index
    %51 = vector.load %arg0[%c1_87, %c1_88, %c2_89, %c0_90] : memref<2x6x6x128xf32, #tpu.memory_space<vmem>>, vector<1x1x4x128xf32>
    %52 = vector.shape_cast %51 : vector<1x1x4x128xf32> to vector<4x128xf32>
    %c1_91 = arith.constant 1 : index
    %c2_92 = arith.constant 2 : index
    %c2_93 = arith.constant 2 : index
    %c0_94 = arith.constant 0 : index
    %53 = vector.load %arg0[%c1_91, %c2_92, %c2_93, %c0_94] : memref<2x6x6x128xf32, #tpu.memory_space<vmem>>, vector<1x1x4x128xf32>
    %54 = vector.shape_cast %53 : vector<1x1x4x128xf32> to vector<4x128xf32>
    %c1_95 = arith.constant 1 : index
    %c3_96 = arith.constant 3 : index
    %c2_97 = arith.constant 2 : index
    %c0_98 = arith.constant 0 : index
    %55 = vector.load %arg0[%c1_95, %c3_96, %c2_97, %c0_98] : memref<2x6x6x128xf32, #tpu.memory_space<vmem>>, vector<1x1x4x128xf32>
    %56 = vector.shape_cast %55 : vector<1x1x4x128xf32> to vector<4x128xf32>
    %57 = tpu.concatenate %42, %44, %46, %48, %50, %52, %54, %56 in 0 : vector<4x128xf32>, vector<4x128xf32>, vector<4x128xf32>, vector<4x128xf32>, vector<4x128xf32>, vector<4x128xf32>, vector<4x128xf32>, vector<4x128xf32> -> vector<32x128xf32>
    %c2_99 = arith.constant 2 : index
    %c0_100 = arith.constant 0 : index
    %c0_101 = arith.constant 0 : index
    %58 = vector.load %arg1[%c2_99, %c0_100, %c0_101] : memref<9x128x128xf32, #tpu.memory_space<vmem>>, vector<1x128x128xf32>
    %59 = vector.shape_cast %58 : vector<1x128x128xf32> to vector<128x128xf32>
    %cst_102 = arith.constant dense<0.000000e+00> : vector<32x128xf32>
    %60 = tpu.matmul %57, %59, %cst_102 {dimension_numbers = #tpu.dot_dimension_numbers<[1], [0], [0], [1], [0, 0, 1, 1], [], []>} : vector<32x128xf32>, vector<128x128xf32>, vector<32x128xf32> -> vector<32x128xf32>
    %61 = arith.addf %40, %60 : vector<32x128xf32>
    %c0_103 = arith.constant 0 : index
    %c1_104 = arith.constant 1 : index
    %c0_105 = arith.constant 0 : index
    %c0_106 = arith.constant 0 : index
    %62 = vector.load %arg0[%c0_103, %c1_104, %c0_105, %c0_106] : memref<2x6x6x128xf32, #tpu.memory_space<vmem>>, vector<1x1x4x128xf32>
    %63 = vector.shape_cast %62 : vector<1x1x4x128xf32> to vector<4x128xf32>
    %c0_107 = arith.constant 0 : index
    %c2_108 = arith.constant 2 : index
    %c0_109 = arith.constant 0 : index
    %c0_110 = arith.constant 0 : index
    %64 = vector.load %arg0[%c0_107, %c2_108, %c0_109, %c0_110] : memref<2x6x6x128xf32, #tpu.memory_space<vmem>>, vector<1x1x4x128xf32>
    %65 = vector.shape_cast %64 : vector<1x1x4x128xf32> to vector<4x128xf32>
    %c0_111 = arith.constant 0 : index
    %c3_112 = arith.constant 3 : index
    %c0_113 = arith.constant 0 : index
    %c0_114 = arith.constant 0 : index
    %66 = vector.load %arg0[%c0_111, %c3_112, %c0_113, %c0_114] : memref<2x6x6x128xf32, #tpu.memory_space<vmem>>, vector<1x1x4x128xf32>
    %67 = vector.shape_cast %66 : vector<1x1x4x128xf32> to vector<4x128xf32>
    %c0_115 = arith.constant 0 : index
    %c4 = arith.constant 4 : index
    %c0_116 = arith.constant 0 : index
    %c0_117 = arith.constant 0 : index
    %68 = vector.load %arg0[%c0_115, %c4, %c0_116, %c0_117] : memref<2x6x6x128xf32, #tpu.memory_space<vmem>>, vector<1x1x4x128xf32>
    %69 = vector.shape_cast %68 : vector<1x1x4x128xf32> to vector<4x128xf32>
    %c1_118 = arith.constant 1 : index
    %c1_119 = arith.constant 1 : index
    %c0_120 = arith.constant 0 : index
    %c0_121 = arith.constant 0 : index
    %70 = vector.load %arg0[%c1_118, %c1_119, %c0_120, %c0_121] : memref<2x6x6x128xf32, #tpu.memory_space<vmem>>, vector<1x1x4x128xf32>
    %71 = vector.shape_cast %70 : vector<1x1x4x128xf32> to vector<4x128xf32>
    %c1_122 = arith.constant 1 : index
    %c2_123 = arith.constant 2 : index
    %c0_124 = arith.constant 0 : index
    %c0_125 = arith.constant 0 : index
    %72 = vector.load %arg0[%c1_122, %c2_123, %c0_124, %c0_125] : memref<2x6x6x128xf32, #tpu.memory_space<vmem>>, vector<1x1x4x128xf32>
    %73 = vector.shape_cast %72 : vector<1x1x4x128xf32> to vector<4x128xf32>
    %c1_126 = arith.constant 1 : index
    %c3_127 = arith.constant 3 : index
    %c0_128 = arith.constant 0 : index
    %c0_129 = arith.constant 0 : index
    %74 = vector.load %arg0[%c1_126, %c3_127, %c0_128, %c0_129] : memref<2x6x6x128xf32, #tpu.memory_space<vmem>>, vector<1x1x4x128xf32>
    %75 = vector.shape_cast %74 : vector<1x1x4x128xf32> to vector<4x128xf32>
    %c1_130 = arith.constant 1 : index
    %c4_131 = arith.constant 4 : index
    %c0_132 = arith.constant 0 : index
    %c0_133 = arith.constant 0 : index
    %76 = vector.load %arg0[%c1_130, %c4_131, %c0_132, %c0_133] : memref<2x6x6x128xf32, #tpu.memory_space<vmem>>, vector<1x1x4x128xf32>
    %77 = vector.shape_cast %76 : vector<1x1x4x128xf32> to vector<4x128xf32>
    %78 = tpu.concatenate %63, %65, %67, %69, %71, %73, %75, %77 in 0 : vector<4x128xf32>, vector<4x128xf32>, vector<4x128xf32>, vector<4x128xf32>, vector<4x128xf32>, vector<4x128xf32>, vector<4x128xf32>, vector<4x128xf32> -> vector<32x128xf32>
    %c3_134 = arith.constant 3 : index
    %c0_135 = arith.constant 0 : index
    %c0_136 = arith.constant 0 : index
    %79 = vector.load %arg1[%c3_134, %c0_135, %c0_136] : memref<9x128x128xf32, #tpu.memory_space<vmem>>, vector<1x128x128xf32>
    %80 = vector.shape_cast %79 : vector<1x128x128xf32> to vector<128x128xf32>
    %cst_137 = arith.constant dense<0.000000e+00> : vector<32x128xf32>
    %81 = tpu.matmul %78, %80, %cst_137 {dimension_numbers = #tpu.dot_dimension_numbers<[1], [0], [0], [1], [0, 0, 1, 1], [], []>} : vector<32x128xf32>, vector<128x128xf32>, vector<32x128xf32> -> vector<32x128xf32>
    %82 = arith.addf %61, %81 : vector<32x128xf32>
    %c0_138 = arith.constant 0 : index
    %c1_139 = arith.constant 1 : index
    %c1_140 = arith.constant 1 : index
    %c0_141 = arith.constant 0 : index
    %83 = vector.load %arg0[%c0_138, %c1_139, %c1_140, %c0_141] : memref<2x6x6x128xf32, #tpu.memory_space<vmem>>, vector<1x1x4x128xf32>
    %84 = vector.shape_cast %83 : vector<1x1x4x128xf32> to vector<4x128xf32>
    %c0_142 = arith.constant 0 : index
    %c2_143 = arith.constant 2 : index
    %c1_144 = arith.constant 1 : index
    %c0_145 = arith.constant 0 : index
    %85 = vector.load %arg0[%c0_142, %c2_143, %c1_144, %c0_145] : memref<2x6x6x128xf32, #tpu.memory_space<vmem>>, vector<1x1x4x128xf32>
    %86 = vector.shape_cast %85 : vector<1x1x4x128xf32> to vector<4x128xf32>
    %c0_146 = arith.constant 0 : index
    %c3_147 = arith.constant 3 : index
    %c1_148 = arith.constant 1 : index
    %c0_149 = arith.constant 0 : index
    %87 = vector.load %arg0[%c0_146, %c3_147, %c1_148, %c0_149] : memref<2x6x6x128xf32, #tpu.memory_space<vmem>>, vector<1x1x4x128xf32>
    %88 = vector.shape_cast %87 : vector<1x1x4x128xf32> to vector<4x128xf32>
    %c0_150 = arith.constant 0 : index
    %c4_151 = arith.constant 4 : index
    %c1_152 = arith.constant 1 : index
    %c0_153 = arith.constant 0 : index
    %89 = vector.load %arg0[%c0_150, %c4_151, %c1_152, %c0_153] : memref<2x6x6x128xf32, #tpu.memory_space<vmem>>, vector<1x1x4x128xf32>
    %90 = vector.shape_cast %89 : vector<1x1x4x128xf32> to vector<4x128xf32>
    %c1_154 = arith.constant 1 : index
    %c1_155 = arith.constant 1 : index
    %c1_156 = arith.constant 1 : index
    %c0_157 = arith.constant 0 : index
    %91 = vector.load %arg0[%c1_154, %c1_155, %c1_156, %c0_157] : memref<2x6x6x128xf32, #tpu.memory_space<vmem>>, vector<1x1x4x128xf32>
    %92 = vector.shape_cast %91 : vector<1x1x4x128xf32> to vector<4x128xf32>
    %c1_158 = arith.constant 1 : index
    %c2_159 = arith.constant 2 : index
    %c1_160 = arith.constant 1 : index
    %c0_161 = arith.constant 0 : index
    %93 = vector.load %arg0[%c1_158, %c2_159, %c1_160, %c0_161] : memref<2x6x6x128xf32, #tpu.memory_space<vmem>>, vector<1x1x4x128xf32>
    %94 = vector.shape_cast %93 : vector<1x1x4x128xf32> to vector<4x128xf32>
    %c1_162 = arith.constant 1 : index
    %c3_163 = arith.constant 3 : index
    %c1_164 = arith.constant 1 : index
    %c0_165 = arith.constant 0 : index
    %95 = vector.load %arg0[%c1_162, %c3_163, %c1_164, %c0_165] : memref<2x6x6x128xf32, #tpu.memory_space<vmem>>, vector<1x1x4x128xf32>
    %96 = vector.shape_cast %95 : vector<1x1x4x128xf32> to vector<4x128xf32>
    %c1_166 = arith.constant 1 : index
    %c4_167 = arith.constant 4 : index
    %c1_168 = arith.constant 1 : index
    %c0_169 = arith.constant 0 : index
    %97 = vector.load %arg0[%c1_166, %c4_167, %c1_168, %c0_169] : memref<2x6x6x128xf32, #tpu.memory_space<vmem>>, vector<1x1x4x128xf32>
    %98 = vector.shape_cast %97 : vector<1x1x4x128xf32> to vector<4x128xf32>
    %99 = tpu.concatenate %84, %86, %88, %90, %92, %94, %96, %98 in 0 : vector<4x128xf32>, vector<4x128xf32>, vector<4x128xf32>, vector<4x128xf32>, vector<4x128xf32>, vector<4x128xf32>, vector<4x128xf32>, vector<4x128xf32> -> vector<32x128xf32>
    %c4_170 = arith.constant 4 : index
    %c0_171 = arith.constant 0 : index
    %c0_172 = arith.constant 0 : index
    %100 = vector.load %arg1[%c4_170, %c0_171, %c0_172] : memref<9x128x128xf32, #tpu.memory_space<vmem>>, vector<1x128x128xf32>
    %101 = vector.shape_cast %100 : vector<1x128x128xf32> to vector<128x128xf32>
    %cst_173 = arith.constant dense<0.000000e+00> : vector<32x128xf32>
    %102 = tpu.matmul %99, %101, %cst_173 {dimension_numbers = #tpu.dot_dimension_numbers<[1], [0], [0], [1], [0, 0, 1, 1], [], []>} : vector<32x128xf32>, vector<128x128xf32>, vector<32x128xf32> -> vector<32x128xf32>
    %103 = arith.addf %82, %102 : vector<32x128xf32>
    %c0_174 = arith.constant 0 : index
    %c1_175 = arith.constant 1 : index
    %c2_176 = arith.constant 2 : index
    %c0_177 = arith.constant 0 : index
    %104 = vector.load %arg0[%c0_174, %c1_175, %c2_176, %c0_177] : memref<2x6x6x128xf32, #tpu.memory_space<vmem>>, vector<1x1x4x128xf32>
    %105 = vector.shape_cast %104 : vector<1x1x4x128xf32> to vector<4x128xf32>
    %c0_178 = arith.constant 0 : index
    %c2_179 = arith.constant 2 : index
    %c2_180 = arith.constant 2 : index
    %c0_181 = arith.constant 0 : index
    %106 = vector.load %arg0[%c0_178, %c2_179, %c2_180, %c0_181] : memref<2x6x6x128xf32, #tpu.memory_space<vmem>>, vector<1x1x4x128xf32>
    %107 = vector.shape_cast %106 : vector<1x1x4x128xf32> to vector<4x128xf32>
    %c0_182 = arith.constant 0 : index
    %c3_183 = arith.constant 3 : index
    %c2_184 = arith.constant 2 : index
    %c0_185 = arith.constant 0 : index
    %108 = vector.load %arg0[%c0_182, %c3_183, %c2_184, %c0_185] : memref<2x6x6x128xf32, #tpu.memory_space<vmem>>, vector<1x1x4x128xf32>
    %109 = vector.shape_cast %108 : vector<1x1x4x128xf32> to vector<4x128xf32>
    %c0_186 = arith.constant 0 : index
    %c4_187 = arith.constant 4 : index
    %c2_188 = arith.constant 2 : index
    %c0_189 = arith.constant 0 : index
    %110 = vector.load %arg0[%c0_186, %c4_187, %c2_188, %c0_189] : memref<2x6x6x128xf32, #tpu.memory_space<vmem>>, vector<1x1x4x128xf32>
    %111 = vector.shape_cast %110 : vector<1x1x4x128xf32> to vector<4x128xf32>
    %c1_190 = arith.constant 1 : index
    %c1_191 = arith.constant 1 : index
    %c2_192 = arith.constant 2 : index
    %c0_193 = arith.constant 0 : index
    %112 = vector.load %arg0[%c1_190, %c1_191, %c2_192, %c0_193] : memref<2x6x6x128xf32, #tpu.memory_space<vmem>>, vector<1x1x4x128xf32>
    %113 = vector.shape_cast %112 : vector<1x1x4x128xf32> to vector<4x128xf32>
    %c1_194 = arith.constant 1 : index
    %c2_195 = arith.constant 2 : index
    %c2_196 = arith.constant 2 : index
    %c0_197 = arith.constant 0 : index
    %114 = vector.load %arg0[%c1_194, %c2_195, %c2_196, %c0_197] : memref<2x6x6x128xf32, #tpu.memory_space<vmem>>, vector<1x1x4x128xf32>
    %115 = vector.shape_cast %114 : vector<1x1x4x128xf32> to vector<4x128xf32>
    %c1_198 = arith.constant 1 : index
    %c3_199 = arith.constant 3 : index
    %c2_200 = arith.constant 2 : index
    %c0_201 = arith.constant 0 : index
    %116 = vector.load %arg0[%c1_198, %c3_199, %c2_200, %c0_201] : memref<2x6x6x128xf32, #tpu.memory_space<vmem>>, vector<1x1x4x128xf32>
    %117 = vector.shape_cast %116 : vector<1x1x4x128xf32> to vector<4x128xf32>
    %c1_202 = arith.constant 1 : index
    %c4_203 = arith.constant 4 : index
    %c2_204 = arith.constant 2 : index
    %c0_205 = arith.constant 0 : index
    %118 = vector.load %arg0[%c1_202, %c4_203, %c2_204, %c0_205] : memref<2x6x6x128xf32, #tpu.memory_space<vmem>>, vector<1x1x4x128xf32>
    %119 = vector.shape_cast %118 : vector<1x1x4x128xf32> to vector<4x128xf32>
    %120 = tpu.concatenate %105, %107, %109, %111, %113, %115, %117, %119 in 0 : vector<4x128xf32>, vector<4x128xf32>, vector<4x128xf32>, vector<4x128xf32>, vector<4x128xf32>, vector<4x128xf32>, vector<4x128xf32>, vector<4x128xf32> -> vector<32x128xf32>
    %c5 = arith.constant 5 : index
    %c0_206 = arith.constant 0 : index
    %c0_207 = arith.constant 0 : index
    %121 = vector.load %arg1[%c5, %c0_206, %c0_207] : memref<9x128x128xf32, #tpu.memory_space<vmem>>, vector<1x128x128xf32>
    %122 = vector.shape_cast %121 : vector<1x128x128xf32> to vector<128x128xf32>
    %cst_208 = arith.constant dense<0.000000e+00> : vector<32x128xf32>
    %123 = tpu.matmul %120, %122, %cst_208 {dimension_numbers = #tpu.dot_dimension_numbers<[1], [0], [0], [1], [0, 0, 1, 1], [], []>} : vector<32x128xf32>, vector<128x128xf32>, vector<32x128xf32> -> vector<32x128xf32>
    %124 = arith.addf %103, %123 : vector<32x128xf32>
    %c0_209 = arith.constant 0 : index
    %c2_210 = arith.constant 2 : index
    %c0_211 = arith.constant 0 : index
    %c0_212 = arith.constant 0 : index
    %125 = vector.load %arg0[%c0_209, %c2_210, %c0_211, %c0_212] : memref<2x6x6x128xf32, #tpu.memory_space<vmem>>, vector<1x1x4x128xf32>
    %126 = vector.shape_cast %125 : vector<1x1x4x128xf32> to vector<4x128xf32>
    %c0_213 = arith.constant 0 : index
    %c3_214 = arith.constant 3 : index
    %c0_215 = arith.constant 0 : index
    %c0_216 = arith.constant 0 : index
    %127 = vector.load %arg0[%c0_213, %c3_214, %c0_215, %c0_216] : memref<2x6x6x128xf32, #tpu.memory_space<vmem>>, vector<1x1x4x128xf32>
    %128 = vector.shape_cast %127 : vector<1x1x4x128xf32> to vector<4x128xf32>
    %c0_217 = arith.constant 0 : index
    %c4_218 = arith.constant 4 : index
    %c0_219 = arith.constant 0 : index
    %c0_220 = arith.constant 0 : index
    %129 = vector.load %arg0[%c0_217, %c4_218, %c0_219, %c0_220] : memref<2x6x6x128xf32, #tpu.memory_space<vmem>>, vector<1x1x4x128xf32>
    %130 = vector.shape_cast %129 : vector<1x1x4x128xf32> to vector<4x128xf32>
    %c0_221 = arith.constant 0 : index
    %c5_222 = arith.constant 5 : index
    %c0_223 = arith.constant 0 : index
    %c0_224 = arith.constant 0 : index
    %131 = vector.load %arg0[%c0_221, %c5_222, %c0_223, %c0_224] : memref<2x6x6x128xf32, #tpu.memory_space<vmem>>, vector<1x1x4x128xf32>
    %132 = vector.shape_cast %131 : vector<1x1x4x128xf32> to vector<4x128xf32>
    %c1_225 = arith.constant 1 : index
    %c2_226 = arith.constant 2 : index
    %c0_227 = arith.constant 0 : index
    %c0_228 = arith.constant 0 : index
    %133 = vector.load %arg0[%c1_225, %c2_226, %c0_227, %c0_228] : memref<2x6x6x128xf32, #tpu.memory_space<vmem>>, vector<1x1x4x128xf32>
    %134 = vector.shape_cast %133 : vector<1x1x4x128xf32> to vector<4x128xf32>
    %c1_229 = arith.constant 1 : index
    %c3_230 = arith.constant 3 : index
    %c0_231 = arith.constant 0 : index
    %c0_232 = arith.constant 0 : index
    %135 = vector.load %arg0[%c1_229, %c3_230, %c0_231, %c0_232] : memref<2x6x6x128xf32, #tpu.memory_space<vmem>>, vector<1x1x4x128xf32>
    %136 = vector.shape_cast %135 : vector<1x1x4x128xf32> to vector<4x128xf32>
    %c1_233 = arith.constant 1 : index
    %c4_234 = arith.constant 4 : index
    %c0_235 = arith.constant 0 : index
    %c0_236 = arith.constant 0 : index
    %137 = vector.load %arg0[%c1_233, %c4_234, %c0_235, %c0_236] : memref<2x6x6x128xf32, #tpu.memory_space<vmem>>, vector<1x1x4x128xf32>
    %138 = vector.shape_cast %137 : vector<1x1x4x128xf32> to vector<4x128xf32>
    %c1_237 = arith.constant 1 : index
    %c5_238 = arith.constant 5 : index
    %c0_239 = arith.constant 0 : index
    %c0_240 = arith.constant 0 : index
    %139 = vector.load %arg0[%c1_237, %c5_238, %c0_239, %c0_240] : memref<2x6x6x128xf32, #tpu.memory_space<vmem>>, vector<1x1x4x128xf32>
    %140 = vector.shape_cast %139 : vector<1x1x4x128xf32> to vector<4x128xf32>
    %141 = tpu.concatenate %126, %128, %130, %132, %134, %136, %138, %140 in 0 : vector<4x128xf32>, vector<4x128xf32>, vector<4x128xf32>, vector<4x128xf32>, vector<4x128xf32>, vector<4x128xf32>, vector<4x128xf32>, vector<4x128xf32> -> vector<32x128xf32>
    %c6 = arith.constant 6 : index
    %c0_241 = arith.constant 0 : index
    %c0_242 = arith.constant 0 : index
    %142 = vector.load %arg1[%c6, %c0_241, %c0_242] : memref<9x128x128xf32, #tpu.memory_space<vmem>>, vector<1x128x128xf32>
    %143 = vector.shape_cast %142 : vector<1x128x128xf32> to vector<128x128xf32>
    %cst_243 = arith.constant dense<0.000000e+00> : vector<32x128xf32>
    %144 = tpu.matmul %141, %143, %cst_243 {dimension_numbers = #tpu.dot_dimension_numbers<[1], [0], [0], [1], [0, 0, 1, 1], [], []>} : vector<32x128xf32>, vector<128x128xf32>, vector<32x128xf32> -> vector<32x128xf32>
    %145 = arith.addf %124, %144 : vector<32x128xf32>
    %c0_244 = arith.constant 0 : index
    %c2_245 = arith.constant 2 : index
    %c1_246 = arith.constant 1 : index
    %c0_247 = arith.constant 0 : index
    %146 = vector.load %arg0[%c0_244, %c2_245, %c1_246, %c0_247] : memref<2x6x6x128xf32, #tpu.memory_space<vmem>>, vector<1x1x4x128xf32>
    %147 = vector.shape_cast %146 : vector<1x1x4x128xf32> to vector<4x128xf32>
    %c0_248 = arith.constant 0 : index
    %c3_249 = arith.constant 3 : index
    %c1_250 = arith.constant 1 : index
    %c0_251 = arith.constant 0 : index
    %148 = vector.load %arg0[%c0_248, %c3_249, %c1_250, %c0_251] : memref<2x6x6x128xf32, #tpu.memory_space<vmem>>, vector<1x1x4x128xf32>
    %149 = vector.shape_cast %148 : vector<1x1x4x128xf32> to vector<4x128xf32>
    %c0_252 = arith.constant 0 : index
    %c4_253 = arith.constant 4 : index
    %c1_254 = arith.constant 1 : index
    %c0_255 = arith.constant 0 : index
    %150 = vector.load %arg0[%c0_252, %c4_253, %c1_254, %c0_255] : memref<2x6x6x128xf32, #tpu.memory_space<vmem>>, vector<1x1x4x128xf32>
    %151 = vector.shape_cast %150 : vector<1x1x4x128xf32> to vector<4x128xf32>
    %c0_256 = arith.constant 0 : index
    %c5_257 = arith.constant 5 : index
    %c1_258 = arith.constant 1 : index
    %c0_259 = arith.constant 0 : index
    %152 = vector.load %arg0[%c0_256, %c5_257, %c1_258, %c0_259] : memref<2x6x6x128xf32, #tpu.memory_space<vmem>>, vector<1x1x4x128xf32>
    %153 = vector.shape_cast %152 : vector<1x1x4x128xf32> to vector<4x128xf32>
    %c1_260 = arith.constant 1 : index
    %c2_261 = arith.constant 2 : index
    %c1_262 = arith.constant 1 : index
    %c0_263 = arith.constant 0 : index
    %154 = vector.load %arg0[%c1_260, %c2_261, %c1_262, %c0_263] : memref<2x6x6x128xf32, #tpu.memory_space<vmem>>, vector<1x1x4x128xf32>
    %155 = vector.shape_cast %154 : vector<1x1x4x128xf32> to vector<4x128xf32>
    %c1_264 = arith.constant 1 : index
    %c3_265 = arith.constant 3 : index
    %c1_266 = arith.constant 1 : index
    %c0_267 = arith.constant 0 : index
    %156 = vector.load %arg0[%c1_264, %c3_265, %c1_266, %c0_267] : memref<2x6x6x128xf32, #tpu.memory_space<vmem>>, vector<1x1x4x128xf32>
    %157 = vector.shape_cast %156 : vector<1x1x4x128xf32> to vector<4x128xf32>
    %c1_268 = arith.constant 1 : index
    %c4_269 = arith.constant 4 : index
    %c1_270 = arith.constant 1 : index
    %c0_271 = arith.constant 0 : index
    %158 = vector.load %arg0[%c1_268, %c4_269, %c1_270, %c0_271] : memref<2x6x6x128xf32, #tpu.memory_space<vmem>>, vector<1x1x4x128xf32>
    %159 = vector.shape_cast %158 : vector<1x1x4x128xf32> to vector<4x128xf32>
    %c1_272 = arith.constant 1 : index
    %c5_273 = arith.constant 5 : index
    %c1_274 = arith.constant 1 : index
    %c0_275 = arith.constant 0 : index
    %160 = vector.load %arg0[%c1_272, %c5_273, %c1_274, %c0_275] : memref<2x6x6x128xf32, #tpu.memory_space<vmem>>, vector<1x1x4x128xf32>
    %161 = vector.shape_cast %160 : vector<1x1x4x128xf32> to vector<4x128xf32>
    %162 = tpu.concatenate %147, %149, %151, %153, %155, %157, %159, %161 in 0 : vector<4x128xf32>, vector<4x128xf32>, vector<4x128xf32>, vector<4x128xf32>, vector<4x128xf32>, vector<4x128xf32>, vector<4x128xf32>, vector<4x128xf32> -> vector<32x128xf32>
    %c7 = arith.constant 7 : index
    %c0_276 = arith.constant 0 : index
    %c0_277 = arith.constant 0 : index
    %163 = vector.load %arg1[%c7, %c0_276, %c0_277] : memref<9x128x128xf32, #tpu.memory_space<vmem>>, vector<1x128x128xf32>
    %164 = vector.shape_cast %163 : vector<1x128x128xf32> to vector<128x128xf32>
    %cst_278 = arith.constant dense<0.000000e+00> : vector<32x128xf32>
    %165 = tpu.matmul %162, %164, %cst_278 {dimension_numbers = #tpu.dot_dimension_numbers<[1], [0], [0], [1], [0, 0, 1, 1], [], []>} : vector<32x128xf32>, vector<128x128xf32>, vector<32x128xf32> -> vector<32x128xf32>
    %166 = arith.addf %145, %165 : vector<32x128xf32>
    %c0_279 = arith.constant 0 : index
    %c2_280 = arith.constant 2 : index
    %c2_281 = arith.constant 2 : index
    %c0_282 = arith.constant 0 : index
    %167 = vector.load %arg0[%c0_279, %c2_280, %c2_281, %c0_282] : memref<2x6x6x128xf32, #tpu.memory_space<vmem>>, vector<1x1x4x128xf32>
    %168 = vector.shape_cast %167 : vector<1x1x4x128xf32> to vector<4x128xf32>
    %c0_283 = arith.constant 0 : index
    %c3_284 = arith.constant 3 : index
    %c2_285 = arith.constant 2 : index
    %c0_286 = arith.constant 0 : index
    %169 = vector.load %arg0[%c0_283, %c3_284, %c2_285, %c0_286] : memref<2x6x6x128xf32, #tpu.memory_space<vmem>>, vector<1x1x4x128xf32>
    %170 = vector.shape_cast %169 : vector<1x1x4x128xf32> to vector<4x128xf32>
    %c0_287 = arith.constant 0 : index
    %c4_288 = arith.constant 4 : index
    %c2_289 = arith.constant 2 : index
    %c0_290 = arith.constant 0 : index
    %171 = vector.load %arg0[%c0_287, %c4_288, %c2_289, %c0_290] : memref<2x6x6x128xf32, #tpu.memory_space<vmem>>, vector<1x1x4x128xf32>
    %172 = vector.shape_cast %171 : vector<1x1x4x128xf32> to vector<4x128xf32>
    %c0_291 = arith.constant 0 : index
    %c5_292 = arith.constant 5 : index
    %c2_293 = arith.constant 2 : index
    %c0_294 = arith.constant 0 : index
    %173 = vector.load %arg0[%c0_291, %c5_292, %c2_293, %c0_294] : memref<2x6x6x128xf32, #tpu.memory_space<vmem>>, vector<1x1x4x128xf32>
    %174 = vector.shape_cast %173 : vector<1x1x4x128xf32> to vector<4x128xf32>
    %c1_295 = arith.constant 1 : index
    %c2_296 = arith.constant 2 : index
    %c2_297 = arith.constant 2 : index
    %c0_298 = arith.constant 0 : index
    %175 = vector.load %arg0[%c1_295, %c2_296, %c2_297, %c0_298] : memref<2x6x6x128xf32, #tpu.memory_space<vmem>>, vector<1x1x4x128xf32>
    %176 = vector.shape_cast %175 : vector<1x1x4x128xf32> to vector<4x128xf32>
    %c1_299 = arith.constant 1 : index
    %c3_300 = arith.constant 3 : index
    %c2_301 = arith.constant 2 : index
    %c0_302 = arith.constant 0 : index
    %177 = vector.load %arg0[%c1_299, %c3_300, %c2_301, %c0_302] : memref<2x6x6x128xf32, #tpu.memory_space<vmem>>, vector<1x1x4x128xf32>
    %178 = vector.shape_cast %177 : vector<1x1x4x128xf32> to vector<4x128xf32>
    %c1_303 = arith.constant 1 : index
    %c4_304 = arith.constant 4 : index
    %c2_305 = arith.constant 2 : index
    %c0_306 = arith.constant 0 : index
    %179 = vector.load %arg0[%c1_303, %c4_304, %c2_305, %c0_306] : memref<2x6x6x128xf32, #tpu.memory_space<vmem>>, vector<1x1x4x128xf32>
    %180 = vector.shape_cast %179 : vector<1x1x4x128xf32> to vector<4x128xf32>
    %c1_307 = arith.constant 1 : index
    %c5_308 = arith.constant 5 : index
    %c2_309 = arith.constant 2 : index
    %c0_310 = arith.constant 0 : index
    %181 = vector.load %arg0[%c1_307, %c5_308, %c2_309, %c0_310] : memref<2x6x6x128xf32, #tpu.memory_space<vmem>>, vector<1x1x4x128xf32>
    %182 = vector.shape_cast %181 : vector<1x1x4x128xf32> to vector<4x128xf32>
    %183 = tpu.concatenate %168, %170, %172, %174, %176, %178, %180, %182 in 0 : vector<4x128xf32>, vector<4x128xf32>, vector<4x128xf32>, vector<4x128xf32>, vector<4x128xf32>, vector<4x128xf32>, vector<4x128xf32>, vector<4x128xf32> -> vector<32x128xf32>
    %c8 = arith.constant 8 : index
    %c0_311 = arith.constant 0 : index
    %c0_312 = arith.constant 0 : index
    %184 = vector.load %arg1[%c8, %c0_311, %c0_312] : memref<9x128x128xf32, #tpu.memory_space<vmem>>, vector<1x128x128xf32>
    %185 = vector.shape_cast %184 : vector<1x128x128xf32> to vector<128x128xf32>
    %cst_313 = arith.constant dense<0.000000e+00> : vector<32x128xf32>
    %186 = tpu.matmul %183, %185, %cst_313 {dimension_numbers = #tpu.dot_dimension_numbers<[1], [0], [0], [1], [0, 0, 1, 1], [], []>} : vector<32x128xf32>, vector<128x128xf32>, vector<32x128xf32> -> vector<32x128xf32>
    %187 = arith.addf %166, %186 : vector<32x128xf32>
    %cst_314 = arith.constant dense<0.000000e+00> : vector<128xf32>
    %188 = vector.multi_reduction <add>, %187, %cst_314 [0] : vector<32x128xf32> to vector<128xf32>
    %189 = vector.shape_cast %188 : vector<128xf32> to vector<1x128xf32>
    %cst_315 = arith.constant 3.200000e+01 : f32
    %190 = vector.broadcast %cst_315 : f32 to vector<1x128xf32>
    %191 = arith.divf %189, %190 : vector<1x128xf32>
    %192 = arith.mulf %187, %187 : vector<32x128xf32>
    %cst_316 = arith.constant dense<0.000000e+00> : vector<128xf32>
    %193 = vector.multi_reduction <add>, %192, %cst_316 [0] : vector<32x128xf32> to vector<128xf32>
    %194 = vector.shape_cast %193 : vector<128xf32> to vector<1x128xf32>
    %cst_317 = arith.constant 3.200000e+01 : f32
    %195 = vector.broadcast %cst_317 : f32 to vector<1x128xf32>
    %196 = arith.divf %194, %195 : vector<1x128xf32>
    %197 = arith.mulf %191, %191 : vector<1x128xf32>
    %198 = arith.subf %196, %197 : vector<1x128xf32>
    %cst_318 = arith.constant 0.000000e+00 : f32
    %199 = vector.broadcast %cst_318 : f32 to vector<1x128xf32>
    %200 = arith.maximumf %198, %199 : vector<1x128xf32>
    %cst_319 = arith.constant 9.99999974E-6 : f32
    %201 = vector.broadcast %cst_319 : f32 to vector<1x128xf32>
    %202 = arith.addf %200, %201 : vector<1x128xf32>
    %203 = math.rsqrt %202 : vector<1x128xf32>
    %c0_320 = arith.constant 0 : index
    %c0_321 = arith.constant 0 : index
    %204 = vector.load %arg2[%c0_320, %c0_321] : memref<1x128xf32, #tpu.memory_space<vmem>>, vector<1x128xf32>
    %205 = arith.mulf %203, %204 : vector<1x128xf32>
    %c0_322 = arith.constant 0 : index
    %c0_323 = arith.constant 0 : index
    %206 = vector.load %arg3[%c0_322, %c0_323] : memref<1x128xf32, #tpu.memory_space<vmem>>, vector<1x128xf32>
    %207 = arith.mulf %191, %205 : vector<1x128xf32>
    %208 = arith.subf %206, %207 : vector<1x128xf32>
    %209 = vector.broadcast %205 : vector<1x128xf32> to vector<32x128xf32>
    %210 = arith.mulf %187, %209 : vector<32x128xf32>
    %211 = vector.broadcast %208 : vector<1x128xf32> to vector<32x128xf32>
    %212 = arith.addf %210, %211 : vector<32x128xf32>
    %cst_324 = arith.constant 0.000000e+00 : f32
    %213 = vector.broadcast %cst_324 : f32 to vector<32x128xf32>
    %214 = arith.maximumf %212, %213 : vector<32x128xf32>
    %c0_325 = arith.constant 0 : index
    %c0_326 = arith.constant 0 : index
    %215 = vector.load %arg4[%c0_325, %c0_326] : memref<32x128xf32, #tpu.memory_space<vmem>>, vector<32x128xf32>
    tpu.vector_store %arg4[%c0_325, %c0_326], %214 {strides = array<i32>} : memref<32x128xf32, #tpu.memory_space<vmem>>, vector<32x128xf32>,
    return
  }
}

module attributes {stable_mosaic.version = 11 : i64} {
  func.func @kernel(%arg0: memref<2x6x6x128xf32, #tpu.memory_space<vmem>>, %arg1: memref<9x128x128xf32, #tpu.memory_space<vmem>>, %arg2: memref<1x128xf32, #tpu.memory_space<vmem>>, %arg3: memref<1x128xf32, #tpu.memory_space<vmem>>, %arg4: memref<32x128xf32, #tpu.memory_space<vmem>>, %arg5: memref<32x128xf32, #tpu.memory_space<vmem>>) attributes {dimension_semantics = [], scalar_prefetch = 0 : i64, scratch_operands = 0 : i64, tpu.core_type = #tpu.core_type<tc>} {
    %c0 = arith.constant 0 : index
    %c0_0 = arith.constant 0 : index
    %c0_1 = arith.constant 0 : index
    %c0_2 = arith.constant 0 : index
    %0 = vector.load %arg0[%c0, %c0_0, %c0_1, %c0_2] : memref<2x6x6x128xf32, #tpu.memory_space<vmem>>, vector<1x1x4x128xf32>
    %1 = vector.shape_cast %0 : vector<1x1x4x128xf32> to vector<4x128xf32>
    %c0_3 = arith.constant 0 : index
    %c1 = arith.constant 1 : index
    %c0_4 = arith.constant 0 : index
    %c0_5 = arith.constant 0 : index
    %2 = vector.load %arg0[%c0_3, %c1, %c0_4, %c0_5] : memref<2x6x6x128xf32, #tpu.memory_space<vmem>>, vector<1x1x4x128xf32>
    %3 = vector.shape_cast %2 : vector<1x1x4x128xf32> to vector<4x128xf32>
    %c0_6 = arith.constant 0 : index
    %c2 = arith.constant 2 : index
    %c0_7 = arith.constant 0 : index
    %c0_8 = arith.constant 0 : index
    %4 = vector.load %arg0[%c0_6, %c2, %c0_7, %c0_8] : memref<2x6x6x128xf32, #tpu.memory_space<vmem>>, vector<1x1x4x128xf32>
    %5 = vector.shape_cast %4 : vector<1x1x4x128xf32> to vector<4x128xf32>
    %c0_9 = arith.constant 0 : index
    %c3 = arith.constant 3 : index
    %c0_10 = arith.constant 0 : index
    %c0_11 = arith.constant 0 : index
    %6 = vector.load %arg0[%c0_9, %c3, %c0_10, %c0_11] : memref<2x6x6x128xf32, #tpu.memory_space<vmem>>, vector<1x1x4x128xf32>
    %7 = vector.shape_cast %6 : vector<1x1x4x128xf32> to vector<4x128xf32>
    %c1_12 = arith.constant 1 : index
    %c0_13 = arith.constant 0 : index
    %c0_14 = arith.constant 0 : index
    %c0_15 = arith.constant 0 : index
    %8 = vector.load %arg0[%c1_12, %c0_13, %c0_14, %c0_15] : memref<2x6x6x128xf32, #tpu.memory_space<vmem>>, vector<1x1x4x128xf32>
    %9 = vector.shape_cast %8 : vector<1x1x4x128xf32> to vector<4x128xf32>
    %c1_16 = arith.constant 1 : index
    %c1_17 = arith.constant 1 : index
    %c0_18 = arith.constant 0 : index
    %c0_19 = arith.constant 0 : index
    %10 = vector.load %arg0[%c1_16, %c1_17, %c0_18, %c0_19] : memref<2x6x6x128xf32, #tpu.memory_space<vmem>>, vector<1x1x4x128xf32>
    %11 = vector.shape_cast %10 : vector<1x1x4x128xf32> to vector<4x128xf32>
    %c1_20 = arith.constant 1 : index
    %c2_21 = arith.constant 2 : index
    %c0_22 = arith.constant 0 : index
    %c0_23 = arith.constant 0 : index
    %12 = vector.load %arg0[%c1_20, %c2_21, %c0_22, %c0_23] : memref<2x6x6x128xf32, #tpu.memory_space<vmem>>, vector<1x1x4x128xf32>
    %13 = vector.shape_cast %12 : vector<1x1x4x128xf32> to vector<4x128xf32>
    %c1_24 = arith.constant 1 : index
    %c3_25 = arith.constant 3 : index
    %c0_26 = arith.constant 0 : index
    %c0_27 = arith.constant 0 : index
    %14 = vector.load %arg0[%c1_24, %c3_25, %c0_26, %c0_27] : memref<2x6x6x128xf32, #tpu.memory_space<vmem>>, vector<1x1x4x128xf32>
    %15 = vector.shape_cast %14 : vector<1x1x4x128xf32> to vector<4x128xf32>
    %16 = tpu.concatenate %1, %3, %5, %7, %9, %11, %13, %15 in 0 : vector<4x128xf32>, vector<4x128xf32>, vector<4x128xf32>, vector<4x128xf32>, vector<4x128xf32>, vector<4x128xf32>, vector<4x128xf32>, vector<4x128xf32> -> vector<32x128xf32>
    %c0_28 = arith.constant 0 : index
    %c0_29 = arith.constant 0 : index
    %c0_30 = arith.constant 0 : index
    %17 = vector.load %arg1[%c0_28, %c0_29, %c0_30] : memref<9x128x128xf32, #tpu.memory_space<vmem>>, vector<1x128x128xf32>
    %18 = vector.shape_cast %17 : vector<1x128x128xf32> to vector<128x128xf32>
    %cst = arith.constant dense<0.000000e+00> : vector<32x128xf32>
    %19 = tpu.matmul %16, %18, %cst {dimension_numbers = #tpu.dot_dimension_numbers<[1], [0], [0], [1], [0, 0, 1, 1], [], []>} : vector<32x128xf32>, vector<128x128xf32>, vector<32x128xf32> -> vector<32x128xf32>
    %c0_31 = arith.constant 0 : index
    %c0_32 = arith.constant 0 : index
    %c1_33 = arith.constant 1 : index
    %c0_34 = arith.constant 0 : index
    %20 = vector.load %arg0[%c0_31, %c0_32, %c1_33, %c0_34] : memref<2x6x6x128xf32, #tpu.memory_space<vmem>>, vector<1x1x4x128xf32>
    %21 = vector.shape_cast %20 : vector<1x1x4x128xf32> to vector<4x128xf32>
    %c0_35 = arith.constant 0 : index
    %c1_36 = arith.constant 1 : index
    %c1_37 = arith.constant 1 : index
    %c0_38 = arith.constant 0 : index
    %22 = vector.load %arg0[%c0_35, %c1_36, %c1_37, %c0_38] : memref<2x6x6x128xf32, #tpu.memory_space<vmem>>, vector<1x1x4x128xf32>
    %23 = vector.shape_cast %22 : vector<1x1x4x128xf32> to vector<4x128xf32>
    %c0_39 = arith.constant 0 : index
    %c2_40 = arith.constant 2 : index
    %c1_41 = arith.constant 1 : index
    %c0_42 = arith.constant 0 : index
    %24 = vector.load %arg0[%c0_39, %c2_40, %c1_41, %c0_42] : memref<2x6x6x128xf32, #tpu.memory_space<vmem>>, vector<1x1x4x128xf32>
    %25 = vector.shape_cast %24 : vector<1x1x4x128xf32> to vector<4x128xf32>
    %c0_43 = arith.constant 0 : index
    %c3_44 = arith.constant 3 : index
    %c1_45 = arith.constant 1 : index
    %c0_46 = arith.constant 0 : index
    %26 = vector.load %arg0[%c0_43, %c3_44, %c1_45, %c0_46] : memref<2x6x6x128xf32, #tpu.memory_space<vmem>>, vector<1x1x4x128xf32>
    %27 = vector.shape_cast %26 : vector<1x1x4x128xf32> to vector<4x128xf32>
    %c1_47 = arith.constant 1 : index
    %c0_48 = arith.constant 0 : index
    %c1_49 = arith.constant 1 : index
    %c0_50 = arith.constant 0 : index
    %28 = vector.load %arg0[%c1_47, %c0_48, %c1_49, %c0_50] : memref<2x6x6x128xf32, #tpu.memory_space<vmem>>, vector<1x1x4x128xf32>
    %29 = vector.shape_cast %28 : vector<1x1x4x128xf32> to vector<4x128xf32>
    %c1_51 = arith.constant 1 : index
    %c1_52 = arith.constant 1 : index
    %c1_53 = arith.constant 1 : index
    %c0_54 = arith.constant 0 : index
    %30 = vector.load %arg0[%c1_51, %c1_52, %c1_53, %c0_54] : memref<2x6x6x128xf32, #tpu.memory_space<vmem>>, vector<1x1x4x128xf32>
    %31 = vector.shape_cast %30 : vector<1x1x4x128xf32> to vector<4x128xf32>
    %c1_55 = arith.constant 1 : index
    %c2_56 = arith.constant 2 : index
    %c1_57 = arith.constant 1 : index
    %c0_58 = arith.constant 0 : index
    %32 = vector.load %arg0[%c1_55, %c2_56, %c1_57, %c0_58] : memref<2x6x6x128xf32, #tpu.memory_space<vmem>>, vector<1x1x4x128xf32>
    %33 = vector.shape_cast %32 : vector<1x1x4x128xf32> to vector<4x128xf32>
    %c1_59 = arith.constant 1 : index
    %c3_60 = arith.constant 3 : index
    %c1_61 = arith.constant 1 : index
    %c0_62 = arith.constant 0 : index
    %34 = vector.load %arg0[%c1_59, %c3_60, %c1_61, %c0_62] : memref<2x6x6x128xf32, #tpu.memory_space<vmem>>, vector<1x1x4x128xf32>
    %35 = vector.shape_cast %34 : vector<1x1x4x128xf32> to vector<4x128xf32>
    %36 = tpu.concatenate %21, %23, %25, %27, %29, %31, %33, %35 in 0 : vector<4x128xf32>, vector<4x128xf32>, vector<4x128xf32>, vector<4x128xf32>, vector<4x128xf32>, vector<4x128xf32>, vector<4x128xf32>, vector<4x128xf32> -> vector<32x128xf32>
    %c1_63 = arith.constant 1 : index
    %c0_64 = arith.constant 0 : index
    %c0_65 = arith.constant 0 : index
    %37 = vector.load %arg1[%c1_63, %c0_64, %c0_65] : memref<9x128x128xf32, #tpu.memory_space<vmem>>, vector<1x128x128xf32>
    %38 = vector.shape_cast %37 : vector<1x128x128xf32> to vector<128x128xf32>
    %cst_66 = arith.constant dense<0.000000e+00> : vector<32x128xf32>
    %39 = tpu.matmul %36, %38, %cst_66 {dimension_numbers = #tpu.dot_dimension_numbers<[1], [0], [0], [1], [0, 0, 1, 1], [], []>} : vector<32x128xf32>, vector<128x128xf32>, vector<32x128xf32> -> vector<32x128xf32>
    %40 = arith.addf %19, %39 : vector<32x128xf32>
    %c0_67 = arith.constant 0 : index
    %c0_68 = arith.constant 0 : index
    %c2_69 = arith.constant 2 : index
    %c0_70 = arith.constant 0 : index
    %41 = vector.load %arg0[%c0_67, %c0_68, %c2_69, %c0_70] : memref<2x6x6x128xf32, #tpu.memory_space<vmem>>, vector<1x1x4x128xf32>
    %42 = vector.shape_cast %41 : vector<1x1x4x128xf32> to vector<4x128xf32>
    %c0_71 = arith.constant 0 : index
    %c1_72 = arith.constant 1 : index
    %c2_73 = arith.constant 2 : index
    %c0_74 = arith.constant 0 : index
    %43 = vector.load %arg0[%c0_71, %c1_72, %c2_73, %c0_74] : memref<2x6x6x128xf32, #tpu.memory_space<vmem>>, vector<1x1x4x128xf32>
    %44 = vector.shape_cast %43 : vector<1x1x4x128xf32> to vector<4x128xf32>
    %c0_75 = arith.constant 0 : index
    %c2_76 = arith.constant 2 : index
    %c2_77 = arith.constant 2 : index
    %c0_78 = arith.constant 0 : index
    %45 = vector.load %arg0[%c0_75, %c2_76, %c2_77, %c0_78] : memref<2x6x6x128xf32, #tpu.memory_space<vmem>>, vector<1x1x4x128xf32>
    %46 = vector.shape_cast %45 : vector<1x1x4x128xf32> to vector<4x128xf32>
    %c0_79 = arith.constant 0 : index
    %c3_80 = arith.constant 3 : index
    %c2_81 = arith.constant 2 : index
    %c0_82 = arith.constant 0 : index
    %47 = vector.load %arg0[%c0_79, %c3_80, %c2_81, %c0_82] : memref<2x6x6x128xf32, #tpu.memory_space<vmem>>, vector<1x1x4x128xf32>
    %48 = vector.shape_cast %47 : vector<1x1x4x128xf32> to vector<4x128xf32>
    %c1_83 = arith.constant 1 : index
    %c0_84 = arith.constant 0 : index
    %c2_85 = arith.constant 2 : index
    %c0_86 = arith.constant 0 : index
    %49 = vector.load %arg0[%c1_83, %c0_84, %c2_85, %c0_86] : memref<2x6x6x128xf32, #tpu.memory_space<vmem>>, vector<1x1x4x128xf32>
    %50 = vector.shape_cast %49 : vector<1x1x4x128xf32> to vector<4x128xf32>
    %c1_87 = arith.constant 1 : index
    %c1_88 = arith.constant 1 : index
    %c2_89 = arith.constant 2 : index
    %c0_90 = arith.constant 0 : index
    %51 = vector.load %arg0[%c1_87, %c1_88, %c2_89, %c0_90] : memref<2x6x6x128xf32, #tpu.memory_space<vmem>>, vector<1x1x4x128xf32>
    %52 = vector.shape_cast %51 : vector<1x1x4x128xf32> to vector<4x128xf32>
    %c1_91 = arith.constant 1 : index
    %c2_92 = arith.constant 2 : index
    %c2_93 = arith.constant 2 : index
    %c0_94 = arith.constant 0 : index
    %53 = vector.load %arg0[%c1_91, %c2_92, %c2_93, %c0_94] : memref<2x6x6x128xf32, #tpu.memory_space<vmem>>, vector<1x1x4x128xf32>
    %54 = vector.shape_cast %53 : vector<1x1x4x128xf32> to vector<4x128xf32>
    %c1_95 = arith.constant 1 : index
    %c3_96 = arith.constant 3 : index
    %c2_97 = arith.constant 2 : index
    %c0_98 = arith.constant 0 : index
    %55 = vector.load %arg0[%c1_95, %c3_96, %c2_97, %c0_98] : memref<2x6x6x128xf32, #tpu.memory_space<vmem>>, vector<1x1x4x128xf32>
    %56 = vector.shape_cast %55 : vector<1x1x4x128xf32> to vector<4x128xf32>
    %57 = tpu.concatenate %42, %44, %46, %48, %50, %52, %54, %56 in 0 : vector<4x128xf32>, vector<4x128xf32>, vector<4x128xf32>, vector<4x128xf32>, vector<4x128xf32>, vector<4x128xf32>, vector<4x128xf32>, vector<4x128xf32> -> vector<32x128xf32>
    %c2_99 = arith.constant 2 : index
    %c0_100 = arith.constant 0 : index
    %c0_101 = arith.constant 0 : index
    %58 = vector.load %arg1[%c2_99, %c0_100, %c0_101] : memref<9x128x128xf32, #tpu.memory_space<vmem>>, vector<1x128x128xf32>
    %59 = vector.shape_cast %58 : vector<1x128x128xf32> to vector<128x128xf32>
    %cst_102 = arith.constant dense<0.000000e+00> : vector<32x128xf32>
    %60 = tpu.matmul %57, %59, %cst_102 {dimension_numbers = #tpu.dot_dimension_numbers<[1], [0], [0], [1], [0, 0, 1, 1], [], []>} : vector<32x128xf32>, vector<128x128xf32>, vector<32x128xf32> -> vector<32x128xf32>
    %61 = arith.addf %40, %60 : vector<32x128xf32>
    %c0_103 = arith.constant 0 : index
    %c1_104 = arith.constant 1 : index
    %c0_105 = arith.constant 0 : index
    %c0_106 = arith.constant 0 : index
    %62 = vector.load %arg0[%c0_103, %c1_104, %c0_105, %c0_106] : memref<2x6x6x128xf32, #tpu.memory_space<vmem>>, vector<1x1x4x128xf32>
    %63 = vector.shape_cast %62 : vector<1x1x4x128xf32> to vector<4x128xf32>
    %c0_107 = arith.constant 0 : index
    %c2_108 = arith.constant 2 : index
    %c0_109 = arith.constant 0 : index
    %c0_110 = arith.constant 0 : index
    %64 = vector.load %arg0[%c0_107, %c2_108, %c0_109, %c0_110] : memref<2x6x6x128xf32, #tpu.memory_space<vmem>>, vector<1x1x4x128xf32>
    %65 = vector.shape_cast %64 : vector<1x1x4x128xf32> to vector<4x128xf32>
    %c0_111 = arith.constant 0 : index
    %c3_112 = arith.constant 3 : index
    %c0_113 = arith.constant 0 : index
    %c0_114 = arith.constant 0 : index
    %66 = vector.load %arg0[%c0_111, %c3_112, %c0_113, %c0_114] : memref<2x6x6x128xf32, #tpu.memory_space<vmem>>, vector<1x1x4x128xf32>
    %67 = vector.shape_cast %66 : vector<1x1x4x128xf32> to vector<4x128xf32>
    %c0_115 = arith.constant 0 : index
    %c4 = arith.constant 4 : index
    %c0_116 = arith.constant 0 : index
    %c0_117 = arith.constant 0 : index
    %68 = vector.load %arg0[%c0_115, %c4, %c0_116, %c0_117] : memref<2x6x6x128xf32, #tpu.memory_space<vmem>>, vector<1x1x4x128xf32>
    %69 = vector.shape_cast %68 : vector<1x1x4x128xf32> to vector<4x128xf32>
    %c1_118 = arith.constant 1 : index
    %c1_119 = arith.constant 1 : index
    %c0_120 = arith.constant 0 : index
    %c0_121 = arith.constant 0 : index
    %70 = vector.load %arg0[%c1_118, %c1_119, %c0_120, %c0_121] : memref<2x6x6x128xf32, #tpu.memory_space<vmem>>, vector<1x1x4x128xf32>
    %71 = vector.shape_cast %70 : vector<1x1x4x128xf32> to vector<4x128xf32>
    %c1_122 = arith.constant 1 : index
    %c2_123 = arith.constant 2 : index
    %c0_124 = arith.constant 0 : index
    %c0_125 = arith.constant 0 : index
    %72 = vector.load %arg0[%c1_122, %c2_123, %c0_124, %c0_125] : memref<2x6x6x128xf32, #tpu.memory_space<vmem>>, vector<1x1x4x128xf32>
    %73 = vector.shape_cast %72 : vector<1x1x4x128xf32> to vector<4x128xf32>
    %c1_126 = arith.constant 1 : index
    %c3_127 = arith.constant 3 : index
    %c0_128 = arith.constant 0 : index
    %c0_129 = arith.constant 0 : index
    %74 = vector.load %arg0[%c1_126, %c3_127, %c0_128, %c0_129] : memref<2x6x6x128xf32, #tpu.memory_space<vmem>>, vector<1x1x4x128xf32>
    %75 = vector.shape_cast %74 : vector<1x1x4x128xf32> to vector<4x128xf32>
    %c1_130 = arith.constant 1 : index
    %c4_131 = arith.constant 4 : index
    %c0_132 = arith.constant 0 : index
    %c0_133 = arith.constant 0 : index
    %76 = vector.load %arg0[%c1_130, %c4_131, %c0_132, %c0_133] : memref<2x6x6x128xf32, #tpu.memory_space<vmem>>, vector<1x1x4x128xf32>
    %77 = vector.shape_cast %76 : vector<1x1x4x128xf32> to vector<4x128xf32>
    %78 = tpu.concatenate %63, %65, %67, %69, %71, %73, %75, %77 in 0 : vector<4x128xf32>, vector<4x128xf32>, vector<4x128xf32>, vector<4x128xf32>, vector<4x128xf32>, vector<4x128xf32>, vector<4x128xf32>, vector<4x128xf32> -> vector<32x128xf32>
    %c3_134 = arith.constant 3 : index
    %c0_135 = arith.constant 0 : index
    %c0_136 = arith.constant 0 : index
    %79 = vector.load %arg1[%c3_134, %c0_135, %c0_136] : memref<9x128x128xf32, #tpu.memory_space<vmem>>, vector<1x128x128xf32>
    %80 = vector.shape_cast %79 : vector<1x128x128xf32> to vector<128x128xf32>
    %cst_137 = arith.constant dense<0.000000e+00> : vector<32x128xf32>
    %81 = tpu.matmul %78, %80, %cst_137 {dimension_numbers = #tpu.dot_dimension_numbers<[1], [0], [0], [1], [0, 0, 1, 1], [], []>} : vector<32x128xf32>, vector<128x128xf32>, vector<32x128xf32> -> vector<32x128xf32>
    %82 = arith.addf %61, %81 : vector<32x128xf32>
    %c0_138 = arith.constant 0 : index
    %c1_139 = arith.constant 1 : index
    %c1_140 = arith.constant 1 : index
    %c0_141 = arith.constant 0 : index
    %83 = vector.load %arg0[%c0_138, %c1_139, %c1_140, %c0_141] : memref<2x6x6x128xf32, #tpu.memory_space<vmem>>, vector<1x1x4x128xf32>
    %84 = vector.shape_cast %83 : vector<1x1x4x128xf32> to vector<4x128xf32>
    %c0_142 = arith.constant 0 : index
    %c2_143 = arith.constant 2 : index
    %c1_144 = arith.constant 1 : index
    %c0_145 = arith.constant 0 : index
    %85 = vector.load %arg0[%c0_142, %c2_143, %c1_144, %c0_145] : memref<2x6x6x128xf32, #tpu.memory_space<vmem>>, vector<1x1x4x128xf32>
    %86 = vector.shape_cast %85 : vector<1x1x4x128xf32> to vector<4x128xf32>
    %c0_146 = arith.constant 0 : index
    %c3_147 = arith.constant 3 : index
    %c1_148 = arith.constant 1 : index
    %c0_149 = arith.constant 0 : index
    %87 = vector.load %arg0[%c0_146, %c3_147, %c1_148, %c0_149] : memref<2x6x6x128xf32, #tpu.memory_space<vmem>>, vector<1x1x4x128xf32>
    %88 = vector.shape_cast %87 : vector<1x1x4x128xf32> to vector<4x128xf32>
    %c0_150 = arith.constant 0 : index
    %c4_151 = arith.constant 4 : index
    %c1_152 = arith.constant 1 : index
    %c0_153 = arith.constant 0 : index
    %89 = vector.load %arg0[%c0_150, %c4_151, %c1_152, %c0_153] : memref<2x6x6x128xf32, #tpu.memory_space<vmem>>, vector<1x1x4x128xf32>
    %90 = vector.shape_cast %89 : vector<1x1x4x128xf32> to vector<4x128xf32>
    %c1_154 = arith.constant 1 : index
    %c1_155 = arith.constant 1 : index
    %c1_156 = arith.constant 1 : index
    %c0_157 = arith.constant 0 : index
    %91 = vector.load %arg0[%c1_154, %c1_155, %c1_156, %c0_157] : memref<2x6x6x128xf32, #tpu.memory_space<vmem>>, vector<1x1x4x128xf32>
    %92 = vector.shape_cast %91 : vector<1x1x4x128xf32> to vector<4x128xf32>
    %c1_158 = arith.constant 1 : index
    %c2_159 = arith.constant 2 : index
    %c1_160 = arith.constant 1 : index
    %c0_161 = arith.constant 0 : index
    %93 = vector.load %arg0[%c1_158, %c2_159, %c1_160, %c0_161] : memref<2x6x6x128xf32, #tpu.memory_space<vmem>>, vector<1x1x4x128xf32>
    %94 = vector.shape_cast %93 : vector<1x1x4x128xf32> to vector<4x128xf32>
    %c1_162 = arith.constant 1 : index
    %c3_163 = arith.constant 3 : index
    %c1_164 = arith.constant 1 : index
    %c0_165 = arith.constant 0 : index
    %95 = vector.load %arg0[%c1_162, %c3_163, %c1_164, %c0_165] : memref<2x6x6x128xf32, #tpu.memory_space<vmem>>, vector<1x1x4x128xf32>
    %96 = vector.shape_cast %95 : vector<1x1x4x128xf32> to vector<4x128xf32>
    %c1_166 = arith.constant 1 : index
    %c4_167 = arith.constant 4 : index
    %c1_168 = arith.constant 1 : index
    %c0_169 = arith.constant 0 : index
    %97 = vector.load %arg0[%c1_166, %c4_167, %c1_168, %c0_169] : memref<2x6x6x128xf32, #tpu.memory_space<vmem>>, vector<1x1x4x128xf32>
    %98 = vector.shape_cast %97 : vector<1x1x4x128xf32> to vector<4x128xf32>
    %99 = tpu.concatenate %84, %86, %88, %90, %92, %94, %96, %98 in 0 : vector<4x128xf32>, vector<4x128xf32>, vector<4x128xf32>, vector<4x128xf32>, vector<4x128xf32>, vector<4x128xf32>, vector<4x128xf32>, vector<4x128xf32> -> vector<32x128xf32>
    %c4_170 = arith.constant 4 : index
    %c0_171 = arith.constant 0 : index
    %c0_172 = arith.constant 0 : index
    %100 = vector.load %arg1[%c4_170, %c0_171, %c0_172] : memref<9x128x128xf32, #tpu.memory_space<vmem>>, vector<1x128x128xf32>
    %101 = vector.shape_cast %100 : vector<1x128x128xf32> to vector<128x128xf32>
    %cst_173 = arith.constant dense<0.000000e+00> : vector<32x128xf32>
    %102 = tpu.matmul %99, %101, %cst_173 {dimension_numbers = #tpu.dot_dimension_numbers<[1], [0], [0], [1], [0, 0, 1, 1], [], []>} : vector<32x128xf32>, vector<128x128xf32>, vector<32x128xf32> -> vector<32x128xf32>
    %103 = arith.addf %82, %102 : vector<32x128xf32>
    %c0_174 = arith.constant 0 : index
    %c1_175 = arith.constant 1 : index
    %c2_176 = arith.constant 2 : index
    %c0_177 = arith.constant 0 : index
    %104 = vector.load %arg0[%c0_174, %c1_175, %c2_176, %c0_177] : memref<2x6x6x128xf32, #tpu.memory_space<vmem>>, vector<1x1x4x128xf32>
    %105 = vector.shape_cast %104 : vector<1x1x4x128xf32> to vector<4x128xf32>
    %c0_178 = arith.constant 0 : index
    %c2_179 = arith.constant 2 : index
    %c2_180 = arith.constant 2 : index
    %c0_181 = arith.constant 0 : index
    %106 = vector.load %arg0[%c0_178, %c2_179, %c2_180, %c0_181] : memref<2x6x6x128xf32, #tpu.memory_space<vmem>>, vector<1x1x4x128xf32>
    %107 = vector.shape_cast %106 : vector<1x1x4x128xf32> to vector<4x128xf32>
    %c0_182 = arith.constant 0 : index
    %c3_183 = arith.constant 3 : index
    %c2_184 = arith.constant 2 : index
    %c0_185 = arith.constant 0 : index
    %108 = vector.load %arg0[%c0_182, %c3_183, %c2_184, %c0_185] : memref<2x6x6x128xf32, #tpu.memory_space<vmem>>, vector<1x1x4x128xf32>
    %109 = vector.shape_cast %108 : vector<1x1x4x128xf32> to vector<4x128xf32>
    %c0_186 = arith.constant 0 : index
    %c4_187 = arith.constant 4 : index
    %c2_188 = arith.constant 2 : index
    %c0_189 = arith.constant 0 : index
    %110 = vector.load %arg0[%c0_186, %c4_187, %c2_188, %c0_189] : memref<2x6x6x128xf32, #tpu.memory_space<vmem>>, vector<1x1x4x128xf32>
    %111 = vector.shape_cast %110 : vector<1x1x4x128xf32> to vector<4x128xf32>
    %c1_190 = arith.constant 1 : index
    %c1_191 = arith.constant 1 : index
    %c2_192 = arith.constant 2 : index
    %c0_193 = arith.constant 0 : index
    %112 = vector.load %arg0[%c1_190, %c1_191, %c2_192, %c0_193] : memref<2x6x6x128xf32, #tpu.memory_space<vmem>>, vector<1x1x4x128xf32>
    %113 = vector.shape_cast %112 : vector<1x1x4x128xf32> to vector<4x128xf32>
    %c1_194 = arith.constant 1 : index
    %c2_195 = arith.constant 2 : index
    %c2_196 = arith.constant 2 : index
    %c0_197 = arith.constant 0 : index
    %114 = vector.load %arg0[%c1_194, %c2_195, %c2_196, %c0_197] : memref<2x6x6x128xf32, #tpu.memory_space<vmem>>, vector<1x1x4x128xf32>
    %115 = vector.shape_cast %114 : vector<1x1x4x128xf32> to vector<4x128xf32>
    %c1_198 = arith.constant 1 : index
    %c3_199 = arith.constant 3 : index
    %c2_200 = arith.constant 2 : index
    %c0_201 = arith.constant 0 : index
    %116 = vector.load %arg0[%c1_198, %c3_199, %c2_200, %c0_201] : memref<2x6x6x128xf32, #tpu.memory_space<vmem>>, vector<1x1x4x128xf32>
    %117 = vector.shape_cast %116 : vector<1x1x4x128xf32> to vector<4x128xf32>
    %c1_202 = arith.constant 1 : index
    %c4_203 = arith.constant 4 : index
    %c2_204 = arith.constant 2 : index
    %c0_205 = arith.constant 0 : index
    %118 = vector.load %arg0[%c1_202, %c4_203, %c2_204, %c0_205] : memref<2x6x6x128xf32, #tpu.memory_space<vmem>>, vector<1x1x4x128xf32>
    %119 = vector.shape_cast %118 : vector<1x1x4x128xf32> to vector<4x128xf32>
    %120 = tpu.concatenate %105, %107, %109, %111, %113, %115, %117, %119 in 0 : vector<4x128xf32>, vector<4x128xf32>, vector<4x128xf32>, vector<4x128xf32>, vector<4x128xf32>, vector<4x128xf32>, vector<4x128xf32>, vector<4x128xf32> -> vector<32x128xf32>
    %c5 = arith.constant 5 : index
    %c0_206 = arith.constant 0 : index
    %c0_207 = arith.constant 0 : index
    %121 = vector.load %arg1[%c5, %c0_206, %c0_207] : memref<9x128x128xf32, #tpu.memory_space<vmem>>, vector<1x128x128xf32>
    %122 = vector.shape_cast %121 : vector<1x128x128xf32> to vector<128x128xf32>
    %cst_208 = arith.constant dense<0.000000e+00> : vector<32x128xf32>
    %123 = tpu.matmul %120, %122, %cst_208 {dimension_numbers = #tpu.dot_dimension_numbers<[1], [0], [0], [1], [0, 0, 1, 1], [], []>} : vector<32x128xf32>, vector<128x128xf32>, vector<32x128xf32> -> vector<32x128xf32>
    %124 = arith.addf %103, %123 : vector<32x128xf32>
    %c0_209 = arith.constant 0 : index
    %c2_210 = arith.constant 2 : index
    %c0_211 = arith.constant 0 : index
    %c0_212 = arith.constant 0 : index
    %125 = vector.load %arg0[%c0_209, %c2_210, %c0_211, %c0_212] : memref<2x6x6x128xf32, #tpu.memory_space<vmem>>, vector<1x1x4x128xf32>
    %126 = vector.shape_cast %125 : vector<1x1x4x128xf32> to vector<4x128xf32>
    %c0_213 = arith.constant 0 : index
    %c3_214 = arith.constant 3 : index
    %c0_215 = arith.constant 0 : index
    %c0_216 = arith.constant 0 : index
    %127 = vector.load %arg0[%c0_213, %c3_214, %c0_215, %c0_216] : memref<2x6x6x128xf32, #tpu.memory_space<vmem>>, vector<1x1x4x128xf32>
    %128 = vector.shape_cast %127 : vector<1x1x4x128xf32> to vector<4x128xf32>
    %c0_217 = arith.constant 0 : index
    %c4_218 = arith.constant 4 : index
    %c0_219 = arith.constant 0 : index
    %c0_220 = arith.constant 0 : index
    %129 = vector.load %arg0[%c0_217, %c4_218, %c0_219, %c0_220] : memref<2x6x6x128xf32, #tpu.memory_space<vmem>>, vector<1x1x4x128xf32>
    %130 = vector.shape_cast %129 : vector<1x1x4x128xf32> to vector<4x128xf32>
    %c0_221 = arith.constant 0 : index
    %c5_222 = arith.constant 5 : index
    %c0_223 = arith.constant 0 : index
    %c0_224 = arith.constant 0 : index
    %131 = vector.load %arg0[%c0_221, %c5_222, %c0_223, %c0_224] : memref<2x6x6x128xf32, #tpu.memory_space<vmem>>, vector<1x1x4x128xf32>
    %132 = vector.shape_cast %131 : vector<1x1x4x128xf32> to vector<4x128xf32>
    %c1_225 = arith.constant 1 : index
    %c2_226 = arith.constant 2 : index
    %c0_227 = arith.constant 0 : index
    %c0_228 = arith.constant 0 : index
    %133 = vector.load %arg0[%c1_225, %c2_226, %c0_227, %c0_228] : memref<2x6x6x128xf32, #tpu.memory_space<vmem>>, vector<1x1x4x128xf32>
    %134 = vector.shape_cast %133 : vector<1x1x4x128xf32> to vector<4x128xf32>
    %c1_229 = arith.constant 1 : index
    %c3_230 = arith.constant 3 : index
    %c0_231 = arith.constant 0 : index
    %c0_232 = arith.constant 0 : index
    %135 = vector.load %arg0[%c1_229, %c3_230, %c0_231, %c0_232] : memref<2x6x6x128xf32, #tpu.memory_space<vmem>>, vector<1x1x4x128xf32>
    %136 = vector.shape_cast %135 : vector<1x1x4x128xf32> to vector<4x128xf32>
    %c1_233 = arith.constant 1 : index
    %c4_234 = arith.constant 4 : index
    %c0_235 = arith.constant 0 : index
    %c0_236 = arith.constant 0 : index
    %137 = vector.load %arg0[%c1_233, %c4_234, %c0_235, %c0_236] : memref<2x6x6x128xf32, #tpu.memory_space<vmem>>, vector<1x1x4x128xf32>
    %138 = vector.shape_cast %137 : vector<1x1x4x128xf32> to vector<4x128xf32>
    %c1_237 = arith.constant 1 : index
    %c5_238 = arith.constant 5 : index
    %c0_239 = arith.constant 0 : index
    %c0_240 = arith.constant 0 : index
    %139 = vector.load %arg0[%c1_237, %c5_238, %c0_239, %c0_240] : memref<2x6x6x128xf32, #tpu.memory_space<vmem>>, vector<1x1x4x128xf32>
    %140 = vector.shape_cast %139 : vector<1x1x4x128xf32> to vector<4x128xf32>
    %141 = tpu.concatenate %126, %128, %130, %132, %134, %136, %138, %140 in 0 : vector<4x128xf32>, vector<4x128xf32>, vector<4x128xf32>, vector<4x128xf32>, vector<4x128xf32>, vector<4x128xf32>, vector<4x128xf32>, vector<4x128xf32> -> vector<32x128xf32>
    %c6 = arith.constant 6 : index
    %c0_241 = arith.constant 0 : index
    %c0_242 = arith.constant 0 : index
    %142 = vector.load %arg1[%c6, %c0_241, %c0_242] : memref<9x128x128xf32, #tpu.memory_space<vmem>>, vector<1x128x128xf32>
    %143 = vector.shape_cast %142 : vector<1x128x128xf32> to vector<128x128xf32>
    %cst_243 = arith.constant dense<0.000000e+00> : vector<32x128xf32>
    %144 = tpu.matmul %141, %143, %cst_243 {dimension_numbers = #tpu.dot_dimension_numbers<[1], [0], [0], [1], [0, 0, 1, 1], [], []>} : vector<32x128xf32>, vector<128x128xf32>, vector<32x128xf32> -> vector<32x128xf32>
    %145 = arith.addf %124, %144 : vector<32x128xf32>
    %c0_244 = arith.constant 0 : index
    %c2_245 = arith.constant 2 : index
    %c1_246 = arith.constant 1 : index
    %c0_247 = arith.constant 0 : index
    %146 = vector.load %arg0[%c0_244, %c2_245, %c1_246, %c0_247] : memref<2x6x6x128xf32, #tpu.memory_space<vmem>>, vector<1x1x4x128xf32>
    %147 = vector.shape_cast %146 : vector<1x1x4x128xf32> to vector<4x128xf32>
    %c0_248 = arith.constant 0 : index
    %c3_249 = arith.constant 3 : index
    %c1_250 = arith.constant 1 : index
    %c0_251 = arith.constant 0 : index
    %148 = vector.load %arg0[%c0_248, %c3_249, %c1_250, %c0_251] : memref<2x6x6x128xf32, #tpu.memory_space<vmem>>, vector<1x1x4x128xf32>
    %149 = vector.shape_cast %148 : vector<1x1x4x128xf32> to vector<4x128xf32>
    %c0_252 = arith.constant 0 : index
    %c4_253 = arith.constant 4 : index
    %c1_254 = arith.constant 1 : index
    %c0_255 = arith.constant 0 : index
    %150 = vector.load %arg0[%c0_252, %c4_253, %c1_254, %c0_255] : memref<2x6x6x128xf32, #tpu.memory_space<vmem>>, vector<1x1x4x128xf32>
    %151 = vector.shape_cast %150 : vector<1x1x4x128xf32> to vector<4x128xf32>
    %c0_256 = arith.constant 0 : index
    %c5_257 = arith.constant 5 : index
    %c1_258 = arith.constant 1 : index
    %c0_259 = arith.constant 0 : index
    %152 = vector.load %arg0[%c0_256, %c5_257, %c1_258, %c0_259] : memref<2x6x6x128xf32, #tpu.memory_space<vmem>>, vector<1x1x4x128xf32>
    %153 = vector.shape_cast %152 : vector<1x1x4x128xf32> to vector<4x128xf32>
    %c1_260 = arith.constant 1 : index
    %c2_261 = arith.constant 2 : index
    %c1_262 = arith.constant 1 : index
    %c0_263 = arith.constant 0 : index
    %154 = vector.load %arg0[%c1_260, %c2_261, %c1_262, %c0_263] : memref<2x6x6x128xf32, #tpu.memory_space<vmem>>, vector<1x1x4x128xf32>
    %155 = vector.shape_cast %154 : vector<1x1x4x128xf32> to vector<4x128xf32>
    %c1_264 = arith.constant 1 : index
    %c3_265 = arith.constant 3 : index
    %c1_266 = arith.constant 1 : index
    %c0_267 = arith.constant 0 : index
    %156 = vector.load %arg0[%c1_264, %c3_265, %c1_266, %c0_267] : memref<2x6x6x128xf32, #tpu.memory_space<vmem>>, vector<1x1x4x128xf32>
    %157 = vector.shape_cast %156 : vector<1x1x4x128xf32> to vector<4x128xf32>
    %c1_268 = arith.constant 1 : index
    %c4_269 = arith.constant 4 : index
    %c1_270 = arith.constant 1 : index
    %c0_271 = arith.constant 0 : index
    %158 = vector.load %arg0[%c1_268, %c4_269, %c1_270, %c0_271] : memref<2x6x6x128xf32, #tpu.memory_space<vmem>>, vector<1x1x4x128xf32>
    %159 = vector.shape_cast %158 : vector<1x1x4x128xf32> to vector<4x128xf32>
    %c1_272 = arith.constant 1 : index
    %c5_273 = arith.constant 5 : index
    %c1_274 = arith.constant 1 : index
    %c0_275 = arith.constant 0 : index
    %160 = vector.load %arg0[%c1_272, %c5_273, %c1_274, %c0_275] : memref<2x6x6x128xf32, #tpu.memory_space<vmem>>, vector<1x1x4x128xf32>
    %161 = vector.shape_cast %160 : vector<1x1x4x128xf32> to vector<4x128xf32>
    %162 = tpu.concatenate %147, %149, %151, %153, %155, %157, %159, %161 in 0 : vector<4x128xf32>, vector<4x128xf32>, vector<4x128xf32>, vector<4x128xf32>, vector<4x128xf32>, vector<4x128xf32>, vector<4x128xf32>, vector<4x128xf32> -> vector<32x128xf32>
    %c7 = arith.constant 7 : index
    %c0_276 = arith.constant 0 : index
    %c0_277 = arith.constant 0 : index
    %163 = vector.load %arg1[%c7, %c0_276, %c0_277] : memref<9x128x128xf32, #tpu.memory_space<vmem>>, vector<1x128x128xf32>
    %164 = vector.shape_cast %163 : vector<1x128x128xf32> to vector<128x128xf32>
    %cst_278 = arith.constant dense<0.000000e+00> : vector<32x128xf32>
    %165 = tpu.matmul %162, %164, %cst_278 {dimension_numbers = #tpu.dot_dimension_numbers<[1], [0], [0], [1], [0, 0, 1, 1], [], []>} : vector<32x128xf32>, vector<128x128xf32>, vector<32x128xf32> -> vector<32x128xf32>
    %166 = arith.addf %145, %165 : vector<32x128xf32>
    %c0_279 = arith.constant 0 : index
    %c2_280 = arith.constant 2 : index
    %c2_281 = arith.constant 2 : index
    %c0_282 = arith.constant 0 : index
    %167 = vector.load %arg0[%c0_279, %c2_280, %c2_281, %c0_282] : memref<2x6x6x128xf32, #tpu.memory_space<vmem>>, vector<1x1x4x128xf32>
    %168 = vector.shape_cast %167 : vector<1x1x4x128xf32> to vector<4x128xf32>
    %c0_283 = arith.constant 0 : index
    %c3_284 = arith.constant 3 : index
    %c2_285 = arith.constant 2 : index
    %c0_286 = arith.constant 0 : index
    %169 = vector.load %arg0[%c0_283, %c3_284, %c2_285, %c0_286] : memref<2x6x6x128xf32, #tpu.memory_space<vmem>>, vector<1x1x4x128xf32>
    %170 = vector.shape_cast %169 : vector<1x1x4x128xf32> to vector<4x128xf32>
    %c0_287 = arith.constant 0 : index
    %c4_288 = arith.constant 4 : index
    %c2_289 = arith.constant 2 : index
    %c0_290 = arith.constant 0 : index
    %171 = vector.load %arg0[%c0_287, %c4_288, %c2_289, %c0_290] : memref<2x6x6x128xf32, #tpu.memory_space<vmem>>, vector<1x1x4x128xf32>
    %172 = vector.shape_cast %171 : vector<1x1x4x128xf32> to vector<4x128xf32>
    %c0_291 = arith.constant 0 : index
    %c5_292 = arith.constant 5 : index
    %c2_293 = arith.constant 2 : index
    %c0_294 = arith.constant 0 : index
    %173 = vector.load %arg0[%c0_291, %c5_292, %c2_293, %c0_294] : memref<2x6x6x128xf32, #tpu.memory_space<vmem>>, vector<1x1x4x128xf32>
    %174 = vector.shape_cast %173 : vector<1x1x4x128xf32> to vector<4x128xf32>
    %c1_295 = arith.constant 1 : index
    %c2_296 = arith.constant 2 : index
    %c2_297 = arith.constant 2 : index
    %c0_298 = arith.constant 0 : index
    %175 = vector.load %arg0[%c1_295, %c2_296, %c2_297, %c0_298] : memref<2x6x6x128xf32, #tpu.memory_space<vmem>>, vector<1x1x4x128xf32>
    %176 = vector.shape_cast %175 : vector<1x1x4x128xf32> to vector<4x128xf32>
    %c1_299 = arith.constant 1 : index
    %c3_300 = arith.constant 3 : index
    %c2_301 = arith.constant 2 : index
    %c0_302 = arith.constant 0 : index
    %177 = vector.load %arg0[%c1_299, %c3_300, %c2_301, %c0_302] : memref<2x6x6x128xf32, #tpu.memory_space<vmem>>, vector<1x1x4x128xf32>
    %178 = vector.shape_cast %177 : vector<1x1x4x128xf32> to vector<4x128xf32>
    %c1_303 = arith.constant 1 : index
    %c4_304 = arith.constant 4 : index
    %c2_305 = arith.constant 2 : index
    %c0_306 = arith.constant 0 : index
    %179 = vector.load %arg0[%c1_303, %c4_304, %c2_305, %c0_306] : memref<2x6x6x128xf32, #tpu.memory_space<vmem>>, vector<1x1x4x128xf32>
    %180 = vector.shape_cast %179 : vector<1x1x4x128xf32> to vector<4x128xf32>
    %c1_307 = arith.constant 1 : index
    %c5_308 = arith.constant 5 : index
    %c2_309 = arith.constant 2 : index
    %c0_310 = arith.constant 0 : index
    %181 = vector.load %arg0[%c1_307, %c5_308, %c2_309, %c0_310] : memref<2x6x6x128xf32, #tpu.memory_space<vmem>>, vector<1x1x4x128xf32>
    %182 = vector.shape_cast %181 : vector<1x1x4x128xf32> to vector<4x128xf32>
    %183 = tpu.concatenate %168, %170, %172, %174, %176, %178, %180, %182 in 0 : vector<4x128xf32>, vector<4x128xf32>, vector<4x128xf32>, vector<4x128xf32>, vector<4x128xf32>, vector<4x128xf32>, vector<4x128xf32>, vector<4x128xf32> -> vector<32x128xf32>
    %c8 = arith.constant 8 : index
    %c0_311 = arith.constant 0 : index
    %c0_312 = arith.constant 0 : index
    %184 = vector.load %arg1[%c8, %c0_311, %c0_312] : memref<9x128x128xf32, #tpu.memory_space<vmem>>, vector<1x128x128xf32>
    %185 = vector.shape_cast %184 : vector<1x128x128xf32> to vector<128x128xf32>
    %cst_313 = arith.constant dense<0.000000e+00> : vector<32x128xf32>
    %186 = tpu.matmul %183, %185, %cst_313 {dimension_numbers = #tpu.dot_dimension_numbers<[1], [0], [0], [1], [0, 0, 1, 1], [], []>} : vector<32x128xf32>, vector<128x128xf32>, vector<32x128xf32> -> vector<32x128xf32>
    %187 = arith.addf %166, %186 : vector<32x128xf32>
    %cst_314 = arith.constant dense<0.000000e+00> : vector<128xf32>
    %188 = vector.multi_reduction <add>, %187, %cst_314 [0] : vector<32x128xf32> to vector<128xf32>
    %189 = vector.shape_cast %188 : vector<128xf32> to vector<1x128xf32>
    %cst_315 = arith.constant 3.200000e+01 : f32
    %190 = vector.broadcast %cst_315 : f32 to vector<1x128xf32>
    %191 = arith.divf %189, %190 : vector<1x128xf32>
    %192 = arith.mulf %187, %187 : vector<32x128xf32>
    %cst_316 = arith.constant dense<0.000000e+00> : vector<128xf32>
    %193 = vector.multi_reduction <add>, %192, %cst_316 [0] : vector<32x128xf32> to vector<128xf32>
    %194 = vector.shape_cast %193 : vector<128xf32> to vector<1x128xf32>
    %cst_317 = arith.constant 3.200000e+01 : f32
    %195 = vector.broadcast %cst_317 : f32 to vector<1x128xf32>
    %196 = arith.divf %194, %195 : vector<1x128xf32>
    %197 = arith.mulf %191, %191 : vector<1x128xf32>
    %198 = arith.subf %196, %197 : vector<1x128xf32>
    %cst_318 = arith.constant 0.000000e+00 : f32
    %199 = vector.broadcast %cst_318 : f32 to vector<1x128xf32>
    %200 = arith.maximumf %198, %199 : vector<1x128xf32>
    %cst_319 = arith.constant 9.99999974E-6 : f32
    %201 = vector.broadcast %cst_319 : f32 to vector<1x128xf32>
    %202 = arith.addf %200, %201 : vector<1x128xf32>
    %203 = math.rsqrt %202 : vector<1x128xf32>
    %c0_320 = arith.constant 0 : index
    %c0_321 = arith.constant 0 : index
    %204 = vector.load %arg2[%c0_320, %c0_321] : memref<1x128xf32, #tpu.memory_space<vmem>>, vector<1x128xf32>
    %205 = arith.mulf %203, %204 : vector<1x128xf32>
    %c0_322 = arith.constant 0 : index
    %c0_323 = arith.constant 0 : index
    %206 = vector.load %arg3[%c0_322, %c0_323] : memref<1x128xf32, #tpu.memory_space<vmem>>, vector<1x128xf32>
    %207 = arith.mulf %191, %205 : vector<1x128xf32>
    %208 = arith.subf %206, %207 : vector<1x128xf32>
    %209 = vector.broadcast %205 : vector<1x128xf32> to vector<32x128xf32>
    %210 = arith.mulf %187, %209 : vector<32x128xf32>
    %211 = vector.broadcast %208 : vector<1x128xf32> to vector<32x128xf32>
    %212 = arith.addf %210, %211 : vector<32x128xf32>
    %c0_324 = arith.constant 0 : index
    %c0_325 = arith.constant 0 : index
    %213 = vector.load %arg4[%c0_324, %c0_325] : memref<32x128xf32, #tpu.memory_space<vmem>>, vector<32x128xf32>
    %214 = arith.addf %212, %213 : vector<32x128xf32>
    %cst_326 = arith.constant 0.000000e+00 : f32
    %215 = vector.broadcast %cst_326 : f32 to vector<32x128xf32>
    %216 = arith.maximumf %214, %215 : vector<32x128xf32>
    %c0_327 = arith.constant 0 : index
    %c0_328 = arith.constant 0 : index
    %217 = vector.load %arg5[%c0_327, %c0_328] : memref<32x128xf32, #tpu.memory_space<vmem>>, vector<32x128xf32>
    tpu.vector_store %arg5[%c0_327, %c0_328], %216 {strides = array<i32>} : memref<32x128xf32, #tpu.memory_space<vmem>>, vector<32x128xf32>,
    return
  }
}

module attributes {stable_mosaic.version = 11 : i64} {
  func.func @kernel(%arg0: memref<2x3x3x128xf32, #tpu.memory_space<vmem>>, %arg1: memref<2x3x3x128xf32, #tpu.memory_space<vmem>>, %arg2: memref<2x3x3x128xf32, #tpu.memory_space<vmem>>, %arg3: memref<2x3x3x128xf32, #tpu.memory_space<vmem>>, %arg4: memref<9x128x128xf32, #tpu.memory_space<vmem>>, %arg5: memref<1x128xf32, #tpu.memory_space<vmem>>, %arg6: memref<1x128xf32, #tpu.memory_space<vmem>>, %arg7: memref<8x128xf32, #tpu.memory_space<vmem>>) attributes {dimension_semantics = [], scalar_prefetch = 0 : i64, scratch_operands = 0 : i64, tpu.core_type = #tpu.core_type<tc>} {
    %c0 = arith.constant 0 : index
    %c0_0 = arith.constant 0 : index
    %c0_1 = arith.constant 0 : index
    %c0_2 = arith.constant 0 : index
    %0 = vector.load %arg0[%c0, %c0_0, %c0_1, %c0_2] : memref<2x3x3x128xf32, #tpu.memory_space<vmem>>, vector<1x1x2x128xf32>
    %1 = vector.shape_cast %0 : vector<1x1x2x128xf32> to vector<2x128xf32>
    %c0_3 = arith.constant 0 : index
    %c1 = arith.constant 1 : index
    %c0_4 = arith.constant 0 : index
    %c0_5 = arith.constant 0 : index
    %2 = vector.load %arg0[%c0_3, %c1, %c0_4, %c0_5] : memref<2x3x3x128xf32, #tpu.memory_space<vmem>>, vector<1x1x2x128xf32>
    %3 = vector.shape_cast %2 : vector<1x1x2x128xf32> to vector<2x128xf32>
    %c1_6 = arith.constant 1 : index
    %c0_7 = arith.constant 0 : index
    %c0_8 = arith.constant 0 : index
    %c0_9 = arith.constant 0 : index
    %4 = vector.load %arg0[%c1_6, %c0_7, %c0_8, %c0_9] : memref<2x3x3x128xf32, #tpu.memory_space<vmem>>, vector<1x1x2x128xf32>
    %5 = vector.shape_cast %4 : vector<1x1x2x128xf32> to vector<2x128xf32>
    %c1_10 = arith.constant 1 : index
    %c1_11 = arith.constant 1 : index
    %c0_12 = arith.constant 0 : index
    %c0_13 = arith.constant 0 : index
    %6 = vector.load %arg0[%c1_10, %c1_11, %c0_12, %c0_13] : memref<2x3x3x128xf32, #tpu.memory_space<vmem>>, vector<1x1x2x128xf32>
    %7 = vector.shape_cast %6 : vector<1x1x2x128xf32> to vector<2x128xf32>
    %8 = tpu.concatenate %1, %3, %5, %7 in 0 : vector<2x128xf32>, vector<2x128xf32>, vector<2x128xf32>, vector<2x128xf32> -> vector<8x128xf32>
    %c0_14 = arith.constant 0 : index
    %c0_15 = arith.constant 0 : index
    %c0_16 = arith.constant 0 : index
    %9 = vector.load %arg4[%c0_14, %c0_15, %c0_16] : memref<9x128x128xf32, #tpu.memory_space<vmem>>, vector<1x128x128xf32>
    %10 = vector.shape_cast %9 : vector<1x128x128xf32> to vector<128x128xf32>
    %cst = arith.constant dense<0.000000e+00> : vector<8x128xf32>
    %11 = tpu.matmul %8, %10, %cst {dimension_numbers = #tpu.dot_dimension_numbers<[1], [0], [0], [1], [0, 0, 1, 1], [], []>} : vector<8x128xf32>, vector<128x128xf32>, vector<8x128xf32> -> vector<8x128xf32>
    %c0_17 = arith.constant 0 : index
    %c0_18 = arith.constant 0 : index
    %c0_19 = arith.constant 0 : index
    %c0_20 = arith.constant 0 : index
    %12 = vector.load %arg1[%c0_17, %c0_18, %c0_19, %c0_20] : memref<2x3x3x128xf32, #tpu.memory_space<vmem>>, vector<1x1x2x128xf32>
    %13 = vector.shape_cast %12 : vector<1x1x2x128xf32> to vector<2x128xf32>
    %c0_21 = arith.constant 0 : index
    %c1_22 = arith.constant 1 : index
    %c0_23 = arith.constant 0 : index
    %c0_24 = arith.constant 0 : index
    %14 = vector.load %arg1[%c0_21, %c1_22, %c0_23, %c0_24] : memref<2x3x3x128xf32, #tpu.memory_space<vmem>>, vector<1x1x2x128xf32>
    %15 = vector.shape_cast %14 : vector<1x1x2x128xf32> to vector<2x128xf32>
    %c1_25 = arith.constant 1 : index
    %c0_26 = arith.constant 0 : index
    %c0_27 = arith.constant 0 : index
    %c0_28 = arith.constant 0 : index
    %16 = vector.load %arg1[%c1_25, %c0_26, %c0_27, %c0_28] : memref<2x3x3x128xf32, #tpu.memory_space<vmem>>, vector<1x1x2x128xf32>
    %17 = vector.shape_cast %16 : vector<1x1x2x128xf32> to vector<2x128xf32>
    %c1_29 = arith.constant 1 : index
    %c1_30 = arith.constant 1 : index
    %c0_31 = arith.constant 0 : index
    %c0_32 = arith.constant 0 : index
    %18 = vector.load %arg1[%c1_29, %c1_30, %c0_31, %c0_32] : memref<2x3x3x128xf32, #tpu.memory_space<vmem>>, vector<1x1x2x128xf32>
    %19 = vector.shape_cast %18 : vector<1x1x2x128xf32> to vector<2x128xf32>
    %20 = tpu.concatenate %13, %15, %17, %19 in 0 : vector<2x128xf32>, vector<2x128xf32>, vector<2x128xf32>, vector<2x128xf32> -> vector<8x128xf32>
    %c1_33 = arith.constant 1 : index
    %c0_34 = arith.constant 0 : index
    %c0_35 = arith.constant 0 : index
    %21 = vector.load %arg4[%c1_33, %c0_34, %c0_35] : memref<9x128x128xf32, #tpu.memory_space<vmem>>, vector<1x128x128xf32>
    %22 = vector.shape_cast %21 : vector<1x128x128xf32> to vector<128x128xf32>
    %cst_36 = arith.constant dense<0.000000e+00> : vector<8x128xf32>
    %23 = tpu.matmul %20, %22, %cst_36 {dimension_numbers = #tpu.dot_dimension_numbers<[1], [0], [0], [1], [0, 0, 1, 1], [], []>} : vector<8x128xf32>, vector<128x128xf32>, vector<8x128xf32> -> vector<8x128xf32>
    %24 = arith.addf %11, %23 : vector<8x128xf32>
    %c0_37 = arith.constant 0 : index
    %c0_38 = arith.constant 0 : index
    %c1_39 = arith.constant 1 : index
    %c0_40 = arith.constant 0 : index
    %25 = vector.load %arg0[%c0_37, %c0_38, %c1_39, %c0_40] : memref<2x3x3x128xf32, #tpu.memory_space<vmem>>, vector<1x1x2x128xf32>
    %26 = vector.shape_cast %25 : vector<1x1x2x128xf32> to vector<2x128xf32>
    %c0_41 = arith.constant 0 : index
    %c1_42 = arith.constant 1 : index
    %c1_43 = arith.constant 1 : index
    %c0_44 = arith.constant 0 : index
    %27 = vector.load %arg0[%c0_41, %c1_42, %c1_43, %c0_44] : memref<2x3x3x128xf32, #tpu.memory_space<vmem>>, vector<1x1x2x128xf32>
    %28 = vector.shape_cast %27 : vector<1x1x2x128xf32> to vector<2x128xf32>
    %c1_45 = arith.constant 1 : index
    %c0_46 = arith.constant 0 : index
    %c1_47 = arith.constant 1 : index
    %c0_48 = arith.constant 0 : index
    %29 = vector.load %arg0[%c1_45, %c0_46, %c1_47, %c0_48] : memref<2x3x3x128xf32, #tpu.memory_space<vmem>>, vector<1x1x2x128xf32>
    %30 = vector.shape_cast %29 : vector<1x1x2x128xf32> to vector<2x128xf32>
    %c1_49 = arith.constant 1 : index
    %c1_50 = arith.constant 1 : index
    %c1_51 = arith.constant 1 : index
    %c0_52 = arith.constant 0 : index
    %31 = vector.load %arg0[%c1_49, %c1_50, %c1_51, %c0_52] : memref<2x3x3x128xf32, #tpu.memory_space<vmem>>, vector<1x1x2x128xf32>
    %32 = vector.shape_cast %31 : vector<1x1x2x128xf32> to vector<2x128xf32>
    %33 = tpu.concatenate %26, %28, %30, %32 in 0 : vector<2x128xf32>, vector<2x128xf32>, vector<2x128xf32>, vector<2x128xf32> -> vector<8x128xf32>
    %c2 = arith.constant 2 : index
    %c0_53 = arith.constant 0 : index
    %c0_54 = arith.constant 0 : index
    %34 = vector.load %arg4[%c2, %c0_53, %c0_54] : memref<9x128x128xf32, #tpu.memory_space<vmem>>, vector<1x128x128xf32>
    %35 = vector.shape_cast %34 : vector<1x128x128xf32> to vector<128x128xf32>
    %cst_55 = arith.constant dense<0.000000e+00> : vector<8x128xf32>
    %36 = tpu.matmul %33, %35, %cst_55 {dimension_numbers = #tpu.dot_dimension_numbers<[1], [0], [0], [1], [0, 0, 1, 1], [], []>} : vector<8x128xf32>, vector<128x128xf32>, vector<8x128xf32> -> vector<8x128xf32>
    %37 = arith.addf %24, %36 : vector<8x128xf32>
    %c0_56 = arith.constant 0 : index
    %c0_57 = arith.constant 0 : index
    %c0_58 = arith.constant 0 : index
    %c0_59 = arith.constant 0 : index
    %38 = vector.load %arg2[%c0_56, %c0_57, %c0_58, %c0_59] : memref<2x3x3x128xf32, #tpu.memory_space<vmem>>, vector<1x1x2x128xf32>
    %39 = vector.shape_cast %38 : vector<1x1x2x128xf32> to vector<2x128xf32>
    %c0_60 = arith.constant 0 : index
    %c1_61 = arith.constant 1 : index
    %c0_62 = arith.constant 0 : index
    %c0_63 = arith.constant 0 : index
    %40 = vector.load %arg2[%c0_60, %c1_61, %c0_62, %c0_63] : memref<2x3x3x128xf32, #tpu.memory_space<vmem>>, vector<1x1x2x128xf32>
    %41 = vector.shape_cast %40 : vector<1x1x2x128xf32> to vector<2x128xf32>
    %c1_64 = arith.constant 1 : index
    %c0_65 = arith.constant 0 : index
    %c0_66 = arith.constant 0 : index
    %c0_67 = arith.constant 0 : index
    %42 = vector.load %arg2[%c1_64, %c0_65, %c0_66, %c0_67] : memref<2x3x3x128xf32, #tpu.memory_space<vmem>>, vector<1x1x2x128xf32>
    %43 = vector.shape_cast %42 : vector<1x1x2x128xf32> to vector<2x128xf32>
    %c1_68 = arith.constant 1 : index
    %c1_69 = arith.constant 1 : index
    %c0_70 = arith.constant 0 : index
    %c0_71 = arith.constant 0 : index
    %44 = vector.load %arg2[%c1_68, %c1_69, %c0_70, %c0_71] : memref<2x3x3x128xf32, #tpu.memory_space<vmem>>, vector<1x1x2x128xf32>
    %45 = vector.shape_cast %44 : vector<1x1x2x128xf32> to vector<2x128xf32>
    %46 = tpu.concatenate %39, %41, %43, %45 in 0 : vector<2x128xf32>, vector<2x128xf32>, vector<2x128xf32>, vector<2x128xf32> -> vector<8x128xf32>
    %c3 = arith.constant 3 : index
    %c0_72 = arith.constant 0 : index
    %c0_73 = arith.constant 0 : index
    %47 = vector.load %arg4[%c3, %c0_72, %c0_73] : memref<9x128x128xf32, #tpu.memory_space<vmem>>, vector<1x128x128xf32>
    %48 = vector.shape_cast %47 : vector<1x128x128xf32> to vector<128x128xf32>
    %cst_74 = arith.constant dense<0.000000e+00> : vector<8x128xf32>
    %49 = tpu.matmul %46, %48, %cst_74 {dimension_numbers = #tpu.dot_dimension_numbers<[1], [0], [0], [1], [0, 0, 1, 1], [], []>} : vector<8x128xf32>, vector<128x128xf32>, vector<8x128xf32> -> vector<8x128xf32>
    %50 = arith.addf %37, %49 : vector<8x128xf32>
    %c0_75 = arith.constant 0 : index
    %c0_76 = arith.constant 0 : index
    %c0_77 = arith.constant 0 : index
    %c0_78 = arith.constant 0 : index
    %51 = vector.load %arg3[%c0_75, %c0_76, %c0_77, %c0_78] : memref<2x3x3x128xf32, #tpu.memory_space<vmem>>, vector<1x1x2x128xf32>
    %52 = vector.shape_cast %51 : vector<1x1x2x128xf32> to vector<2x128xf32>
    %c0_79 = arith.constant 0 : index
    %c1_80 = arith.constant 1 : index
    %c0_81 = arith.constant 0 : index
    %c0_82 = arith.constant 0 : index
    %53 = vector.load %arg3[%c0_79, %c1_80, %c0_81, %c0_82] : memref<2x3x3x128xf32, #tpu.memory_space<vmem>>, vector<1x1x2x128xf32>
    %54 = vector.shape_cast %53 : vector<1x1x2x128xf32> to vector<2x128xf32>
    %c1_83 = arith.constant 1 : index
    %c0_84 = arith.constant 0 : index
    %c0_85 = arith.constant 0 : index
    %c0_86 = arith.constant 0 : index
    %55 = vector.load %arg3[%c1_83, %c0_84, %c0_85, %c0_86] : memref<2x3x3x128xf32, #tpu.memory_space<vmem>>, vector<1x1x2x128xf32>
    %56 = vector.shape_cast %55 : vector<1x1x2x128xf32> to vector<2x128xf32>
    %c1_87 = arith.constant 1 : index
    %c1_88 = arith.constant 1 : index
    %c0_89 = arith.constant 0 : index
    %c0_90 = arith.constant 0 : index
    %57 = vector.load %arg3[%c1_87, %c1_88, %c0_89, %c0_90] : memref<2x3x3x128xf32, #tpu.memory_space<vmem>>, vector<1x1x2x128xf32>
    %58 = vector.shape_cast %57 : vector<1x1x2x128xf32> to vector<2x128xf32>
    %59 = tpu.concatenate %52, %54, %56, %58 in 0 : vector<2x128xf32>, vector<2x128xf32>, vector<2x128xf32>, vector<2x128xf32> -> vector<8x128xf32>
    %c4 = arith.constant 4 : index
    %c0_91 = arith.constant 0 : index
    %c0_92 = arith.constant 0 : index
    %60 = vector.load %arg4[%c4, %c0_91, %c0_92] : memref<9x128x128xf32, #tpu.memory_space<vmem>>, vector<1x128x128xf32>
    %61 = vector.shape_cast %60 : vector<1x128x128xf32> to vector<128x128xf32>
    %cst_93 = arith.constant dense<0.000000e+00> : vector<8x128xf32>
    %62 = tpu.matmul %59, %61, %cst_93 {dimension_numbers = #tpu.dot_dimension_numbers<[1], [0], [0], [1], [0, 0, 1, 1], [], []>} : vector<8x128xf32>, vector<128x128xf32>, vector<8x128xf32> -> vector<8x128xf32>
    %63 = arith.addf %50, %62 : vector<8x128xf32>
    %c0_94 = arith.constant 0 : index
    %c0_95 = arith.constant 0 : index
    %c1_96 = arith.constant 1 : index
    %c0_97 = arith.constant 0 : index
    %64 = vector.load %arg2[%c0_94, %c0_95, %c1_96, %c0_97] : memref<2x3x3x128xf32, #tpu.memory_space<vmem>>, vector<1x1x2x128xf32>
    %65 = vector.shape_cast %64 : vector<1x1x2x128xf32> to vector<2x128xf32>
    %c0_98 = arith.constant 0 : index
    %c1_99 = arith.constant 1 : index
    %c1_100 = arith.constant 1 : index
    %c0_101 = arith.constant 0 : index
    %66 = vector.load %arg2[%c0_98, %c1_99, %c1_100, %c0_101] : memref<2x3x3x128xf32, #tpu.memory_space<vmem>>, vector<1x1x2x128xf32>
    %67 = vector.shape_cast %66 : vector<1x1x2x128xf32> to vector<2x128xf32>
    %c1_102 = arith.constant 1 : index
    %c0_103 = arith.constant 0 : index
    %c1_104 = arith.constant 1 : index
    %c0_105 = arith.constant 0 : index
    %68 = vector.load %arg2[%c1_102, %c0_103, %c1_104, %c0_105] : memref<2x3x3x128xf32, #tpu.memory_space<vmem>>, vector<1x1x2x128xf32>
    %69 = vector.shape_cast %68 : vector<1x1x2x128xf32> to vector<2x128xf32>
    %c1_106 = arith.constant 1 : index
    %c1_107 = arith.constant 1 : index
    %c1_108 = arith.constant 1 : index
    %c0_109 = arith.constant 0 : index
    %70 = vector.load %arg2[%c1_106, %c1_107, %c1_108, %c0_109] : memref<2x3x3x128xf32, #tpu.memory_space<vmem>>, vector<1x1x2x128xf32>
    %71 = vector.shape_cast %70 : vector<1x1x2x128xf32> to vector<2x128xf32>
    %72 = tpu.concatenate %65, %67, %69, %71 in 0 : vector<2x128xf32>, vector<2x128xf32>, vector<2x128xf32>, vector<2x128xf32> -> vector<8x128xf32>
    %c5 = arith.constant 5 : index
    %c0_110 = arith.constant 0 : index
    %c0_111 = arith.constant 0 : index
    %73 = vector.load %arg4[%c5, %c0_110, %c0_111] : memref<9x128x128xf32, #tpu.memory_space<vmem>>, vector<1x128x128xf32>
    %74 = vector.shape_cast %73 : vector<1x128x128xf32> to vector<128x128xf32>
    %cst_112 = arith.constant dense<0.000000e+00> : vector<8x128xf32>
    %75 = tpu.matmul %72, %74, %cst_112 {dimension_numbers = #tpu.dot_dimension_numbers<[1], [0], [0], [1], [0, 0, 1, 1], [], []>} : vector<8x128xf32>, vector<128x128xf32>, vector<8x128xf32> -> vector<8x128xf32>
    %76 = arith.addf %63, %75 : vector<8x128xf32>
    %c0_113 = arith.constant 0 : index
    %c1_114 = arith.constant 1 : index
    %c0_115 = arith.constant 0 : index
    %c0_116 = arith.constant 0 : index
    %77 = vector.load %arg0[%c0_113, %c1_114, %c0_115, %c0_116] : memref<2x3x3x128xf32, #tpu.memory_space<vmem>>, vector<1x1x2x128xf32>
    %78 = vector.shape_cast %77 : vector<1x1x2x128xf32> to vector<2x128xf32>
    %c0_117 = arith.constant 0 : index
    %c2_118 = arith.constant 2 : index
    %c0_119 = arith.constant 0 : index
    %c0_120 = arith.constant 0 : index
    %79 = vector.load %arg0[%c0_117, %c2_118, %c0_119, %c0_120] : memref<2x3x3x128xf32, #tpu.memory_space<vmem>>, vector<1x1x2x128xf32>
    %80 = vector.shape_cast %79 : vector<1x1x2x128xf32> to vector<2x128xf32>
    %c1_121 = arith.constant 1 : index
    %c1_122 = arith.constant 1 : index
    %c0_123 = arith.constant 0 : index
    %c0_124 = arith.constant 0 : index
    %81 = vector.load %arg0[%c1_121, %c1_122, %c0_123, %c0_124] : memref<2x3x3x128xf32, #tpu.memory_space<vmem>>, vector<1x1x2x128xf32>
    %82 = vector.shape_cast %81 : vector<1x1x2x128xf32> to vector<2x128xf32>
    %c1_125 = arith.constant 1 : index
    %c2_126 = arith.constant 2 : index
    %c0_127 = arith.constant 0 : index
    %c0_128 = arith.constant 0 : index
    %83 = vector.load %arg0[%c1_125, %c2_126, %c0_127, %c0_128] : memref<2x3x3x128xf32, #tpu.memory_space<vmem>>, vector<1x1x2x128xf32>
    %84 = vector.shape_cast %83 : vector<1x1x2x128xf32> to vector<2x128xf32>
    %85 = tpu.concatenate %78, %80, %82, %84 in 0 : vector<2x128xf32>, vector<2x128xf32>, vector<2x128xf32>, vector<2x128xf32> -> vector<8x128xf32>
    %c6 = arith.constant 6 : index
    %c0_129 = arith.constant 0 : index
    %c0_130 = arith.constant 0 : index
    %86 = vector.load %arg4[%c6, %c0_129, %c0_130] : memref<9x128x128xf32, #tpu.memory_space<vmem>>, vector<1x128x128xf32>
    %87 = vector.shape_cast %86 : vector<1x128x128xf32> to vector<128x128xf32>
    %cst_131 = arith.constant dense<0.000000e+00> : vector<8x128xf32>
    %88 = tpu.matmul %85, %87, %cst_131 {dimension_numbers = #tpu.dot_dimension_numbers<[1], [0], [0], [1], [0, 0, 1, 1], [], []>} : vector<8x128xf32>, vector<128x128xf32>, vector<8x128xf32> -> vector<8x128xf32>
    %89 = arith.addf %76, %88 : vector<8x128xf32>
    %c0_132 = arith.constant 0 : index
    %c1_133 = arith.constant 1 : index
    %c0_134 = arith.constant 0 : index
    %c0_135 = arith.constant 0 : index
    %90 = vector.load %arg1[%c0_132, %c1_133, %c0_134, %c0_135] : memref<2x3x3x128xf32, #tpu.memory_space<vmem>>, vector<1x1x2x128xf32>
    %91 = vector.shape_cast %90 : vector<1x1x2x128xf32> to vector<2x128xf32>
    %c0_136 = arith.constant 0 : index
    %c2_137 = arith.constant 2 : index
    %c0_138 = arith.constant 0 : index
    %c0_139 = arith.constant 0 : index
    %92 = vector.load %arg1[%c0_136, %c2_137, %c0_138, %c0_139] : memref<2x3x3x128xf32, #tpu.memory_space<vmem>>, vector<1x1x2x128xf32>
    %93 = vector.shape_cast %92 : vector<1x1x2x128xf32> to vector<2x128xf32>
    %c1_140 = arith.constant 1 : index
    %c1_141 = arith.constant 1 : index
    %c0_142 = arith.constant 0 : index
    %c0_143 = arith.constant 0 : index
    %94 = vector.load %arg1[%c1_140, %c1_141, %c0_142, %c0_143] : memref<2x3x3x128xf32, #tpu.memory_space<vmem>>, vector<1x1x2x128xf32>
    %95 = vector.shape_cast %94 : vector<1x1x2x128xf32> to vector<2x128xf32>
    %c1_144 = arith.constant 1 : index
    %c2_145 = arith.constant 2 : index
    %c0_146 = arith.constant 0 : index
    %c0_147 = arith.constant 0 : index
    %96 = vector.load %arg1[%c1_144, %c2_145, %c0_146, %c0_147] : memref<2x3x3x128xf32, #tpu.memory_space<vmem>>, vector<1x1x2x128xf32>
    %97 = vector.shape_cast %96 : vector<1x1x2x128xf32> to vector<2x128xf32>
    %98 = tpu.concatenate %91, %93, %95, %97 in 0 : vector<2x128xf32>, vector<2x128xf32>, vector<2x128xf32>, vector<2x128xf32> -> vector<8x128xf32>
    %c7 = arith.constant 7 : index
    %c0_148 = arith.constant 0 : index
    %c0_149 = arith.constant 0 : index
    %99 = vector.load %arg4[%c7, %c0_148, %c0_149] : memref<9x128x128xf32, #tpu.memory_space<vmem>>, vector<1x128x128xf32>
    %100 = vector.shape_cast %99 : vector<1x128x128xf32> to vector<128x128xf32>
    %cst_150 = arith.constant dense<0.000000e+00> : vector<8x128xf32>
    %101 = tpu.matmul %98, %100, %cst_150 {dimension_numbers = #tpu.dot_dimension_numbers<[1], [0], [0], [1], [0, 0, 1, 1], [], []>} : vector<8x128xf32>, vector<128x128xf32>, vector<8x128xf32> -> vector<8x128xf32>
    %102 = arith.addf %89, %101 : vector<8x128xf32>
    %c0_151 = arith.constant 0 : index
    %c1_152 = arith.constant 1 : index
    %c1_153 = arith.constant 1 : index
    %c0_154 = arith.constant 0 : index
    %103 = vector.load %arg0[%c0_151, %c1_152, %c1_153, %c0_154] : memref<2x3x3x128xf32, #tpu.memory_space<vmem>>, vector<1x1x2x128xf32>
    %104 = vector.shape_cast %103 : vector<1x1x2x128xf32> to vector<2x128xf32>
    %c0_155 = arith.constant 0 : index
    %c2_156 = arith.constant 2 : index
    %c1_157 = arith.constant 1 : index
    %c0_158 = arith.constant 0 : index
    %105 = vector.load %arg0[%c0_155, %c2_156, %c1_157, %c0_158] : memref<2x3x3x128xf32, #tpu.memory_space<vmem>>, vector<1x1x2x128xf32>
    %106 = vector.shape_cast %105 : vector<1x1x2x128xf32> to vector<2x128xf32>
    %c1_159 = arith.constant 1 : index
    %c1_160 = arith.constant 1 : index
    %c1_161 = arith.constant 1 : index
    %c0_162 = arith.constant 0 : index
    %107 = vector.load %arg0[%c1_159, %c1_160, %c1_161, %c0_162] : memref<2x3x3x128xf32, #tpu.memory_space<vmem>>, vector<1x1x2x128xf32>
    %108 = vector.shape_cast %107 : vector<1x1x2x128xf32> to vector<2x128xf32>
    %c1_163 = arith.constant 1 : index
    %c2_164 = arith.constant 2 : index
    %c1_165 = arith.constant 1 : index
    %c0_166 = arith.constant 0 : index
    %109 = vector.load %arg0[%c1_163, %c2_164, %c1_165, %c0_166] : memref<2x3x3x128xf32, #tpu.memory_space<vmem>>, vector<1x1x2x128xf32>
    %110 = vector.shape_cast %109 : vector<1x1x2x128xf32> to vector<2x128xf32>
    %111 = tpu.concatenate %104, %106, %108, %110 in 0 : vector<2x128xf32>, vector<2x128xf32>, vector<2x128xf32>, vector<2x128xf32> -> vector<8x128xf32>
    %c8 = arith.constant 8 : index
    %c0_167 = arith.constant 0 : index
    %c0_168 = arith.constant 0 : index
    %112 = vector.load %arg4[%c8, %c0_167, %c0_168] : memref<9x128x128xf32, #tpu.memory_space<vmem>>, vector<1x128x128xf32>
    %113 = vector.shape_cast %112 : vector<1x128x128xf32> to vector<128x128xf32>
    %cst_169 = arith.constant dense<0.000000e+00> : vector<8x128xf32>
    %114 = tpu.matmul %111, %113, %cst_169 {dimension_numbers = #tpu.dot_dimension_numbers<[1], [0], [0], [1], [0, 0, 1, 1], [], []>} : vector<8x128xf32>, vector<128x128xf32>, vector<8x128xf32> -> vector<8x128xf32>
    %115 = arith.addf %102, %114 : vector<8x128xf32>
    %cst_170 = arith.constant dense<0.000000e+00> : vector<128xf32>
    %116 = vector.multi_reduction <add>, %115, %cst_170 [0] : vector<8x128xf32> to vector<128xf32>
    %117 = vector.shape_cast %116 : vector<128xf32> to vector<1x128xf32>
    %cst_171 = arith.constant 8.000000e+00 : f32
    %118 = vector.broadcast %cst_171 : f32 to vector<1x128xf32>
    %119 = arith.divf %117, %118 : vector<1x128xf32>
    %120 = arith.mulf %115, %115 : vector<8x128xf32>
    %cst_172 = arith.constant dense<0.000000e+00> : vector<128xf32>
    %121 = vector.multi_reduction <add>, %120, %cst_172 [0] : vector<8x128xf32> to vector<128xf32>
    %122 = vector.shape_cast %121 : vector<128xf32> to vector<1x128xf32>
    %cst_173 = arith.constant 8.000000e+00 : f32
    %123 = vector.broadcast %cst_173 : f32 to vector<1x128xf32>
    %124 = arith.divf %122, %123 : vector<1x128xf32>
    %125 = arith.mulf %119, %119 : vector<1x128xf32>
    %126 = arith.subf %124, %125 : vector<1x128xf32>
    %cst_174 = arith.constant 0.000000e+00 : f32
    %127 = vector.broadcast %cst_174 : f32 to vector<1x128xf32>
    %128 = arith.maximumf %126, %127 : vector<1x128xf32>
    %cst_175 = arith.constant 9.99999974E-6 : f32
    %129 = vector.broadcast %cst_175 : f32 to vector<1x128xf32>
    %130 = arith.addf %128, %129 : vector<1x128xf32>
    %131 = math.rsqrt %130 : vector<1x128xf32>
    %c0_176 = arith.constant 0 : index
    %c0_177 = arith.constant 0 : index
    %132 = vector.load %arg5[%c0_176, %c0_177] : memref<1x128xf32, #tpu.memory_space<vmem>>, vector<1x128xf32>
    %133 = arith.mulf %131, %132 : vector<1x128xf32>
    %c0_178 = arith.constant 0 : index
    %c0_179 = arith.constant 0 : index
    %134 = vector.load %arg6[%c0_178, %c0_179] : memref<1x128xf32, #tpu.memory_space<vmem>>, vector<1x128xf32>
    %135 = arith.mulf %119, %133 : vector<1x128xf32>
    %136 = arith.subf %134, %135 : vector<1x128xf32>
    %137 = vector.broadcast %133 : vector<1x128xf32> to vector<8x128xf32>
    %138 = arith.mulf %115, %137 : vector<8x128xf32>
    %139 = vector.broadcast %136 : vector<1x128xf32> to vector<8x128xf32>
    %140 = arith.addf %138, %139 : vector<8x128xf32>
    %cst_180 = arith.constant 0.000000e+00 : f32
    %141 = vector.broadcast %cst_180 : f32 to vector<8x128xf32>
    %142 = arith.maximumf %140, %141 : vector<8x128xf32>
    %c0_181 = arith.constant 0 : index
    %c0_182 = arith.constant 0 : index
    %143 = vector.load %arg7[%c0_181, %c0_182] : memref<8x128xf32, #tpu.memory_space<vmem>>, vector<8x128xf32>
    tpu.vector_store %arg7[%c0_181, %c0_182], %142 {strides = array<i32>} : memref<8x128xf32, #tpu.memory_space<vmem>>, vector<8x128xf32>,
    return
  }
}

module attributes {stable_mosaic.version = 11 : i64} {
  func.func @kernel(%arg0: memref<2x2x2x128xf32, #tpu.memory_space<vmem>>, %arg1: memref<1x128x128xf32, #tpu.memory_space<vmem>>, %arg2: memref<1x128xf32, #tpu.memory_space<vmem>>, %arg3: memref<1x128xf32, #tpu.memory_space<vmem>>, %arg4: memref<8x128xf32, #tpu.memory_space<vmem>>) attributes {dimension_semantics = [], scalar_prefetch = 0 : i64, scratch_operands = 0 : i64, tpu.core_type = #tpu.core_type<tc>} {
    %c0 = arith.constant 0 : index
    %c0_0 = arith.constant 0 : index
    %c0_1 = arith.constant 0 : index
    %c0_2 = arith.constant 0 : index
    %0 = vector.load %arg0[%c0, %c0_0, %c0_1, %c0_2] : memref<2x2x2x128xf32, #tpu.memory_space<vmem>>, vector<1x1x2x128xf32>
    %1 = vector.shape_cast %0 : vector<1x1x2x128xf32> to vector<2x128xf32>
    %c0_3 = arith.constant 0 : index
    %c1 = arith.constant 1 : index
    %c0_4 = arith.constant 0 : index
    %c0_5 = arith.constant 0 : index
    %2 = vector.load %arg0[%c0_3, %c1, %c0_4, %c0_5] : memref<2x2x2x128xf32, #tpu.memory_space<vmem>>, vector<1x1x2x128xf32>
    %3 = vector.shape_cast %2 : vector<1x1x2x128xf32> to vector<2x128xf32>
    %c1_6 = arith.constant 1 : index
    %c0_7 = arith.constant 0 : index
    %c0_8 = arith.constant 0 : index
    %c0_9 = arith.constant 0 : index
    %4 = vector.load %arg0[%c1_6, %c0_7, %c0_8, %c0_9] : memref<2x2x2x128xf32, #tpu.memory_space<vmem>>, vector<1x1x2x128xf32>
    %5 = vector.shape_cast %4 : vector<1x1x2x128xf32> to vector<2x128xf32>
    %c1_10 = arith.constant 1 : index
    %c1_11 = arith.constant 1 : index
    %c0_12 = arith.constant 0 : index
    %c0_13 = arith.constant 0 : index
    %6 = vector.load %arg0[%c1_10, %c1_11, %c0_12, %c0_13] : memref<2x2x2x128xf32, #tpu.memory_space<vmem>>, vector<1x1x2x128xf32>
    %7 = vector.shape_cast %6 : vector<1x1x2x128xf32> to vector<2x128xf32>
    %8 = tpu.concatenate %1, %3, %5, %7 in 0 : vector<2x128xf32>, vector<2x128xf32>, vector<2x128xf32>, vector<2x128xf32> -> vector<8x128xf32>
    %c0_14 = arith.constant 0 : index
    %c0_15 = arith.constant 0 : index
    %c0_16 = arith.constant 0 : index
    %9 = vector.load %arg1[%c0_14, %c0_15, %c0_16] : memref<1x128x128xf32, #tpu.memory_space<vmem>>, vector<1x128x128xf32>
    %10 = vector.shape_cast %9 : vector<1x128x128xf32> to vector<128x128xf32>
    %cst = arith.constant dense<0.000000e+00> : vector<8x128xf32>
    %11 = tpu.matmul %8, %10, %cst {dimension_numbers = #tpu.dot_dimension_numbers<[1], [0], [0], [1], [0, 0, 1, 1], [], []>} : vector<8x128xf32>, vector<128x128xf32>, vector<8x128xf32> -> vector<8x128xf32>
    %cst_17 = arith.constant dense<0.000000e+00> : vector<128xf32>
    %12 = vector.multi_reduction <add>, %11, %cst_17 [0] : vector<8x128xf32> to vector<128xf32>
    %13 = vector.shape_cast %12 : vector<128xf32> to vector<1x128xf32>
    %cst_18 = arith.constant 8.000000e+00 : f32
    %14 = vector.broadcast %cst_18 : f32 to vector<1x128xf32>
    %15 = arith.divf %13, %14 : vector<1x128xf32>
    %16 = arith.mulf %11, %11 : vector<8x128xf32>
    %cst_19 = arith.constant dense<0.000000e+00> : vector<128xf32>
    %17 = vector.multi_reduction <add>, %16, %cst_19 [0] : vector<8x128xf32> to vector<128xf32>
    %18 = vector.shape_cast %17 : vector<128xf32> to vector<1x128xf32>
    %cst_20 = arith.constant 8.000000e+00 : f32
    %19 = vector.broadcast %cst_20 : f32 to vector<1x128xf32>
    %20 = arith.divf %18, %19 : vector<1x128xf32>
    %21 = arith.mulf %15, %15 : vector<1x128xf32>
    %22 = arith.subf %20, %21 : vector<1x128xf32>
    %cst_21 = arith.constant 0.000000e+00 : f32
    %23 = vector.broadcast %cst_21 : f32 to vector<1x128xf32>
    %24 = arith.maximumf %22, %23 : vector<1x128xf32>
    %cst_22 = arith.constant 9.99999974E-6 : f32
    %25 = vector.broadcast %cst_22 : f32 to vector<1x128xf32>
    %26 = arith.addf %24, %25 : vector<1x128xf32>
    %27 = math.rsqrt %26 : vector<1x128xf32>
    %c0_23 = arith.constant 0 : index
    %c0_24 = arith.constant 0 : index
    %28 = vector.load %arg2[%c0_23, %c0_24] : memref<1x128xf32, #tpu.memory_space<vmem>>, vector<1x128xf32>
    %29 = arith.mulf %27, %28 : vector<1x128xf32>
    %c0_25 = arith.constant 0 : index
    %c0_26 = arith.constant 0 : index
    %30 = vector.load %arg3[%c0_25, %c0_26] : memref<1x128xf32, #tpu.memory_space<vmem>>, vector<1x128xf32>
    %31 = arith.mulf %15, %29 : vector<1x128xf32>
    %32 = arith.subf %30, %31 : vector<1x128xf32>
    %33 = vector.broadcast %29 : vector<1x128xf32> to vector<8x128xf32>
    %34 = arith.mulf %11, %33 : vector<8x128xf32>
    %35 = vector.broadcast %32 : vector<1x128xf32> to vector<8x128xf32>
    %36 = arith.addf %34, %35 : vector<8x128xf32>
    %c0_27 = arith.constant 0 : index
    %c0_28 = arith.constant 0 : index
    %37 = vector.load %arg4[%c0_27, %c0_28] : memref<8x128xf32, #tpu.memory_space<vmem>>, vector<8x128xf32>
    tpu.vector_store %arg4[%c0_27, %c0_28], %36 {strides = array<i32>} : memref<8x128xf32, #tpu.memory_space<vmem>>, vector<8x128xf32>,
    return
  }
}

module attributes {stable_mosaic.version = 11 : i64} {
  func.func @kernel(%arg0: memref<2x4x4x128xf32, #tpu.memory_space<vmem>>, %arg1: memref<9x128x128xf32, #tpu.memory_space<vmem>>, %arg2: memref<1x128xf32, #tpu.memory_space<vmem>>, %arg3: memref<1x128xf32, #tpu.memory_space<vmem>>, %arg4: memref<8x128xf32, #tpu.memory_space<vmem>>, %arg5: memref<8x128xf32, #tpu.memory_space<vmem>>) attributes {dimension_semantics = [], scalar_prefetch = 0 : i64, scratch_operands = 0 : i64, tpu.core_type = #tpu.core_type<tc>} {
    %c0 = arith.constant 0 : index
    %c0_0 = arith.constant 0 : index
    %c0_1 = arith.constant 0 : index
    %c0_2 = arith.constant 0 : index
    %0 = vector.load %arg0[%c0, %c0_0, %c0_1, %c0_2] : memref<2x4x4x128xf32, #tpu.memory_space<vmem>>, vector<1x1x2x128xf32>
    %1 = vector.shape_cast %0 : vector<1x1x2x128xf32> to vector<2x128xf32>
    %c0_3 = arith.constant 0 : index
    %c1 = arith.constant 1 : index
    %c0_4 = arith.constant 0 : index
    %c0_5 = arith.constant 0 : index
    %2 = vector.load %arg0[%c0_3, %c1, %c0_4, %c0_5] : memref<2x4x4x128xf32, #tpu.memory_space<vmem>>, vector<1x1x2x128xf32>
    %3 = vector.shape_cast %2 : vector<1x1x2x128xf32> to vector<2x128xf32>
    %c1_6 = arith.constant 1 : index
    %c0_7 = arith.constant 0 : index
    %c0_8 = arith.constant 0 : index
    %c0_9 = arith.constant 0 : index
    %4 = vector.load %arg0[%c1_6, %c0_7, %c0_8, %c0_9] : memref<2x4x4x128xf32, #tpu.memory_space<vmem>>, vector<1x1x2x128xf32>
    %5 = vector.shape_cast %4 : vector<1x1x2x128xf32> to vector<2x128xf32>
    %c1_10 = arith.constant 1 : index
    %c1_11 = arith.constant 1 : index
    %c0_12 = arith.constant 0 : index
    %c0_13 = arith.constant 0 : index
    %6 = vector.load %arg0[%c1_10, %c1_11, %c0_12, %c0_13] : memref<2x4x4x128xf32, #tpu.memory_space<vmem>>, vector<1x1x2x128xf32>
    %7 = vector.shape_cast %6 : vector<1x1x2x128xf32> to vector<2x128xf32>
    %8 = tpu.concatenate %1, %3, %5, %7 in 0 : vector<2x128xf32>, vector<2x128xf32>, vector<2x128xf32>, vector<2x128xf32> -> vector<8x128xf32>
    %c0_14 = arith.constant 0 : index
    %c0_15 = arith.constant 0 : index
    %c0_16 = arith.constant 0 : index
    %9 = vector.load %arg1[%c0_14, %c0_15, %c0_16] : memref<9x128x128xf32, #tpu.memory_space<vmem>>, vector<1x128x128xf32>
    %10 = vector.shape_cast %9 : vector<1x128x128xf32> to vector<128x128xf32>
    %cst = arith.constant dense<0.000000e+00> : vector<8x128xf32>
    %11 = tpu.matmul %8, %10, %cst {dimension_numbers = #tpu.dot_dimension_numbers<[1], [0], [0], [1], [0, 0, 1, 1], [], []>} : vector<8x128xf32>, vector<128x128xf32>, vector<8x128xf32> -> vector<8x128xf32>
    %c0_17 = arith.constant 0 : index
    %c0_18 = arith.constant 0 : index
    %c1_19 = arith.constant 1 : index
    %c0_20 = arith.constant 0 : index
    %12 = vector.load %arg0[%c0_17, %c0_18, %c1_19, %c0_20] : memref<2x4x4x128xf32, #tpu.memory_space<vmem>>, vector<1x1x2x128xf32>
    %13 = vector.shape_cast %12 : vector<1x1x2x128xf32> to vector<2x128xf32>
    %c0_21 = arith.constant 0 : index
    %c1_22 = arith.constant 1 : index
    %c1_23 = arith.constant 1 : index
    %c0_24 = arith.constant 0 : index
    %14 = vector.load %arg0[%c0_21, %c1_22, %c1_23, %c0_24] : memref<2x4x4x128xf32, #tpu.memory_space<vmem>>, vector<1x1x2x128xf32>
    %15 = vector.shape_cast %14 : vector<1x1x2x128xf32> to vector<2x128xf32>
    %c1_25 = arith.constant 1 : index
    %c0_26 = arith.constant 0 : index
    %c1_27 = arith.constant 1 : index
    %c0_28 = arith.constant 0 : index
    %16 = vector.load %arg0[%c1_25, %c0_26, %c1_27, %c0_28] : memref<2x4x4x128xf32, #tpu.memory_space<vmem>>, vector<1x1x2x128xf32>
    %17 = vector.shape_cast %16 : vector<1x1x2x128xf32> to vector<2x128xf32>
    %c1_29 = arith.constant 1 : index
    %c1_30 = arith.constant 1 : index
    %c1_31 = arith.constant 1 : index
    %c0_32 = arith.constant 0 : index
    %18 = vector.load %arg0[%c1_29, %c1_30, %c1_31, %c0_32] : memref<2x4x4x128xf32, #tpu.memory_space<vmem>>, vector<1x1x2x128xf32>
    %19 = vector.shape_cast %18 : vector<1x1x2x128xf32> to vector<2x128xf32>
    %20 = tpu.concatenate %13, %15, %17, %19 in 0 : vector<2x128xf32>, vector<2x128xf32>, vector<2x128xf32>, vector<2x128xf32> -> vector<8x128xf32>
    %c1_33 = arith.constant 1 : index
    %c0_34 = arith.constant 0 : index
    %c0_35 = arith.constant 0 : index
    %21 = vector.load %arg1[%c1_33, %c0_34, %c0_35] : memref<9x128x128xf32, #tpu.memory_space<vmem>>, vector<1x128x128xf32>
    %22 = vector.shape_cast %21 : vector<1x128x128xf32> to vector<128x128xf32>
    %cst_36 = arith.constant dense<0.000000e+00> : vector<8x128xf32>
    %23 = tpu.matmul %20, %22, %cst_36 {dimension_numbers = #tpu.dot_dimension_numbers<[1], [0], [0], [1], [0, 0, 1, 1], [], []>} : vector<8x128xf32>, vector<128x128xf32>, vector<8x128xf32> -> vector<8x128xf32>
    %24 = arith.addf %11, %23 : vector<8x128xf32>
    %c0_37 = arith.constant 0 : index
    %c0_38 = arith.constant 0 : index
    %c2 = arith.constant 2 : index
    %c0_39 = arith.constant 0 : index
    %25 = vector.load %arg0[%c0_37, %c0_38, %c2, %c0_39] : memref<2x4x4x128xf32, #tpu.memory_space<vmem>>, vector<1x1x2x128xf32>
    %26 = vector.shape_cast %25 : vector<1x1x2x128xf32> to vector<2x128xf32>
    %c0_40 = arith.constant 0 : index
    %c1_41 = arith.constant 1 : index
    %c2_42 = arith.constant 2 : index
    %c0_43 = arith.constant 0 : index
    %27 = vector.load %arg0[%c0_40, %c1_41, %c2_42, %c0_43] : memref<2x4x4x128xf32, #tpu.memory_space<vmem>>, vector<1x1x2x128xf32>
    %28 = vector.shape_cast %27 : vector<1x1x2x128xf32> to vector<2x128xf32>
    %c1_44 = arith.constant 1 : index
    %c0_45 = arith.constant 0 : index
    %c2_46 = arith.constant 2 : index
    %c0_47 = arith.constant 0 : index
    %29 = vector.load %arg0[%c1_44, %c0_45, %c2_46, %c0_47] : memref<2x4x4x128xf32, #tpu.memory_space<vmem>>, vector<1x1x2x128xf32>
    %30 = vector.shape_cast %29 : vector<1x1x2x128xf32> to vector<2x128xf32>
    %c1_48 = arith.constant 1 : index
    %c1_49 = arith.constant 1 : index
    %c2_50 = arith.constant 2 : index
    %c0_51 = arith.constant 0 : index
    %31 = vector.load %arg0[%c1_48, %c1_49, %c2_50, %c0_51] : memref<2x4x4x128xf32, #tpu.memory_space<vmem>>, vector<1x1x2x128xf32>
    %32 = vector.shape_cast %31 : vector<1x1x2x128xf32> to vector<2x128xf32>
    %33 = tpu.concatenate %26, %28, %30, %32 in 0 : vector<2x128xf32>, vector<2x128xf32>, vector<2x128xf32>, vector<2x128xf32> -> vector<8x128xf32>
    %c2_52 = arith.constant 2 : index
    %c0_53 = arith.constant 0 : index
    %c0_54 = arith.constant 0 : index
    %34 = vector.load %arg1[%c2_52, %c0_53, %c0_54] : memref<9x128x128xf32, #tpu.memory_space<vmem>>, vector<1x128x128xf32>
    %35 = vector.shape_cast %34 : vector<1x128x128xf32> to vector<128x128xf32>
    %cst_55 = arith.constant dense<0.000000e+00> : vector<8x128xf32>
    %36 = tpu.matmul %33, %35, %cst_55 {dimension_numbers = #tpu.dot_dimension_numbers<[1], [0], [0], [1], [0, 0, 1, 1], [], []>} : vector<8x128xf32>, vector<128x128xf32>, vector<8x128xf32> -> vector<8x128xf32>
    %37 = arith.addf %24, %36 : vector<8x128xf32>
    %c0_56 = arith.constant 0 : index
    %c1_57 = arith.constant 1 : index
    %c0_58 = arith.constant 0 : index
    %c0_59 = arith.constant 0 : index
    %38 = vector.load %arg0[%c0_56, %c1_57, %c0_58, %c0_59] : memref<2x4x4x128xf32, #tpu.memory_space<vmem>>, vector<1x1x2x128xf32>
    %39 = vector.shape_cast %38 : vector<1x1x2x128xf32> to vector<2x128xf32>
    %c0_60 = arith.constant 0 : index
    %c2_61 = arith.constant 2 : index
    %c0_62 = arith.constant 0 : index
    %c0_63 = arith.constant 0 : index
    %40 = vector.load %arg0[%c0_60, %c2_61, %c0_62, %c0_63] : memref<2x4x4x128xf32, #tpu.memory_space<vmem>>, vector<1x1x2x128xf32>
    %41 = vector.shape_cast %40 : vector<1x1x2x128xf32> to vector<2x128xf32>
    %c1_64 = arith.constant 1 : index
    %c1_65 = arith.constant 1 : index
    %c0_66 = arith.constant 0 : index
    %c0_67 = arith.constant 0 : index
    %42 = vector.load %arg0[%c1_64, %c1_65, %c0_66, %c0_67] : memref<2x4x4x128xf32, #tpu.memory_space<vmem>>, vector<1x1x2x128xf32>
    %43 = vector.shape_cast %42 : vector<1x1x2x128xf32> to vector<2x128xf32>
    %c1_68 = arith.constant 1 : index
    %c2_69 = arith.constant 2 : index
    %c0_70 = arith.constant 0 : index
    %c0_71 = arith.constant 0 : index
    %44 = vector.load %arg0[%c1_68, %c2_69, %c0_70, %c0_71] : memref<2x4x4x128xf32, #tpu.memory_space<vmem>>, vector<1x1x2x128xf32>
    %45 = vector.shape_cast %44 : vector<1x1x2x128xf32> to vector<2x128xf32>
    %46 = tpu.concatenate %39, %41, %43, %45 in 0 : vector<2x128xf32>, vector<2x128xf32>, vector<2x128xf32>, vector<2x128xf32> -> vector<8x128xf32>
    %c3 = arith.constant 3 : index
    %c0_72 = arith.constant 0 : index
    %c0_73 = arith.constant 0 : index
    %47 = vector.load %arg1[%c3, %c0_72, %c0_73] : memref<9x128x128xf32, #tpu.memory_space<vmem>>, vector<1x128x128xf32>
    %48 = vector.shape_cast %47 : vector<1x128x128xf32> to vector<128x128xf32>
    %cst_74 = arith.constant dense<0.000000e+00> : vector<8x128xf32>
    %49 = tpu.matmul %46, %48, %cst_74 {dimension_numbers = #tpu.dot_dimension_numbers<[1], [0], [0], [1], [0, 0, 1, 1], [], []>} : vector<8x128xf32>, vector<128x128xf32>, vector<8x128xf32> -> vector<8x128xf32>
    %50 = arith.addf %37, %49 : vector<8x128xf32>
    %c0_75 = arith.constant 0 : index
    %c1_76 = arith.constant 1 : index
    %c1_77 = arith.constant 1 : index
    %c0_78 = arith.constant 0 : index
    %51 = vector.load %arg0[%c0_75, %c1_76, %c1_77, %c0_78] : memref<2x4x4x128xf32, #tpu.memory_space<vmem>>, vector<1x1x2x128xf32>
    %52 = vector.shape_cast %51 : vector<1x1x2x128xf32> to vector<2x128xf32>
    %c0_79 = arith.constant 0 : index
    %c2_80 = arith.constant 2 : index
    %c1_81 = arith.constant 1 : index
    %c0_82 = arith.constant 0 : index
    %53 = vector.load %arg0[%c0_79, %c2_80, %c1_81, %c0_82] : memref<2x4x4x128xf32, #tpu.memory_space<vmem>>, vector<1x1x2x128xf32>
    %54 = vector.shape_cast %53 : vector<1x1x2x128xf32> to vector<2x128xf32>
    %c1_83 = arith.constant 1 : index
    %c1_84 = arith.constant 1 : index
    %c1_85 = arith.constant 1 : index
    %c0_86 = arith.constant 0 : index
    %55 = vector.load %arg0[%c1_83, %c1_84, %c1_85, %c0_86] : memref<2x4x4x128xf32, #tpu.memory_space<vmem>>, vector<1x1x2x128xf32>
    %56 = vector.shape_cast %55 : vector<1x1x2x128xf32> to vector<2x128xf32>
    %c1_87 = arith.constant 1 : index
    %c2_88 = arith.constant 2 : index
    %c1_89 = arith.constant 1 : index
    %c0_90 = arith.constant 0 : index
    %57 = vector.load %arg0[%c1_87, %c2_88, %c1_89, %c0_90] : memref<2x4x4x128xf32, #tpu.memory_space<vmem>>, vector<1x1x2x128xf32>
    %58 = vector.shape_cast %57 : vector<1x1x2x128xf32> to vector<2x128xf32>
    %59 = tpu.concatenate %52, %54, %56, %58 in 0 : vector<2x128xf32>, vector<2x128xf32>, vector<2x128xf32>, vector<2x128xf32> -> vector<8x128xf32>
    %c4 = arith.constant 4 : index
    %c0_91 = arith.constant 0 : index
    %c0_92 = arith.constant 0 : index
    %60 = vector.load %arg1[%c4, %c0_91, %c0_92] : memref<9x128x128xf32, #tpu.memory_space<vmem>>, vector<1x128x128xf32>
    %61 = vector.shape_cast %60 : vector<1x128x128xf32> to vector<128x128xf32>
    %cst_93 = arith.constant dense<0.000000e+00> : vector<8x128xf32>
    %62 = tpu.matmul %59, %61, %cst_93 {dimension_numbers = #tpu.dot_dimension_numbers<[1], [0], [0], [1], [0, 0, 1, 1], [], []>} : vector<8x128xf32>, vector<128x128xf32>, vector<8x128xf32> -> vector<8x128xf32>
    %63 = arith.addf %50, %62 : vector<8x128xf32>
    %c0_94 = arith.constant 0 : index
    %c1_95 = arith.constant 1 : index
    %c2_96 = arith.constant 2 : index
    %c0_97 = arith.constant 0 : index
    %64 = vector.load %arg0[%c0_94, %c1_95, %c2_96, %c0_97] : memref<2x4x4x128xf32, #tpu.memory_space<vmem>>, vector<1x1x2x128xf32>
    %65 = vector.shape_cast %64 : vector<1x1x2x128xf32> to vector<2x128xf32>
    %c0_98 = arith.constant 0 : index
    %c2_99 = arith.constant 2 : index
    %c2_100 = arith.constant 2 : index
    %c0_101 = arith.constant 0 : index
    %66 = vector.load %arg0[%c0_98, %c2_99, %c2_100, %c0_101] : memref<2x4x4x128xf32, #tpu.memory_space<vmem>>, vector<1x1x2x128xf32>
    %67 = vector.shape_cast %66 : vector<1x1x2x128xf32> to vector<2x128xf32>
    %c1_102 = arith.constant 1 : index
    %c1_103 = arith.constant 1 : index
    %c2_104 = arith.constant 2 : index
    %c0_105 = arith.constant 0 : index
    %68 = vector.load %arg0[%c1_102, %c1_103, %c2_104, %c0_105] : memref<2x4x4x128xf32, #tpu.memory_space<vmem>>, vector<1x1x2x128xf32>
    %69 = vector.shape_cast %68 : vector<1x1x2x128xf32> to vector<2x128xf32>
    %c1_106 = arith.constant 1 : index
    %c2_107 = arith.constant 2 : index
    %c2_108 = arith.constant 2 : index
    %c0_109 = arith.constant 0 : index
    %70 = vector.load %arg0[%c1_106, %c2_107, %c2_108, %c0_109] : memref<2x4x4x128xf32, #tpu.memory_space<vmem>>, vector<1x1x2x128xf32>
    %71 = vector.shape_cast %70 : vector<1x1x2x128xf32> to vector<2x128xf32>
    %72 = tpu.concatenate %65, %67, %69, %71 in 0 : vector<2x128xf32>, vector<2x128xf32>, vector<2x128xf32>, vector<2x128xf32> -> vector<8x128xf32>
    %c5 = arith.constant 5 : index
    %c0_110 = arith.constant 0 : index
    %c0_111 = arith.constant 0 : index
    %73 = vector.load %arg1[%c5, %c0_110, %c0_111] : memref<9x128x128xf32, #tpu.memory_space<vmem>>, vector<1x128x128xf32>
    %74 = vector.shape_cast %73 : vector<1x128x128xf32> to vector<128x128xf32>
    %cst_112 = arith.constant dense<0.000000e+00> : vector<8x128xf32>
    %75 = tpu.matmul %72, %74, %cst_112 {dimension_numbers = #tpu.dot_dimension_numbers<[1], [0], [0], [1], [0, 0, 1, 1], [], []>} : vector<8x128xf32>, vector<128x128xf32>, vector<8x128xf32> -> vector<8x128xf32>
    %76 = arith.addf %63, %75 : vector<8x128xf32>
    %c0_113 = arith.constant 0 : index
    %c2_114 = arith.constant 2 : index
    %c0_115 = arith.constant 0 : index
    %c0_116 = arith.constant 0 : index
    %77 = vector.load %arg0[%c0_113, %c2_114, %c0_115, %c0_116] : memref<2x4x4x128xf32, #tpu.memory_space<vmem>>, vector<1x1x2x128xf32>
    %78 = vector.shape_cast %77 : vector<1x1x2x128xf32> to vector<2x128xf32>
    %c0_117 = arith.constant 0 : index
    %c3_118 = arith.constant 3 : index
    %c0_119 = arith.constant 0 : index
    %c0_120 = arith.constant 0 : index
    %79 = vector.load %arg0[%c0_117, %c3_118, %c0_119, %c0_120] : memref<2x4x4x128xf32, #tpu.memory_space<vmem>>, vector<1x1x2x128xf32>
    %80 = vector.shape_cast %79 : vector<1x1x2x128xf32> to vector<2x128xf32>
    %c1_121 = arith.constant 1 : index
    %c2_122 = arith.constant 2 : index
    %c0_123 = arith.constant 0 : index
    %c0_124 = arith.constant 0 : index
    %81 = vector.load %arg0[%c1_121, %c2_122, %c0_123, %c0_124] : memref<2x4x4x128xf32, #tpu.memory_space<vmem>>, vector<1x1x2x128xf32>
    %82 = vector.shape_cast %81 : vector<1x1x2x128xf32> to vector<2x128xf32>
    %c1_125 = arith.constant 1 : index
    %c3_126 = arith.constant 3 : index
    %c0_127 = arith.constant 0 : index
    %c0_128 = arith.constant 0 : index
    %83 = vector.load %arg0[%c1_125, %c3_126, %c0_127, %c0_128] : memref<2x4x4x128xf32, #tpu.memory_space<vmem>>, vector<1x1x2x128xf32>
    %84 = vector.shape_cast %83 : vector<1x1x2x128xf32> to vector<2x128xf32>
    %85 = tpu.concatenate %78, %80, %82, %84 in 0 : vector<2x128xf32>, vector<2x128xf32>, vector<2x128xf32>, vector<2x128xf32> -> vector<8x128xf32>
    %c6 = arith.constant 6 : index
    %c0_129 = arith.constant 0 : index
    %c0_130 = arith.constant 0 : index
    %86 = vector.load %arg1[%c6, %c0_129, %c0_130] : memref<9x128x128xf32, #tpu.memory_space<vmem>>, vector<1x128x128xf32>
    %87 = vector.shape_cast %86 : vector<1x128x128xf32> to vector<128x128xf32>
    %cst_131 = arith.constant dense<0.000000e+00> : vector<8x128xf32>
    %88 = tpu.matmul %85, %87, %cst_131 {dimension_numbers = #tpu.dot_dimension_numbers<[1], [0], [0], [1], [0, 0, 1, 1], [], []>} : vector<8x128xf32>, vector<128x128xf32>, vector<8x128xf32> -> vector<8x128xf32>
    %89 = arith.addf %76, %88 : vector<8x128xf32>
    %c0_132 = arith.constant 0 : index
    %c2_133 = arith.constant 2 : index
    %c1_134 = arith.constant 1 : index
    %c0_135 = arith.constant 0 : index
    %90 = vector.load %arg0[%c0_132, %c2_133, %c1_134, %c0_135] : memref<2x4x4x128xf32, #tpu.memory_space<vmem>>, vector<1x1x2x128xf32>
    %91 = vector.shape_cast %90 : vector<1x1x2x128xf32> to vector<2x128xf32>
    %c0_136 = arith.constant 0 : index
    %c3_137 = arith.constant 3 : index
    %c1_138 = arith.constant 1 : index
    %c0_139 = arith.constant 0 : index
    %92 = vector.load %arg0[%c0_136, %c3_137, %c1_138, %c0_139] : memref<2x4x4x128xf32, #tpu.memory_space<vmem>>, vector<1x1x2x128xf32>
    %93 = vector.shape_cast %92 : vector<1x1x2x128xf32> to vector<2x128xf32>
    %c1_140 = arith.constant 1 : index
    %c2_141 = arith.constant 2 : index
    %c1_142 = arith.constant 1 : index
    %c0_143 = arith.constant 0 : index
    %94 = vector.load %arg0[%c1_140, %c2_141, %c1_142, %c0_143] : memref<2x4x4x128xf32, #tpu.memory_space<vmem>>, vector<1x1x2x128xf32>
    %95 = vector.shape_cast %94 : vector<1x1x2x128xf32> to vector<2x128xf32>
    %c1_144 = arith.constant 1 : index
    %c3_145 = arith.constant 3 : index
    %c1_146 = arith.constant 1 : index
    %c0_147 = arith.constant 0 : index
    %96 = vector.load %arg0[%c1_144, %c3_145, %c1_146, %c0_147] : memref<2x4x4x128xf32, #tpu.memory_space<vmem>>, vector<1x1x2x128xf32>
    %97 = vector.shape_cast %96 : vector<1x1x2x128xf32> to vector<2x128xf32>
    %98 = tpu.concatenate %91, %93, %95, %97 in 0 : vector<2x128xf32>, vector<2x128xf32>, vector<2x128xf32>, vector<2x128xf32> -> vector<8x128xf32>
    %c7 = arith.constant 7 : index
    %c0_148 = arith.constant 0 : index
    %c0_149 = arith.constant 0 : index
    %99 = vector.load %arg1[%c7, %c0_148, %c0_149] : memref<9x128x128xf32, #tpu.memory_space<vmem>>, vector<1x128x128xf32>
    %100 = vector.shape_cast %99 : vector<1x128x128xf32> to vector<128x128xf32>
    %cst_150 = arith.constant dense<0.000000e+00> : vector<8x128xf32>
    %101 = tpu.matmul %98, %100, %cst_150 {dimension_numbers = #tpu.dot_dimension_numbers<[1], [0], [0], [1], [0, 0, 1, 1], [], []>} : vector<8x128xf32>, vector<128x128xf32>, vector<8x128xf32> -> vector<8x128xf32>
    %102 = arith.addf %89, %101 : vector<8x128xf32>
    %c0_151 = arith.constant 0 : index
    %c2_152 = arith.constant 2 : index
    %c2_153 = arith.constant 2 : index
    %c0_154 = arith.constant 0 : index
    %103 = vector.load %arg0[%c0_151, %c2_152, %c2_153, %c0_154] : memref<2x4x4x128xf32, #tpu.memory_space<vmem>>, vector<1x1x2x128xf32>
    %104 = vector.shape_cast %103 : vector<1x1x2x128xf32> to vector<2x128xf32>
    %c0_155 = arith.constant 0 : index
    %c3_156 = arith.constant 3 : index
    %c2_157 = arith.constant 2 : index
    %c0_158 = arith.constant 0 : index
    %105 = vector.load %arg0[%c0_155, %c3_156, %c2_157, %c0_158] : memref<2x4x4x128xf32, #tpu.memory_space<vmem>>, vector<1x1x2x128xf32>
    %106 = vector.shape_cast %105 : vector<1x1x2x128xf32> to vector<2x128xf32>
    %c1_159 = arith.constant 1 : index
    %c2_160 = arith.constant 2 : index
    %c2_161 = arith.constant 2 : index
    %c0_162 = arith.constant 0 : index
    %107 = vector.load %arg0[%c1_159, %c2_160, %c2_161, %c0_162] : memref<2x4x4x128xf32, #tpu.memory_space<vmem>>, vector<1x1x2x128xf32>
    %108 = vector.shape_cast %107 : vector<1x1x2x128xf32> to vector<2x128xf32>
    %c1_163 = arith.constant 1 : index
    %c3_164 = arith.constant 3 : index
    %c2_165 = arith.constant 2 : index
    %c0_166 = arith.constant 0 : index
    %109 = vector.load %arg0[%c1_163, %c3_164, %c2_165, %c0_166] : memref<2x4x4x128xf32, #tpu.memory_space<vmem>>, vector<1x1x2x128xf32>
    %110 = vector.shape_cast %109 : vector<1x1x2x128xf32> to vector<2x128xf32>
    %111 = tpu.concatenate %104, %106, %108, %110 in 0 : vector<2x128xf32>, vector<2x128xf32>, vector<2x128xf32>, vector<2x128xf32> -> vector<8x128xf32>
    %c8 = arith.constant 8 : index
    %c0_167 = arith.constant 0 : index
    %c0_168 = arith.constant 0 : index
    %112 = vector.load %arg1[%c8, %c0_167, %c0_168] : memref<9x128x128xf32, #tpu.memory_space<vmem>>, vector<1x128x128xf32>
    %113 = vector.shape_cast %112 : vector<1x128x128xf32> to vector<128x128xf32>
    %cst_169 = arith.constant dense<0.000000e+00> : vector<8x128xf32>
    %114 = tpu.matmul %111, %113, %cst_169 {dimension_numbers = #tpu.dot_dimension_numbers<[1], [0], [0], [1], [0, 0, 1, 1], [], []>} : vector<8x128xf32>, vector<128x128xf32>, vector<8x128xf32> -> vector<8x128xf32>
    %115 = arith.addf %102, %114 : vector<8x128xf32>
    %cst_170 = arith.constant dense<0.000000e+00> : vector<128xf32>
    %116 = vector.multi_reduction <add>, %115, %cst_170 [0] : vector<8x128xf32> to vector<128xf32>
    %117 = vector.shape_cast %116 : vector<128xf32> to vector<1x128xf32>
    %cst_171 = arith.constant 8.000000e+00 : f32
    %118 = vector.broadcast %cst_171 : f32 to vector<1x128xf32>
    %119 = arith.divf %117, %118 : vector<1x128xf32>
    %120 = arith.mulf %115, %115 : vector<8x128xf32>
    %cst_172 = arith.constant dense<0.000000e+00> : vector<128xf32>
    %121 = vector.multi_reduction <add>, %120, %cst_172 [0] : vector<8x128xf32> to vector<128xf32>
    %122 = vector.shape_cast %121 : vector<128xf32> to vector<1x128xf32>
    %cst_173 = arith.constant 8.000000e+00 : f32
    %123 = vector.broadcast %cst_173 : f32 to vector<1x128xf32>
    %124 = arith.divf %122, %123 : vector<1x128xf32>
    %125 = arith.mulf %119, %119 : vector<1x128xf32>
    %126 = arith.subf %124, %125 : vector<1x128xf32>
    %cst_174 = arith.constant 0.000000e+00 : f32
    %127 = vector.broadcast %cst_174 : f32 to vector<1x128xf32>
    %128 = arith.maximumf %126, %127 : vector<1x128xf32>
    %cst_175 = arith.constant 9.99999974E-6 : f32
    %129 = vector.broadcast %cst_175 : f32 to vector<1x128xf32>
    %130 = arith.addf %128, %129 : vector<1x128xf32>
    %131 = math.rsqrt %130 : vector<1x128xf32>
    %c0_176 = arith.constant 0 : index
    %c0_177 = arith.constant 0 : index
    %132 = vector.load %arg2[%c0_176, %c0_177] : memref<1x128xf32, #tpu.memory_space<vmem>>, vector<1x128xf32>
    %133 = arith.mulf %131, %132 : vector<1x128xf32>
    %c0_178 = arith.constant 0 : index
    %c0_179 = arith.constant 0 : index
    %134 = vector.load %arg3[%c0_178, %c0_179] : memref<1x128xf32, #tpu.memory_space<vmem>>, vector<1x128xf32>
    %135 = arith.mulf %119, %133 : vector<1x128xf32>
    %136 = arith.subf %134, %135 : vector<1x128xf32>
    %137 = vector.broadcast %133 : vector<1x128xf32> to vector<8x128xf32>
    %138 = arith.mulf %115, %137 : vector<8x128xf32>
    %139 = vector.broadcast %136 : vector<1x128xf32> to vector<8x128xf32>
    %140 = arith.addf %138, %139 : vector<8x128xf32>
    %c0_180 = arith.constant 0 : index
    %c0_181 = arith.constant 0 : index
    %141 = vector.load %arg4[%c0_180, %c0_181] : memref<8x128xf32, #tpu.memory_space<vmem>>, vector<8x128xf32>
    %142 = arith.addf %140, %141 : vector<8x128xf32>
    %cst_182 = arith.constant 0.000000e+00 : f32
    %143 = vector.broadcast %cst_182 : f32 to vector<8x128xf32>
    %144 = arith.maximumf %142, %143 : vector<8x128xf32>
    %c0_183 = arith.constant 0 : index
    %c0_184 = arith.constant 0 : index
    %145 = vector.load %arg5[%c0_183, %c0_184] : memref<8x128xf32, #tpu.memory_space<vmem>>, vector<8x128xf32>
    tpu.vector_store %arg5[%c0_183, %c0_184], %144 {strides = array<i32>} : memref<8x128xf32, #tpu.memory_space<vmem>>, vector<8x128xf32>,
    return
  }
}

module attributes {stable_mosaic.version = 11 : i64} {
  func.func @_avgpool_kernel(%arg0: memref<2x4x128xf32, #tpu.memory_space<vmem>>, %arg1: memref<2x1x128xf32, #tpu.memory_space<vmem>>) attributes {dimension_semantics = [], scalar_prefetch = 0 : i64, scratch_operands = 0 : i64, tpu.core_type = #tpu.core_type<tc>} {
    %c0 = arith.constant 0 : index
    %c0_0 = arith.constant 0 : index
    %c0_1 = arith.constant 0 : index
    %0 = vector.load %arg0[%c0, %c0_0, %c0_1] : memref<2x4x128xf32, #tpu.memory_space<vmem>>, vector<2x4x128xf32>
    %cst = arith.constant dense<0.000000e+00> : vector<2x128xf32>
    %1 = vector.multi_reduction <add>, %0, %cst [1] : vector<2x4x128xf32> to vector<2x128xf32>
    %2 = vector.shape_cast %1 : vector<2x128xf32> to vector<2x1x128xf32>
    %cst_2 = arith.constant 4.000000e+00 : f32
    %3 = vector.broadcast %cst_2 : f32 to vector<2x1x128xf32>
    %4 = arith.divf %2, %3 : vector<2x1x128xf32>
    %c0_3 = arith.constant 0 : index
    %c0_4 = arith.constant 0 : index
    %c0_5 = arith.constant 0 : index
    %5 = vector.load %arg1[%c0_3, %c0_4, %c0_5] : memref<2x1x128xf32, #tpu.memory_space<vmem>>, vector<2x1x128xf32>
    tpu.vector_store %arg1[%c0_3, %c0_4, %c0_5], %4 {strides = array<i32>} : memref<2x1x128xf32, #tpu.memory_space<vmem>>, vector<2x1x128xf32>,
    return
  }
}

</mosaic_0001>

<llo_original>
// kernel: resnet_forward.10
$region0: #{resnet_forward.10}
  #allocation0 [shape = 'u32[]', space=smem, size = 0x4, offset = 0x4, fixed_abs, tag = 'smem constant byte address 0x4 - core index']
  #allocation1 [shape = 'u32[144,128]{1,0:T(1,128)}', space=vmem, size = 0x12000, scoped, tag = 'internal scratch']
  %s0 = inlined_call_operand.vmem [shape: f32[2,5,5,128], index: 0, kind: input, shape index: {}]
  %s1 = inlined_call_operand.vmem [shape: f32[2,5,5,128], index: 1, kind: input, shape index: {}]
  %s2 = inlined_call_operand.vmem [shape: f32[2,5,5,128], index: 2, kind: input, shape index: {}]
  %s3 = inlined_call_operand.vmem [shape: f32[2,5,5,128], index: 3, kind: input, shape index: {}]
  %s4 = inlined_call_operand.vmem [shape: f32[2,4,4,128], index: 4, kind: output, shape index: {}]
  %s5 = sld [smem:[#allocation0]]
  $region26: #{resnet_forward.10} parent=0
    _
  %s7 = ssub.s32 1, %s5
  %s8 = scalar_select 0, %s7, %s5
  // Predicated region
  $region2: #{resnet_forward.10} parent=0 // pred_check
    _
  $region3: #{resnet_forward.10} parent=0 // pred_check_branch
    %10 = sbr.rel (0) target = $region5
  $region4: #{resnet_forward.10} parent=0 // pred_region
    _
  $region5: #{resnet_forward.10} parent=0 // pred_fallthru
    _
  // Predicated region
  $region6: #{resnet_forward.10} parent=0 // pred_check
    _
  $region7: #{resnet_forward.10} parent=0 // pred_check_branch
    %12 = sbr.rel (0) target = $region9
  $region8: #{resnet_forward.10} parent=0 // pred_region
    _
  $region9: #{resnet_forward.10} parent=0 // pred_fallthru
    _
  // Predicated region
  $region10: #{resnet_forward.10} parent=0 // pred_check
    _
  $region11: #{resnet_forward.10} parent=0 // pred_check_branch
    %14 = sbr.rel (0) target = $region13
  $region12: #{resnet_forward.10} parent=0 // pred_region
    _
  $region13: #{resnet_forward.10} parent=0 // pred_fallthru
    _
  // Predicated region
  $region14: #{resnet_forward.10} parent=0 // pred_check
    _
  $region15: #{resnet_forward.10} parent=0 // pred_check_branch
    %16 = sbr.rel (0) target = $region17
  $region16: #{resnet_forward.10} parent=0 // pred_region
    _
  $region17: #{resnet_forward.10} parent=0 // pred_fallthru
    _
  %v17 = vld [vmem:[%s0] sm:$0xf]
  %v18 = vld [vmem:[%s0 + $0x8] sm:$0xf]
  %v19 = vld [vmem:[%s0 + $0x10] sm:$0xf]
  %v20 = vld [vmem:[%s0 + $0x18] sm:$0xf]
  %v21 = vld [vmem:[%s0 + $0x28] sm:$0xf]
  %v22 = vld [vmem:[%s0 + $0x30] sm:$0xf]
  %v23 = vld [vmem:[%s0 + $0x38] sm:$0xf]
  %v24 = vld [vmem:[%s0 + $0x40] sm:$0xf]
  %v25 = vld [vmem:[%s1] sm:$0xf]
  %v26 = vld [vmem:[%s1 + $0x8] sm:$0xf]
  %v27 = vld [vmem:[%s1 + $0x10] sm:$0xf]
  %v28 = vld [vmem:[%s1 + $0x18] sm:$0xf]
  %v29 = vld [vmem:[%s1 + $0x28] sm:$0xf]
  %v30 = vld [vmem:[%s1 + $0x30] sm:$0xf]
  %v31 = vld [vmem:[%s1 + $0x38] sm:$0xf]
  %v32 = vld [vmem:[%s1 + $0x40] sm:$0xf]
  %v33 = vmax.f32 %v17, %v25
  %v34 = vmax.f32 %v18, %v26
  %v35 = vmax.f32 %v19, %v27
  %v36 = vmax.f32 %v20, %v28
  %v37 = vmax.f32 %v21, %v29
  %v38 = vmax.f32 %v22, %v30
  %v39 = vmax.f32 %v23, %v31
  %v40 = vmax.f32 %v24, %v32
  %v41 = vld [vmem:[%s0 + $0x1] sm:$0xf]
  %v42 = vld [vmem:[%s0 + $0x9] sm:$0xf]
  %v43 = vld [vmem:[%s0 + $0x11] sm:$0xf]
  %v44 = vld [vmem:[%s0 + $0x19] sm:$0xf]
  %v45 = vld [vmem:[%s0 + $0x29] sm:$0xf]
  %v46 = vld [vmem:[%s0 + $0x31] sm:$0xf]
  %v47 = vld [vmem:[%s0 + $0x39] sm:$0xf]
  %v48 = vld [vmem:[%s0 + $0x41] sm:$0xf]
  %v49 = vmax.f32 %v33, %v41
  %v50 = vmax.f32 %v34, %v42
  %v51 = vmax.f32 %v35, %v43
  %v52 = vmax.f32 %v36, %v44
  %v53 = vmax.f32 %v37, %v45
  %v54 = vmax.f32 %v38, %v46
  %v55 = vmax.f32 %v39, %v47
  %v56 = vmax.f32 %v40, %v48
  %v57 = vld [vmem:[%s2] sm:$0xf]
  %v58 = vld [vmem:[%s2 + $0x8] sm:$0xf]
  %v59 = vld [vmem:[%s2 + $0x10] sm:$0xf]
  %v60 = vld [vmem:[%s2 + $0x18] sm:$0xf]
  %v61 = vld [vmem:[%s2 + $0x28] sm:$0xf]
  %v62 = vld [vmem:[%s2 + $0x30] sm:$0xf]
  %v63 = vld [vmem:[%s2 + $0x38] sm:$0xf]
  %v64 = vld [vmem:[%s2 + $0x40] sm:$0xf]
  %v65 = vmax.f32 %v49, %v57
  %v66 = vmax.f32 %v50, %v58
  %v67 = vmax.f32 %v51, %v59
  %v68 = vmax.f32 %v52, %v60
  %v69 = vmax.f32 %v53, %v61
  %v70 = vmax.f32 %v54, %v62
  %v71 = vmax.f32 %v55, %v63
  %v72 = vmax.f32 %v56, %v64
  %v73 = vld [vmem:[%s3] sm:$0xf]
  %v74 = vld [vmem:[%s3 + $0x8] sm:$0xf]
  %v75 = vld [vmem:[%s3 + $0x10] sm:$0xf]
  %v76 = vld [vmem:[%s3 + $0x18] sm:$0xf]
  %v77 = vld [vmem:[%s3 + $0x28] sm:$0xf]
  %v78 = vld [vmem:[%s3 + $0x30] sm:$0xf]
  %v79 = vld [vmem:[%s3 + $0x38] sm:$0xf]
  %v80 = vld [vmem:[%s3 + $0x40] sm:$0xf]
  %v81 = vmax.f32 %v65, %v73
  %v82 = vmax.f32 %v66, %v74
  %v83 = vmax.f32 %v67, %v75
  %v84 = vmax.f32 %v68, %v76
  %v85 = vmax.f32 %v69, %v77
  %v86 = vmax.f32 %v70, %v78
  %v87 = vmax.f32 %v71, %v79
  %v88 = vmax.f32 %v72, %v80
  %v89 = vld [vmem:[%s2 + $0x1] sm:$0xf]
  %v90 = vld [vmem:[%s2 + $0x9] sm:$0xf]
  %v91 = vld [vmem:[%s2 + $0x11] sm:$0xf]
  %v92 = vld [vmem:[%s2 + $0x19] sm:$0xf]
  %v93 = vld [vmem:[%s2 + $0x29] sm:$0xf]
  %v94 = vld [vmem:[%s2 + $0x31] sm:$0xf]
  %v95 = vld [vmem:[%s2 + $0x39] sm:$0xf]
  %v96 = vld [vmem:[%s2 + $0x41] sm:$0xf]
  %v97 = vmax.f32 %v81, %v89
  %v98 = vmax.f32 %v82, %v90
  %v99 = vmax.f32 %v83, %v91
  %v100 = vmax.f32 %v84, %v92
  %v101 = vmax.f32 %v85, %v93
  %v102 = vmax.f32 %v86, %v94
  %v103 = vmax.f32 %v87, %v95
  %v104 = vmax.f32 %v88, %v96
  %s105 = scalar_lea.vmem %s0, 8
  %v106 = vld [vmem:[%s105] sm:$0xf]
  %v107 = vld [vmem:[%s105 + $0x8] sm:$0xf]
  %v108 = vld [vmem:[%s105 + $0x10] sm:$0xf]
  %v109 = vld [vmem:[%s105 + $0x18] sm:$0xf]
  %v110 = vld [vmem:[%s105 + $0x28] sm:$0xf]
  %v111 = vld [vmem:[%s105 + $0x30] sm:$0xf]
  %v112 = vld [vmem:[%s105 + $0x38] sm:$0xf]
  %v113 = vld [vmem:[%s105 + $0x40] sm:$0xf]
  %v114 = vmax.f32 %v97, %v106
  %v115 = vmax.f32 %v98, %v107
  %v116 = vmax.f32 %v99, %v108
  %v117 = vmax.f32 %v100, %v109
  %v118 = vmax.f32 %v101, %v110
  %v119 = vmax.f32 %v102, %v111
  %v120 = vmax.f32 %v103, %v112
  %v121 = vmax.f32 %v104, %v113
  %s122 = scalar_lea.vmem %s1, 8
  %v123 = vld [vmem:[%s122] sm:$0xf]
  %v124 = vld [vmem:[%s122 + $0x8] sm:$0xf]
  %v125 = vld [vmem:[%s122 + $0x10] sm:$0xf]
  %v126 = vld [vmem:[%s122 + $0x18] sm:$0xf]
  %v127 = vld [vmem:[%s122 + $0x28] sm:$0xf]
  %v128 = vld [vmem:[%s122 + $0x30] sm:$0xf]
  %v129 = vld [vmem:[%s122 + $0x38] sm:$0xf]
  %v130 = vld [vmem:[%s122 + $0x40] sm:$0xf]
  %v131 = vmax.f32 %v114, %v123
  %v132 = vmax.f32 %v115, %v124
  %v133 = vmax.f32 %v116, %v125
  %v134 = vmax.f32 %v117, %v126
  %v135 = vmax.f32 %v118, %v127
  %v136 = vmax.f32 %v119, %v128
  %v137 = vmax.f32 %v120, %v129
  %v138 = vmax.f32 %v121, %v130
  %v139 = vld [vmem:[%s105 + $0x1] sm:$0xf]
  %v140 = vld [vmem:[%s105 + $0x9] sm:$0xf]
  %v141 = vld [vmem:[%s105 + $0x11] sm:$0xf]
  %v142 = vld [vmem:[%s105 + $0x19] sm:$0xf]
  %v143 = vld [vmem:[%s105 + $0x29] sm:$0xf]
  %v144 = vld [vmem:[%s105 + $0x31] sm:$0xf]
  %v145 = vld [vmem:[%s105 + $0x39] sm:$0xf]
  %v146 = vld [vmem:[%s105 + $0x41] sm:$0xf]
  %v147 = vmax.f32 %v131, %v139
  %v148 = vmax.f32 %v132, %v140
  %v149 = vmax.f32 %v133, %v141
  %v150 = vmax.f32 %v134, %v142
  %v151 = vmax.f32 %v135, %v143
  %v152 = vmax.f32 %v136, %v144
  %v153 = vmax.f32 %v137, %v145
  %v154 = vmax.f32 %v138, %v146
  %155 = vst [vmem:[%s4] sm:$0xf] %v147
  %156 = vst [vmem:[%s4 + $0x4] sm:$0xf] %v148
  %157 = vst [vmem:[%s4 + $0x8] sm:$0xf] %v149
  %158 = vst [vmem:[%s4 + $0xc] sm:$0xf] %v150
  %159 = vst [vmem:[%s4 + $0x10] sm:$0xf] %v151
  %160 = vst [vmem:[%s4 + $0x14] sm:$0xf] %v152
  %161 = vst [vmem:[%s4 + $0x18] sm:$0xf] %v153
  %162 = vst [vmem:[%s4 + $0x1c] sm:$0xf] %v154
  // Predicated region
  $region18: #{resnet_forward.10} parent=0 // pred_check
    _
  $region19: #{resnet_forward.10} parent=0 // pred_check_branch
    %164 = sbr.rel (0) target = $region21
  $region20: #{resnet_forward.10} parent=0 // pred_region
    _
  $region21: #{resnet_forward.10} parent=0 // pred_fallthru
    _
  // Predicated region
  $region22: #{resnet_forward.10} parent=0 // pred_check
    _
  $region23: #{resnet_forward.10} parent=0 // pred_check_branch
    %166 = sbr.rel (0) target = $region25
  $region24: #{resnet_forward.10} parent=0 // pred_region
    _
  $region25: #{resnet_forward.10} parent=0 // pred_fallthru
    _

// kernel: resnet_forward.11
$region0: #{resnet_forward.11}
  #allocation0 [shape = 'u32[]', space=smem, size = 0x4, offset = 0x4, fixed_abs, tag = 'smem constant byte address 0x4 - core index']
  #allocation1 [shape = 'u32[144,128]{1,0:T(1,128)}', space=vmem, size = 0x12000, scoped, tag = 'internal scratch']
  %s0 = inlined_call_operand.vmem [shape: f32[2,4,4,128], index: 0, kind: input, shape index: {}]
  %s1 = inlined_call_operand.vmem [shape: f32[1,128,128], index: 1, kind: input, shape index: {}]
  %s2 = inlined_call_operand.vmem [shape: f32[1,128], index: 2, kind: input, shape index: {}]
  %s3 = inlined_call_operand.vmem [shape: f32[1,128], index: 3, kind: input, shape index: {}]
  %s4 = inlined_call_operand.vmem [shape: f32[32,128], index: 4, kind: output, shape index: {}]
  %s5 = sld [smem:[#allocation0]]
  $region26: #{resnet_forward.11} parent=0
    _
  %s7 = ssub.s32 1, %s5
  %s8 = scalar_select 0, %s7, %s5
  // Predicated region
  $region2: #{resnet_forward.11} parent=0 // pred_check
    _
  $region3: #{resnet_forward.11} parent=0 // pred_check_branch
    %10 = sbr.rel (0) target = $region5
  $region4: #{resnet_forward.11} parent=0 // pred_region
    _
  $region5: #{resnet_forward.11} parent=0 // pred_fallthru
    _
  // Predicated region
  $region6: #{resnet_forward.11} parent=0 // pred_check
    _
  $region7: #{resnet_forward.11} parent=0 // pred_check_branch
    %12 = sbr.rel (0) target = $region9
  $region8: #{resnet_forward.11} parent=0 // pred_region
    _
  $region9: #{resnet_forward.11} parent=0 // pred_fallthru
    _
  // Predicated region
  $region10: #{resnet_forward.11} parent=0 // pred_check
    _
  $region11: #{resnet_forward.11} parent=0 // pred_check_branch
    %14 = sbr.rel (0) target = $region13
  $region12: #{resnet_forward.11} parent=0 // pred_region
    _
  $region13: #{resnet_forward.11} parent=0 // pred_fallthru
    _
  // Predicated region
  $region14: #{resnet_forward.11} parent=0 // pred_check
    _
  $region15: #{resnet_forward.11} parent=0 // pred_check_branch
    %16 = sbr.rel (0) target = $region17
  $region16: #{resnet_forward.11} parent=0 // pred_region
    _
  $region17: #{resnet_forward.11} parent=0 // pred_fallthru
    _
  %v17 = vld [vmem:[%s0] sm:$0xf]
  %s18 = scalar_lea.vmem %s0, 4
  %v19 = vld [vmem:[%s18] sm:$0xf]
  %s20 = scalar_lea.vmem %s0, 8
  %v21 = vld [vmem:[%s20] sm:$0xf]
  %s22 = scalar_lea.vmem %s0, 12
  %v23 = vld [vmem:[%s22] sm:$0xf]
  %s24 = scalar_lea.vmem %s0, 16
  %v25 = vld [vmem:[%s24] sm:$0xf]
  %s26 = scalar_lea.vmem %s0, 20
  %v27 = vld [vmem:[%s26] sm:$0xf]
  %s28 = scalar_lea.vmem %s0, 24
  %v29 = vld [vmem:[%s28] sm:$0xf]
  %s30 = scalar_lea.vmem %s0, 28
  %v31 = vld [vmem:[%s30] sm:$0xf]
  %v33 = vrot.slane %v19, 4
  %v36 = vrot.slane %v23, 4
  %v39 = vrot.slane %v27, 4
  %v42 = vrot.slane %v31, 4
  %vm44 = vcmask 1043456
  %v45 = vsel %vm44, %v17, %v33
  %v46 = vsel %vm44, %v21, %v36
  %v47 = vsel %vm44, %v25, %v39
  %v48 = vsel %vm44, %v29, %v42
  %v49 = vld [vmem:[%s1] sm:$0xff]
  %v50 = vld [vmem:[%s1 + $0x8] sm:$0xff]
  %v51 = vld [vmem:[%s1 + $0x10] sm:$0xff]
  %v52 = vld [vmem:[%s1 + $0x18] sm:$0xff]
  %v53 = vld [vmem:[%s1 + $0x20] sm:$0xff]
  %v54 = vld [vmem:[%s1 + $0x28] sm:$0xff]
  %v55 = vld [vmem:[%s1 + $0x30] sm:$0xff]
  %v56 = vld [vmem:[%s1 + $0x38] sm:$0xff]
  %v57 = vld [vmem:[%s1 + $0x40] sm:$0xff]
  %v58 = vld [vmem:[%s1 + $0x48] sm:$0xff]
  %v59 = vld [vmem:[%s1 + $0x50] sm:$0xff]
  %v60 = vld [vmem:[%s1 + $0x58] sm:$0xff]
  %v61 = vld [vmem:[%s1 + $0x60] sm:$0xff]
  %v62 = vld [vmem:[%s1 + $0x68] sm:$0xff]
  %v63 = vld [vmem:[%s1 + $0x70] sm:$0xff]
  %v64 = vld [vmem:[%s1 + $0x78] sm:$0xff]
  %65 = vmatprep.subr.mxu0 0.0
  %66 = vmatpush1.msra.mxu0 %v64
  %67 = vmatprep.subr.mxu0 0.0
  %68 = vmatpush1.msra.mxu0 %v63
  %69 = vmatprep.subr.mxu0 0.0
  %70 = vmatpush1.msra.mxu0 %v62
  %71 = vmatprep.subr.mxu0 0.0
  %72 = vmatpush1.msra.mxu0 %v61
  %73 = vmatprep.subr.mxu0 0.0
  %74 = vmatpush1.msra.mxu0 %v60
  %75 = vmatprep.subr.mxu0 0.0
  %76 = vmatpush1.msra.mxu0 %v59
  %77 = vmatprep.subr.mxu0 0.0
  %78 = vmatpush1.msra.mxu0 %v58
  %79 = vmatprep.subr.mxu0 0.0
  %80 = vmatpush1.msra.mxu0 %v57
  %81 = vmatprep.subr.mxu0 0.0
  %82 = vmatpush1.msra.mxu0 %v56
  %83 = vmatprep.subr.mxu0 0.0
  %84 = vmatpush1.msra.mxu0 %v55
  %85 = vmatprep.subr.mxu0 0.0
  %86 = vmatpush1.msra.mxu0 %v54
  %87 = vmatprep.subr.mxu0 0.0
  %88 = vmatpush1.msra.mxu0 %v53
  %89 = vmatprep.subr.mxu0 0.0
  %90 = vmatpush1.msra.mxu0 %v52
  %91 = vmatprep.subr.mxu0 0.0
  %92 = vmatpush1.msra.mxu0 %v51
  %93 = vmatprep.subr.mxu0 0.0
  %94 = vmatpush1.msra.mxu0 %v50
  %95 = vmatprep.subr.mxu0 0.0
  %96 = vmatpush1.msra.mxu0 %v49
  %97 = vmatprep.subr.mxu0 0.0
  %98 = vmatpush2.msra.mxu0 0.0
  %99 = vmatprep.subr.mxu0 0.0
  %100 = vmatpush2.msra.mxu0 0.0
  %101 = vmatprep.subr.mxu0 0.0
  %102 = vmatpush2.msra.mxu0 0.0
  %103 = vmatprep.subr.mxu0 0.0
  %104 = vmatpush2.msra.mxu0 0.0
  %105 = vmatprep.subr.mxu0 0.0
  %106 = vmatpush2.msra.mxu0 0.0
  %107 = vmatprep.subr.mxu0 0.0
  %108 = vmatpush2.msra.mxu0 0.0
  %109 = vmatprep.subr.mxu0 0.0
  %110 = vmatpush2.msra.mxu0 0.0
  %111 = vmatprep.subr.mxu0 0.0
  %112 = vmatpush2.msra.mxu0 0.0
  %113 = vmatprep.subr.mxu0 0.0
  %114 = vmatpush2.msra.mxu0 0.0
  %115 = vmatprep.subr.mxu0 0.0
  %116 = vmatpush2.msra.mxu0 0.0
  %117 = vmatprep.subr.mxu0 0.0
  %118 = vmatpush2.msra.mxu0 0.0
  %119 = vmatprep.subr.mxu0 0.0
  %120 = vmatpush2.msra.mxu0 0.0
  %121 = vmatprep.subr.mxu0 0.0
  %122 = vmatpush2.msra.mxu0 0.0
  %123 = vmatprep.subr.mxu0 0.0
  %124 = vmatpush2.msra.mxu0 0.0
  %125 = vmatprep.subr.mxu0 0.0
  %126 = vmatpush2.msra.mxu0 0.0
  %127 = vmatprep.subr.mxu0 0.0
  %128 = vmatpush2.msra.mxu0 0.0
  %129 = vmatprep.mubr.f32.mxu0 0.0
  %130 = vmatmul.mubr.f32.gmra.mxu0 %v45
  %v131 = vpop.f32.mrf.mxu0
  %v132 = vadd.f32 0.0, %v131
  %v133 = vpop.f32.mrf.mxu0
  %134 = vmatprep.mubr.f32.mxu0 0.0
  %135 = vmatmul.mubr.f32.gmra.mxu0 %v46
  %v136 = vpop.f32.mrf.mxu0
  %v137 = vadd.f32 0.0, %v136
  %v138 = vpop.f32.mrf.mxu0
  %139 = vmatprep.mubr.f32.mxu0 0.0
  %140 = vmatmul.mubr.f32.gmra.mxu0 %v47
  %v141 = vpop.f32.mrf.mxu0
  %v142 = vadd.f32 0.0, %v141
  %v143 = vpop.f32.mrf.mxu0
  %144 = vmatprep.mubr.f32.mxu0 0.0
  %145 = vmatmul.mubr.f32.gmra.mxu0 %v48
  %v146 = vpop.f32.mrf.mxu0
  %v147 = vadd.f32 0.0, %v146
  %v148 = vpop.f32.mrf.mxu0
  %149 = vdwg.mxu0
  %v150 = vadd.f32 %v132, %v137
  %v151 = vadd.f32 %v150, %v142
  %v152 = vadd.f32 %v151, %v147
  %v153 = vrot.slane %v152, 4
  %v154 = vadd.f32 %v152, %v153
  %v155 = vrot.slane %v154, 2
  %v156 = vadd.f32 %v154, %v155
  %v157 = vrot.slane %v156, 1
  %v158 = vadd.f32 %v156, %v157
  %v159 = vrcp.pop 32.0
  %v160 = vmul.f32 %v158, %v159
  %v161 = vmul.f32 %v132, %v132
  %v162 = vmul.f32 %v137, %v137
  %v163 = vmul.f32 %v142, %v142
  %v164 = vmul.f32 %v147, %v147
  %v165 = vadd.f32 %v161, %v162
  %v166 = vadd.f32 %v165, %v163
  %v167 = vadd.f32 %v166, %v164
  %v168 = vrot.slane %v167, 4
  %v169 = vadd.f32 %v167, %v168
  %v170 = vrot.slane %v169, 2
  %v171 = vadd.f32 %v169, %v170
  %v172 = vrot.slane %v171, 1
  %v173 = vadd.f32 %v171, %v172
  %v174 = vmul.f32 %v173, %v159
  %v175 = vmul.f32 %v160, %v160
  %v176 = vsub.f32 %v174, %v175
  %v177 = vmax.f32 %v176, 0.0
  %v178 = vadd.f32 %v177, 1e-05
  %v179 = vrsqrt.pop %v178
  %v180 = vld [vmem:[%s2] sm:$0x1]
  %v181 = vmul.f32 %v179, %v180
  %v182 = vld [vmem:[%s3] sm:$0x1]
  %v183 = vmul.f32 %v160, %v181
  %v184 = vsub.f32 %v182, %v183
  %v185 = vlaneseq
  %v186 = vshrl.u32 %v185, 7
  %v187 = vsub.s32 0, %v186
  %v188 = vrot.slane %v181, %v187
  %v189 = vmul.f32 %v132, %v188
  %v190 = vmul.f32 %v137, %v188
  %v191 = vmul.f32 %v142, %v188
  %v192 = vmul.f32 %v147, %v188
  %v194 = vlaneseq
  %v195 = vshrl.u32 %v194, 7
  %v196 = vsub.s32 0, %v195
  %v197 = vrot.slane %v184, %v196
  %v199 = vadd.f32 %v189, %v197
  %v200 = vadd.f32 %v190, %v197
  %v201 = vadd.f32 %v191, %v197
  %v202 = vadd.f32 %v192, %v197
  %203 = vst [vmem:[%s4] sm:$0xff] %v199
  %204 = vst [vmem:[%s4 + $0x8] sm:$0xff] %v200
  %205 = vst [vmem:[%s4 + $0x10] sm:$0xff] %v201
  %206 = vst [vmem:[%s4 + $0x18] sm:$0xff] %v202
  // Predicated region
  $region18: #{resnet_forward.11} parent=0 // pred_check
    _
  $region19: #{resnet_forward.11} parent=0 // pred_check_branch
    %208 = sbr.rel (0) target = $region21
  $region20: #{resnet_forward.11} parent=0 // pred_region
    _
  $region21: #{resnet_forward.11} parent=0 // pred_fallthru
    _
  // Predicated region
  $region22: #{resnet_forward.11} parent=0 // pred_check
    _
  $region23: #{resnet_forward.11} parent=0 // pred_check_branch
    %210 = sbr.rel (0) target = $region25
  $region24: #{resnet_forward.11} parent=0 // pred_region
    _
  $region25: #{resnet_forward.11} parent=0 // pred_fallthru
    _

// kernel: resnet_forward.12
$region0: #{resnet_forward.12}
  #allocation0 [shape = 'u32[]', space=smem, size = 0x4, offset = 0x4, fixed_abs, tag = 'smem constant byte address 0x4 - core index']
  #allocation1 [shape = 'u32[144,128]{1,0:T(1,128)}', space=vmem, size = 0x12000, scoped, tag = 'internal scratch']
  %s0 = inlined_call_operand.vmem [shape: f32[2,6,6,128], index: 0, kind: input, shape index: {}]
  %s1 = inlined_call_operand.vmem [shape: f32[9,128,128], index: 1, kind: input, shape index: {}]
  %s2 = inlined_call_operand.vmem [shape: f32[1,128], index: 2, kind: input, shape index: {}]
  %s3 = inlined_call_operand.vmem [shape: f32[1,128], index: 3, kind: input, shape index: {}]
  %s4 = inlined_call_operand.vmem [shape: f32[32,128], index: 4, kind: output, shape index: {}]
  %s5 = sld [smem:[#allocation0]]
  $region26: #{resnet_forward.12} parent=0
    _
  %s7 = ssub.s32 1, %s5
  %s8 = scalar_select 0, %s7, %s5
  // Predicated region
  $region2: #{resnet_forward.12} parent=0 // pred_check
    _
  $region3: #{resnet_forward.12} parent=0 // pred_check_branch
    %10 = sbr.rel (0) target = $region5
  $region4: #{resnet_forward.12} parent=0 // pred_region
    _
  $region5: #{resnet_forward.12} parent=0 // pred_fallthru
    _
  // Predicated region
  $region6: #{resnet_forward.12} parent=0 // pred_check
    _
  $region7: #{resnet_forward.12} parent=0 // pred_check_branch
    %12 = sbr.rel (0) target = $region9
  $region8: #{resnet_forward.12} parent=0 // pred_region
    _
  $region9: #{resnet_forward.12} parent=0 // pred_fallthru
    _
  // Predicated region
  $region10: #{resnet_forward.12} parent=0 // pred_check
    _
  $region11: #{resnet_forward.12} parent=0 // pred_check_branch
    %14 = sbr.rel (0) target = $region13
  $region12: #{resnet_forward.12} parent=0 // pred_region
    _
  $region13: #{resnet_forward.12} parent=0 // pred_fallthru
    _
  // Predicated region
  $region14: #{resnet_forward.12} parent=0 // pred_check
    _
  $region15: #{resnet_forward.12} parent=0 // pred_check_branch
    %16 = sbr.rel (0) target = $region17
  $region16: #{resnet_forward.12} parent=0 // pred_region
    _
  $region17: #{resnet_forward.12} parent=0 // pred_fallthru
    _
  %v17 = vld [vmem:[%s0] sm:$0xf]
  %s18 = scalar_lea.vmem %s0, 8
  %v19 = vld [vmem:[%s18] sm:$0xf]
  %s20 = scalar_lea.vmem %s0, 16
  %v21 = vld [vmem:[%s20] sm:$0xf]
  %s22 = scalar_lea.vmem %s0, 24
  %v23 = vld [vmem:[%s22] sm:$0xf]
  %s24 = scalar_lea.vmem %s0, 48
  %v25 = vld [vmem:[%s24] sm:$0xf]
  %s26 = scalar_lea.vmem %s0, 56
  %v27 = vld [vmem:[%s26] sm:$0xf]
  %s28 = scalar_lea.vmem %s0, 64
  %v29 = vld [vmem:[%s28] sm:$0xf]
  %s30 = scalar_lea.vmem %s0, 72
  %v31 = vld [vmem:[%s30] sm:$0xf]
  %v33 = vrot.slane %v19, 4
  %v36 = vrot.slane %v23, 4
  %v39 = vrot.slane %v27, 4
  %v42 = vrot.slane %v31, 4
  %vm44 = vcmask 1043456
  %v45 = vsel %vm44, %v17, %v33
  %v46 = vsel %vm44, %v21, %v36
  %v47 = vsel %vm44, %v25, %v39
  %v48 = vsel %vm44, %v29, %v42
  %v49 = vld [vmem:[%s1] sm:$0xff]
  %v50 = vld [vmem:[%s1 + $0x8] sm:$0xff]
  %v51 = vld [vmem:[%s1 + $0x10] sm:$0xff]
  %v52 = vld [vmem:[%s1 + $0x18] sm:$0xff]
  %v53 = vld [vmem:[%s1 + $0x20] sm:$0xff]
  %v54 = vld [vmem:[%s1 + $0x28] sm:$0xff]
  %v55 = vld [vmem:[%s1 + $0x30] sm:$0xff]
  %v56 = vld [vmem:[%s1 + $0x38] sm:$0xff]
  %v57 = vld [vmem:[%s1 + $0x40] sm:$0xff]
  %v58 = vld [vmem:[%s1 + $0x48] sm:$0xff]
  %v59 = vld [vmem:[%s1 + $0x50] sm:$0xff]
  %v60 = vld [vmem:[%s1 + $0x58] sm:$0xff]
  %v61 = vld [vmem:[%s1 + $0x60] sm:$0xff]
  %v62 = vld [vmem:[%s1 + $0x68] sm:$0xff]
  %v63 = vld [vmem:[%s1 + $0x70] sm:$0xff]
  %v64 = vld [vmem:[%s1 + $0x78] sm:$0xff]
  %v65 = vld [vmem:[%s0 + $0x1] sm:$0xf]
  %v66 = vld [vmem:[%s18 + $0x1] sm:$0xf]
  %v67 = vld [vmem:[%s20 + $0x1] sm:$0xf]
  %v68 = vld [vmem:[%s22 + $0x1] sm:$0xf]
  %v69 = vld [vmem:[%s24 + $0x1] sm:$0xf]
  %v70 = vld [vmem:[%s26 + $0x1] sm:$0xf]
  %v71 = vld [vmem:[%s28 + $0x1] sm:$0xf]
  %v72 = vld [vmem:[%s30 + $0x1] sm:$0xf]
  %v74 = vrot.slane %v66, 4
  %v77 = vrot.slane %v68, 4
  %v80 = vrot.slane %v70, 4
  %v83 = vrot.slane %v72, 4
  %v85 = vsel %vm44, %v65, %v74
  %v86 = vsel %vm44, %v67, %v77
  %v87 = vsel %vm44, %v69, %v80
  %v88 = vsel %vm44, %v71, %v83
  %s89 = scalar_lea.vmem %s1, 128
  %v90 = vld [vmem:[%s89] sm:$0xff]
  %v91 = vld [vmem:[%s89 + $0x8] sm:$0xff]
  %v92 = vld [vmem:[%s89 + $0x10] sm:$0xff]
  %v93 = vld [vmem:[%s89 + $0x18] sm:$0xff]
  %v94 = vld [vmem:[%s89 + $0x20] sm:$0xff]
  %v95 = vld [vmem:[%s89 + $0x28] sm:$0xff]
  %v96 = vld [vmem:[%s89 + $0x30] sm:$0xff]
  %v97 = vld [vmem:[%s89 + $0x38] sm:$0xff]
  %v98 = vld [vmem:[%s89 + $0x40] sm:$0xff]
  %v99 = vld [vmem:[%s89 + $0x48] sm:$0xff]
  %v100 = vld [vmem:[%s89 + $0x50] sm:$0xff]
  %v101 = vld [vmem:[%s89 + $0x58] sm:$0xff]
  %v102 = vld [vmem:[%s89 + $0x60] sm:$0xff]
  %v103 = vld [vmem:[%s89 + $0x68] sm:$0xff]
  %v104 = vld [vmem:[%s89 + $0x70] sm:$0xff]
  %v105 = vld [vmem:[%s89 + $0x78] sm:$0xff]
  %106 = vmatprep.subr.mxu0 0.0
  %107 = vmatpush1.msra.mxu0 %v105
  %108 = vmatprep.subr.mxu0 0.0
  %109 = vmatpush1.msra.mxu0 %v104
  %110 = vmatprep.subr.mxu0 0.0
  %111 = vmatpush1.msra.mxu0 %v103
  %112 = vmatprep.subr.mxu0 0.0
  %113 = vmatpush1.msra.mxu0 %v102
  %114 = vmatprep.subr.mxu0 0.0
  %115 = vmatpush1.msra.mxu0 %v101
  %116 = vmatprep.subr.mxu0 0.0
  %117 = vmatpush1.msra.mxu0 %v100
  %118 = vmatprep.subr.mxu0 0.0
  %119 = vmatpush1.msra.mxu0 %v99
  %120 = vmatprep.subr.mxu0 0.0
  %121 = vmatpush1.msra.mxu0 %v98
  %122 = vmatprep.subr.mxu0 0.0
  %123 = vmatpush1.msra.mxu0 %v97
  %124 = vmatprep.subr.mxu0 0.0
  %125 = vmatpush1.msra.mxu0 %v96
  %126 = vmatprep.subr.mxu0 0.0
  %127 = vmatpush1.msra.mxu0 %v95
  %128 = vmatprep.subr.mxu0 0.0
  %129 = vmatpush1.msra.mxu0 %v94
  %130 = vmatprep.subr.mxu0 0.0
  %131 = vmatpush1.msra.mxu0 %v93
  %132 = vmatprep.subr.mxu0 0.0
  %133 = vmatpush1.msra.mxu0 %v92
  %134 = vmatprep.subr.mxu0 0.0
  %135 = vmatpush1.msra.mxu0 %v91
  %136 = vmatprep.subr.mxu0 0.0
  %137 = vmatpush1.msra.mxu0 %v90
  %138 = vmatprep.subr.mxu0 0.0
  %139 = vmatpush2.msra.mxu0 0.0
  %140 = vmatprep.subr.mxu0 0.0
  %141 = vmatpush2.msra.mxu0 0.0
  %142 = vmatprep.subr.mxu0 0.0
  %143 = vmatpush2.msra.mxu0 0.0
  %144 = vmatprep.subr.mxu0 0.0
  %145 = vmatpush2.msra.mxu0 0.0
  %146 = vmatprep.subr.mxu0 0.0
  %147 = vmatpush2.msra.mxu0 0.0
  %148 = vmatprep.subr.mxu0 0.0
  %149 = vmatpush2.msra.mxu0 0.0
  %150 = vmatprep.subr.mxu0 0.0
  %151 = vmatpush2.msra.mxu0 0.0
  %152 = vmatprep.subr.mxu0 0.0
  %153 = vmatpush2.msra.mxu0 0.0
  %154 = vmatprep.subr.mxu0 0.0
  %155 = vmatpush2.msra.mxu0 0.0
  %156 = vmatprep.subr.mxu0 0.0
  %157 = vmatpush2.msra.mxu0 0.0
  %158 = vmatprep.subr.mxu0 0.0
  %159 = vmatpush2.msra.mxu0 0.0
  %160 = vmatprep.subr.mxu0 0.0
  %161 = vmatpush2.msra.mxu0 0.0
  %162 = vmatprep.subr.mxu0 0.0
  %163 = vmatpush2.msra.mxu0 0.0
  %164 = vmatprep.subr.mxu0 0.0
  %165 = vmatpush2.msra.mxu0 0.0
  %166 = vmatprep.subr.mxu0 0.0
  %167 = vmatpush2.msra.mxu0 0.0
  %168 = vmatprep.subr.mxu0 0.0
  %169 = vmatpush2.msra.mxu0 0.0
  %170 = vmatprep.mubr.f32.mxu0 0.0
  %171 = vmatmul.mubr.f32.gmra.mxu0 %v85
  %v172 = vpop.f32.mrf.mxu0
  %v173 = vadd.f32 0.0, %v172
  %v174 = vpop.f32.mrf.mxu0
  %175 = vmatprep.mubr.f32.mxu0 0.0
  %176 = vmatmul.mubr.f32.gmra.mxu0 %v86
  %v177 = vpop.f32.mrf.mxu0
  %v178 = vadd.f32 0.0, %v177
  %v179 = vpop.f32.mrf.mxu0
  %180 = vmatprep.mubr.f32.mxu0 0.0
  %181 = vmatmul.mubr.f32.gmra.mxu0 %v87
  %v182 = vpop.f32.mrf.mxu0
  %v183 = vadd.f32 0.0, %v182
  %v184 = vpop.f32.mrf.mxu0
  %185 = vmatprep.mubr.f32.mxu0 0.0
  %186 = vmatmul.mubr.f32.gmra.mxu0 %v88
  %v187 = vpop.f32.mrf.mxu0
  %v188 = vadd.f32 0.0, %v187
  %v189 = vpop.f32.mrf.mxu0
  %190 = vdwg.mxu0
  %191 = vmatprep.subr.mxu0 0.0
  %192 = vmatpush1.msra.mxu0 %v64
  %193 = vmatprep.subr.mxu0 0.0
  %194 = vmatpush1.msra.mxu0 %v63
  %195 = vmatprep.subr.mxu0 0.0
  %196 = vmatpush1.msra.mxu0 %v62
  %197 = vmatprep.subr.mxu0 0.0
  %198 = vmatpush1.msra.mxu0 %v61
  %199 = vmatprep.subr.mxu0 0.0
  %200 = vmatpush1.msra.mxu0 %v60
  %201 = vmatprep.subr.mxu0 0.0
  %202 = vmatpush1.msra.mxu0 %v59
  %203 = vmatprep.subr.mxu0 0.0
  %204 = vmatpush1.msra.mxu0 %v58
  %205 = vmatprep.subr.mxu0 0.0
  %206 = vmatpush1.msra.mxu0 %v57
  %207 = vmatprep.subr.mxu0 0.0
  %208 = vmatpush1.msra.mxu0 %v56
  %209 = vmatprep.subr.mxu0 0.0
  %210 = vmatpush1.msra.mxu0 %v55
  %211 = vmatprep.subr.mxu0 0.0
  %212 = vmatpush1.msra.mxu0 %v54
  %213 = vmatprep.subr.mxu0 0.0
  %214 = vmatpush1.msra.mxu0 %v53
  %215 = vmatprep.subr.mxu0 0.0
  %216 = vmatpush1.msra.mxu0 %v52
  %217 = vmatprep.subr.mxu0 0.0
  %218 = vmatpush1.msra.mxu0 %v51
  %219 = vmatprep.subr.mxu0 0.0
  %220 = vmatpush1.msra.mxu0 %v50
  %221 = vmatprep.subr.mxu0 0.0
  %222 = vmatpush1.msra.mxu0 %v49
  %223 = vmatprep.subr.mxu0 0.0
  %224 = vmatpush2.msra.mxu0 0.0
  %225 = vmatprep.subr.mxu0 0.0
  %226 = vmatpush2.msra.mxu0 0.0
  %227 = vmatprep.subr.mxu0 0.0
  %228 = vmatpush2.msra.mxu0 0.0
  %229 = vmatprep.subr.mxu0 0.0
  %230 = vmatpush2.msra.mxu0 0.0
  %231 = vmatprep.subr.mxu0 0.0
  %232 = vmatpush2.msra.mxu0 0.0
  %233 = vmatprep.subr.mxu0 0.0
  %234 = vmatpush2.msra.mxu0 0.0
  %235 = vmatprep.subr.mxu0 0.0
  %236 = vmatpush2.msra.mxu0 0.0
  %237 = vmatprep.subr.mxu0 0.0
  %238 = vmatpush2.msra.mxu0 0.0
  %239 = vmatprep.subr.mxu0 0.0
  %240 = vmatpush2.msra.mxu0 0.0
  %241 = vmatprep.subr.mxu0 0.0
  %242 = vmatpush2.msra.mxu0 0.0
  %243 = vmatprep.subr.mxu0 0.0
  %244 = vmatpush2.msra.mxu0 0.0
  %245 = vmatprep.subr.mxu0 0.0
  %246 = vmatpush2.msra.mxu0 0.0
  %247 = vmatprep.subr.mxu0 0.0
  %248 = vmatpush2.msra.mxu0 0.0
  %249 = vmatprep.subr.mxu0 0.0
  %250 = vmatpush2.msra.mxu0 0.0
  %251 = vmatprep.subr.mxu0 0.0
  %252 = vmatpush2.msra.mxu0 0.0
  %253 = vmatprep.subr.mxu0 0.0
  %254 = vmatpush2.msra.mxu0 0.0
  %255 = vmatprep.mubr.f32.mxu0 0.0
  %256 = vmatmul.mubr.f32.gmra.mxu0 %v45
  %v257 = vpop.f32.mrf.mxu0
  %v258 = vadd.f32 %v173, %v257
  %v259 = vpop.f32.mrf.mxu0
  %260 = vmatprep.mubr.f32.mxu0 0.0
  %261 = vmatmul.mubr.f32.gmra.mxu0 %v46
  %v262 = vpop.f32.mrf.mxu0
  %v263 = vadd.f32 %v178, %v262
  %v264 = vpop.f32.mrf.mxu0
  %265 = vmatprep.mubr.f32.mxu0 0.0
  %266 = vmatmul.mubr.f32.gmra.mxu0 %v47
  %v267 = vpop.f32.mrf.mxu0
  %v268 = vadd.f32 %v183, %v267
  %v269 = vpop.f32.mrf.mxu0
  %270 = vmatprep.mubr.f32.mxu0 0.0
  %271 = vmatmul.mubr.f32.gmra.mxu0 %v48
  %v272 = vpop.f32.mrf.mxu0
  %v273 = vadd.f32 %v188, %v272
  %v274 = vpop.f32.mrf.mxu0
  %275 = vdwg.mxu0
  %v276 = vld [vmem:[%s0 + $0x2] sm:$0xf]
  %v277 = vld [vmem:[%s18 + $0x2] sm:$0xf]
  %v278 = vld [vmem:[%s20 + $0x2] sm:$0xf]
  %v279 = vld [vmem:[%s22 + $0x2] sm:$0xf]
  %v280 = vld [vmem:[%s24 + $0x2] sm:$0xf]
  %v281 = vld [vmem:[%s26 + $0x2] sm:$0xf]
  %v282 = vld [vmem:[%s28 + $0x2] sm:$0xf]
  %v283 = vld [vmem:[%s30 + $0x2] sm:$0xf]
  %v285 = vrot.slane %v277, 4
  %v288 = vrot.slane %v279, 4
  %v291 = vrot.slane %v281, 4
  %v294 = vrot.slane %v283, 4
  %v296 = vsel %vm44, %v276, %v285
  %v297 = vsel %vm44, %v278, %v288
  %v298 = vsel %vm44, %v280, %v291
  %v299 = vsel %vm44, %v282, %v294
  %s300 = scalar_lea.vmem %s1, 256
  %v301 = vld [vmem:[%s300] sm:$0xff]
  %v302 = vld [vmem:[%s300 + $0x8] sm:$0xff]
  %v303 = vld [vmem:[%s300 + $0x10] sm:$0xff]
  %v304 = vld [vmem:[%s300 + $0x18] sm:$0xff]
  %v305 = vld [vmem:[%s300 + $0x20] sm:$0xff]
  %v306 = vld [vmem:[%s300 + $0x28] sm:$0xff]
  %v307 = vld [vmem:[%s300 + $0x30] sm:$0xff]
  %v308 = vld [vmem:[%s300 + $0x38] sm:$0xff]
  %v309 = vld [vmem:[%s300 + $0x40] sm:$0xff]
  %v310 = vld [vmem:[%s300 + $0x48] sm:$0xff]
  %v311 = vld [vmem:[%s300 + $0x50] sm:$0xff]
  %v312 = vld [vmem:[%s300 + $0x58] sm:$0xff]
  %v313 = vld [vmem:[%s300 + $0x60] sm:$0xff]
  %v314 = vld [vmem:[%s300 + $0x68] sm:$0xff]
  %v315 = vld [vmem:[%s300 + $0x70] sm:$0xff]
  %v316 = vld [vmem:[%s300 + $0x78] sm:$0xff]
  %317 = vmatprep.subr.mxu0 0.0
  %318 = vmatpush1.msra.mxu0 %v316
  %319 = vmatprep.subr.mxu0 0.0
  %320 = vmatpush1.msra.mxu0 %v315
  %321 = vmatprep.subr.mxu0 0.0
  %322 = vmatpush1.msra.mxu0 %v314
  %323 = vmatprep.subr.mxu0 0.0
  %324 = vmatpush1.msra.mxu0 %v313
  %325 = vmatprep.subr.mxu0 0.0
  %326 = vmatpush1.msra.mxu0 %v312
  %327 = vmatprep.subr.mxu0 0.0
  %328 = vmatpush1.msra.mxu0 %v311
  %329 = vmatprep.subr.mxu0 0.0
  %330 = vmatpush1.msra.mxu0 %v310
  %331 = vmatprep.subr.mxu0 0.0
  %332 = vmatpush1.msra.mxu0 %v309
  %333 = vmatprep.subr.mxu0 0.0
  %334 = vmatpush1.msra.mxu0 %v308
  %335 = vmatprep.subr.mxu0 0.0
  %336 = vmatpush1.msra.mxu0 %v307
  %337 = vmatprep.subr.mxu0 0.0
  %338 = vmatpush1.msra.mxu0 %v306
  %339 = vmatprep.subr.mxu0 0.0
  %340 = vmatpush1.msra.mxu0 %v305
  %341 = vmatprep.subr.mxu0 0.0
  %342 = vmatpush1.msra.mxu0 %v304
  %343 = vmatprep.subr.mxu0 0.0
  %344 = vmatpush1.msra.mxu0 %v303
  %345 = vmatprep.subr.mxu0 0.0
  %346 = vmatpush1.msra.mxu0 %v302
  %347 = vmatprep.subr.mxu0 0.0
  %348 = vmatpush1.msra.mxu0 %v301
  %349 = vmatprep.subr.mxu0 0.0
  %350 = vmatpush2.msra.mxu0 0.0
  %351 = vmatprep.subr.mxu0 0.0
  %352 = vmatpush2.msra.mxu0 0.0
  %353 = vmatprep.subr.mxu0 0.0
  %354 = vmatpush2.msra.mxu0 0.0
  %355 = vmatprep.subr.mxu0 0.0
  %356 = vmatpush2.msra.mxu0 0.0
  %357 = vmatprep.subr.mxu0 0.0
  %358 = vmatpush2.msra.mxu0 0.0
  %359 = vmatprep.subr.mxu0 0.0
  %360 = vmatpush2.msra.mxu0 0.0
  %361 = vmatprep.subr.mxu0 0.0
  %362 = vmatpush2.msra.mxu0 0.0
  %363 = vmatprep.subr.mxu0 0.0
  %364 = vmatpush2.msra.mxu0 0.0
  %365 = vmatprep.subr.mxu0 0.0
  %366 = vmatpush2.msra.mxu0 0.0
  %367 = vmatprep.subr.mxu0 0.0
  %368 = vmatpush2.msra.mxu0 0.0
  %369 = vmatprep.subr.mxu0 0.0
  %370 = vmatpush2.msra.mxu0 0.0
  %371 = vmatprep.subr.mxu0 0.0
  %372 = vmatpush2.msra.mxu0 0.0
  %373 = vmatprep.subr.mxu0 0.0
  %374 = vmatpush2.msra.mxu0 0.0
  %375 = vmatprep.subr.mxu0 0.0
  %376 = vmatpush2.msra.mxu0 0.0
  %377 = vmatprep.subr.mxu0 0.0
  %378 = vmatpush2.msra.mxu0 0.0
  %379 = vmatprep.subr.mxu0 0.0
  %380 = vmatpush2.msra.mxu0 0.0
  %381 = vmatprep.mubr.f32.mxu0 0.0
  %382 = vmatmul.mubr.f32.gmra.mxu0 %v296
  %v383 = vpop.f32.mrf.mxu0
  %v384 = vadd.f32 0.0, %v383
  %v385 = vpop.f32.mrf.mxu0
  %386 = vmatprep.mubr.f32.mxu0 0.0
  %387 = vmatmul.mubr.f32.gmra.mxu0 %v297
  %v388 = vpop.f32.mrf.mxu0
  %v389 = vadd.f32 0.0, %v388
  %v390 = vpop.f32.mrf.mxu0
  %391 = vmatprep.mubr.f32.mxu0 0.0
  %392 = vmatmul.mubr.f32.gmra.mxu0 %v298
  %v393 = vpop.f32.mrf.mxu0
  %v394 = vadd.f32 0.0, %v393
  %v395 = vpop.f32.mrf.mxu0
  %396 = vmatprep.mubr.f32.mxu0 0.0
  %397 = vmatmul.mubr.f32.gmra.mxu0 %v299
  %v398 = vpop.f32.mrf.mxu0
  %v399 = vadd.f32 0.0, %v398
  %v400 = vpop.f32.mrf.mxu0
  %401 = vdwg.mxu0
  %v402 = vadd.f32 %v258, %v384
  %v403 = vadd.f32 %v263, %v389
  %v404 = vadd.f32 %v268, %v394
  %v405 = vadd.f32 %v273, %v399
  %s406 = scalar_lea.vmem %s0, 32
  %v407 = vld [vmem:[%s406] sm:$0xf]
  %s408 = scalar_lea.vmem %s0, 80
  %v409 = vld [vmem:[%s408] sm:$0xf]
  %v411 = vrot.slane %v21, 4
  %v414 = vrot.slane %v407, 4
  %v417 = vrot.slane %v29, 4
  %v420 = vrot.slane %v409, 4
  %v422 = vsel %vm44, %v19, %v411
  %v423 = vsel %vm44, %v23, %v414
  %v424 = vsel %vm44, %v27, %v417
  %v425 = vsel %vm44, %v31, %v420
  %s426 = scalar_lea.vmem %s1, 384
  %v427 = vld [vmem:[%s426] sm:$0xff]
  %v428 = vld [vmem:[%s426 + $0x8] sm:$0xff]
  %v429 = vld [vmem:[%s426 + $0x10] sm:$0xff]
  %v430 = vld [vmem:[%s426 + $0x18] sm:$0xff]
  %v431 = vld [vmem:[%s426 + $0x20] sm:$0xff]
  %v432 = vld [vmem:[%s426 + $0x28] sm:$0xff]
  %v433 = vld [vmem:[%s426 + $0x30] sm:$0xff]
  %v434 = vld [vmem:[%s426 + $0x38] sm:$0xff]
  %v435 = vld [vmem:[%s426 + $0x40] sm:$0xff]
  %v436 = vld [vmem:[%s426 + $0x48] sm:$0xff]
  %v437 = vld [vmem:[%s426 + $0x50] sm:$0xff]
  %v438 = vld [vmem:[%s426 + $0x58] sm:$0xff]
  %v439 = vld [vmem:[%s426 + $0x60] sm:$0xff]
  %v440 = vld [vmem:[%s426 + $0x68] sm:$0xff]
  %v441 = vld [vmem:[%s426 + $0x70] sm:$0xff]
  %v442 = vld [vmem:[%s426 + $0x78] sm:$0xff]
  %443 = vmatprep.subr.mxu0 0.0
  %444 = vmatpush1.msra.mxu0 %v442
  %445 = vmatprep.subr.mxu0 0.0
  %446 = vmatpush1.msra.mxu0 %v441
  %447 = vmatprep.subr.mxu0 0.0
  %448 = vmatpush1.msra.mxu0 %v440
  %449 = vmatprep.subr.mxu0 0.0
  %450 = vmatpush1.msra.mxu0 %v439
  %451 = vmatprep.subr.mxu0 0.0
  %452 = vmatpush1.msra.mxu0 %v438
  %453 = vmatprep.subr.mxu0 0.0
  %454 = vmatpush1.msra.mxu0 %v437
  %455 = vmatprep.subr.mxu0 0.0
  %456 = vmatpush1.msra.mxu0 %v436
  %457 = vmatprep.subr.mxu0 0.0
  %458 = vmatpush1.msra.mxu0 %v435
  %459 = vmatprep.subr.mxu0 0.0
  %460 = vmatpush1.msra.mxu0 %v434
  %461 = vmatprep.subr.mxu0 0.0
  %462 = vmatpush1.msra.mxu0 %v433
  %463 = vmatprep.subr.mxu0 0.0
  %464 = vmatpush1.msra.mxu0 %v432
  %465 = vmatprep.subr.mxu0 0.0
  %466 = vmatpush1.msra.mxu0 %v431
  %467 = vmatprep.subr.mxu0 0.0
  %468 = vmatpush1.msra.mxu0 %v430
  %469 = vmatprep.subr.mxu0 0.0
  %470 = vmatpush1.msra.mxu0 %v429
  %471 = vmatprep.subr.mxu0 0.0
  %472 = vmatpush1.msra.mxu0 %v428
  %473 = vmatprep.subr.mxu0 0.0
  %474 = vmatpush1.msra.mxu0 %v427
  %475 = vmatprep.subr.mxu0 0.0
  %476 = vmatpush2.msra.mxu0 0.0
  %477 = vmatprep.subr.mxu0 0.0
  %478 = vmatpush2.msra.mxu0 0.0
  %479 = vmatprep.subr.mxu0 0.0
  %480 = vmatpush2.msra.mxu0 0.0
  %481 = vmatprep.subr.mxu0 0.0
  %482 = vmatpush2.msra.mxu0 0.0
  %483 = vmatprep.subr.mxu0 0.0
  %484 = vmatpush2.msra.mxu0 0.0
  %485 = vmatprep.subr.mxu0 0.0
  %486 = vmatpush2.msra.mxu0 0.0
  %487 = vmatprep.subr.mxu0 0.0
  %488 = vmatpush2.msra.mxu0 0.0
  %489 = vmatprep.subr.mxu0 0.0
  %490 = vmatpush2.msra.mxu0 0.0
  %491 = vmatprep.subr.mxu0 0.0
  %492 = vmatpush2.msra.mxu0 0.0
  %493 = vmatprep.subr.mxu0 0.0
  %494 = vmatpush2.msra.mxu0 0.0
  %495 = vmatprep.subr.mxu0 0.0
  %496 = vmatpush2.msra.mxu0 0.0
  %497 = vmatprep.subr.mxu0 0.0
  %498 = vmatpush2.msra.mxu0 0.0
  %499 = vmatprep.subr.mxu0 0.0
  %500 = vmatpush2.msra.mxu0 0.0
  %501 = vmatprep.subr.mxu0 0.0
  %502 = vmatpush2.msra.mxu0 0.0
  %503 = vmatprep.subr.mxu0 0.0
  %504 = vmatpush2.msra.mxu0 0.0
  %505 = vmatprep.subr.mxu0 0.0
  %506 = vmatpush2.msra.mxu0 0.0
  %507 = vmatprep.mubr.f32.mxu0 0.0
  %508 = vmatmul.mubr.f32.gmra.mxu0 %v422
  %v509 = vpop.f32.mrf.mxu0
  %v510 = vadd.f32 0.0, %v509
  %v511 = vpop.f32.mrf.mxu0
  %512 = vmatprep.mubr.f32.mxu0 0.0
  %513 = vmatmul.mubr.f32.gmra.mxu0 %v423
  %v514 = vpop.f32.mrf.mxu0
  %v515 = vadd.f32 0.0, %v514
  %v516 = vpop.f32.mrf.mxu0
  %517 = vmatprep.mubr.f32.mxu0 0.0
  %518 = vmatmul.mubr.f32.gmra.mxu0 %v424
  %v519 = vpop.f32.mrf.mxu0
  %v520 = vadd.f32 0.0, %v519
  %v521 = vpop.f32.mrf.mxu0
  %522 = vmatprep.mubr.f32.mxu0 0.0
  %523 = vmatmul.mubr.f32.gmra.mxu0 %v425
  %v524 = vpop.f32.mrf.mxu0
  %v525 = vadd.f32 0.0, %v524
  %v526 = vpop.f32.mrf.mxu0
  %527 = vdwg.mxu0
  %v528 = vadd.f32 %v402, %v510
  %v529 = vadd.f32 %v403, %v515
  %v530 = vadd.f32 %v404, %v520
  %v531 = vadd.f32 %v405, %v525
  %v532 = vld [vmem:[%s406 + $0x1] sm:$0xf]
  %v533 = vld [vmem:[%s408 + $0x1] sm:$0xf]
  %v535 = vrot.slane %v67, 4
  %v538 = vrot.slane %v532, 4
  %v541 = vrot.slane %v71, 4
  %v544 = vrot.slane %v533, 4
  %v546 = vsel %vm44, %v66, %v535
  %v547 = vsel %vm44, %v68, %v538
  %v548 = vsel %vm44, %v70, %v541
  %v549 = vsel %vm44, %v72, %v544
  %s550 = scalar_lea.vmem %s1, 512
  %v551 = vld [vmem:[%s550] sm:$0xff]
  %v552 = vld [vmem:[%s550 + $0x8] sm:$0xff]
  %v553 = vld [vmem:[%s550 + $0x10] sm:$0xff]
  %v554 = vld [vmem:[%s550 + $0x18] sm:$0xff]
  %v555 = vld [vmem:[%s550 + $0x20] sm:$0xff]
  %v556 = vld [vmem:[%s550 + $0x28] sm:$0xff]
  %v557 = vld [vmem:[%s550 + $0x30] sm:$0xff]
  %v558 = vld [vmem:[%s550 + $0x38] sm:$0xff]
  %v559 = vld [vmem:[%s550 + $0x40] sm:$0xff]
  %v560 = vld [vmem:[%s550 + $0x48] sm:$0xff]
  %v561 = vld [vmem:[%s550 + $0x50] sm:$0xff]
  %v562 = vld [vmem:[%s550 + $0x58] sm:$0xff]
  %v563 = vld [vmem:[%s550 + $0x60] sm:$0xff]
  %v564 = vld [vmem:[%s550 + $0x68] sm:$0xff]
  %v565 = vld [vmem:[%s550 + $0x70] sm:$0xff]
  %v566 = vld [vmem:[%s550 + $0x78] sm:$0xff]
  %567 = vmatprep.subr.mxu0 0.0
  %568 = vmatpush1.msra.mxu0 %v566
  %569 = vmatprep.subr.mxu0 0.0
  %570 = vmatpush1.msra.mxu0 %v565
  %571 = vmatprep.subr.mxu0 0.0
  %572 = vmatpush1.msra.mxu0 %v564
  %573 = vmatprep.subr.mxu0 0.0
  %574 = vmatpush1.msra.mxu0 %v563
  %575 = vmatprep.subr.mxu0 0.0
  %576 = vmatpush1.msra.mxu0 %v562
  %577 = vmatprep.subr.mxu0 0.0
  %578 = vmatpush1.msra.mxu0 %v561
  %579 = vmatprep.subr.mxu0 0.0
  %580 = vmatpush1.msra.mxu0 %v560
  %581 = vmatprep.subr.mxu0 0.0
  %582 = vmatpush1.msra.mxu0 %v559
  %583 = vmatprep.subr.mxu0 0.0
  %584 = vmatpush1.msra.mxu0 %v558
  %585 = vmatprep.subr.mxu0 0.0
  %586 = vmatpush1.msra.mxu0 %v557
  %587 = vmatprep.subr.mxu0 0.0
  %588 = vmatpush1.msra.mxu0 %v556
  %589 = vmatprep.subr.mxu0 0.0
  %590 = vmatpush1.msra.mxu0 %v555
  %591 = vmatprep.subr.mxu0 0.0
  %592 = vmatpush1.msra.mxu0 %v554
  %593 = vmatprep.subr.mxu0 0.0
  %594 = vmatpush1.msra.mxu0 %v553
  %595 = vmatprep.subr.mxu0 0.0
  %596 = vmatpush1.msra.mxu0 %v552
  %597 = vmatprep.subr.mxu0 0.0
  %598 = vmatpush1.msra.mxu0 %v551
  %599 = vmatprep.subr.mxu0 0.0
  %600 = vmatpush2.msra.mxu0 0.0
  %601 = vmatprep.subr.mxu0 0.0
  %602 = vmatpush2.msra.mxu0 0.0
  %603 = vmatprep.subr.mxu0 0.0
  %604 = vmatpush2.msra.mxu0 0.0
  %605 = vmatprep.subr.mxu0 0.0
  %606 = vmatpush2.msra.mxu0 0.0
  %607 = vmatprep.subr.mxu0 0.0
  %608 = vmatpush2.msra.mxu0 0.0
  %609 = vmatprep.subr.mxu0 0.0
  %610 = vmatpush2.msra.mxu0 0.0
  %611 = vmatprep.subr.mxu0 0.0
  %612 = vmatpush2.msra.mxu0 0.0
  %613 = vmatprep.subr.mxu0 0.0
  %614 = vmatpush2.msra.mxu0 0.0
  %615 = vmatprep.subr.mxu0 0.0
  %616 = vmatpush2.msra.mxu0 0.0
  %617 = vmatprep.subr.mxu0 0.0
  %618 = vmatpush2.msra.mxu0 0.0
  %619 = vmatprep.subr.mxu0 0.0
  %620 = vmatpush2.msra.mxu0 0.0
  %621 = vmatprep.subr.mxu0 0.0
  %622 = vmatpush2.msra.mxu0 0.0
  %623 = vmatprep.subr.mxu0 0.0
  %624 = vmatpush2.msra.mxu0 0.0
  %625 = vmatprep.subr.mxu0 0.0
  %626 = vmatpush2.msra.mxu0 0.0
  %627 = vmatprep.subr.mxu0 0.0
  %628 = vmatpush2.msra.mxu0 0.0
  %629 = vmatprep.subr.mxu0 0.0
  %630 = vmatpush2.msra.mxu0 0.0
  %631 = vmatprep.mubr.f32.mxu0 0.0
  %632 = vmatmul.mubr.f32.gmra.mxu0 %v546
  %v633 = vpop.f32.mrf.mxu0
  %v634 = vadd.f32 0.0, %v633
  %v635 = vpop.f32.mrf.mxu0
  %636 = vmatprep.mubr.f32.mxu0 0.0
  %637 = vmatmul.mubr.f32.gmra.mxu0 %v547
  %v638 = vpop.f32.mrf.mxu0
  %v639 = vadd.f32 0.0, %v638
  %v640 = vpop.f32.mrf.mxu0
  %641 = vmatprep.mubr.f32.mxu0 0.0
  %642 = vmatmul.mubr.f32.gmra.mxu0 %v548
  %v643 = vpop.f32.mrf.mxu0
  %v644 = vadd.f32 0.0, %v643
  %v645 = vpop.f32.mrf.mxu0
  %646 = vmatprep.mubr.f32.mxu0 0.0
  %647 = vmatmul.mubr.f32.gmra.mxu0 %v549
  %v648 = vpop.f32.mrf.mxu0
  %v649 = vadd.f32 0.0, %v648
  %v650 = vpop.f32.mrf.mxu0
  %651 = vdwg.mxu0
  %v652 = vadd.f32 %v528, %v634
  %v653 = vadd.f32 %v529, %v639
  %v654 = vadd.f32 %v530, %v644
  %v655 = vadd.f32 %v531, %v649
  %v656 = vld [vmem:[%s406 + $0x2] sm:$0xf]
  %v657 = vld [vmem:[%s408 + $0x2] sm:$0xf]
  %v659 = vrot.slane %v278, 4
  %v662 = vrot.slane %v656, 4
  %v665 = vrot.slane %v282, 4
  %v668 = vrot.slane %v657, 4
  %v670 = vsel %vm44, %v277, %v659
  %v671 = vsel %vm44, %v279, %v662
  %v672 = vsel %vm44, %v281, %v665
  %v673 = vsel %vm44, %v283, %v668
  %s674 = scalar_lea.vmem %s1, 640
  %v675 = vld [vmem:[%s674] sm:$0xff]
  %v676 = vld [vmem:[%s674 + $0x8] sm:$0xff]
  %v677 = vld [vmem:[%s674 + $0x10] sm:$0xff]
  %v678 = vld [vmem:[%s674 + $0x18] sm:$0xff]
  %v679 = vld [vmem:[%s674 + $0x20] sm:$0xff]
  %v680 = vld [vmem:[%s674 + $0x28] sm:$0xff]
  %v681 = vld [vmem:[%s674 + $0x30] sm:$0xff]
  %v682 = vld [vmem:[%s674 + $0x38] sm:$0xff]
  %v683 = vld [vmem:[%s674 + $0x40] sm:$0xff]
  %v684 = vld [vmem:[%s674 + $0x48] sm:$0xff]
  %v685 = vld [vmem:[%s674 + $0x50] sm:$0xff]
  %v686 = vld [vmem:[%s674 + $0x58] sm:$0xff]
  %v687 = vld [vmem:[%s674 + $0x60] sm:$0xff]
  %v688 = vld [vmem:[%s674 + $0x68] sm:$0xff]
  %v689 = vld [vmem:[%s674 + $0x70] sm:$0xff]
  %v690 = vld [vmem:[%s674 + $0x78] sm:$0xff]
  %691 = vmatprep.subr.mxu0 0.0
  %692 = vmatpush1.msra.mxu0 %v690
  %693 = vmatprep.subr.mxu0 0.0
  %694 = vmatpush1.msra.mxu0 %v689
  %695 = vmatprep.subr.mxu0 0.0
  %696 = vmatpush1.msra.mxu0 %v688
  %697 = vmatprep.subr.mxu0 0.0
  %698 = vmatpush1.msra.mxu0 %v687
  %699 = vmatprep.subr.mxu0 0.0
  %700 = vmatpush1.msra.mxu0 %v686
  %701 = vmatprep.subr.mxu0 0.0
  %702 = vmatpush1.msra.mxu0 %v685
  %703 = vmatprep.subr.mxu0 0.0
  %704 = vmatpush1.msra.mxu0 %v684
  %705 = vmatprep.subr.mxu0 0.0
  %706 = vmatpush1.msra.mxu0 %v683
  %707 = vmatprep.subr.mxu0 0.0
  %708 = vmatpush1.msra.mxu0 %v682
  %709 = vmatprep.subr.mxu0 0.0
  %710 = vmatpush1.msra.mxu0 %v681
  %711 = vmatprep.subr.mxu0 0.0
  %712 = vmatpush1.msra.mxu0 %v680
  %713 = vmatprep.subr.mxu0 0.0
  %714 = vmatpush1.msra.mxu0 %v679
  %715 = vmatprep.subr.mxu0 0.0
  %716 = vmatpush1.msra.mxu0 %v678
  %717 = vmatprep.subr.mxu0 0.0
  %718 = vmatpush1.msra.mxu0 %v677
  %719 = vmatprep.subr.mxu0 0.0
  %720 = vmatpush1.msra.mxu0 %v676
  %721 = vmatprep.subr.mxu0 0.0
  %722 = vmatpush1.msra.mxu0 %v675
  %723 = vmatprep.subr.mxu0 0.0
  %724 = vmatpush2.msra.mxu0 0.0
  %725 = vmatprep.subr.mxu0 0.0
  %726 = vmatpush2.msra.mxu0 0.0
  %727 = vmatprep.subr.mxu0 0.0
  %728 = vmatpush2.msra.mxu0 0.0
  %729 = vmatprep.subr.mxu0 0.0
  %730 = vmatpush2.msra.mxu0 0.0
  %731 = vmatprep.subr.mxu0 0.0
  %732 = vmatpush2.msra.mxu0 0.0
  %733 = vmatprep.subr.mxu0 0.0
  %734 = vmatpush2.msra.mxu0 0.0
  %735 = vmatprep.subr.mxu0 0.0
  %736 = vmatpush2.msra.mxu0 0.0
  %737 = vmatprep.subr.mxu0 0.0
  %738 = vmatpush2.msra.mxu0 0.0
  %739 = vmatprep.subr.mxu0 0.0
  %740 = vmatpush2.msra.mxu0 0.0
  %741 = vmatprep.subr.mxu0 0.0
  %742 = vmatpush2.msra.mxu0 0.0
  %743 = vmatprep.subr.mxu0 0.0
  %744 = vmatpush2.msra.mxu0 0.0
  %745 = vmatprep.subr.mxu0 0.0
  %746 = vmatpush2.msra.mxu0 0.0
  %747 = vmatprep.subr.mxu0 0.0
  %748 = vmatpush2.msra.mxu0 0.0
  %749 = vmatprep.subr.mxu0 0.0
  %750 = vmatpush2.msra.mxu0 0.0
  %751 = vmatprep.subr.mxu0 0.0
  %752 = vmatpush2.msra.mxu0 0.0
  %753 = vmatprep.subr.mxu0 0.0
  %754 = vmatpush2.msra.mxu0 0.0
  %755 = vmatprep.mubr.f32.mxu0 0.0
  %756 = vmatmul.mubr.f32.gmra.mxu0 %v670
  %v757 = vpop.f32.mrf.mxu0
  %v758 = vadd.f32 0.0, %v757
  %v759 = vpop.f32.mrf.mxu0
  %760 = vmatprep.mubr.f32.mxu0 0.0
  %761 = vmatmul.mubr.f32.gmra.mxu0 %v671
  %v762 = vpop.f32.mrf.mxu0
  %v763 = vadd.f32 0.0, %v762
  %v764 = vpop.f32.mrf.mxu0
  %765 = vmatprep.mubr.f32.mxu0 0.0
  %766 = vmatmul.mubr.f32.gmra.mxu0 %v672
  %v767 = vpop.f32.mrf.mxu0
  %v768 = vadd.f32 0.0, %v767
  %v769 = vpop.f32.mrf.mxu0
  %770 = vmatprep.mubr.f32.mxu0 0.0
  %771 = vmatmul.mubr.f32.gmra.mxu0 %v673
  %v772 = vpop.f32.mrf.mxu0
  %v773 = vadd.f32 0.0, %v772
  %v774 = vpop.f32.mrf.mxu0
  %775 = vdwg.mxu0
  %v776 = vadd.f32 %v652, %v758
  %v777 = vadd.f32 %v653, %v763
  %v778 = vadd.f32 %v654, %v768
  %v779 = vadd.f32 %v655, %v773
  %s780 = scalar_lea.vmem %s0, 40
  %v781 = vld [vmem:[%s780] sm:$0xf]
  %s782 = scalar_lea.vmem %s0, 88
  %v783 = vld [vmem:[%s782] sm:$0xf]
  %v785 = vrot.slane %v781, 4
  %v788 = vrot.slane %v783, 4
  %v790 = vsel %vm44, %v407, %v785
  %v791 = vsel %vm44, %v409, %v788
  %s792 = scalar_lea.vmem %s1, 768
  %v793 = vld [vmem:[%s792] sm:$0xff]
  %v794 = vld [vmem:[%s792 + $0x8] sm:$0xff]
  %v795 = vld [vmem:[%s792 + $0x10] sm:$0xff]
  %v796 = vld [vmem:[%s792 + $0x18] sm:$0xff]
  %v797 = vld [vmem:[%s792 + $0x20] sm:$0xff]
  %v798 = vld [vmem:[%s792 + $0x28] sm:$0xff]
  %v799 = vld [vmem:[%s792 + $0x30] sm:$0xff]
  %v800 = vld [vmem:[%s792 + $0x38] sm:$0xff]
  %v801 = vld [vmem:[%s792 + $0x40] sm:$0xff]
  %v802 = vld [vmem:[%s792 + $0x48] sm:$0xff]
  %v803 = vld [vmem:[%s792 + $0x50] sm:$0xff]
  %v804 = vld [vmem:[%s792 + $0x58] sm:$0xff]
  %v805 = vld [vmem:[%s792 + $0x60] sm:$0xff]
  %v806 = vld [vmem:[%s792 + $0x68] sm:$0xff]
  %v807 = vld [vmem:[%s792 + $0x70] sm:$0xff]
  %v808 = vld [vmem:[%s792 + $0x78] sm:$0xff]
  %809 = vmatprep.subr.mxu0 0.0
  %810 = vmatpush1.msra.mxu0 %v808
  %811 = vmatprep.subr.mxu0 0.0
  %812 = vmatpush1.msra.mxu0 %v807
  %813 = vmatprep.subr.mxu0 0.0
  %814 = vmatpush1.msra.mxu0 %v806
  %815 = vmatprep.subr.mxu0 0.0
  %816 = vmatpush1.msra.mxu0 %v805
  %817 = vmatprep.subr.mxu0 0.0
  %818 = vmatpush1.msra.mxu0 %v804
  %819 = vmatprep.subr.mxu0 0.0
  %820 = vmatpush1.msra.mxu0 %v803
  %821 = vmatprep.subr.mxu0 0.0
  %822 = vmatpush1.msra.mxu0 %v802
  %823 = vmatprep.subr.mxu0 0.0
  %824 = vmatpush1.msra.mxu0 %v801
  %825 = vmatprep.subr.mxu0 0.0
  %826 = vmatpush1.msra.mxu0 %v800
  %827 = vmatprep.subr.mxu0 0.0
  %828 = vmatpush1.msra.mxu0 %v799
  %829 = vmatprep.subr.mxu0 0.0
  %830 = vmatpush1.msra.mxu0 %v798
  %831 = vmatprep.subr.mxu0 0.0
  %832 = vmatpush1.msra.mxu0 %v797
  %833 = vmatprep.subr.mxu0 0.0
  %834 = vmatpush1.msra.mxu0 %v796
  %835 = vmatprep.subr.mxu0 0.0
  %836 = vmatpush1.msra.mxu0 %v795
  %837 = vmatprep.subr.mxu0 0.0
  %838 = vmatpush1.msra.mxu0 %v794
  %839 = vmatprep.subr.mxu0 0.0
  %840 = vmatpush1.msra.mxu0 %v793
  %841 = vmatprep.subr.mxu0 0.0
  %842 = vmatpush2.msra.mxu0 0.0
  %843 = vmatprep.subr.mxu0 0.0
  %844 = vmatpush2.msra.mxu0 0.0
  %845 = vmatprep.subr.mxu0 0.0
  %846 = vmatpush2.msra.mxu0 0.0
  %847 = vmatprep.subr.mxu0 0.0
  %848 = vmatpush2.msra.mxu0 0.0
  %849 = vmatprep.subr.mxu0 0.0
  %850 = vmatpush2.msra.mxu0 0.0
  %851 = vmatprep.subr.mxu0 0.0
  %852 = vmatpush2.msra.mxu0 0.0
  %853 = vmatprep.subr.mxu0 0.0
  %854 = vmatpush2.msra.mxu0 0.0
  %855 = vmatprep.subr.mxu0 0.0
  %856 = vmatpush2.msra.mxu0 0.0
  %857 = vmatprep.subr.mxu0 0.0
  %858 = vmatpush2.msra.mxu0 0.0
  %859 = vmatprep.subr.mxu0 0.0
  %860 = vmatpush2.msra.mxu0 0.0
  %861 = vmatprep.subr.mxu0 0.0
  %862 = vmatpush2.msra.mxu0 0.0
  %863 = vmatprep.subr.mxu0 0.0
  %864 = vmatpush2.msra.mxu0 0.0
  %865 = vmatprep.subr.mxu0 0.0
  %866 = vmatpush2.msra.mxu0 0.0
  %867 = vmatprep.subr.mxu0 0.0
  %868 = vmatpush2.msra.mxu0 0.0
  %869 = vmatprep.subr.mxu0 0.0
  %870 = vmatpush2.msra.mxu0 0.0
  %871 = vmatprep.subr.mxu0 0.0
  %872 = vmatpush2.msra.mxu0 0.0
  %873 = vmatprep.mubr.f32.mxu0 0.0
  %874 = vmatmul.mubr.f32.gmra.mxu0 %v46
  %v875 = vpop.f32.mrf.mxu0
  %v876 = vadd.f32 0.0, %v875
  %v877 = vpop.f32.mrf.mxu0
  %878 = vmatprep.mubr.f32.mxu0 0.0
  %879 = vmatmul.mubr.f32.gmra.mxu0 %v790
  %v880 = vpop.f32.mrf.mxu0
  %v881 = vadd.f32 0.0, %v880
  %v882 = vpop.f32.mrf.mxu0
  %883 = vmatprep.mubr.f32.mxu0 0.0
  %884 = vmatmul.mubr.f32.gmra.mxu0 %v48
  %v885 = vpop.f32.mrf.mxu0
  %v886 = vadd.f32 0.0, %v885
  %v887 = vpop.f32.mrf.mxu0
  %888 = vmatprep.mubr.f32.mxu0 0.0
  %889 = vmatmul.mubr.f32.gmra.mxu0 %v791
  %v890 = vpop.f32.mrf.mxu0
  %v891 = vadd.f32 0.0, %v890
  %v892 = vpop.f32.mrf.mxu0
  %893 = vdwg.mxu0
  %v894 = vadd.f32 %v776, %v876
  %v895 = vadd.f32 %v777, %v881
  %v896 = vadd.f32 %v778, %v886
  %v897 = vadd.f32 %v779, %v891
  %v898 = vld [vmem:[%s780 + $0x1] sm:$0xf]
  %v899 = vld [vmem:[%s782 + $0x1] sm:$0xf]
  %v901 = vrot.slane %v898, 4
  %v904 = vrot.slane %v899, 4
  %v906 = vsel %vm44, %v532, %v901
  %v907 = vsel %vm44, %v533, %v904
  %s908 = scalar_lea.vmem %s1, 896
  %v909 = vld [vmem:[%s908] sm:$0xff]
  %v910 = vld [vmem:[%s908 + $0x8] sm:$0xff]
  %v911 = vld [vmem:[%s908 + $0x10] sm:$0xff]
  %v912 = vld [vmem:[%s908 + $0x18] sm:$0xff]
  %v913 = vld [vmem:[%s908 + $0x20] sm:$0xff]
  %v914 = vld [vmem:[%s908 + $0x28] sm:$0xff]
  %v915 = vld [vmem:[%s908 + $0x30] sm:$0xff]
  %v916 = vld [vmem:[%s908 + $0x38] sm:$0xff]
  %v917 = vld [vmem:[%s908 + $0x40] sm:$0xff]
  %v918 = vld [vmem:[%s908 + $0x48] sm:$0xff]
  %v919 = vld [vmem:[%s908 + $0x50] sm:$0xff]
  %v920 = vld [vmem:[%s908 + $0x58] sm:$0xff]
  %v921 = vld [vmem:[%s908 + $0x60] sm:$0xff]
  %v922 = vld [vmem:[%s908 + $0x68] sm:$0xff]
  %v923 = vld [vmem:[%s908 + $0x70] sm:$0xff]
  %v924 = vld [vmem:[%s908 + $0x78] sm:$0xff]
  %925 = vmatprep.subr.mxu0 0.0
  %926 = vmatpush1.msra.mxu0 %v924
  %927 = vmatprep.subr.mxu0 0.0
  %928 = vmatpush1.msra.mxu0 %v923
  %929 = vmatprep.subr.mxu0 0.0
  %930 = vmatpush1.msra.mxu0 %v922
  %931 = vmatprep.subr.mxu0 0.0
  %932 = vmatpush1.msra.mxu0 %v921
  %933 = vmatprep.subr.mxu0 0.0
  %934 = vmatpush1.msra.mxu0 %v920
  %935 = vmatprep.subr.mxu0 0.0
  %936 = vmatpush1.msra.mxu0 %v919
  %937 = vmatprep.subr.mxu0 0.0
  %938 = vmatpush1.msra.mxu0 %v918
  %939 = vmatprep.subr.mxu0 0.0
  %940 = vmatpush1.msra.mxu0 %v917
  %941 = vmatprep.subr.mxu0 0.0
  %942 = vmatpush1.msra.mxu0 %v916
  %943 = vmatprep.subr.mxu0 0.0
  %944 = vmatpush1.msra.mxu0 %v915
  %945 = vmatprep.subr.mxu0 0.0
  %946 = vmatpush1.msra.mxu0 %v914
  %947 = vmatprep.subr.mxu0 0.0
  %948 = vmatpush1.msra.mxu0 %v913
  %949 = vmatprep.subr.mxu0 0.0
  %950 = vmatpush1.msra.mxu0 %v912
  %951 = vmatprep.subr.mxu0 0.0
  %952 = vmatpush1.msra.mxu0 %v911
  %953 = vmatprep.subr.mxu0 0.0
  %954 = vmatpush1.msra.mxu0 %v910
  %955 = vmatprep.subr.mxu0 0.0
  %956 = vmatpush1.msra.mxu0 %v909
  %957 = vmatprep.subr.mxu0 0.0
  %958 = vmatpush2.msra.mxu0 0.0
  %959 = vmatprep.subr.mxu0 0.0
  %960 = vmatpush2.msra.mxu0 0.0
  %961 = vmatprep.subr.mxu0 0.0
  %962 = vmatpush2.msra.mxu0 0.0
  %963 = vmatprep.subr.mxu0 0.0
  %964 = vmatpush2.msra.mxu0 0.0
  %965 = vmatprep.subr.mxu0 0.0
  %966 = vmatpush2.msra.mxu0 0.0
  %967 = vmatprep.subr.mxu0 0.0
  %968 = vmatpush2.msra.mxu0 0.0
  %969 = vmatprep.subr.mxu0 0.0
  %970 = vmatpush2.msra.mxu0 0.0
  %971 = vmatprep.subr.mxu0 0.0
  %972 = vmatpush2.msra.mxu0 0.0
  %973 = vmatprep.subr.mxu0 0.0
  %974 = vmatpush2.msra.mxu0 0.0
  %975 = vmatprep.subr.mxu0 0.0
  %976 = vmatpush2.msra.mxu0 0.0
  %977 = vmatprep.subr.mxu0 0.0
  %978 = vmatpush2.msra.mxu0 0.0
  %979 = vmatprep.subr.mxu0 0.0
  %980 = vmatpush2.msra.mxu0 0.0
  %981 = vmatprep.subr.mxu0 0.0
  %982 = vmatpush2.msra.mxu0 0.0
  %983 = vmatprep.subr.mxu0 0.0
  %984 = vmatpush2.msra.mxu0 0.0
  %985 = vmatprep.subr.mxu0 0.0
  %986 = vmatpush2.msra.mxu0 0.0
  %987 = vmatprep.subr.mxu0 0.0
  %988 = vmatpush2.msra.mxu0 0.0
  %989 = vmatprep.mubr.f32.mxu0 0.0
  %990 = vmatmul.mubr.f32.gmra.mxu0 %v86
  %v991 = vpop.f32.mrf.mxu0
  %v992 = vadd.f32 0.0, %v991
  %v993 = vpop.f32.mrf.mxu0
  %994 = vmatprep.mubr.f32.mxu0 0.0
  %995 = vmatmul.mubr.f32.gmra.mxu0 %v906
  %v996 = vpop.f32.mrf.mxu0
  %v997 = vadd.f32 0.0, %v996
  %v998 = vpop.f32.mrf.mxu0
  %999 = vmatprep.mubr.f32.mxu0 0.0
  %1000 = vmatmul.mubr.f32.gmra.mxu0 %v88
  %v1001 = vpop.f32.mrf.mxu0
  %v1002 = vadd.f32 0.0, %v1001
  %v1003 = vpop.f32.mrf.mxu0
  %1004 = vmatprep.mubr.f32.mxu0 0.0
  %1005 = vmatmul.mubr.f32.gmra.mxu0 %v907
  %v1006 = vpop.f32.mrf.mxu0
  %v1007 = vadd.f32 0.0, %v1006
  %v1008 = vpop.f32.mrf.mxu0
  %1009 = vdwg.mxu0
  %v1010 = vadd.f32 %v894, %v992
  %v1011 = vadd.f32 %v895, %v997
  %v1012 = vadd.f32 %v896, %v1002
  %v1013 = vadd.f32 %v897, %v1007
  %v1014 = vld [vmem:[%s780 + $0x2] sm:$0xf]
  %v1015 = vld [vmem:[%s782 + $0x2] sm:$0xf]
  %v1017 = vrot.slane %v1014, 4
  %v1020 = vrot.slane %v1015, 4
  %v1022 = vsel %vm44, %v656, %v1017
  %v1023 = vsel %vm44, %v657, %v1020
  %s1024 = scalar_lea.vmem %s1, 1024
  %v1025 = vld [vmem:[%s1024] sm:$0xff]
  %v1026 = vld [vmem:[%s1024 + $0x8] sm:$0xff]
  %v1027 = vld [vmem:[%s1024 + $0x10] sm:$0xff]
  %v1028 = vld [vmem:[%s1024 + $0x18] sm:$0xff]
  %v1029 = vld [vmem:[%s1024 + $0x20] sm:$0xff]
  %v1030 = vld [vmem:[%s1024 + $0x28] sm:$0xff]
  %v1031 = vld [vmem:[%s1024 + $0x30] sm:$0xff]
  %v1032 = vld [vmem:[%s1024 + $0x38] sm:$0xff]
  %v1033 = vld [vmem:[%s1024 + $0x40] sm:$0xff]
  %v1034 = vld [vmem:[%s1024 + $0x48] sm:$0xff]
  %v1035 = vld [vmem:[%s1024 + $0x50] sm:$0xff]
  %v1036 = vld [vmem:[%s1024 + $0x58] sm:$0xff]
  %v1037 = vld [vmem:[%s1024 + $0x60] sm:$0xff]
  %v1038 = vld [vmem:[%s1024 + $0x68] sm:$0xff]
  %v1039 = vld [vmem:[%s1024 + $0x70] sm:$0xff]
  %v1040 = vld [vmem:[%s1024 + $0x78] sm:$0xff]
  %1041 = vmatprep.subr.mxu0 0.0
  %1042 = vmatpush1.msra.mxu0 %v1040
  %1043 = vmatprep.subr.mxu0 0.0
  %1044 = vmatpush1.msra.mxu0 %v1039
  %1045 = vmatprep.subr.mxu0 0.0
  %1046 = vmatpush1.msra.mxu0 %v1038
  %1047 = vmatprep.subr.mxu0 0.0
  %1048 = vmatpush1.msra.mxu0 %v1037
  %1049 = vmatprep.subr.mxu0 0.0
  %1050 = vmatpush1.msra.mxu0 %v1036
  %1051 = vmatprep.subr.mxu0 0.0
  %1052 = vmatpush1.msra.mxu0 %v1035
  %1053 = vmatprep.subr.mxu0 0.0
  %1054 = vmatpush1.msra.mxu0 %v1034
  %1055 = vmatprep.subr.mxu0 0.0
  %1056 = vmatpush1.msra.mxu0 %v1033
  %1057 = vmatprep.subr.mxu0 0.0
  %1058 = vmatpush1.msra.mxu0 %v1032
  %1059 = vmatprep.subr.mxu0 0.0
  %1060 = vmatpush1.msra.mxu0 %v1031
  %1061 = vmatprep.subr.mxu0 0.0
  %1062 = vmatpush1.msra.mxu0 %v1030
  %1063 = vmatprep.subr.mxu0 0.0
  %1064 = vmatpush1.msra.mxu0 %v1029
  %1065 = vmatprep.subr.mxu0 0.0
  %1066 = vmatpush1.msra.mxu0 %v1028
  %1067 = vmatprep.subr.mxu0 0.0
  %1068 = vmatpush1.msra.mxu0 %v1027
  %1069 = vmatprep.subr.mxu0 0.0
  %1070 = vmatpush1.msra.mxu0 %v1026
  %1071 = vmatprep.subr.mxu0 0.0
  %1072 = vmatpush1.msra.mxu0 %v1025
  %1073 = vmatprep.subr.mxu0 0.0
  %1074 = vmatpush2.msra.mxu0 0.0
  %1075 = vmatprep.subr.mxu0 0.0
  %1076 = vmatpush2.msra.mxu0 0.0
  %1077 = vmatprep.subr.mxu0 0.0
  %1078 = vmatpush2.msra.mxu0 0.0
  %1079 = vmatprep.subr.mxu0 0.0
  %1080 = vmatpush2.msra.mxu0 0.0
  %1081 = vmatprep.subr.mxu0 0.0
  %1082 = vmatpush2.msra.mxu0 0.0
  %1083 = vmatprep.subr.mxu0 0.0
  %1084 = vmatpush2.msra.mxu0 0.0
  %1085 = vmatprep.subr.mxu0 0.0
  %1086 = vmatpush2.msra.mxu0 0.0
  %1087 = vmatprep.subr.mxu0 0.0
  %1088 = vmatpush2.msra.mxu0 0.0
  %1089 = vmatprep.subr.mxu0 0.0
  %1090 = vmatpush2.msra.mxu0 0.0
  %1091 = vmatprep.subr.mxu0 0.0
  %1092 = vmatpush2.msra.mxu0 0.0
  %1093 = vmatprep.subr.mxu0 0.0
  %1094 = vmatpush2.msra.mxu0 0.0
  %1095 = vmatprep.subr.mxu0 0.0
  %1096 = vmatpush2.msra.mxu0 0.0
  %1097 = vmatprep.subr.mxu0 0.0
  %1098 = vmatpush2.msra.mxu0 0.0
  %1099 = vmatprep.subr.mxu0 0.0
  %1100 = vmatpush2.msra.mxu0 0.0
  %1101 = vmatprep.subr.mxu0 0.0
  %1102 = vmatpush2.msra.mxu0 0.0
  %1103 = vmatprep.subr.mxu0 0.0
  %1104 = vmatpush2.msra.mxu0 0.0
  %1105 = vmatprep.mubr.f32.mxu0 0.0
  %1106 = vmatmul.mubr.f32.gmra.mxu0 %v297
  %v1107 = vpop.f32.mrf.mxu0
  %v1108 = vadd.f32 0.0, %v1107
  %v1109 = vpop.f32.mrf.mxu0
  %1110 = vmatprep.mubr.f32.mxu0 0.0
  %1111 = vmatmul.mubr.f32.gmra.mxu0 %v1022
  %v1112 = vpop.f32.mrf.mxu0
  %v1113 = vadd.f32 0.0, %v1112
  %v1114 = vpop.f32.mrf.mxu0
  %1115 = vmatprep.mubr.f32.mxu0 0.0
  %1116 = vmatmul.mubr.f32.gmra.mxu0 %v299
  %v1117 = vpop.f32.mrf.mxu0
  %v1118 = vadd.f32 0.0, %v1117
  %v1119 = vpop.f32.mrf.mxu0
  %1120 = vmatprep.mubr.f32.mxu0 0.0
  %1121 = vmatmul.mubr.f32.gmra.mxu0 %v1023
  %v1122 = vpop.f32.mrf.mxu0
  %v1123 = vadd.f32 0.0, %v1122
  %v1124 = vpop.f32.mrf.mxu0
  %1125 = vdwg.mxu0
  %v1126 = vadd.f32 %v1010, %v1108
  %v1127 = vadd.f32 %v1011, %v1113
  %v1128 = vadd.f32 %v1012, %v1118
  %v1129 = vadd.f32 %v1013, %v1123
  %v1130 = vadd.f32 %v1126, %v1127
  %v1131 = vadd.f32 %v1130, %v1128
  %v1132 = vadd.f32 %v1131, %v1129
  %v1133 = vrot.slane %v1132, 4
  %v1134 = vadd.f32 %v1132, %v1133
  %v1135 = vrot.slane %v1134, 2
  %v1136 = vadd.f32 %v1134, %v1135
  %v1137 = vrot.slane %v1136, 1
  %v1138 = vadd.f32 %v1136, %v1137
  %v1139 = vrcp.pop 32.0
  %v1140 = vmul.f32 %v1138, %v1139
  %v1141 = vmul.f32 %v1126, %v1126
  %v1142 = vmul.f32 %v1127, %v1127
  %v1143 = vmul.f32 %v1128, %v1128
  %v1144 = vmul.f32 %v1129, %v1129
  %v1145 = vadd.f32 %v1141, %v1142
  %v1146 = vadd.f32 %v1145, %v1143
  %v1147 = vadd.f32 %v1146, %v1144
  %v1148 = vrot.slane %v1147, 4
  %v1149 = vadd.f32 %v1147, %v1148
  %v1150 = vrot.slane %v1149, 2
  %v1151 = vadd.f32 %v1149, %v1150
  %v1152 = vrot.slane %v1151, 1
  %v1153 = vadd.f32 %v1151, %v1152
  %v1154 = vmul.f32 %v1153, %v1139
  %v1155 = vmul.f32 %v1140, %v1140
  %v1156 = vsub.f32 %v1154, %v1155
  %v1157 = vmax.f32 %v1156, 0.0
  %v1158 = vadd.f32 %v1157, 1e-05
  %v1159 = vrsqrt.pop %v1158
  %v1160 = vld [vmem:[%s2] sm:$0x1]
  %v1161 = vmul.f32 %v1159, %v1160
  %v1162 = vld [vmem:[%s3] sm:$0x1]
  %v1163 = vmul.f32 %v1140, %v1161
  %v1164 = vsub.f32 %v1162, %v1163
  %v1165 = vlaneseq
  %v1166 = vshrl.u32 %v1165, 7
  %v1167 = vsub.s32 0, %v1166
  %v1168 = vrot.slane %v1161, %v1167
  %v1169 = vmul.f32 %v1126, %v1168
  %v1170 = vmul.f32 %v1127, %v1168
  %v1171 = vmul.f32 %v1128, %v1168
  %v1172 = vmul.f32 %v1129, %v1168
  %v1174 = vlaneseq
  %v1175 = vshrl.u32 %v1174, 7
  %v1176 = vsub.s32 0, %v1175
  %v1177 = vrot.slane %v1164, %v1176
  %v1179 = vadd.f32 %v1169, %v1177
  %v1180 = vadd.f32 %v1170, %v1177
  %v1181 = vadd.f32 %v1171, %v1177
  %v1182 = vadd.f32 %v1172, %v1177
  %v1183 = vmax.f32 %v1179, 0.0
  %v1184 = vmax.f32 %v1180, 0.0
  %v1185 = vmax.f32 %v1181, 0.0
  %v1186 = vmax.f32 %v1182, 0.0
  %1187 = vst [vmem:[%s4] sm:$0xff] %v1183
  %1188 = vst [vmem:[%s4 + $0x8] sm:$0xff] %v1184
  %1189 = vst [vmem:[%s4 + $0x10] sm:$0xff] %v1185
  %1190 = vst [vmem:[%s4 + $0x18] sm:$0xff] %v1186
  // Predicated region
  $region18: #{resnet_forward.12} parent=0 // pred_check
    _
  $region19: #{resnet_forward.12} parent=0 // pred_check_branch
    %1192 = sbr.rel (0) target = $region21
  $region20: #{resnet_forward.12} parent=0 // pred_region
    _
  $region21: #{resnet_forward.12} parent=0 // pred_fallthru
    _
  // Predicated region
  $region22: #{resnet_forward.12} parent=0 // pred_check
    _
  $region23: #{resnet_forward.12} parent=0 // pred_check_branch
    %1194 = sbr.rel (0) target = $region25
  $region24: #{resnet_forward.12} parent=0 // pred_region
    _
  $region25: #{resnet_forward.12} parent=0 // pred_fallthru
    _

// kernel: resnet_forward.9
$region0: #{resnet_forward.9}
  #allocation0 [shape = 'u32[]', space=smem, size = 0x4, offset = 0x4, fixed_abs, tag = 'smem constant byte address 0x4 - core index']
  #allocation1 [shape = 'u32[144,128]{1,0:T(1,128)}', space=vmem, size = 0x12000, scoped, tag = 'internal scratch']
  %s0 = inlined_call_operand.vmem [shape: f32[2,9,9,128], index: 0, kind: input, shape index: {}]
  %s1 = inlined_call_operand.vmem [shape: f32[2,9,9,128], index: 1, kind: input, shape index: {}]
  %s2 = inlined_call_operand.vmem [shape: f32[2,9,9,128], index: 2, kind: input, shape index: {}]
  %s3 = inlined_call_operand.vmem [shape: f32[2,9,9,128], index: 3, kind: input, shape index: {}]
  %s4 = inlined_call_operand.vmem [shape: f32[9,128,128], index: 4, kind: input, shape index: {}]
  %s5 = inlined_call_operand.vmem [shape: f32[1,128], index: 5, kind: input, shape index: {}]
  %s6 = inlined_call_operand.vmem [shape: f32[1,128], index: 6, kind: input, shape index: {}]
  %s7 = inlined_call_operand.vmem [shape: f32[128,128], index: 7, kind: output, shape index: {}]
  %s8 = sld [smem:[#allocation0]]
  $region38: #{resnet_forward.9} parent=0
    _
  %s10 = ssub.s32 1, %s8
  %s11 = scalar_select 0, %s10, %s8
  // Predicated region
  $region2: #{resnet_forward.9} parent=0 // pred_check
    _
  $region3: #{resnet_forward.9} parent=0 // pred_check_branch
    %13 = sbr.rel (0) target = $region5
  $region4: #{resnet_forward.9} parent=0 // pred_region
    _
  $region5: #{resnet_forward.9} parent=0 // pred_fallthru
    _
  // Predicated region
  $region6: #{resnet_forward.9} parent=0 // pred_check
    _
  $region7: #{resnet_forward.9} parent=0 // pred_check_branch
    %15 = sbr.rel (0) target = $region9
  $region8: #{resnet_forward.9} parent=0 // pred_region
    _
  $region9: #{resnet_forward.9} parent=0 // pred_fallthru
    _
  // Predicated region
  $region10: #{resnet_forward.9} parent=0 // pred_check
    _
  $region11: #{resnet_forward.9} parent=0 // pred_check_branch
    %17 = sbr.rel (0) target = $region13
  $region12: #{resnet_forward.9} parent=0 // pred_region
    _
  $region13: #{resnet_forward.9} parent=0 // pred_fallthru
    _
  // Predicated region
  $region14: #{resnet_forward.9} parent=0 // pred_check
    _
  $region15: #{resnet_forward.9} parent=0 // pred_check_branch
    %19 = sbr.rel (0) target = $region17
  $region16: #{resnet_forward.9} parent=0 // pred_region
    _
  $region17: #{resnet_forward.9} parent=0 // pred_fallthru
    _
  // Predicated region
  $region18: #{resnet_forward.9} parent=0 // pred_check
    _
  $region19: #{resnet_forward.9} parent=0 // pred_check_branch
    %21 = sbr.rel (0) target = $region21
  $region20: #{resnet_forward.9} parent=0 // pred_region
    _
  $region21: #{resnet_forward.9} parent=0 // pred_fallthru
    _
  // Predicated region
  $region22: #{resnet_forward.9} parent=0 // pred_check
    _
  $region23: #{resnet_forward.9} parent=0 // pred_check_branch
    %23 = sbr.rel (0) target = $region25
  $region24: #{resnet_forward.9} parent=0 // pred_region
    _
  $region25: #{resnet_forward.9} parent=0 // pred_fallthru
    _
  // Predicated region
  $region26: #{resnet_forward.9} parent=0 // pred_check
    _
  $region27: #{resnet_forward.9} parent=0 // pred_check_branch
    %25 = sbr.rel (0) target = $region29
  $region28: #{resnet_forward.9} parent=0 // pred_region
    _
  $region29: #{resnet_forward.9} parent=0 // pred_fallthru
    _
  %v26 = vld [vmem:[%s0] sm:$0xff]
  %v27 = vld [vmem:[%s0 + $0x10] sm:$0xff]
  %v28 = vld [vmem:[%s0 + $0x20] sm:$0xff]
  %v29 = vld [vmem:[%s0 + $0x30] sm:$0xff]
  %v30 = vld [vmem:[%s0 + $0x40] sm:$0xff]
  %v31 = vld [vmem:[%s0 + $0x50] sm:$0xff]
  %v32 = vld [vmem:[%s0 + $0x60] sm:$0xff]
  %v33 = vld [vmem:[%s0 + $0x70] sm:$0xff]
  %v34 = vld [vmem:[%s0 + $0x90] sm:$0xff]
  %v35 = vld [vmem:[%s0 + $0xa0] sm:$0xff]
  %v36 = vld [vmem:[%s0 + $0xb0] sm:$0xff]
  %v37 = vld [vmem:[%s0 + $0xc0] sm:$0xff]
  %v38 = vld [vmem:[%s0 + $0xd0] sm:$0xff]
  %v39 = vld [vmem:[%s0 + $0xe0] sm:$0xff]
  %v40 = vld [vmem:[%s0 + $0xf0] sm:$0xff]
  %v41 = vld [vmem:[%s0 + $0x100] sm:$0xff]
  %v42 = vld [vmem:[%s4] sm:$0xff]
  %v43 = vld [vmem:[%s4 + $0x8] sm:$0xff]
  %v44 = vld [vmem:[%s4 + $0x10] sm:$0xff]
  %v45 = vld [vmem:[%s4 + $0x18] sm:$0xff]
  %v46 = vld [vmem:[%s4 + $0x20] sm:$0xff]
  %v47 = vld [vmem:[%s4 + $0x28] sm:$0xff]
  %v48 = vld [vmem:[%s4 + $0x30] sm:$0xff]
  %v49 = vld [vmem:[%s4 + $0x38] sm:$0xff]
  %v50 = vld [vmem:[%s4 + $0x40] sm:$0xff]
  %v51 = vld [vmem:[%s4 + $0x48] sm:$0xff]
  %v52 = vld [vmem:[%s4 + $0x50] sm:$0xff]
  %v53 = vld [vmem:[%s4 + $0x58] sm:$0xff]
  %v54 = vld [vmem:[%s4 + $0x60] sm:$0xff]
  %v55 = vld [vmem:[%s4 + $0x68] sm:$0xff]
  %v56 = vld [vmem:[%s4 + $0x70] sm:$0xff]
  %v57 = vld [vmem:[%s4 + $0x78] sm:$0xff]
  %v58 = vld [vmem:[%s1] sm:$0xff]
  %v59 = vld [vmem:[%s1 + $0x10] sm:$0xff]
  %v60 = vld [vmem:[%s1 + $0x20] sm:$0xff]
  %v61 = vld [vmem:[%s1 + $0x30] sm:$0xff]
  %v62 = vld [vmem:[%s1 + $0x40] sm:$0xff]
  %v63 = vld [vmem:[%s1 + $0x50] sm:$0xff]
  %v64 = vld [vmem:[%s1 + $0x60] sm:$0xff]
  %v65 = vld [vmem:[%s1 + $0x70] sm:$0xff]
  %v66 = vld [vmem:[%s1 + $0x90] sm:$0xff]
  %v67 = vld [vmem:[%s1 + $0xa0] sm:$0xff]
  %v68 = vld [vmem:[%s1 + $0xb0] sm:$0xff]
  %v69 = vld [vmem:[%s1 + $0xc0] sm:$0xff]
  %v70 = vld [vmem:[%s1 + $0xd0] sm:$0xff]
  %v71 = vld [vmem:[%s1 + $0xe0] sm:$0xff]
  %v72 = vld [vmem:[%s1 + $0xf0] sm:$0xff]
  %v73 = vld [vmem:[%s1 + $0x100] sm:$0xff]
  %s74 = scalar_lea.vmem %s4, 128
  %v75 = vld [vmem:[%s74] sm:$0xff]
  %v76 = vld [vmem:[%s74 + $0x8] sm:$0xff]
  %v77 = vld [vmem:[%s74 + $0x10] sm:$0xff]
  %v78 = vld [vmem:[%s74 + $0x18] sm:$0xff]
  %v79 = vld [vmem:[%s74 + $0x20] sm:$0xff]
  %v80 = vld [vmem:[%s74 + $0x28] sm:$0xff]
  %v81 = vld [vmem:[%s74 + $0x30] sm:$0xff]
  %v82 = vld [vmem:[%s74 + $0x38] sm:$0xff]
  %v83 = vld [vmem:[%s74 + $0x40] sm:$0xff]
  %v84 = vld [vmem:[%s74 + $0x48] sm:$0xff]
  %v85 = vld [vmem:[%s74 + $0x50] sm:$0xff]
  %v86 = vld [vmem:[%s74 + $0x58] sm:$0xff]
  %v87 = vld [vmem:[%s74 + $0x60] sm:$0xff]
  %v88 = vld [vmem:[%s74 + $0x68] sm:$0xff]
  %v89 = vld [vmem:[%s74 + $0x70] sm:$0xff]
  %v90 = vld [vmem:[%s74 + $0x78] sm:$0xff]
  %91 = vmatprep.subr.mxu0 0.0
  %92 = vmatpush1.msra.mxu0 %v90
  %93 = vmatprep.subr.mxu0 0.0
  %94 = vmatpush1.msra.mxu0 %v89
  %95 = vmatprep.subr.mxu0 0.0
  %96 = vmatpush1.msra.mxu0 %v88
  %97 = vmatprep.subr.mxu0 0.0
  %98 = vmatpush1.msra.mxu0 %v87
  %99 = vmatprep.subr.mxu0 0.0
  %100 = vmatpush1.msra.mxu0 %v86
  %101 = vmatprep.subr.mxu0 0.0
  %102 = vmatpush1.msra.mxu0 %v85
  %103 = vmatprep.subr.mxu0 0.0
  %104 = vmatpush1.msra.mxu0 %v84
  %105 = vmatprep.subr.mxu0 0.0
  %106 = vmatpush1.msra.mxu0 %v83
  %107 = vmatprep.subr.mxu0 0.0
  %108 = vmatpush1.msra.mxu0 %v82
  %109 = vmatprep.subr.mxu0 0.0
  %110 = vmatpush1.msra.mxu0 %v81
  %111 = vmatprep.subr.mxu0 0.0
  %112 = vmatpush1.msra.mxu0 %v80
  %113 = vmatprep.subr.mxu0 0.0
  %114 = vmatpush1.msra.mxu0 %v79
  %115 = vmatprep.subr.mxu0 0.0
  %116 = vmatpush1.msra.mxu0 %v78
  %117 = vmatprep.subr.mxu0 0.0
  %118 = vmatpush1.msra.mxu0 %v77
  %119 = vmatprep.subr.mxu0 0.0
  %120 = vmatpush1.msra.mxu0 %v76
  %121 = vmatprep.subr.mxu0 0.0
  %122 = vmatpush1.msra.mxu0 %v75
  %123 = vmatprep.subr.mxu0 0.0
  %124 = vmatpush2.msra.mxu0 0.0
  %125 = vmatprep.subr.mxu0 0.0
  %126 = vmatpush2.msra.mxu0 0.0
  %127 = vmatprep.subr.mxu0 0.0
  %128 = vmatpush2.msra.mxu0 0.0
  %129 = vmatprep.subr.mxu0 0.0
  %130 = vmatpush2.msra.mxu0 0.0
  %131 = vmatprep.subr.mxu0 0.0
  %132 = vmatpush2.msra.mxu0 0.0
  %133 = vmatprep.subr.mxu0 0.0
  %134 = vmatpush2.msra.mxu0 0.0
  %135 = vmatprep.subr.mxu0 0.0
  %136 = vmatpush2.msra.mxu0 0.0
  %137 = vmatprep.subr.mxu0 0.0
  %138 = vmatpush2.msra.mxu0 0.0
  %139 = vmatprep.subr.mxu0 0.0
  %140 = vmatpush2.msra.mxu0 0.0
  %141 = vmatprep.subr.mxu0 0.0
  %142 = vmatpush2.msra.mxu0 0.0
  %143 = vmatprep.subr.mxu0 0.0
  %144 = vmatpush2.msra.mxu0 0.0
  %145 = vmatprep.subr.mxu0 0.0
  %146 = vmatpush2.msra.mxu0 0.0
  %147 = vmatprep.subr.mxu0 0.0
  %148 = vmatpush2.msra.mxu0 0.0
  %149 = vmatprep.subr.mxu0 0.0
  %150 = vmatpush2.msra.mxu0 0.0
  %151 = vmatprep.subr.mxu0 0.0
  %152 = vmatpush2.msra.mxu0 0.0
  %153 = vmatprep.subr.mxu0 0.0
  %154 = vmatpush2.msra.mxu0 0.0
  %155 = vmatprep.mubr.f32.mxu0 0.0
  %156 = vmatmul.mubr.f32.gmra.mxu0 %v58
  %v157 = vpop.f32.mrf.mxu0
  %v158 = vadd.f32 0.0, %v157
  %v159 = vpop.f32.mrf.mxu0
  %160 = vmatprep.mubr.f32.mxu0 0.0
  %161 = vmatmul.mubr.f32.gmra.mxu0 %v59
  %v162 = vpop.f32.mrf.mxu0
  %v163 = vadd.f32 0.0, %v162
  %v164 = vpop.f32.mrf.mxu0
  %165 = vmatprep.mubr.f32.mxu0 0.0
  %166 = vmatmul.mubr.f32.gmra.mxu0 %v60
  %v167 = vpop.f32.mrf.mxu0
  %v168 = vadd.f32 0.0, %v167
  %v169 = vpop.f32.mrf.mxu0
  %170 = vmatprep.mubr.f32.mxu0 0.0
  %171 = vmatmul.mubr.f32.gmra.mxu0 %v61
  %v172 = vpop.f32.mrf.mxu0
  %v173 = vadd.f32 0.0, %v172
  %v174 = vpop.f32.mrf.mxu0
  %175 = vmatprep.mubr.f32.mxu0 0.0
  %176 = vmatmul.mubr.f32.gmra.mxu0 %v62
  %v177 = vpop.f32.mrf.mxu0
  %v178 = vadd.f32 0.0, %v177
  %v179 = vpop.f32.mrf.mxu0
  %180 = vmatprep.mubr.f32.mxu0 0.0
  %181 = vmatmul.mubr.f32.gmra.mxu0 %v63
  %v182 = vpop.f32.mrf.mxu0
  %v183 = vadd.f32 0.0, %v182
  %v184 = vpop.f32.mrf.mxu0
  %185 = vmatprep.mubr.f32.mxu0 0.0
  %186 = vmatmul.mubr.f32.gmra.mxu0 %v64
  %v187 = vpop.f32.mrf.mxu0
  %v188 = vadd.f32 0.0, %v187
  %v189 = vpop.f32.mrf.mxu0
  %190 = vmatprep.mubr.f32.mxu0 0.0
  %191 = vmatmul.mubr.f32.gmra.mxu0 %v65
  %v192 = vpop.f32.mrf.mxu0
  %v193 = vadd.f32 0.0, %v192
  %v194 = vpop.f32.mrf.mxu0
  %195 = vmatprep.mubr.f32.mxu0 0.0
  %196 = vmatmul.mubr.f32.gmra.mxu0 %v66
  %v197 = vpop.f32.mrf.mxu0
  %v198 = vadd.f32 0.0, %v197
  %v199 = vpop.f32.mrf.mxu0
  %200 = vmatprep.mubr.f32.mxu0 0.0
  %201 = vmatmul.mubr.f32.gmra.mxu0 %v67
  %v202 = vpop.f32.mrf.mxu0
  %v203 = vadd.f32 0.0, %v202
  %v204 = vpop.f32.mrf.mxu0
  %205 = vmatprep.mubr.f32.mxu0 0.0
  %206 = vmatmul.mubr.f32.gmra.mxu0 %v68
  %v207 = vpop.f32.mrf.mxu0
  %v208 = vadd.f32 0.0, %v207
  %v209 = vpop.f32.mrf.mxu0
  %210 = vmatprep.mubr.f32.mxu0 0.0
  %211 = vmatmul.mubr.f32.gmra.mxu0 %v69
  %v212 = vpop.f32.mrf.mxu0
  %v213 = vadd.f32 0.0, %v212
  %v214 = vpop.f32.mrf.mxu0
  %215 = vmatprep.mubr.f32.mxu0 0.0
  %216 = vmatmul.mubr.f32.gmra.mxu0 %v70
  %v217 = vpop.f32.mrf.mxu0
  %v218 = vadd.f32 0.0, %v217
  %v219 = vpop.f32.mrf.mxu0
  %220 = vmatprep.mubr.f32.mxu0 0.0
  %221 = vmatmul.mubr.f32.gmra.mxu0 %v71
  %v222 = vpop.f32.mrf.mxu0
  %v223 = vadd.f32 0.0, %v222
  %v224 = vpop.f32.mrf.mxu0
  %225 = vmatprep.mubr.f32.mxu0 0.0
  %226 = vmatmul.mubr.f32.gmra.mxu0 %v72
  %v227 = vpop.f32.mrf.mxu0
  %v228 = vadd.f32 0.0, %v227
  %v229 = vpop.f32.mrf.mxu0
  %230 = vmatprep.mubr.f32.mxu0 0.0
  %231 = vmatmul.mubr.f32.gmra.mxu0 %v73
  %v232 = vpop.f32.mrf.mxu0
  %v233 = vadd.f32 0.0, %v232
  %v234 = vpop.f32.mrf.mxu0
  %235 = vdwg.mxu0
  %236 = vmatprep.subr.mxu0 0.0
  %237 = vmatpush1.msra.mxu0 %v57
  %238 = vmatprep.subr.mxu0 0.0
  %239 = vmatpush1.msra.mxu0 %v56
  %240 = vmatprep.subr.mxu0 0.0
  %241 = vmatpush1.msra.mxu0 %v55
  %242 = vmatprep.subr.mxu0 0.0
  %243 = vmatpush1.msra.mxu0 %v54
  %244 = vmatprep.subr.mxu0 0.0
  %245 = vmatpush1.msra.mxu0 %v53
  %246 = vmatprep.subr.mxu0 0.0
  %247 = vmatpush1.msra.mxu0 %v52
  %248 = vmatprep.subr.mxu0 0.0
  %249 = vmatpush1.msra.mxu0 %v51
  %250 = vmatprep.subr.mxu0 0.0
  %251 = vmatpush1.msra.mxu0 %v50
  %252 = vmatprep.subr.mxu0 0.0
  %253 = vmatpush1.msra.mxu0 %v49
  %254 = vmatprep.subr.mxu0 0.0
  %255 = vmatpush1.msra.mxu0 %v48
  %256 = vmatprep.subr.mxu0 0.0
  %257 = vmatpush1.msra.mxu0 %v47
  %258 = vmatprep.subr.mxu0 0.0
  %259 = vmatpush1.msra.mxu0 %v46
  %260 = vmatprep.subr.mxu0 0.0
  %261 = vmatpush1.msra.mxu0 %v45
  %262 = vmatprep.subr.mxu0 0.0
  %263 = vmatpush1.msra.mxu0 %v44
  %264 = vmatprep.subr.mxu0 0.0
  %265 = vmatpush1.msra.mxu0 %v43
  %266 = vmatprep.subr.mxu0 0.0
  %267 = vmatpush1.msra.mxu0 %v42
  %268 = vmatprep.subr.mxu0 0.0
  %269 = vmatpush2.msra.mxu0 0.0
  %270 = vmatprep.subr.mxu0 0.0
  %271 = vmatpush2.msra.mxu0 0.0
  %272 = vmatprep.subr.mxu0 0.0
  %273 = vmatpush2.msra.mxu0 0.0
  %274 = vmatprep.subr.mxu0 0.0
  %275 = vmatpush2.msra.mxu0 0.0
  %276 = vmatprep.subr.mxu0 0.0
  %277 = vmatpush2.msra.mxu0 0.0
  %278 = vmatprep.subr.mxu0 0.0
  %279 = vmatpush2.msra.mxu0 0.0
  %280 = vmatprep.subr.mxu0 0.0
  %281 = vmatpush2.msra.mxu0 0.0
  %282 = vmatprep.subr.mxu0 0.0
  %283 = vmatpush2.msra.mxu0 0.0
  %284 = vmatprep.subr.mxu0 0.0
  %285 = vmatpush2.msra.mxu0 0.0
  %286 = vmatprep.subr.mxu0 0.0
  %287 = vmatpush2.msra.mxu0 0.0
  %288 = vmatprep.subr.mxu0 0.0
  %289 = vmatpush2.msra.mxu0 0.0
  %290 = vmatprep.subr.mxu0 0.0
  %291 = vmatpush2.msra.mxu0 0.0
  %292 = vmatprep.subr.mxu0 0.0
  %293 = vmatpush2.msra.mxu0 0.0
  %294 = vmatprep.subr.mxu0 0.0
  %295 = vmatpush2.msra.mxu0 0.0
  %296 = vmatprep.subr.mxu0 0.0
  %297 = vmatpush2.msra.mxu0 0.0
  %298 = vmatprep.subr.mxu0 0.0
  %299 = vmatpush2.msra.mxu0 0.0
  %300 = vmatprep.mubr.f32.mxu0 0.0
  %301 = vmatmul.mubr.f32.gmra.mxu0 %v26
  %v302 = vpop.f32.mrf.mxu0
  %v303 = vadd.f32 %v158, %v302
  %v304 = vpop.f32.mrf.mxu0
  %305 = vmatprep.mubr.f32.mxu0 0.0
  %306 = vmatmul.mubr.f32.gmra.mxu0 %v27
  %v307 = vpop.f32.mrf.mxu0
  %v308 = vadd.f32 %v163, %v307
  %v309 = vpop.f32.mrf.mxu0
  %310 = vmatprep.mubr.f32.mxu0 0.0
  %311 = vmatmul.mubr.f32.gmra.mxu0 %v28
  %v312 = vpop.f32.mrf.mxu0
  %v313 = vadd.f32 %v168, %v312
  %v314 = vpop.f32.mrf.mxu0
  %315 = vmatprep.mubr.f32.mxu0 0.0
  %316 = vmatmul.mubr.f32.gmra.mxu0 %v29
  %v317 = vpop.f32.mrf.mxu0
  %v318 = vadd.f32 %v173, %v317
  %v319 = vpop.f32.mrf.mxu0
  %320 = vmatprep.mubr.f32.mxu0 0.0
  %321 = vmatmul.mubr.f32.gmra.mxu0 %v30
  %v322 = vpop.f32.mrf.mxu0
  %v323 = vadd.f32 %v178, %v322
  %v324 = vpop.f32.mrf.mxu0
  %325 = vmatprep.mubr.f32.mxu0 0.0
  %326 = vmatmul.mubr.f32.gmra.mxu0 %v31
  %v327 = vpop.f32.mrf.mxu0
  %v328 = vadd.f32 %v183, %v327
  %v329 = vpop.f32.mrf.mxu0
  %330 = vmatprep.mubr.f32.mxu0 0.0
  %331 = vmatmul.mubr.f32.gmra.mxu0 %v32
  %v332 = vpop.f32.mrf.mxu0
  %v333 = vadd.f32 %v188, %v332
  %v334 = vpop.f32.mrf.mxu0
  %335 = vmatprep.mubr.f32.mxu0 0.0
  %336 = vmatmul.mubr.f32.gmra.mxu0 %v33
  %v337 = vpop.f32.mrf.mxu0
  %v338 = vadd.f32 %v193, %v337
  %v339 = vpop.f32.mrf.mxu0
  %340 = vmatprep.mubr.f32.mxu0 0.0
  %341 = vmatmul.mubr.f32.gmra.mxu0 %v34
  %v342 = vpop.f32.mrf.mxu0
  %v343 = vadd.f32 %v198, %v342
  %v344 = vpop.f32.mrf.mxu0
  %345 = vmatprep.mubr.f32.mxu0 0.0
  %346 = vmatmul.mubr.f32.gmra.mxu0 %v35
  %v347 = vpop.f32.mrf.mxu0
  %v348 = vadd.f32 %v203, %v347
  %v349 = vpop.f32.mrf.mxu0
  %350 = vmatprep.mubr.f32.mxu0 0.0
  %351 = vmatmul.mubr.f32.gmra.mxu0 %v36
  %v352 = vpop.f32.mrf.mxu0
  %v353 = vadd.f32 %v208, %v352
  %v354 = vpop.f32.mrf.mxu0
  %355 = vmatprep.mubr.f32.mxu0 0.0
  %356 = vmatmul.mubr.f32.gmra.mxu0 %v37
  %v357 = vpop.f32.mrf.mxu0
  %v358 = vadd.f32 %v213, %v357
  %v359 = vpop.f32.mrf.mxu0
  %360 = vmatprep.mubr.f32.mxu0 0.0
  %361 = vmatmul.mubr.f32.gmra.mxu0 %v38
  %v362 = vpop.f32.mrf.mxu0
  %v363 = vadd.f32 %v218, %v362
  %v364 = vpop.f32.mrf.mxu0
  %365 = vmatprep.mubr.f32.mxu0 0.0
  %366 = vmatmul.mubr.f32.gmra.mxu0 %v39
  %v367 = vpop.f32.mrf.mxu0
  %v368 = vadd.f32 %v223, %v367
  %v369 = vpop.f32.mrf.mxu0
  %370 = vmatprep.mubr.f32.mxu0 0.0
  %371 = vmatmul.mubr.f32.gmra.mxu0 %v40
  %v372 = vpop.f32.mrf.mxu0
  %v373 = vadd.f32 %v228, %v372
  %v374 = vpop.f32.mrf.mxu0
  %375 = vmatprep.mubr.f32.mxu0 0.0
  %376 = vmatmul.mubr.f32.gmra.mxu0 %v41
  %v377 = vpop.f32.mrf.mxu0
  %v378 = vadd.f32 %v233, %v377
  %v379 = vpop.f32.mrf.mxu0
  %380 = vdwg.mxu0
  %v381 = vld [vmem:[%s0 + $0x1] sm:$0xff]
  %v382 = vld [vmem:[%s0 + $0x11] sm:$0xff]
  %v383 = vld [vmem:[%s0 + $0x21] sm:$0xff]
  %v384 = vld [vmem:[%s0 + $0x31] sm:$0xff]
  %v385 = vld [vmem:[%s0 + $0x41] sm:$0xff]
  %v386 = vld [vmem:[%s0 + $0x51] sm:$0xff]
  %v387 = vld [vmem:[%s0 + $0x61] sm:$0xff]
  %v388 = vld [vmem:[%s0 + $0x71] sm:$0xff]
  %v389 = vld [vmem:[%s0 + $0x91] sm:$0xff]
  %v390 = vld [vmem:[%s0 + $0xa1] sm:$0xff]
  %v391 = vld [vmem:[%s0 + $0xb1] sm:$0xff]
  %v392 = vld [vmem:[%s0 + $0xc1] sm:$0xff]
  %v393 = vld [vmem:[%s0 + $0xd1] sm:$0xff]
  %v394 = vld [vmem:[%s0 + $0xe1] sm:$0xff]
  %v395 = vld [vmem:[%s0 + $0xf1] sm:$0xff]
  %v396 = vld [vmem:[%s0 + $0x101] sm:$0xff]
  %s397 = scalar_lea.vmem %s4, 256
  %v398 = vld [vmem:[%s397] sm:$0xff]
  %v399 = vld [vmem:[%s397 + $0x8] sm:$0xff]
  %v400 = vld [vmem:[%s397 + $0x10] sm:$0xff]
  %v401 = vld [vmem:[%s397 + $0x18] sm:$0xff]
  %v402 = vld [vmem:[%s397 + $0x20] sm:$0xff]
  %v403 = vld [vmem:[%s397 + $0x28] sm:$0xff]
  %v404 = vld [vmem:[%s397 + $0x30] sm:$0xff]
  %v405 = vld [vmem:[%s397 + $0x38] sm:$0xff]
  %v406 = vld [vmem:[%s397 + $0x40] sm:$0xff]
  %v407 = vld [vmem:[%s397 + $0x48] sm:$0xff]
  %v408 = vld [vmem:[%s397 + $0x50] sm:$0xff]
  %v409 = vld [vmem:[%s397 + $0x58] sm:$0xff]
  %v410 = vld [vmem:[%s397 + $0x60] sm:$0xff]
  %v411 = vld [vmem:[%s397 + $0x68] sm:$0xff]
  %v412 = vld [vmem:[%s397 + $0x70] sm:$0xff]
  %v413 = vld [vmem:[%s397 + $0x78] sm:$0xff]
  %414 = vmatprep.subr.mxu0 0.0
  %415 = vmatpush1.msra.mxu0 %v413
  %416 = vmatprep.subr.mxu0 0.0
  %417 = vmatpush1.msra.mxu0 %v412
  %418 = vmatprep.subr.mxu0 0.0
  %419 = vmatpush1.msra.mxu0 %v411
  %420 = vmatprep.subr.mxu0 0.0
  %421 = vmatpush1.msra.mxu0 %v410
  %422 = vmatprep.subr.mxu0 0.0
  %423 = vmatpush1.msra.mxu0 %v409
  %424 = vmatprep.subr.mxu0 0.0
  %425 = vmatpush1.msra.mxu0 %v408
  %426 = vmatprep.subr.mxu0 0.0
  %427 = vmatpush1.msra.mxu0 %v407
  %428 = vmatprep.subr.mxu0 0.0
  %429 = vmatpush1.msra.mxu0 %v406
  %430 = vmatprep.subr.mxu0 0.0
  %431 = vmatpush1.msra.mxu0 %v405
  %432 = vmatprep.subr.mxu0 0.0
  %433 = vmatpush1.msra.mxu0 %v404
  %434 = vmatprep.subr.mxu0 0.0
  %435 = vmatpush1.msra.mxu0 %v403
  %436 = vmatprep.subr.mxu0 0.0
  %437 = vmatpush1.msra.mxu0 %v402
  %438 = vmatprep.subr.mxu0 0.0
  %439 = vmatpush1.msra.mxu0 %v401
  %440 = vmatprep.subr.mxu0 0.0
  %441 = vmatpush1.msra.mxu0 %v400
  %442 = vmatprep.subr.mxu0 0.0
  %443 = vmatpush1.msra.mxu0 %v399
  %444 = vmatprep.subr.mxu0 0.0
  %445 = vmatpush1.msra.mxu0 %v398
  %446 = vmatprep.subr.mxu0 0.0
  %447 = vmatpush2.msra.mxu0 0.0
  %448 = vmatprep.subr.mxu0 0.0
  %449 = vmatpush2.msra.mxu0 0.0
  %450 = vmatprep.subr.mxu0 0.0
  %451 = vmatpush2.msra.mxu0 0.0
  %452 = vmatprep.subr.mxu0 0.0
  %453 = vmatpush2.msra.mxu0 0.0
  %454 = vmatprep.subr.mxu0 0.0
  %455 = vmatpush2.msra.mxu0 0.0
  %456 = vmatprep.subr.mxu0 0.0
  %457 = vmatpush2.msra.mxu0 0.0
  %458 = vmatprep.subr.mxu0 0.0
  %459 = vmatpush2.msra.mxu0 0.0
  %460 = vmatprep.subr.mxu0 0.0
  %461 = vmatpush2.msra.mxu0 0.0
  %462 = vmatprep.subr.mxu0 0.0
  %463 = vmatpush2.msra.mxu0 0.0
  %464 = vmatprep.subr.mxu0 0.0
  %465 = vmatpush2.msra.mxu0 0.0
  %466 = vmatprep.subr.mxu0 0.0
  %467 = vmatpush2.msra.mxu0 0.0
  %468 = vmatprep.subr.mxu0 0.0
  %469 = vmatpush2.msra.mxu0 0.0
  %470 = vmatprep.subr.mxu0 0.0
  %471 = vmatpush2.msra.mxu0 0.0
  %472 = vmatprep.subr.mxu0 0.0
  %473 = vmatpush2.msra.mxu0 0.0
  %474 = vmatprep.subr.mxu0 0.0
  %475 = vmatpush2.msra.mxu0 0.0
  %476 = vmatprep.subr.mxu0 0.0
  %477 = vmatpush2.msra.mxu0 0.0
  %478 = vmatprep.mubr.f32.mxu0 0.0
  %479 = vmatmul.mubr.f32.gmra.mxu0 %v381
  %v480 = vpop.f32.mrf.mxu0
  %v481 = vadd.f32 0.0, %v480
  %v482 = vpop.f32.mrf.mxu0
  %483 = vmatprep.mubr.f32.mxu0 0.0
  %484 = vmatmul.mubr.f32.gmra.mxu0 %v382
  %v485 = vpop.f32.mrf.mxu0
  %v486 = vadd.f32 0.0, %v485
  %v487 = vpop.f32.mrf.mxu0
  %488 = vmatprep.mubr.f32.mxu0 0.0
  %489 = vmatmul.mubr.f32.gmra.mxu0 %v383
  %v490 = vpop.f32.mrf.mxu0
  %v491 = vadd.f32 0.0, %v490
  %v492 = vpop.f32.mrf.mxu0
  %493 = vmatprep.mubr.f32.mxu0 0.0
  %494 = vmatmul.mubr.f32.gmra.mxu0 %v384
  %v495 = vpop.f32.mrf.mxu0
  %v496 = vadd.f32 0.0, %v495
  %v497 = vpop.f32.mrf.mxu0
  %498 = vmatprep.mubr.f32.mxu0 0.0
  %499 = vmatmul.mubr.f32.gmra.mxu0 %v385
  %v500 = vpop.f32.mrf.mxu0
  %v501 = vadd.f32 0.0, %v500
  %v502 = vpop.f32.mrf.mxu0
  %503 = vmatprep.mubr.f32.mxu0 0.0
  %504 = vmatmul.mubr.f32.gmra.mxu0 %v386
  %v505 = vpop.f32.mrf.mxu0
  %v506 = vadd.f32 0.0, %v505
  %v507 = vpop.f32.mrf.mxu0
  %508 = vmatprep.mubr.f32.mxu0 0.0
  %509 = vmatmul.mubr.f32.gmra.mxu0 %v387
  %v510 = vpop.f32.mrf.mxu0
  %v511 = vadd.f32 0.0, %v510
  %v512 = vpop.f32.mrf.mxu0
  %513 = vmatprep.mubr.f32.mxu0 0.0
  %514 = vmatmul.mubr.f32.gmra.mxu0 %v388
  %v515 = vpop.f32.mrf.mxu0
  %v516 = vadd.f32 0.0, %v515
  %v517 = vpop.f32.mrf.mxu0
  %518 = vmatprep.mubr.f32.mxu0 0.0
  %519 = vmatmul.mubr.f32.gmra.mxu0 %v389
  %v520 = vpop.f32.mrf.mxu0
  %v521 = vadd.f32 0.0, %v520
  %v522 = vpop.f32.mrf.mxu0
  %523 = vmatprep.mubr.f32.mxu0 0.0
  %524 = vmatmul.mubr.f32.gmra.mxu0 %v390
  %v525 = vpop.f32.mrf.mxu0
  %v526 = vadd.f32 0.0, %v525
  %v527 = vpop.f32.mrf.mxu0
  %528 = vmatprep.mubr.f32.mxu0 0.0
  %529 = vmatmul.mubr.f32.gmra.mxu0 %v391
  %v530 = vpop.f32.mrf.mxu0
  %v531 = vadd.f32 0.0, %v530
  %v532 = vpop.f32.mrf.mxu0
  %533 = vmatprep.mubr.f32.mxu0 0.0
  %534 = vmatmul.mubr.f32.gmra.mxu0 %v392
  %v535 = vpop.f32.mrf.mxu0
  %v536 = vadd.f32 0.0, %v535
  %v537 = vpop.f32.mrf.mxu0
  %538 = vmatprep.mubr.f32.mxu0 0.0
  %539 = vmatmul.mubr.f32.gmra.mxu0 %v393
  %v540 = vpop.f32.mrf.mxu0
  %v541 = vadd.f32 0.0, %v540
  %v542 = vpop.f32.mrf.mxu0
  %543 = vmatprep.mubr.f32.mxu0 0.0
  %544 = vmatmul.mubr.f32.gmra.mxu0 %v394
  %v545 = vpop.f32.mrf.mxu0
  %v546 = vadd.f32 0.0, %v545
  %v547 = vpop.f32.mrf.mxu0
  %548 = vmatprep.mubr.f32.mxu0 0.0
  %549 = vmatmul.mubr.f32.gmra.mxu0 %v395
  %v550 = vpop.f32.mrf.mxu0
  %v551 = vadd.f32 0.0, %v550
  %v552 = vpop.f32.mrf.mxu0
  %553 = vmatprep.mubr.f32.mxu0 0.0
  %554 = vmatmul.mubr.f32.gmra.mxu0 %v396
  %v555 = vpop.f32.mrf.mxu0
  %v556 = vadd.f32 0.0, %v555
  %v557 = vpop.f32.mrf.mxu0
  %558 = vdwg.mxu0
  %v559 = vadd.f32 %v303, %v481
  %v560 = vadd.f32 %v308, %v486
  %v561 = vadd.f32 %v313, %v491
  %v562 = vadd.f32 %v318, %v496
  %v563 = vadd.f32 %v323, %v501
  %v564 = vadd.f32 %v328, %v506
  %v565 = vadd.f32 %v333, %v511
  %v566 = vadd.f32 %v338, %v516
  %v567 = vadd.f32 %v343, %v521
  %v568 = vadd.f32 %v348, %v526
  %v569 = vadd.f32 %v353, %v531
  %v570 = vadd.f32 %v358, %v536
  %v571 = vadd.f32 %v363, %v541
  %v572 = vadd.f32 %v368, %v546
  %v573 = vadd.f32 %v373, %v551
  %v574 = vadd.f32 %v378, %v556
  %v575 = vld [vmem:[%s2] sm:$0xff]
  %v576 = vld [vmem:[%s2 + $0x10] sm:$0xff]
  %v577 = vld [vmem:[%s2 + $0x20] sm:$0xff]
  %v578 = vld [vmem:[%s2 + $0x30] sm:$0xff]
  %v579 = vld [vmem:[%s2 + $0x40] sm:$0xff]
  %v580 = vld [vmem:[%s2 + $0x50] sm:$0xff]
  %v581 = vld [vmem:[%s2 + $0x60] sm:$0xff]
  %v582 = vld [vmem:[%s2 + $0x70] sm:$0xff]
  %v583 = vld [vmem:[%s2 + $0x90] sm:$0xff]
  %v584 = vld [vmem:[%s2 + $0xa0] sm:$0xff]
  %v585 = vld [vmem:[%s2 + $0xb0] sm:$0xff]
  %v586 = vld [vmem:[%s2 + $0xc0] sm:$0xff]
  %v587 = vld [vmem:[%s2 + $0xd0] sm:$0xff]
  %v588 = vld [vmem:[%s2 + $0xe0] sm:$0xff]
  %v589 = vld [vmem:[%s2 + $0xf0] sm:$0xff]
  %v590 = vld [vmem:[%s2 + $0x100] sm:$0xff]
  %s591 = scalar_lea.vmem %s4, 384
  %v592 = vld [vmem:[%s591] sm:$0xff]
  %v593 = vld [vmem:[%s591 + $0x8] sm:$0xff]
  %v594 = vld [vmem:[%s591 + $0x10] sm:$0xff]
  %v595 = vld [vmem:[%s591 + $0x18] sm:$0xff]
  %v596 = vld [vmem:[%s591 + $0x20] sm:$0xff]
  %v597 = vld [vmem:[%s591 + $0x28] sm:$0xff]
  %v598 = vld [vmem:[%s591 + $0x30] sm:$0xff]
  %v599 = vld [vmem:[%s591 + $0x38] sm:$0xff]
  %v600 = vld [vmem:[%s591 + $0x40] sm:$0xff]
  %v601 = vld [vmem:[%s591 + $0x48] sm:$0xff]
  %v602 = vld [vmem:[%s591 + $0x50] sm:$0xff]
  %v603 = vld [vmem:[%s591 + $0x58] sm:$0xff]
  %v604 = vld [vmem:[%s591 + $0x60] sm:$0xff]
  %v605 = vld [vmem:[%s591 + $0x68] sm:$0xff]
  %v606 = vld [vmem:[%s591 + $0x70] sm:$0xff]
  %v607 = vld [vmem:[%s591 + $0x78] sm:$0xff]
  %608 = vmatprep.subr.mxu0 0.0
  %609 = vmatpush1.msra.mxu0 %v607
  %610 = vmatprep.subr.mxu0 0.0
  %611 = vmatpush1.msra.mxu0 %v606
  %612 = vmatprep.subr.mxu0 0.0
  %613 = vmatpush1.msra.mxu0 %v605
  %614 = vmatprep.subr.mxu0 0.0
  %615 = vmatpush1.msra.mxu0 %v604
  %616 = vmatprep.subr.mxu0 0.0
  %617 = vmatpush1.msra.mxu0 %v603
  %618 = vmatprep.subr.mxu0 0.0
  %619 = vmatpush1.msra.mxu0 %v602
  %620 = vmatprep.subr.mxu0 0.0
  %621 = vmatpush1.msra.mxu0 %v601
  %622 = vmatprep.subr.mxu0 0.0
  %623 = vmatpush1.msra.mxu0 %v600
  %624 = vmatprep.subr.mxu0 0.0
  %625 = vmatpush1.msra.mxu0 %v599
  %626 = vmatprep.subr.mxu0 0.0
  %627 = vmatpush1.msra.mxu0 %v598
  %628 = vmatprep.subr.mxu0 0.0
  %629 = vmatpush1.msra.mxu0 %v597
  %630 = vmatprep.subr.mxu0 0.0
  %631 = vmatpush1.msra.mxu0 %v596
  %632 = vmatprep.subr.mxu0 0.0
  %633 = vmatpush1.msra.mxu0 %v595
  %634 = vmatprep.subr.mxu0 0.0
  %635 = vmatpush1.msra.mxu0 %v594
  %636 = vmatprep.subr.mxu0 0.0
  %637 = vmatpush1.msra.mxu0 %v593
  %638 = vmatprep.subr.mxu0 0.0
  %639 = vmatpush1.msra.mxu0 %v592
  %640 = vmatprep.subr.mxu0 0.0
  %641 = vmatpush2.msra.mxu0 0.0
  %642 = vmatprep.subr.mxu0 0.0
  %643 = vmatpush2.msra.mxu0 0.0
  %644 = vmatprep.subr.mxu0 0.0
  %645 = vmatpush2.msra.mxu0 0.0
  %646 = vmatprep.subr.mxu0 0.0
  %647 = vmatpush2.msra.mxu0 0.0
  %648 = vmatprep.subr.mxu0 0.0
  %649 = vmatpush2.msra.mxu0 0.0
  %650 = vmatprep.subr.mxu0 0.0
  %651 = vmatpush2.msra.mxu0 0.0
  %652 = vmatprep.subr.mxu0 0.0
  %653 = vmatpush2.msra.mxu0 0.0
  %654 = vmatprep.subr.mxu0 0.0
  %655 = vmatpush2.msra.mxu0 0.0
  %656 = vmatprep.subr.mxu0 0.0
  %657 = vmatpush2.msra.mxu0 0.0
  %658 = vmatprep.subr.mxu0 0.0
  %659 = vmatpush2.msra.mxu0 0.0
  %660 = vmatprep.subr.mxu0 0.0
  %661 = vmatpush2.msra.mxu0 0.0
  %662 = vmatprep.subr.mxu0 0.0
  %663 = vmatpush2.msra.mxu0 0.0
  %664 = vmatprep.subr.mxu0 0.0
  %665 = vmatpush2.msra.mxu0 0.0
  %666 = vmatprep.subr.mxu0 0.0
  %667 = vmatpush2.msra.mxu0 0.0
  %668 = vmatprep.subr.mxu0 0.0
  %669 = vmatpush2.msra.mxu0 0.0
  %670 = vmatprep.subr.mxu0 0.0
  %671 = vmatpush2.msra.mxu0 0.0
  %672 = vmatprep.mubr.f32.mxu0 0.0
  %673 = vmatmul.mubr.f32.gmra.mxu0 %v575
  %v674 = vpop.f32.mrf.mxu0
  %v675 = vadd.f32 0.0, %v674
  %v676 = vpop.f32.mrf.mxu0
  %677 = vmatprep.mubr.f32.mxu0 0.0
  %678 = vmatmul.mubr.f32.gmra.mxu0 %v576
  %v679 = vpop.f32.mrf.mxu0
  %v680 = vadd.f32 0.0, %v679
  %v681 = vpop.f32.mrf.mxu0
  %682 = vmatprep.mubr.f32.mxu0 0.0
  %683 = vmatmul.mubr.f32.gmra.mxu0 %v577
  %v684 = vpop.f32.mrf.mxu0
  %v685 = vadd.f32 0.0, %v684
  %v686 = vpop.f32.mrf.mxu0
  %687 = vmatprep.mubr.f32.mxu0 0.0
  %688 = vmatmul.mubr.f32.gmra.mxu0 %v578
  %v689 = vpop.f32.mrf.mxu0
  %v690 = vadd.f32 0.0, %v689
  %v691 = vpop.f32.mrf.mxu0
  %692 = vmatprep.mubr.f32.mxu0 0.0
  %693 = vmatmul.mubr.f32.gmra.mxu0 %v579
  %v694 = vpop.f32.mrf.mxu0
  %v695 = vadd.f32 0.0, %v694
  %v696 = vpop.f32.mrf.mxu0
  %697 = vmatprep.mubr.f32.mxu0 0.0
  %698 = vmatmul.mubr.f32.gmra.mxu0 %v580
  %v699 = vpop.f32.mrf.mxu0
  %v700 = vadd.f32 0.0, %v699
  %v701 = vpop.f32.mrf.mxu0
  %702 = vmatprep.mubr.f32.mxu0 0.0
  %703 = vmatmul.mubr.f32.gmra.mxu0 %v581
  %v704 = vpop.f32.mrf.mxu0
  %v705 = vadd.f32 0.0, %v704
  %v706 = vpop.f32.mrf.mxu0
  %707 = vmatprep.mubr.f32.mxu0 0.0
  %708 = vmatmul.mubr.f32.gmra.mxu0 %v582
  %v709 = vpop.f32.mrf.mxu0
  %v710 = vadd.f32 0.0, %v709
  %v711 = vpop.f32.mrf.mxu0
  %712 = vmatprep.mubr.f32.mxu0 0.0
  %713 = vmatmul.mubr.f32.gmra.mxu0 %v583
  %v714 = vpop.f32.mrf.mxu0
  %v715 = vadd.f32 0.0, %v714
  %v716 = vpop.f32.mrf.mxu0
  %717 = vmatprep.mubr.f32.mxu0 0.0
  %718 = vmatmul.mubr.f32.gmra.mxu0 %v584
  %v719 = vpop.f32.mrf.mxu0
  %v720 = vadd.f32 0.0, %v719
  %v721 = vpop.f32.mrf.mxu0
  %722 = vmatprep.mubr.f32.mxu0 0.0
  %723 = vmatmul.mubr.f32.gmra.mxu0 %v585
  %v724 = vpop.f32.mrf.mxu0
  %v725 = vadd.f32 0.0, %v724
  %v726 = vpop.f32.mrf.mxu0
  %727 = vmatprep.mubr.f32.mxu0 0.0
  %728 = vmatmul.mubr.f32.gmra.mxu0 %v586
  %v729 = vpop.f32.mrf.mxu0
  %v730 = vadd.f32 0.0, %v729
  %v731 = vpop.f32.mrf.mxu0
  %732 = vmatprep.mubr.f32.mxu0 0.0
  %733 = vmatmul.mubr.f32.gmra.mxu0 %v587
  %v734 = vpop.f32.mrf.mxu0
  %v735 = vadd.f32 0.0, %v734
  %v736 = vpop.f32.mrf.mxu0
  %737 = vmatprep.mubr.f32.mxu0 0.0
  %738 = vmatmul.mubr.f32.gmra.mxu0 %v588
  %v739 = vpop.f32.mrf.mxu0
  %v740 = vadd.f32 0.0, %v739
  %v741 = vpop.f32.mrf.mxu0
  %742 = vmatprep.mubr.f32.mxu0 0.0
  %743 = vmatmul.mubr.f32.gmra.mxu0 %v589
  %v744 = vpop.f32.mrf.mxu0
  %v745 = vadd.f32 0.0, %v744
  %v746 = vpop.f32.mrf.mxu0
  %747 = vmatprep.mubr.f32.mxu0 0.0
  %748 = vmatmul.mubr.f32.gmra.mxu0 %v590
  %v749 = vpop.f32.mrf.mxu0
  %v750 = vadd.f32 0.0, %v749
  %v751 = vpop.f32.mrf.mxu0
  %752 = vdwg.mxu0
  %v753 = vadd.f32 %v559, %v675
  %v754 = vadd.f32 %v560, %v680
  %v755 = vadd.f32 %v561, %v685
  %v756 = vadd.f32 %v562, %v690
  %v757 = vadd.f32 %v563, %v695
  %v758 = vadd.f32 %v564, %v700
  %v759 = vadd.f32 %v565, %v705
  %v760 = vadd.f32 %v566, %v710
  %v761 = vadd.f32 %v567, %v715
  %v762 = vadd.f32 %v568, %v720
  %v763 = vadd.f32 %v569, %v725
  %v764 = vadd.f32 %v570, %v730
  %v765 = vadd.f32 %v571, %v735
  %v766 = vadd.f32 %v572, %v740
  %v767 = vadd.f32 %v573, %v745
  %v768 = vadd.f32 %v574, %v750
  %v769 = vld [vmem:[%s3] sm:$0xff]
  %v770 = vld [vmem:[%s3 + $0x10] sm:$0xff]
  %v771 = vld [vmem:[%s3 + $0x20] sm:$0xff]
  %v772 = vld [vmem:[%s3 + $0x30] sm:$0xff]
  %v773 = vld [vmem:[%s3 + $0x40] sm:$0xff]
  %v774 = vld [vmem:[%s3 + $0x50] sm:$0xff]
  %v775 = vld [vmem:[%s3 + $0x60] sm:$0xff]
  %v776 = vld [vmem:[%s3 + $0x70] sm:$0xff]
  %v777 = vld [vmem:[%s3 + $0x90] sm:$0xff]
  %v778 = vld [vmem:[%s3 + $0xa0] sm:$0xff]
  %v779 = vld [vmem:[%s3 + $0xb0] sm:$0xff]
  %v780 = vld [vmem:[%s3 + $0xc0] sm:$0xff]
  %v781 = vld [vmem:[%s3 + $0xd0] sm:$0xff]
  %v782 = vld [vmem:[%s3 + $0xe0] sm:$0xff]
  %v783 = vld [vmem:[%s3 + $0xf0] sm:$0xff]
  %v784 = vld [vmem:[%s3 + $0x100] sm:$0xff]
  %s785 = scalar_lea.vmem %s4, 512
  %v786 = vld [vmem:[%s785] sm:$0xff]
  %v787 = vld [vmem:[%s785 + $0x8] sm:$0xff]
  %v788 = vld [vmem:[%s785 + $0x10] sm:$0xff]
  %v789 = vld [vmem:[%s785 + $0x18] sm:$0xff]
  %v790 = vld [vmem:[%s785 + $0x20] sm:$0xff]
  %v791 = vld [vmem:[%s785 + $0x28] sm:$0xff]
  %v792 = vld [vmem:[%s785 + $0x30] sm:$0xff]
  %v793 = vld [vmem:[%s785 + $0x38] sm:$0xff]
  %v794 = vld [vmem:[%s785 + $0x40] sm:$0xff]
  %v795 = vld [vmem:[%s785 + $0x48] sm:$0xff]
  %v796 = vld [vmem:[%s785 + $0x50] sm:$0xff]
  %v797 = vld [vmem:[%s785 + $0x58] sm:$0xff]
  %v798 = vld [vmem:[%s785 + $0x60] sm:$0xff]
  %v799 = vld [vmem:[%s785 + $0x68] sm:$0xff]
  %v800 = vld [vmem:[%s785 + $0x70] sm:$0xff]
  %v801 = vld [vmem:[%s785 + $0x78] sm:$0xff]
  %802 = vmatprep.subr.mxu0 0.0
  %803 = vmatpush1.msra.mxu0 %v801
  %804 = vmatprep.subr.mxu0 0.0
  %805 = vmatpush1.msra.mxu0 %v800
  %806 = vmatprep.subr.mxu0 0.0
  %807 = vmatpush1.msra.mxu0 %v799
  %808 = vmatprep.subr.mxu0 0.0
  %809 = vmatpush1.msra.mxu0 %v798
  %810 = vmatprep.subr.mxu0 0.0
  %811 = vmatpush1.msra.mxu0 %v797
  %812 = vmatprep.subr.mxu0 0.0
  %813 = vmatpush1.msra.mxu0 %v796
  %814 = vmatprep.subr.mxu0 0.0
  %815 = vmatpush1.msra.mxu0 %v795
  %816 = vmatprep.subr.mxu0 0.0
  %817 = vmatpush1.msra.mxu0 %v794
  %818 = vmatprep.subr.mxu0 0.0
  %819 = vmatpush1.msra.mxu0 %v793
  %820 = vmatprep.subr.mxu0 0.0
  %821 = vmatpush1.msra.mxu0 %v792
  %822 = vmatprep.subr.mxu0 0.0
  %823 = vmatpush1.msra.mxu0 %v791
  %824 = vmatprep.subr.mxu0 0.0
  %825 = vmatpush1.msra.mxu0 %v790
  %826 = vmatprep.subr.mxu0 0.0
  %827 = vmatpush1.msra.mxu0 %v789
  %828 = vmatprep.subr.mxu0 0.0
  %829 = vmatpush1.msra.mxu0 %v788
  %830 = vmatprep.subr.mxu0 0.0
  %831 = vmatpush1.msra.mxu0 %v787
  %832 = vmatprep.subr.mxu0 0.0
  %833 = vmatpush1.msra.mxu0 %v786
  %834 = vmatprep.subr.mxu0 0.0
  %835 = vmatpush2.msra.mxu0 0.0
  %836 = vmatprep.subr.mxu0 0.0
  %837 = vmatpush2.msra.mxu0 0.0
  %838 = vmatprep.subr.mxu0 0.0
  %839 = vmatpush2.msra.mxu0 0.0
  %840 = vmatprep.subr.mxu0 0.0
  %841 = vmatpush2.msra.mxu0 0.0
  %842 = vmatprep.subr.mxu0 0.0
  %843 = vmatpush2.msra.mxu0 0.0
  %844 = vmatprep.subr.mxu0 0.0
  %845 = vmatpush2.msra.mxu0 0.0
  %846 = vmatprep.subr.mxu0 0.0
  %847 = vmatpush2.msra.mxu0 0.0
  %848 = vmatprep.subr.mxu0 0.0
  %849 = vmatpush2.msra.mxu0 0.0
  %850 = vmatprep.subr.mxu0 0.0
  %851 = vmatpush2.msra.mxu0 0.0
  %852 = vmatprep.subr.mxu0 0.0
  %853 = vmatpush2.msra.mxu0 0.0
  %854 = vmatprep.subr.mxu0 0.0
  %855 = vmatpush2.msra.mxu0 0.0
  %856 = vmatprep.subr.mxu0 0.0
  %857 = vmatpush2.msra.mxu0 0.0
  %858 = vmatprep.subr.mxu0 0.0
  %859 = vmatpush2.msra.mxu0 0.0
  %860 = vmatprep.subr.mxu0 0.0
  %861 = vmatpush2.msra.mxu0 0.0
  %862 = vmatprep.subr.mxu0 0.0
  %863 = vmatpush2.msra.mxu0 0.0
  %864 = vmatprep.subr.mxu0 0.0
  %865 = vmatpush2.msra.mxu0 0.0
  %866 = vmatprep.mubr.f32.mxu0 0.0
  %867 = vmatmul.mubr.f32.gmra.mxu0 %v769
  %v868 = vpop.f32.mrf.mxu0
  %v869 = vadd.f32 0.0, %v868
  %v870 = vpop.f32.mrf.mxu0
  %871 = vmatprep.mubr.f32.mxu0 0.0
  %872 = vmatmul.mubr.f32.gmra.mxu0 %v770
  %v873 = vpop.f32.mrf.mxu0
  %v874 = vadd.f32 0.0, %v873
  %v875 = vpop.f32.mrf.mxu0
  %876 = vmatprep.mubr.f32.mxu0 0.0
  %877 = vmatmul.mubr.f32.gmra.mxu0 %v771
  %v878 = vpop.f32.mrf.mxu0
  %v879 = vadd.f32 0.0, %v878
  %v880 = vpop.f32.mrf.mxu0
  %881 = vmatprep.mubr.f32.mxu0 0.0
  %882 = vmatmul.mubr.f32.gmra.mxu0 %v772
  %v883 = vpop.f32.mrf.mxu0
  %v884 = vadd.f32 0.0, %v883
  %v885 = vpop.f32.mrf.mxu0
  %886 = vmatprep.mubr.f32.mxu0 0.0
  %887 = vmatmul.mubr.f32.gmra.mxu0 %v773
  %v888 = vpop.f32.mrf.mxu0
  %v889 = vadd.f32 0.0, %v888
  %v890 = vpop.f32.mrf.mxu0
  %891 = vmatprep.mubr.f32.mxu0 0.0
  %892 = vmatmul.mubr.f32.gmra.mxu0 %v774
  %v893 = vpop.f32.mrf.mxu0
  %v894 = vadd.f32 0.0, %v893
  %v895 = vpop.f32.mrf.mxu0
  %896 = vmatprep.mubr.f32.mxu0 0.0
  %897 = vmatmul.mubr.f32.gmra.mxu0 %v775
  %v898 = vpop.f32.mrf.mxu0
  %v899 = vadd.f32 0.0, %v898
  %v900 = vpop.f32.mrf.mxu0
  %901 = vmatprep.mubr.f32.mxu0 0.0
  %902 = vmatmul.mubr.f32.gmra.mxu0 %v776
  %v903 = vpop.f32.mrf.mxu0
  %v904 = vadd.f32 0.0, %v903
  %v905 = vpop.f32.mrf.mxu0
  %906 = vmatprep.mubr.f32.mxu0 0.0
  %907 = vmatmul.mubr.f32.gmra.mxu0 %v777
  %v908 = vpop.f32.mrf.mxu0
  %v909 = vadd.f32 0.0, %v908
  %v910 = vpop.f32.mrf.mxu0
  %911 = vmatprep.mubr.f32.mxu0 0.0
  %912 = vmatmul.mubr.f32.gmra.mxu0 %v778
  %v913 = vpop.f32.mrf.mxu0
  %v914 = vadd.f32 0.0, %v913
  %v915 = vpop.f32.mrf.mxu0
  %916 = vmatprep.mubr.f32.mxu0 0.0
  %917 = vmatmul.mubr.f32.gmra.mxu0 %v779
  %v918 = vpop.f32.mrf.mxu0
  %v919 = vadd.f32 0.0, %v918
  %v920 = vpop.f32.mrf.mxu0
  %921 = vmatprep.mubr.f32.mxu0 0.0
  %922 = vmatmul.mubr.f32.gmra.mxu0 %v780
  %v923 = vpop.f32.mrf.mxu0
  %v924 = vadd.f32 0.0, %v923
  %v925 = vpop.f32.mrf.mxu0
  %926 = vmatprep.mubr.f32.mxu0 0.0
  %927 = vmatmul.mubr.f32.gmra.mxu0 %v781
  %v928 = vpop.f32.mrf.mxu0
  %v929 = vadd.f32 0.0, %v928
  %v930 = vpop.f32.mrf.mxu0
  %931 = vmatprep.mubr.f32.mxu0 0.0
  %932 = vmatmul.mubr.f32.gmra.mxu0 %v782
  %v933 = vpop.f32.mrf.mxu0
  %v934 = vadd.f32 0.0, %v933
  %v935 = vpop.f32.mrf.mxu0
  %936 = vmatprep.mubr.f32.mxu0 0.0
  %937 = vmatmul.mubr.f32.gmra.mxu0 %v783
  %v938 = vpop.f32.mrf.mxu0
  %v939 = vadd.f32 0.0, %v938
  %v940 = vpop.f32.mrf.mxu0
  %941 = vmatprep.mubr.f32.mxu0 0.0
  %942 = vmatmul.mubr.f32.gmra.mxu0 %v784
  %v943 = vpop.f32.mrf.mxu0
  %v944 = vadd.f32 0.0, %v943
  %v945 = vpop.f32.mrf.mxu0
  %946 = vdwg.mxu0
  %v947 = vadd.f32 %v753, %v869
  %v948 = vadd.f32 %v754, %v874
  %v949 = vadd.f32 %v755, %v879
  %v950 = vadd.f32 %v756, %v884
  %v951 = vadd.f32 %v757, %v889
  %v952 = vadd.f32 %v758, %v894
  %v953 = vadd.f32 %v759, %v899
  %v954 = vadd.f32 %v760, %v904
  %v955 = vadd.f32 %v761, %v909
  %v956 = vadd.f32 %v762, %v914
  %v957 = vadd.f32 %v763, %v919
  %v958 = vadd.f32 %v764, %v924
  %v959 = vadd.f32 %v765, %v929
  %v960 = vadd.f32 %v766, %v934
  %v961 = vadd.f32 %v767, %v939
  %v962 = vadd.f32 %v768, %v944
  %v963 = vld [vmem:[%s2 + $0x1] sm:$0xff]
  %v964 = vld [vmem:[%s2 + $0x11] sm:$0xff]
  %v965 = vld [vmem:[%s2 + $0x21] sm:$0xff]
  %v966 = vld [vmem:[%s2 + $0x31] sm:$0xff]
  %v967 = vld [vmem:[%s2 + $0x41] sm:$0xff]
  %v968 = vld [vmem:[%s2 + $0x51] sm:$0xff]
  %v969 = vld [vmem:[%s2 + $0x61] sm:$0xff]
  %v970 = vld [vmem:[%s2 + $0x71] sm:$0xff]
  %v971 = vld [vmem:[%s2 + $0x91] sm:$0xff]
  %v972 = vld [vmem:[%s2 + $0xa1] sm:$0xff]
  %v973 = vld [vmem:[%s2 + $0xb1] sm:$0xff]
  %v974 = vld [vmem:[%s2 + $0xc1] sm:$0xff]
  %v975 = vld [vmem:[%s2 + $0xd1] sm:$0xff]
  %v976 = vld [vmem:[%s2 + $0xe1] sm:$0xff]
  %v977 = vld [vmem:[%s2 + $0xf1] sm:$0xff]
  %v978 = vld [vmem:[%s2 + $0x101] sm:$0xff]
  %s979 = scalar_lea.vmem %s4, 640
  %v980 = vld [vmem:[%s979] sm:$0xff]
  %v981 = vld [vmem:[%s979 + $0x8] sm:$0xff]
  %v982 = vld [vmem:[%s979 + $0x10] sm:$0xff]
  %v983 = vld [vmem:[%s979 + $0x18] sm:$0xff]
  %v984 = vld [vmem:[%s979 + $0x20] sm:$0xff]
  %v985 = vld [vmem:[%s979 + $0x28] sm:$0xff]
  %v986 = vld [vmem:[%s979 + $0x30] sm:$0xff]
  %v987 = vld [vmem:[%s979 + $0x38] sm:$0xff]
  %v988 = vld [vmem:[%s979 + $0x40] sm:$0xff]
  %v989 = vld [vmem:[%s979 + $0x48] sm:$0xff]
  %v990 = vld [vmem:[%s979 + $0x50] sm:$0xff]
  %v991 = vld [vmem:[%s979 + $0x58] sm:$0xff]
  %v992 = vld [vmem:[%s979 + $0x60] sm:$0xff]
  %v993 = vld [vmem:[%s979 + $0x68] sm:$0xff]
  %v994 = vld [vmem:[%s979 + $0x70] sm:$0xff]
  %v995 = vld [vmem:[%s979 + $0x78] sm:$0xff]
  %996 = vmatprep.subr.mxu0 0.0
  %997 = vmatpush1.msra.mxu0 %v995
  %998 = vmatprep.subr.mxu0 0.0
  %999 = vmatpush1.msra.mxu0 %v994
  %1000 = vmatprep.subr.mxu0 0.0
  %1001 = vmatpush1.msra.mxu0 %v993
  %1002 = vmatprep.subr.mxu0 0.0
  %1003 = vmatpush1.msra.mxu0 %v992
  %1004 = vmatprep.subr.mxu0 0.0
  %1005 = vmatpush1.msra.mxu0 %v991
  %1006 = vmatprep.subr.mxu0 0.0
  %1007 = vmatpush1.msra.mxu0 %v990
  %1008 = vmatprep.subr.mxu0 0.0
  %1009 = vmatpush1.msra.mxu0 %v989
  %1010 = vmatprep.subr.mxu0 0.0
  %1011 = vmatpush1.msra.mxu0 %v988
  %1012 = vmatprep.subr.mxu0 0.0
  %1013 = vmatpush1.msra.mxu0 %v987
  %1014 = vmatprep.subr.mxu0 0.0
  %1015 = vmatpush1.msra.mxu0 %v986
  %1016 = vmatprep.subr.mxu0 0.0
  %1017 = vmatpush1.msra.mxu0 %v985
  %1018 = vmatprep.subr.mxu0 0.0
  %1019 = vmatpush1.msra.mxu0 %v984
  %1020 = vmatprep.subr.mxu0 0.0
  %1021 = vmatpush1.msra.mxu0 %v983
  %1022 = vmatprep.subr.mxu0 0.0
  %1023 = vmatpush1.msra.mxu0 %v982
  %1024 = vmatprep.subr.mxu0 0.0
  %1025 = vmatpush1.msra.mxu0 %v981
  %1026 = vmatprep.subr.mxu0 0.0
  %1027 = vmatpush1.msra.mxu0 %v980
  %1028 = vmatprep.subr.mxu0 0.0
  %1029 = vmatpush2.msra.mxu0 0.0
  %1030 = vmatprep.subr.mxu0 0.0
  %1031 = vmatpush2.msra.mxu0 0.0
  %1032 = vmatprep.subr.mxu0 0.0
  %1033 = vmatpush2.msra.mxu0 0.0
  %1034 = vmatprep.subr.mxu0 0.0
  %1035 = vmatpush2.msra.mxu0 0.0
  %1036 = vmatprep.subr.mxu0 0.0
  %1037 = vmatpush2.msra.mxu0 0.0
  %1038 = vmatprep.subr.mxu0 0.0
  %1039 = vmatpush2.msra.mxu0 0.0
  %1040 = vmatprep.subr.mxu0 0.0
  %1041 = vmatpush2.msra.mxu0 0.0
  %1042 = vmatprep.subr.mxu0 0.0
  %1043 = vmatpush2.msra.mxu0 0.0
  %1044 = vmatprep.subr.mxu0 0.0
  %1045 = vmatpush2.msra.mxu0 0.0
  %1046 = vmatprep.subr.mxu0 0.0
  %1047 = vmatpush2.msra.mxu0 0.0
  %1048 = vmatprep.subr.mxu0 0.0
  %1049 = vmatpush2.msra.mxu0 0.0
  %1050 = vmatprep.subr.mxu0 0.0
  %1051 = vmatpush2.msra.mxu0 0.0
  %1052 = vmatprep.subr.mxu0 0.0
  %1053 = vmatpush2.msra.mxu0 0.0
  %1054 = vmatprep.subr.mxu0 0.0
  %1055 = vmatpush2.msra.mxu0 0.0
  %1056 = vmatprep.subr.mxu0 0.0
  %1057 = vmatpush2.msra.mxu0 0.0
  %1058 = vmatprep.subr.mxu0 0.0
  %1059 = vmatpush2.msra.mxu0 0.0
  %1060 = vmatprep.mubr.f32.mxu0 0.0
  %1061 = vmatmul.mubr.f32.gmra.mxu0 %v963
  %v1062 = vpop.f32.mrf.mxu0
  %v1063 = vadd.f32 0.0, %v1062
  %v1064 = vpop.f32.mrf.mxu0
  %1065 = vmatprep.mubr.f32.mxu0 0.0
  %1066 = vmatmul.mubr.f32.gmra.mxu0 %v964
  %v1067 = vpop.f32.mrf.mxu0
  %v1068 = vadd.f32 0.0, %v1067
  %v1069 = vpop.f32.mrf.mxu0
  %1070 = vmatprep.mubr.f32.mxu0 0.0
  %1071 = vmatmul.mubr.f32.gmra.mxu0 %v965
  %v1072 = vpop.f32.mrf.mxu0
  %v1073 = vadd.f32 0.0, %v1072
  %v1074 = vpop.f32.mrf.mxu0
  %1075 = vmatprep.mubr.f32.mxu0 0.0
  %1076 = vmatmul.mubr.f32.gmra.mxu0 %v966
  %v1077 = vpop.f32.mrf.mxu0
  %v1078 = vadd.f32 0.0, %v1077
  %v1079 = vpop.f32.mrf.mxu0
  %1080 = vmatprep.mubr.f32.mxu0 0.0
  %1081 = vmatmul.mubr.f32.gmra.mxu0 %v967
  %v1082 = vpop.f32.mrf.mxu0
  %v1083 = vadd.f32 0.0, %v1082
  %v1084 = vpop.f32.mrf.mxu0
  %1085 = vmatprep.mubr.f32.mxu0 0.0
  %1086 = vmatmul.mubr.f32.gmra.mxu0 %v968
  %v1087 = vpop.f32.mrf.mxu0
  %v1088 = vadd.f32 0.0, %v1087
  %v1089 = vpop.f32.mrf.mxu0
  %1090 = vmatprep.mubr.f32.mxu0 0.0
  %1091 = vmatmul.mubr.f32.gmra.mxu0 %v969
  %v1092 = vpop.f32.mrf.mxu0
  %v1093 = vadd.f32 0.0, %v1092
  %v1094 = vpop.f32.mrf.mxu0
  %1095 = vmatprep.mubr.f32.mxu0 0.0
  %1096 = vmatmul.mubr.f32.gmra.mxu0 %v970
  %v1097 = vpop.f32.mrf.mxu0
  %v1098 = vadd.f32 0.0, %v1097
  %v1099 = vpop.f32.mrf.mxu0
  %1100 = vmatprep.mubr.f32.mxu0 0.0
  %1101 = vmatmul.mubr.f32.gmra.mxu0 %v971
  %v1102 = vpop.f32.mrf.mxu0
  %v1103 = vadd.f32 0.0, %v1102
  %v1104 = vpop.f32.mrf.mxu0
  %1105 = vmatprep.mubr.f32.mxu0 0.0
  %1106 = vmatmul.mubr.f32.gmra.mxu0 %v972
  %v1107 = vpop.f32.mrf.mxu0
  %v1108 = vadd.f32 0.0, %v1107
  %v1109 = vpop.f32.mrf.mxu0
  %1110 = vmatprep.mubr.f32.mxu0 0.0
  %1111 = vmatmul.mubr.f32.gmra.mxu0 %v973
  %v1112 = vpop.f32.mrf.mxu0
  %v1113 = vadd.f32 0.0, %v1112
  %v1114 = vpop.f32.mrf.mxu0
  %1115 = vmatprep.mubr.f32.mxu0 0.0
  %1116 = vmatmul.mubr.f32.gmra.mxu0 %v974
  %v1117 = vpop.f32.mrf.mxu0
  %v1118 = vadd.f32 0.0, %v1117
  %v1119 = vpop.f32.mrf.mxu0
  %1120 = vmatprep.mubr.f32.mxu0 0.0
  %1121 = vmatmul.mubr.f32.gmra.mxu0 %v975
  %v1122 = vpop.f32.mrf.mxu0
  %v1123 = vadd.f32 0.0, %v1122
  %v1124 = vpop.f32.mrf.mxu0
  %1125 = vmatprep.mubr.f32.mxu0 0.0
  %1126 = vmatmul.mubr.f32.gmra.mxu0 %v976
  %v1127 = vpop.f32.mrf.mxu0
  %v1128 = vadd.f32 0.0, %v1127
  %v1129 = vpop.f32.mrf.mxu0
  %1130 = vmatprep.mubr.f32.mxu0 0.0
  %1131 = vmatmul.mubr.f32.gmra.mxu0 %v977
  %v1132 = vpop.f32.mrf.mxu0
  %v1133 = vadd.f32 0.0, %v1132
  %v1134 = vpop.f32.mrf.mxu0
  %1135 = vmatprep.mubr.f32.mxu0 0.0
  %1136 = vmatmul.mubr.f32.gmra.mxu0 %v978
  %v1137 = vpop.f32.mrf.mxu0
  %v1138 = vadd.f32 0.0, %v1137
  %v1139 = vpop.f32.mrf.mxu0
  %1140 = vdwg.mxu0
  %v1141 = vadd.f32 %v947, %v1063
  %v1142 = vadd.f32 %v948, %v1068
  %v1143 = vadd.f32 %v949, %v1073
  %v1144 = vadd.f32 %v950, %v1078
  %v1145 = vadd.f32 %v951, %v1083
  %v1146 = vadd.f32 %v952, %v1088
  %v1147 = vadd.f32 %v953, %v1093
  %v1148 = vadd.f32 %v954, %v1098
  %v1149 = vadd.f32 %v955, %v1103
  %v1150 = vadd.f32 %v956, %v1108
  %v1151 = vadd.f32 %v957, %v1113
  %v1152 = vadd.f32 %v958, %v1118
  %v1153 = vadd.f32 %v959, %v1123
  %v1154 = vadd.f32 %v960, %v1128
  %v1155 = vadd.f32 %v961, %v1133
  %v1156 = vadd.f32 %v962, %v1138
  %s1157 = scalar_lea.vmem %s0, 16
  %v1158 = vld [vmem:[%s1157] sm:$0xff]
  %v1159 = vld [vmem:[%s1157 + $0x10] sm:$0xff]
  %v1160 = vld [vmem:[%s1157 + $0x20] sm:$0xff]
  %v1161 = vld [vmem:[%s1157 + $0x30] sm:$0xff]
  %v1162 = vld [vmem:[%s1157 + $0x40] sm:$0xff]
  %v1163 = vld [vmem:[%s1157 + $0x50] sm:$0xff]
  %v1164 = vld [vmem:[%s1157 + $0x60] sm:$0xff]
  %v1165 = vld [vmem:[%s1157 + $0x70] sm:$0xff]
  %v1166 = vld [vmem:[%s1157 + $0x90] sm:$0xff]
  %v1167 = vld [vmem:[%s1157 + $0xa0] sm:$0xff]
  %v1168 = vld [vmem:[%s1157 + $0xb0] sm:$0xff]
  %v1169 = vld [vmem:[%s1157 + $0xc0] sm:$0xff]
  %v1170 = vld [vmem:[%s1157 + $0xd0] sm:$0xff]
  %v1171 = vld [vmem:[%s1157 + $0xe0] sm:$0xff]
  %v1172 = vld [vmem:[%s1157 + $0xf0] sm:$0xff]
  %v1173 = vld [vmem:[%s1157 + $0x100] sm:$0xff]
  %s1174 = scalar_lea.vmem %s4, 768
  %v1175 = vld [vmem:[%s1174] sm:$0xff]
  %v1176 = vld [vmem:[%s1174 + $0x8] sm:$0xff]
  %v1177 = vld [vmem:[%s1174 + $0x10] sm:$0xff]
  %v1178 = vld [vmem:[%s1174 + $0x18] sm:$0xff]
  %v1179 = vld [vmem:[%s1174 + $0x20] sm:$0xff]
  %v1180 = vld [vmem:[%s1174 + $0x28] sm:$0xff]
  %v1181 = vld [vmem:[%s1174 + $0x30] sm:$0xff]
  %v1182 = vld [vmem:[%s1174 + $0x38] sm:$0xff]
  %v1183 = vld [vmem:[%s1174 + $0x40] sm:$0xff]
  %v1184 = vld [vmem:[%s1174 + $0x48] sm:$0xff]
  %v1185 = vld [vmem:[%s1174 + $0x50] sm:$0xff]
  %v1186 = vld [vmem:[%s1174 + $0x58] sm:$0xff]
  %v1187 = vld [vmem:[%s1174 + $0x60] sm:$0xff]
  %v1188 = vld [vmem:[%s1174 + $0x68] sm:$0xff]
  %v1189 = vld [vmem:[%s1174 + $0x70] sm:$0xff]
  %v1190 = vld [vmem:[%s1174 + $0x78] sm:$0xff]
  %1191 = vmatprep.subr.mxu0 0.0
  %1192 = vmatpush1.msra.mxu0 %v1190
  %1193 = vmatprep.subr.mxu0 0.0
  %1194 = vmatpush1.msra.mxu0 %v1189
  %1195 = vmatprep.subr.mxu0 0.0
  %1196 = vmatpush1.msra.mxu0 %v1188
  %1197 = vmatprep.subr.mxu0 0.0
  %1198 = vmatpush1.msra.mxu0 %v1187
  %1199 = vmatprep.subr.mxu0 0.0
  %1200 = vmatpush1.msra.mxu0 %v1186
  %1201 = vmatprep.subr.mxu0 0.0
  %1202 = vmatpush1.msra.mxu0 %v1185
  %1203 = vmatprep.subr.mxu0 0.0
  %1204 = vmatpush1.msra.mxu0 %v1184
  %1205 = vmatprep.subr.mxu0 0.0
  %1206 = vmatpush1.msra.mxu0 %v1183
  %1207 = vmatprep.subr.mxu0 0.0
  %1208 = vmatpush1.msra.mxu0 %v1182
  %1209 = vmatprep.subr.mxu0 0.0
  %1210 = vmatpush1.msra.mxu0 %v1181
  %1211 = vmatprep.subr.mxu0 0.0
  %1212 = vmatpush1.msra.mxu0 %v1180
  %1213 = vmatprep.subr.mxu0 0.0
  %1214 = vmatpush1.msra.mxu0 %v1179
  %1215 = vmatprep.subr.mxu0 0.0
  %1216 = vmatpush1.msra.mxu0 %v1178
  %1217 = vmatprep.subr.mxu0 0.0
  %1218 = vmatpush1.msra.mxu0 %v1177
  %1219 = vmatprep.subr.mxu0 0.0
  %1220 = vmatpush1.msra.mxu0 %v1176
  %1221 = vmatprep.subr.mxu0 0.0
  %1222 = vmatpush1.msra.mxu0 %v1175
  %1223 = vmatprep.subr.mxu0 0.0
  %1224 = vmatpush2.msra.mxu0 0.0
  %1225 = vmatprep.subr.mxu0 0.0
  %1226 = vmatpush2.msra.mxu0 0.0
  %1227 = vmatprep.subr.mxu0 0.0
  %1228 = vmatpush2.msra.mxu0 0.0
  %1229 = vmatprep.subr.mxu0 0.0
  %1230 = vmatpush2.msra.mxu0 0.0
  %1231 = vmatprep.subr.mxu0 0.0
  %1232 = vmatpush2.msra.mxu0 0.0
  %1233 = vmatprep.subr.mxu0 0.0
  %1234 = vmatpush2.msra.mxu0 0.0
  %1235 = vmatprep.subr.mxu0 0.0
  %1236 = vmatpush2.msra.mxu0 0.0
  %1237 = vmatprep.subr.mxu0 0.0
  %1238 = vmatpush2.msra.mxu0 0.0
  %1239 = vmatprep.subr.mxu0 0.0
  %1240 = vmatpush2.msra.mxu0 0.0
  %1241 = vmatprep.subr.mxu0 0.0
  %1242 = vmatpush2.msra.mxu0 0.0
  %1243 = vmatprep.subr.mxu0 0.0
  %1244 = vmatpush2.msra.mxu0 0.0
  %1245 = vmatprep.subr.mxu0 0.0
  %1246 = vmatpush2.msra.mxu0 0.0
  %1247 = vmatprep.subr.mxu0 0.0
  %1248 = vmatpush2.msra.mxu0 0.0
  %1249 = vmatprep.subr.mxu0 0.0
  %1250 = vmatpush2.msra.mxu0 0.0
  %1251 = vmatprep.subr.mxu0 0.0
  %1252 = vmatpush2.msra.mxu0 0.0
  %1253 = vmatprep.subr.mxu0 0.0
  %1254 = vmatpush2.msra.mxu0 0.0
  %1255 = vmatprep.mubr.f32.mxu0 0.0
  %1256 = vmatmul.mubr.f32.gmra.mxu0 %v1158
  %v1257 = vpop.f32.mrf.mxu0
  %v1258 = vadd.f32 0.0, %v1257
  %v1259 = vpop.f32.mrf.mxu0
  %1260 = vmatprep.mubr.f32.mxu0 0.0
  %1261 = vmatmul.mubr.f32.gmra.mxu0 %v1159
  %v1262 = vpop.f32.mrf.mxu0
  %v1263 = vadd.f32 0.0, %v1262
  %v1264 = vpop.f32.mrf.mxu0
  %1265 = vmatprep.mubr.f32.mxu0 0.0
  %1266 = vmatmul.mubr.f32.gmra.mxu0 %v1160
  %v1267 = vpop.f32.mrf.mxu0
  %v1268 = vadd.f32 0.0, %v1267
  %v1269 = vpop.f32.mrf.mxu0
  %1270 = vmatprep.mubr.f32.mxu0 0.0
  %1271 = vmatmul.mubr.f32.gmra.mxu0 %v1161
  %v1272 = vpop.f32.mrf.mxu0
  %v1273 = vadd.f32 0.0, %v1272
  %v1274 = vpop.f32.mrf.mxu0
  %1275 = vmatprep.mubr.f32.mxu0 0.0
  %1276 = vmatmul.mubr.f32.gmra.mxu0 %v1162
  %v1277 = vpop.f32.mrf.mxu0
  %v1278 = vadd.f32 0.0, %v1277
  %v1279 = vpop.f32.mrf.mxu0
  %1280 = vmatprep.mubr.f32.mxu0 0.0
  %1281 = vmatmul.mubr.f32.gmra.mxu0 %v1163
  %v1282 = vpop.f32.mrf.mxu0
  %v1283 = vadd.f32 0.0, %v1282
  %v1284 = vpop.f32.mrf.mxu0
  %1285 = vmatprep.mubr.f32.mxu0 0.0
  %1286 = vmatmul.mubr.f32.gmra.mxu0 %v1164
  %v1287 = vpop.f32.mrf.mxu0
  %v1288 = vadd.f32 0.0, %v1287
  %v1289 = vpop.f32.mrf.mxu0
  %1290 = vmatprep.mubr.f32.mxu0 0.0
  %1291 = vmatmul.mubr.f32.gmra.mxu0 %v1165
  %v1292 = vpop.f32.mrf.mxu0
  %v1293 = vadd.f32 0.0, %v1292
  %v1294 = vpop.f32.mrf.mxu0
  %1295 = vmatprep.mubr.f32.mxu0 0.0
  %1296 = vmatmul.mubr.f32.gmra.mxu0 %v1166
  %v1297 = vpop.f32.mrf.mxu0
  %v1298 = vadd.f32 0.0, %v1297
  %v1299 = vpop.f32.mrf.mxu0
  %1300 = vmatprep.mubr.f32.mxu0 0.0
  %1301 = vmatmul.mubr.f32.gmra.mxu0 %v1167
  %v1302 = vpop.f32.mrf.mxu0
  %v1303 = vadd.f32 0.0, %v1302
  %v1304 = vpop.f32.mrf.mxu0
  %1305 = vmatprep.mubr.f32.mxu0 0.0
  %1306 = vmatmul.mubr.f32.gmra.mxu0 %v1168
  %v1307 = vpop.f32.mrf.mxu0
  %v1308 = vadd.f32 0.0, %v1307
  %v1309 = vpop.f32.mrf.mxu0
  %1310 = vmatprep.mubr.f32.mxu0 0.0
  %1311 = vmatmul.mubr.f32.gmra.mxu0 %v1169
  %v1312 = vpop.f32.mrf.mxu0
  %v1313 = vadd.f32 0.0, %v1312
  %v1314 = vpop.f32.mrf.mxu0
  %1315 = vmatprep.mubr.f32.mxu0 0.0
  %1316 = vmatmul.mubr.f32.gmra.mxu0 %v1170
  %v1317 = vpop.f32.mrf.mxu0
  %v1318 = vadd.f32 0.0, %v1317
  %v1319 = vpop.f32.mrf.mxu0
  %1320 = vmatprep.mubr.f32.mxu0 0.0
  %1321 = vmatmul.mubr.f32.gmra.mxu0 %v1171
  %v1322 = vpop.f32.mrf.mxu0
  %v1323 = vadd.f32 0.0, %v1322
  %v1324 = vpop.f32.mrf.mxu0
  %1325 = vmatprep.mubr.f32.mxu0 0.0
  %1326 = vmatmul.mubr.f32.gmra.mxu0 %v1172
  %v1327 = vpop.f32.mrf.mxu0
  %v1328 = vadd.f32 0.0, %v1327
  %v1329 = vpop.f32.mrf.mxu0
  %1330 = vmatprep.mubr.f32.mxu0 0.0
  %1331 = vmatmul.mubr.f32.gmra.mxu0 %v1173
  %v1332 = vpop.f32.mrf.mxu0
  %v1333 = vadd.f32 0.0, %v1332
  %v1334 = vpop.f32.mrf.mxu0
  %1335 = vdwg.mxu0
  %v1336 = vadd.f32 %v1141, %v1258
  %v1337 = vadd.f32 %v1142, %v1263
  %v1338 = vadd.f32 %v1143, %v1268
  %v1339 = vadd.f32 %v1144, %v1273
  %v1340 = vadd.f32 %v1145, %v1278
  %v1341 = vadd.f32 %v1146, %v1283
  %v1342 = vadd.f32 %v1147, %v1288
  %v1343 = vadd.f32 %v1148, %v1293
  %v1344 = vadd.f32 %v1149, %v1298
  %v1345 = vadd.f32 %v1150, %v1303
  %v1346 = vadd.f32 %v1151, %v1308
  %v1347 = vadd.f32 %v1152, %v1313
  %v1348 = vadd.f32 %v1153, %v1318
  %v1349 = vadd.f32 %v1154, %v1323
  %v1350 = vadd.f32 %v1155, %v1328
  %v1351 = vadd.f32 %v1156, %v1333
  %s1352 = scalar_lea.vmem %s1, 16
  %v1353 = vld [vmem:[%s1352] sm:$0xff]
  %v1354 = vld [vmem:[%s1352 + $0x10] sm:$0xff]
  %v1355 = vld [vmem:[%s1352 + $0x20] sm:$0xff]
  %v1356 = vld [vmem:[%s1352 + $0x30] sm:$0xff]
  %v1357 = vld [vmem:[%s1352 + $0x40] sm:$0xff]
  %v1358 = vld [vmem:[%s1352 + $0x50] sm:$0xff]
  %v1359 = vld [vmem:[%s1352 + $0x60] sm:$0xff]
  %v1360 = vld [vmem:[%s1352 + $0x70] sm:$0xff]
  %v1361 = vld [vmem:[%s1352 + $0x90] sm:$0xff]
  %v1362 = vld [vmem:[%s1352 + $0xa0] sm:$0xff]
  %v1363 = vld [vmem:[%s1352 + $0xb0] sm:$0xff]
  %v1364 = vld [vmem:[%s1352 + $0xc0] sm:$0xff]
  %v1365 = vld [vmem:[%s1352 + $0xd0] sm:$0xff]
  %v1366 = vld [vmem:[%s1352 + $0xe0] sm:$0xff]
  %v1367 = vld [vmem:[%s1352 + $0xf0] sm:$0xff]
  %v1368 = vld [vmem:[%s1352 + $0x100] sm:$0xff]
  %s1369 = scalar_lea.vmem %s4, 896
  %v1370 = vld [vmem:[%s1369] sm:$0xff]
  %v1371 = vld [vmem:[%s1369 + $0x8] sm:$0xff]
  %v1372 = vld [vmem:[%s1369 + $0x10] sm:$0xff]
  %v1373 = vld [vmem:[%s1369 + $0x18] sm:$0xff]
  %v1374 = vld [vmem:[%s1369 + $0x20] sm:$0xff]
  %v1375 = vld [vmem:[%s1369 + $0x28] sm:$0xff]
  %v1376 = vld [vmem:[%s1369 + $0x30] sm:$0xff]
  %v1377 = vld [vmem:[%s1369 + $0x38] sm:$0xff]
  %v1378 = vld [vmem:[%s1369 + $0x40] sm:$0xff]
  %v1379 = vld [vmem:[%s1369 + $0x48] sm:$0xff]
  %v1380 = vld [vmem:[%s1369 + $0x50] sm:$0xff]
  %v1381 = vld [vmem:[%s1369 + $0x58] sm:$0xff]
  %v1382 = vld [vmem:[%s1369 + $0x60] sm:$0xff]
  %v1383 = vld [vmem:[%s1369 + $0x68] sm:$0xff]
  %v1384 = vld [vmem:[%s1369 + $0x70] sm:$0xff]
  %v1385 = vld [vmem:[%s1369 + $0x78] sm:$0xff]
  %1386 = vmatprep.subr.mxu0 0.0
  %1387 = vmatpush1.msra.mxu0 %v1385
  %1388 = vmatprep.subr.mxu0 0.0
  %1389 = vmatpush1.msra.mxu0 %v1384
  %1390 = vmatprep.subr.mxu0 0.0
  %1391 = vmatpush1.msra.mxu0 %v1383
  %1392 = vmatprep.subr.mxu0 0.0
  %1393 = vmatpush1.msra.mxu0 %v1382
  %1394 = vmatprep.subr.mxu0 0.0
  %1395 = vmatpush1.msra.mxu0 %v1381
  %1396 = vmatprep.subr.mxu0 0.0
  %1397 = vmatpush1.msra.mxu0 %v1380
  %1398 = vmatprep.subr.mxu0 0.0
  %1399 = vmatpush1.msra.mxu0 %v1379
  %1400 = vmatprep.subr.mxu0 0.0
  %1401 = vmatpush1.msra.mxu0 %v1378
  %1402 = vmatprep.subr.mxu0 0.0
  %1403 = vmatpush1.msra.mxu0 %v1377
  %1404 = vmatprep.subr.mxu0 0.0
  %1405 = vmatpush1.msra.mxu0 %v1376
  %1406 = vmatprep.subr.mxu0 0.0
  %1407 = vmatpush1.msra.mxu0 %v1375
  %1408 = vmatprep.subr.mxu0 0.0
  %1409 = vmatpush1.msra.mxu0 %v1374
  %1410 = vmatprep.subr.mxu0 0.0
  %1411 = vmatpush1.msra.mxu0 %v1373
  %1412 = vmatprep.subr.mxu0 0.0
  %1413 = vmatpush1.msra.mxu0 %v1372
  %1414 = vmatprep.subr.mxu0 0.0
  %1415 = vmatpush1.msra.mxu0 %v1371
  %1416 = vmatprep.subr.mxu0 0.0
  %1417 = vmatpush1.msra.mxu0 %v1370
  %1418 = vmatprep.subr.mxu0 0.0
  %1419 = vmatpush2.msra.mxu0 0.0
  %1420 = vmatprep.subr.mxu0 0.0
  %1421 = vmatpush2.msra.mxu0 0.0
  %1422 = vmatprep.subr.mxu0 0.0
  %1423 = vmatpush2.msra.mxu0 0.0
  %1424 = vmatprep.subr.mxu0 0.0
  %1425 = vmatpush2.msra.mxu0 0.0
  %1426 = vmatprep.subr.mxu0 0.0
  %1427 = vmatpush2.msra.mxu0 0.0
  %1428 = vmatprep.subr.mxu0 0.0
  %1429 = vmatpush2.msra.mxu0 0.0
  %1430 = vmatprep.subr.mxu0 0.0
  %1431 = vmatpush2.msra.mxu0 0.0
  %1432 = vmatprep.subr.mxu0 0.0
  %1433 = vmatpush2.msra.mxu0 0.0
  %1434 = vmatprep.subr.mxu0 0.0
  %1435 = vmatpush2.msra.mxu0 0.0
  %1436 = vmatprep.subr.mxu0 0.0
  %1437 = vmatpush2.msra.mxu0 0.0
  %1438 = vmatprep.subr.mxu0 0.0
  %1439 = vmatpush2.msra.mxu0 0.0
  %1440 = vmatprep.subr.mxu0 0.0
  %1441 = vmatpush2.msra.mxu0 0.0
  %1442 = vmatprep.subr.mxu0 0.0
  %1443 = vmatpush2.msra.mxu0 0.0
  %1444 = vmatprep.subr.mxu0 0.0
  %1445 = vmatpush2.msra.mxu0 0.0
  %1446 = vmatprep.subr.mxu0 0.0
  %1447 = vmatpush2.msra.mxu0 0.0
  %1448 = vmatprep.subr.mxu0 0.0
  %1449 = vmatpush2.msra.mxu0 0.0
  %1450 = vmatprep.mubr.f32.mxu0 0.0
  %1451 = vmatmul.mubr.f32.gmra.mxu0 %v1353
  %v1452 = vpop.f32.mrf.mxu0
  %v1453 = vadd.f32 0.0, %v1452
  %v1454 = vpop.f32.mrf.mxu0
  %1455 = vmatprep.mubr.f32.mxu0 0.0
  %1456 = vmatmul.mubr.f32.gmra.mxu0 %v1354
  %v1457 = vpop.f32.mrf.mxu0
  %v1458 = vadd.f32 0.0, %v1457
  %v1459 = vpop.f32.mrf.mxu0
  %1460 = vmatprep.mubr.f32.mxu0 0.0
  %1461 = vmatmul.mubr.f32.gmra.mxu0 %v1355
  %v1462 = vpop.f32.mrf.mxu0
  %v1463 = vadd.f32 0.0, %v1462
  %v1464 = vpop.f32.mrf.mxu0
  %1465 = vmatprep.mubr.f32.mxu0 0.0
  %1466 = vmatmul.mubr.f32.gmra.mxu0 %v1356
  %v1467 = vpop.f32.mrf.mxu0
  %v1468 = vadd.f32 0.0, %v1467
  %v1469 = vpop.f32.mrf.mxu0
  %1470 = vmatprep.mubr.f32.mxu0 0.0
  %1471 = vmatmul.mubr.f32.gmra.mxu0 %v1357
  %v1472 = vpop.f32.mrf.mxu0
  %v1473 = vadd.f32 0.0, %v1472
  %v1474 = vpop.f32.mrf.mxu0
  %1475 = vmatprep.mubr.f32.mxu0 0.0
  %1476 = vmatmul.mubr.f32.gmra.mxu0 %v1358
  %v1477 = vpop.f32.mrf.mxu0
  %v1478 = vadd.f32 0.0, %v1477
  %v1479 = vpop.f32.mrf.mxu0
  %1480 = vmatprep.mubr.f32.mxu0 0.0
  %1481 = vmatmul.mubr.f32.gmra.mxu0 %v1359
  %v1482 = vpop.f32.mrf.mxu0
  %v1483 = vadd.f32 0.0, %v1482
  %v1484 = vpop.f32.mrf.mxu0
  %1485 = vmatprep.mubr.f32.mxu0 0.0
  %1486 = vmatmul.mubr.f32.gmra.mxu0 %v1360
  %v1487 = vpop.f32.mrf.mxu0
  %v1488 = vadd.f32 0.0, %v1487
  %v1489 = vpop.f32.mrf.mxu0
  %1490 = vmatprep.mubr.f32.mxu0 0.0
  %1491 = vmatmul.mubr.f32.gmra.mxu0 %v1361
  %v1492 = vpop.f32.mrf.mxu0
  %v1493 = vadd.f32 0.0, %v1492
  %v1494 = vpop.f32.mrf.mxu0
  %1495 = vmatprep.mubr.f32.mxu0 0.0
  %1496 = vmatmul.mubr.f32.gmra.mxu0 %v1362
  %v1497 = vpop.f32.mrf.mxu0
  %v1498 = vadd.f32 0.0, %v1497
  %v1499 = vpop.f32.mrf.mxu0
  %1500 = vmatprep.mubr.f32.mxu0 0.0
  %1501 = vmatmul.mubr.f32.gmra.mxu0 %v1363
  %v1502 = vpop.f32.mrf.mxu0
  %v1503 = vadd.f32 0.0, %v1502
  %v1504 = vpop.f32.mrf.mxu0
  %1505 = vmatprep.mubr.f32.mxu0 0.0
  %1506 = vmatmul.mubr.f32.gmra.mxu0 %v1364
  %v1507 = vpop.f32.mrf.mxu0
  %v1508 = vadd.f32 0.0, %v1507
  %v1509 = vpop.f32.mrf.mxu0
  %1510 = vmatprep.mubr.f32.mxu0 0.0
  %1511 = vmatmul.mubr.f32.gmra.mxu0 %v1365
  %v1512 = vpop.f32.mrf.mxu0
  %v1513 = vadd.f32 0.0, %v1512
  %v1514 = vpop.f32.mrf.mxu0
  %1515 = vmatprep.mubr.f32.mxu0 0.0
  %1516 = vmatmul.mubr.f32.gmra.mxu0 %v1366
  %v1517 = vpop.f32.mrf.mxu0
  %v1518 = vadd.f32 0.0, %v1517
  %v1519 = vpop.f32.mrf.mxu0
  %1520 = vmatprep.mubr.f32.mxu0 0.0
  %1521 = vmatmul.mubr.f32.gmra.mxu0 %v1367
  %v1522 = vpop.f32.mrf.mxu0
  %v1523 = vadd.f32 0.0, %v1522
  %v1524 = vpop.f32.mrf.mxu0
  %1525 = vmatprep.mubr.f32.mxu0 0.0
  %1526 = vmatmul.mubr.f32.gmra.mxu0 %v1368
  %v1527 = vpop.f32.mrf.mxu0
  %v1528 = vadd.f32 0.0, %v1527
  %v1529 = vpop.f32.mrf.mxu0
  %1530 = vdwg.mxu0
  %v1531 = vadd.f32 %v1336, %v1453
  %v1532 = vadd.f32 %v1337, %v1458
  %v1533 = vadd.f32 %v1338, %v1463
  %v1534 = vadd.f32 %v1339, %v1468
  %v1535 = vadd.f32 %v1340, %v1473
  %v1536 = vadd.f32 %v1341, %v1478
  %v1537 = vadd.f32 %v1342, %v1483
  %v1538 = vadd.f32 %v1343, %v1488
  %v1539 = vadd.f32 %v1344, %v1493
  %v1540 = vadd.f32 %v1345, %v1498
  %v1541 = vadd.f32 %v1346, %v1503
  %v1542 = vadd.f32 %v1347, %v1508
  %v1543 = vadd.f32 %v1348, %v1513
  %v1544 = vadd.f32 %v1349, %v1518
  %v1545 = vadd.f32 %v1350, %v1523
  %v1546 = vadd.f32 %v1351, %v1528
  %v1547 = vld [vmem:[%s1157 + $0x1] sm:$0xff]
  %v1548 = vld [vmem:[%s1157 + $0x11] sm:$0xff]
  %v1549 = vld [vmem:[%s1157 + $0x21] sm:$0xff]
  %v1550 = vld [vmem:[%s1157 + $0x31] sm:$0xff]
  %v1551 = vld [vmem:[%s1157 + $0x41] sm:$0xff]
  %v1552 = vld [vmem:[%s1157 + $0x51] sm:$0xff]
  %v1553 = vld [vmem:[%s1157 + $0x61] sm:$0xff]
  %v1554 = vld [vmem:[%s1157 + $0x71] sm:$0xff]
  %v1555 = vld [vmem:[%s1157 + $0x91] sm:$0xff]
  %v1556 = vld [vmem:[%s1157 + $0xa1] sm:$0xff]
  %v1557 = vld [vmem:[%s1157 + $0xb1] sm:$0xff]
  %v1558 = vld [vmem:[%s1157 + $0xc1] sm:$0xff]
  %v1559 = vld [vmem:[%s1157 + $0xd1] sm:$0xff]
  %v1560 = vld [vmem:[%s1157 + $0xe1] sm:$0xff]
  %v1561 = vld [vmem:[%s1157 + $0xf1] sm:$0xff]
  %v1562 = vld [vmem:[%s1157 + $0x101] sm:$0xff]
  %s1563 = scalar_lea.vmem %s4, 1024
  %v1564 = vld [vmem:[%s1563] sm:$0xff]
  %v1565 = vld [vmem:[%s1563 + $0x8] sm:$0xff]
  %v1566 = vld [vmem:[%s1563 + $0x10] sm:$0xff]
  %v1567 = vld [vmem:[%s1563 + $0x18] sm:$0xff]
  %v1568 = vld [vmem:[%s1563 + $0x20] sm:$0xff]
  %v1569 = vld [vmem:[%s1563 + $0x28] sm:$0xff]
  %v1570 = vld [vmem:[%s1563 + $0x30] sm:$0xff]
  %v1571 = vld [vmem:[%s1563 + $0x38] sm:$0xff]
  %v1572 = vld [vmem:[%s1563 + $0x40] sm:$0xff]
  %v1573 = vld [vmem:[%s1563 + $0x48] sm:$0xff]
  %v1574 = vld [vmem:[%s1563 + $0x50] sm:$0xff]
  %v1575 = vld [vmem:[%s1563 + $0x58] sm:$0xff]
  %v1576 = vld [vmem:[%s1563 + $0x60] sm:$0xff]
  %v1577 = vld [vmem:[%s1563 + $0x68] sm:$0xff]
  %v1578 = vld [vmem:[%s1563 + $0x70] sm:$0xff]
  %v1579 = vld [vmem:[%s1563 + $0x78] sm:$0xff]
  %1580 = vmatprep.subr.mxu0 0.0
  %1581 = vmatpush1.msra.mxu0 %v1579
  %1582 = vmatprep.subr.mxu0 0.0
  %1583 = vmatpush1.msra.mxu0 %v1578
  %1584 = vmatprep.subr.mxu0 0.0
  %1585 = vmatpush1.msra.mxu0 %v1577
  %1586 = vmatprep.subr.mxu0 0.0
  %1587 = vmatpush1.msra.mxu0 %v1576
  %1588 = vmatprep.subr.mxu0 0.0
  %1589 = vmatpush1.msra.mxu0 %v1575
  %1590 = vmatprep.subr.mxu0 0.0
  %1591 = vmatpush1.msra.mxu0 %v1574
  %1592 = vmatprep.subr.mxu0 0.0
  %1593 = vmatpush1.msra.mxu0 %v1573
  %1594 = vmatprep.subr.mxu0 0.0
  %1595 = vmatpush1.msra.mxu0 %v1572
  %1596 = vmatprep.subr.mxu0 0.0
  %1597 = vmatpush1.msra.mxu0 %v1571
  %1598 = vmatprep.subr.mxu0 0.0
  %1599 = vmatpush1.msra.mxu0 %v1570
  %1600 = vmatprep.subr.mxu0 0.0
  %1601 = vmatpush1.msra.mxu0 %v1569
  %1602 = vmatprep.subr.mxu0 0.0
  %1603 = vmatpush1.msra.mxu0 %v1568
  %1604 = vmatprep.subr.mxu0 0.0
  %1605 = vmatpush1.msra.mxu0 %v1567
  %1606 = vmatprep.subr.mxu0 0.0
  %1607 = vmatpush1.msra.mxu0 %v1566
  %1608 = vmatprep.subr.mxu0 0.0
  %1609 = vmatpush1.msra.mxu0 %v1565
  %1610 = vmatprep.subr.mxu0 0.0
  %1611 = vmatpush1.msra.mxu0 %v1564
  %1612 = vmatprep.subr.mxu0 0.0
  %1613 = vmatpush2.msra.mxu0 0.0
  %1614 = vmatprep.subr.mxu0 0.0
  %1615 = vmatpush2.msra.mxu0 0.0
  %1616 = vmatprep.subr.mxu0 0.0
  %1617 = vmatpush2.msra.mxu0 0.0
  %1618 = vmatprep.subr.mxu0 0.0
  %1619 = vmatpush2.msra.mxu0 0.0
  %1620 = vmatprep.subr.mxu0 0.0
  %1621 = vmatpush2.msra.mxu0 0.0
  %1622 = vmatprep.subr.mxu0 0.0
  %1623 = vmatpush2.msra.mxu0 0.0
  %1624 = vmatprep.subr.mxu0 0.0
  %1625 = vmatpush2.msra.mxu0 0.0
  %1626 = vmatprep.subr.mxu0 0.0
  %1627 = vmatpush2.msra.mxu0 0.0
  %1628 = vmatprep.subr.mxu0 0.0
  %1629 = vmatpush2.msra.mxu0 0.0
  %1630 = vmatprep.subr.mxu0 0.0
  %1631 = vmatpush2.msra.mxu0 0.0
  %1632 = vmatprep.subr.mxu0 0.0
  %1633 = vmatpush2.msra.mxu0 0.0
  %1634 = vmatprep.subr.mxu0 0.0
  %1635 = vmatpush2.msra.mxu0 0.0
  %1636 = vmatprep.subr.mxu0 0.0
  %1637 = vmatpush2.msra.mxu0 0.0
  %1638 = vmatprep.subr.mxu0 0.0
  %1639 = vmatpush2.msra.mxu0 0.0
  %1640 = vmatprep.subr.mxu0 0.0
  %1641 = vmatpush2.msra.mxu0 0.0
  %1642 = vmatprep.subr.mxu0 0.0
  %1643 = vmatpush2.msra.mxu0 0.0
  %1644 = vmatprep.mubr.f32.mxu0 0.0
  %1645 = vmatmul.mubr.f32.gmra.mxu0 %v1547
  %v1646 = vpop.f32.mrf.mxu0
  %v1647 = vadd.f32 0.0, %v1646
  %v1648 = vpop.f32.mrf.mxu0
  %1649 = vmatprep.mubr.f32.mxu0 0.0
  %1650 = vmatmul.mubr.f32.gmra.mxu0 %v1548
  %v1651 = vpop.f32.mrf.mxu0
  %v1652 = vadd.f32 0.0, %v1651
  %v1653 = vpop.f32.mrf.mxu0
  %1654 = vmatprep.mubr.f32.mxu0 0.0
  %1655 = vmatmul.mubr.f32.gmra.mxu0 %v1549
  %v1656 = vpop.f32.mrf.mxu0
  %v1657 = vadd.f32 0.0, %v1656
  %v1658 = vpop.f32.mrf.mxu0
  %1659 = vmatprep.mubr.f32.mxu0 0.0
  %1660 = vmatmul.mubr.f32.gmra.mxu0 %v1550
  %v1661 = vpop.f32.mrf.mxu0
  %v1662 = vadd.f32 0.0, %v1661
  %v1663 = vpop.f32.mrf.mxu0
  %1664 = vmatprep.mubr.f32.mxu0 0.0
  %1665 = vmatmul.mubr.f32.gmra.mxu0 %v1551
  %v1666 = vpop.f32.mrf.mxu0
  %v1667 = vadd.f32 0.0, %v1666
  %v1668 = vpop.f32.mrf.mxu0
  %1669 = vmatprep.mubr.f32.mxu0 0.0
  %1670 = vmatmul.mubr.f32.gmra.mxu0 %v1552
  %v1671 = vpop.f32.mrf.mxu0
  %v1672 = vadd.f32 0.0, %v1671
  %v1673 = vpop.f32.mrf.mxu0
  %1674 = vmatprep.mubr.f32.mxu0 0.0
  %1675 = vmatmul.mubr.f32.gmra.mxu0 %v1553
  %v1676 = vpop.f32.mrf.mxu0
  %v1677 = vadd.f32 0.0, %v1676
  %v1678 = vpop.f32.mrf.mxu0
  %1679 = vmatprep.mubr.f32.mxu0 0.0
  %1680 = vmatmul.mubr.f32.gmra.mxu0 %v1554
  %v1681 = vpop.f32.mrf.mxu0
  %v1682 = vadd.f32 0.0, %v1681
  %v1683 = vpop.f32.mrf.mxu0
  %1684 = vmatprep.mubr.f32.mxu0 0.0
  %1685 = vmatmul.mubr.f32.gmra.mxu0 %v1555
  %v1686 = vpop.f32.mrf.mxu0
  %v1687 = vadd.f32 0.0, %v1686
  %v1688 = vpop.f32.mrf.mxu0
  %1689 = vmatprep.mubr.f32.mxu0 0.0
  %1690 = vmatmul.mubr.f32.gmra.mxu0 %v1556
  %v1691 = vpop.f32.mrf.mxu0
  %v1692 = vadd.f32 0.0, %v1691
  %v1693 = vpop.f32.mrf.mxu0
  %1694 = vmatprep.mubr.f32.mxu0 0.0
  %1695 = vmatmul.mubr.f32.gmra.mxu0 %v1557
  %v1696 = vpop.f32.mrf.mxu0
  %v1697 = vadd.f32 0.0, %v1696
  %v1698 = vpop.f32.mrf.mxu0
  %1699 = vmatprep.mubr.f32.mxu0 0.0
  %1700 = vmatmul.mubr.f32.gmra.mxu0 %v1558
  %v1701 = vpop.f32.mrf.mxu0
  %v1702 = vadd.f32 0.0, %v1701
  %v1703 = vpop.f32.mrf.mxu0
  %1704 = vmatprep.mubr.f32.mxu0 0.0
  %1705 = vmatmul.mubr.f32.gmra.mxu0 %v1559
  %v1706 = vpop.f32.mrf.mxu0
  %v1707 = vadd.f32 0.0, %v1706
  %v1708 = vpop.f32.mrf.mxu0
  %1709 = vmatprep.mubr.f32.mxu0 0.0
  %1710 = vmatmul.mubr.f32.gmra.mxu0 %v1560
  %v1711 = vpop.f32.mrf.mxu0
  %v1712 = vadd.f32 0.0, %v1711
  %v1713 = vpop.f32.mrf.mxu0
  %1714 = vmatprep.mubr.f32.mxu0 0.0
  %1715 = vmatmul.mubr.f32.gmra.mxu0 %v1561
  %v1716 = vpop.f32.mrf.mxu0
  %v1717 = vadd.f32 0.0, %v1716
  %v1718 = vpop.f32.mrf.mxu0
  %1719 = vmatprep.mubr.f32.mxu0 0.0
  %1720 = vmatmul.mubr.f32.gmra.mxu0 %v1562
  %v1721 = vpop.f32.mrf.mxu0
  %v1722 = vadd.f32 0.0, %v1721
  %v1723 = vpop.f32.mrf.mxu0
  %1724 = vdwg.mxu0
  %v1725 = vadd.f32 %v1531, %v1647
  %v1726 = vadd.f32 %v1532, %v1652
  %v1727 = vadd.f32 %v1533, %v1657
  %v1728 = vadd.f32 %v1534, %v1662
  %v1729 = vadd.f32 %v1535, %v1667
  %v1730 = vadd.f32 %v1536, %v1672
  %v1731 = vadd.f32 %v1537, %v1677
  %v1732 = vadd.f32 %v1538, %v1682
  %v1733 = vadd.f32 %v1539, %v1687
  %v1734 = vadd.f32 %v1540, %v1692
  %v1735 = vadd.f32 %v1541, %v1697
  %v1736 = vadd.f32 %v1542, %v1702
  %v1737 = vadd.f32 %v1543, %v1707
  %v1738 = vadd.f32 %v1544, %v1712
  %v1739 = vadd.f32 %v1545, %v1717
  %v1740 = vadd.f32 %v1546, %v1722
  %v1741 = vadd.f32 %v1725, %v1726
  %v1742 = vadd.f32 %v1741, %v1727
  %v1743 = vadd.f32 %v1742, %v1728
  %v1744 = vadd.f32 %v1743, %v1729
  %v1745 = vadd.f32 %v1744, %v1730
  %v1746 = vadd.f32 %v1745, %v1731
  %v1747 = vadd.f32 %v1746, %v1732
  %v1748 = vadd.f32 %v1747, %v1733
  %v1749 = vadd.f32 %v1748, %v1734
  %v1750 = vadd.f32 %v1749, %v1735
  %v1751 = vadd.f32 %v1750, %v1736
  %v1752 = vadd.f32 %v1751, %v1737
  %v1753 = vadd.f32 %v1752, %v1738
  %v1754 = vadd.f32 %v1753, %v1739
  %v1755 = vadd.f32 %v1754, %v1740
  %v1756 = vrot.slane %v1755, 4
  %v1757 = vadd.f32 %v1755, %v1756
  %v1758 = vrot.slane %v1757, 2
  %v1759 = vadd.f32 %v1757, %v1758
  %v1760 = vrot.slane %v1759, 1
  %v1761 = vadd.f32 %v1759, %v1760
  %v1762 = vrcp.pop 128.0
  %v1763 = vmul.f32 %v1761, %v1762
  %v1764 = vmul.f32 %v1725, %v1725
  %v1765 = vmul.f32 %v1726, %v1726
  %v1766 = vmul.f32 %v1727, %v1727
  %v1767 = vmul.f32 %v1728, %v1728
  %v1768 = vmul.f32 %v1729, %v1729
  %v1769 = vmul.f32 %v1730, %v1730
  %v1770 = vmul.f32 %v1731, %v1731
  %v1771 = vmul.f32 %v1732, %v1732
  %v1772 = vmul.f32 %v1733, %v1733
  %v1773 = vmul.f32 %v1734, %v1734
  %v1774 = vmul.f32 %v1735, %v1735
  %v1775 = vmul.f32 %v1736, %v1736
  %v1776 = vmul.f32 %v1737, %v1737
  %v1777 = vmul.f32 %v1738, %v1738
  %v1778 = vmul.f32 %v1739, %v1739
  %v1779 = vmul.f32 %v1740, %v1740
  %v1780 = vadd.f32 %v1764, %v1765
  %v1781 = vadd.f32 %v1780, %v1766
  %v1782 = vadd.f32 %v1781, %v1767
  %v1783 = vadd.f32 %v1782, %v1768
  %v1784 = vadd.f32 %v1783, %v1769
  %v1785 = vadd.f32 %v1784, %v1770
  %v1786 = vadd.f32 %v1785, %v1771
  %v1787 = vadd.f32 %v1786, %v1772
  %v1788 = vadd.f32 %v1787, %v1773
  %v1789 = vadd.f32 %v1788, %v1774
  %v1790 = vadd.f32 %v1789, %v1775
  %v1791 = vadd.f32 %v1790, %v1776
  %v1792 = vadd.f32 %v1791, %v1777
  %v1793 = vadd.f32 %v1792, %v1778
  %v1794 = vadd.f32 %v1793, %v1779
  %v1795 = vrot.slane %v1794, 4
  %v1796 = vadd.f32 %v1794, %v1795
  %v1797 = vrot.slane %v1796, 2
  %v1798 = vadd.f32 %v1796, %v1797
  %v1799 = vrot.slane %v1798, 1
  %v1800 = vadd.f32 %v1798, %v1799
  %v1801 = vmul.f32 %v1800, %v1762
  %v1802 = vmul.f32 %v1763, %v1763
  %v1803 = vsub.f32 %v1801, %v1802
  %v1804 = vmax.f32 %v1803, 0.0
  %v1805 = vadd.f32 %v1804, 1e-05
  %v1806 = vrsqrt.pop %v1805
  %v1807 = vld [vmem:[%s5] sm:$0x1]
  %v1808 = vmul.f32 %v1806, %v1807
  %v1809 = vld [vmem:[%s6] sm:$0x1]
  %v1810 = vmul.f32 %v1763, %v1808
  %v1811 = vsub.f32 %v1809, %v1810
  %v1812 = vlaneseq
  %v1813 = vshrl.u32 %v1812, 7
  %v1814 = vsub.s32 0, %v1813
  %v1815 = vrot.slane %v1808, %v1814
  %v1816 = vmul.f32 %v1725, %v1815
  %v1817 = vmul.f32 %v1726, %v1815
  %v1818 = vmul.f32 %v1727, %v1815
  %v1819 = vmul.f32 %v1728, %v1815
  %v1820 = vmul.f32 %v1729, %v1815
  %v1821 = vmul.f32 %v1730, %v1815
  %v1822 = vmul.f32 %v1731, %v1815
  %v1823 = vmul.f32 %v1732, %v1815
  %v1824 = vmul.f32 %v1733, %v1815
  %v1825 = vmul.f32 %v1734, %v1815
  %v1826 = vmul.f32 %v1735, %v1815
  %v1827 = vmul.f32 %v1736, %v1815
  %v1828 = vmul.f32 %v1737, %v1815
  %v1829 = vmul.f32 %v1738, %v1815
  %v1830 = vmul.f32 %v1739, %v1815
  %v1831 = vmul.f32 %v1740, %v1815
  %v1833 = vlaneseq
  %v1834 = vshrl.u32 %v1833, 7
  %v1835 = vsub.s32 0, %v1834
  %v1836 = vrot.slane %v1811, %v1835
  %v1838 = vadd.f32 %v1816, %v1836
  %v1839 = vadd.f32 %v1817, %v1836
  %v1840 = vadd.f32 %v1818, %v1836
  %v1841 = vadd.f32 %v1819, %v1836
  %v1842 = vadd.f32 %v1820, %v1836
  %v1843 = vadd.f32 %v1821, %v1836
  %v1844 = vadd.f32 %v1822, %v1836
  %v1845 = vadd.f32 %v1823, %v1836
  %v1846 = vadd.f32 %v1824, %v1836
  %v1847 = vadd.f32 %v1825, %v1836
  %v1848 = vadd.f32 %v1826, %v1836
  %v1849 = vadd.f32 %v1827, %v1836
  %v1850 = vadd.f32 %v1828, %v1836
  %v1851 = vadd.f32 %v1829, %v1836
  %v1852 = vadd.f32 %v1830, %v1836
  %v1853 = vadd.f32 %v1831, %v1836
  %v1854 = vmax.f32 %v1838, 0.0
  %v1855 = vmax.f32 %v1839, 0.0
  %v1856 = vmax.f32 %v1840, 0.0
  %v1857 = vmax.f32 %v1841, 0.0
  %v1858 = vmax.f32 %v1842, 0.0
  %v1859 = vmax.f32 %v1843, 0.0
  %v1860 = vmax.f32 %v1844, 0.0
  %v1861 = vmax.f32 %v1845, 0.0
  %v1862 = vmax.f32 %v1846, 0.0
  %v1863 = vmax.f32 %v1847, 0.0
  %v1864 = vmax.f32 %v1848, 0.0
  %v1865 = vmax.f32 %v1849, 0.0
  %v1866 = vmax.f32 %v1850, 0.0
  %v1867 = vmax.f32 %v1851, 0.0
  %v1868 = vmax.f32 %v1852, 0.0
  %v1869 = vmax.f32 %v1853, 0.0
  %1870 = vst [vmem:[%s7] sm:$0xff] %v1854
  %1871 = vst [vmem:[%s7 + $0x8] sm:$0xff] %v1855
  %1872 = vst [vmem:[%s7 + $0x10] sm:$0xff] %v1856
  %1873 = vst [vmem:[%s7 + $0x18] sm:$0xff] %v1857
  %1874 = vst [vmem:[%s7 + $0x20] sm:$0xff] %v1858
  %1875 = vst [vmem:[%s7 + $0x28] sm:$0xff] %v1859
  %1876 = vst [vmem:[%s7 + $0x30] sm:$0xff] %v1860
  %1877 = vst [vmem:[%s7 + $0x38] sm:$0xff] %v1861
  %1878 = vst [vmem:[%s7 + $0x40] sm:$0xff] %v1862
  %1879 = vst [vmem:[%s7 + $0x48] sm:$0xff] %v1863
  %1880 = vst [vmem:[%s7 + $0x50] sm:$0xff] %v1864
  %1881 = vst [vmem:[%s7 + $0x58] sm:$0xff] %v1865
  %1882 = vst [vmem:[%s7 + $0x60] sm:$0xff] %v1866
  %1883 = vst [vmem:[%s7 + $0x68] sm:$0xff] %v1867
  %1884 = vst [vmem:[%s7 + $0x70] sm:$0xff] %v1868
  %1885 = vst [vmem:[%s7 + $0x78] sm:$0xff] %v1869
  // Predicated region
  $region30: #{resnet_forward.9} parent=0 // pred_check
    _
  $region31: #{resnet_forward.9} parent=0 // pred_check_branch
    %1887 = sbr.rel (0) target = $region33
  $region32: #{resnet_forward.9} parent=0 // pred_region
    _
  $region33: #{resnet_forward.9} parent=0 // pred_fallthru
    _
  // Predicated region
  $region34: #{resnet_forward.9} parent=0 // pred_check
    _
  $region35: #{resnet_forward.9} parent=0 // pred_check_branch
    %1889 = sbr.rel (0) target = $region37
  $region36: #{resnet_forward.9} parent=0 // pred_region
    _
  $region37: #{resnet_forward.9} parent=0 // pred_fallthru
    _

// kernel: resnet_forward.13
$region0: #{resnet_forward.13}
  #allocation0 [shape = 'u32[]', space=smem, size = 0x4, offset = 0x4, fixed_abs, tag = 'smem constant byte address 0x4 - core index']
  #allocation1 [shape = 'u32[144,128]{1,0:T(1,128)}', space=vmem, size = 0x12000, scoped, tag = 'internal scratch']
  %s0 = inlined_call_operand.vmem [shape: f32[2,6,6,128], index: 0, kind: input, shape index: {}]
  %s1 = inlined_call_operand.vmem [shape: f32[9,128,128], index: 1, kind: input, shape index: {}]
  %s2 = inlined_call_operand.vmem [shape: f32[1,128], index: 2, kind: input, shape index: {}, may-alias: {2,3}]
  %s3 = inlined_call_operand.vmem [shape: f32[1,128], index: 3, kind: input, shape index: {}, may-alias: {2,3}]
  %s4 = inlined_call_operand.vmem [shape: f32[32,128], index: 4, kind: input, shape index: {}]
  %s5 = inlined_call_operand.vmem [shape: f32[32,128], index: 5, kind: output, shape index: {}]
  %s6 = sld [smem:[#allocation0]]
  $region30: #{resnet_forward.13} parent=0
    _
  %s8 = ssub.s32 1, %s6
  %s9 = scalar_select 0, %s8, %s6
  // Predicated region
  $region2: #{resnet_forward.13} parent=0 // pred_check
    _
  $region3: #{resnet_forward.13} parent=0 // pred_check_branch
    %11 = sbr.rel (0) target = $region5
  $region4: #{resnet_forward.13} parent=0 // pred_region
    _
  $region5: #{resnet_forward.13} parent=0 // pred_fallthru
    _
  // Predicated region
  $region6: #{resnet_forward.13} parent=0 // pred_check
    _
  $region7: #{resnet_forward.13} parent=0 // pred_check_branch
    %13 = sbr.rel (0) target = $region9
  $region8: #{resnet_forward.13} parent=0 // pred_region
    _
  $region9: #{resnet_forward.13} parent=0 // pred_fallthru
    _
  // Predicated region
  $region10: #{resnet_forward.13} parent=0 // pred_check
    _
  $region11: #{resnet_forward.13} parent=0 // pred_check_branch
    %15 = sbr.rel (0) target = $region13
  $region12: #{resnet_forward.13} parent=0 // pred_region
    _
  $region13: #{resnet_forward.13} parent=0 // pred_fallthru
    _
  // Predicated region
  $region14: #{resnet_forward.13} parent=0 // pred_check
    _
  $region15: #{resnet_forward.13} parent=0 // pred_check_branch
    %17 = sbr.rel (0) target = $region17
  $region16: #{resnet_forward.13} parent=0 // pred_region
    _
  $region17: #{resnet_forward.13} parent=0 // pred_fallthru
    _
  // Predicated region
  $region18: #{resnet_forward.13} parent=0 // pred_check
    _
  $region19: #{resnet_forward.13} parent=0 // pred_check_branch
    %19 = sbr.rel (0) target = $region21
  $region20: #{resnet_forward.13} parent=0 // pred_region
    _
  $region21: #{resnet_forward.13} parent=0 // pred_fallthru
    _
  %v20 = vld [vmem:[%s0] sm:$0xf]
  %s21 = scalar_lea.vmem %s0, 8
  %v22 = vld [vmem:[%s21] sm:$0xf]
  %s23 = scalar_lea.vmem %s0, 16
  %v24 = vld [vmem:[%s23] sm:$0xf]
  %s25 = scalar_lea.vmem %s0, 24
  %v26 = vld [vmem:[%s25] sm:$0xf]
  %s27 = scalar_lea.vmem %s0, 48
  %v28 = vld [vmem:[%s27] sm:$0xf]
  %s29 = scalar_lea.vmem %s0, 56
  %v30 = vld [vmem:[%s29] sm:$0xf]
  %s31 = scalar_lea.vmem %s0, 64
  %v32 = vld [vmem:[%s31] sm:$0xf]
  %s33 = scalar_lea.vmem %s0, 72
  %v34 = vld [vmem:[%s33] sm:$0xf]
  %v36 = vrot.slane %v22, 4
  %v39 = vrot.slane %v26, 4
  %v42 = vrot.slane %v30, 4
  %v45 = vrot.slane %v34, 4
  %vm47 = vcmask 1043456
  %v48 = vsel %vm47, %v20, %v36
  %v49 = vsel %vm47, %v24, %v39
  %v50 = vsel %vm47, %v28, %v42
  %v51 = vsel %vm47, %v32, %v45
  %v52 = vld [vmem:[%s1] sm:$0xff]
  %v53 = vld [vmem:[%s1 + $0x8] sm:$0xff]
  %v54 = vld [vmem:[%s1 + $0x10] sm:$0xff]
  %v55 = vld [vmem:[%s1 + $0x18] sm:$0xff]
  %v56 = vld [vmem:[%s1 + $0x20] sm:$0xff]
  %v57 = vld [vmem:[%s1 + $0x28] sm:$0xff]
  %v58 = vld [vmem:[%s1 + $0x30] sm:$0xff]
  %v59 = vld [vmem:[%s1 + $0x38] sm:$0xff]
  %v60 = vld [vmem:[%s1 + $0x40] sm:$0xff]
  %v61 = vld [vmem:[%s1 + $0x48] sm:$0xff]
  %v62 = vld [vmem:[%s1 + $0x50] sm:$0xff]
  %v63 = vld [vmem:[%s1 + $0x58] sm:$0xff]
  %v64 = vld [vmem:[%s1 + $0x60] sm:$0xff]
  %v65 = vld [vmem:[%s1 + $0x68] sm:$0xff]
  %v66 = vld [vmem:[%s1 + $0x70] sm:$0xff]
  %v67 = vld [vmem:[%s1 + $0x78] sm:$0xff]
  %v68 = vld [vmem:[%s0 + $0x1] sm:$0xf]
  %v69 = vld [vmem:[%s21 + $0x1] sm:$0xf]
  %v70 = vld [vmem:[%s23 + $0x1] sm:$0xf]
  %v71 = vld [vmem:[%s25 + $0x1] sm:$0xf]
  %v72 = vld [vmem:[%s27 + $0x1] sm:$0xf]
  %v73 = vld [vmem:[%s29 + $0x1] sm:$0xf]
  %v74 = vld [vmem:[%s31 + $0x1] sm:$0xf]
  %v75 = vld [vmem:[%s33 + $0x1] sm:$0xf]
  %v77 = vrot.slane %v69, 4
  %v80 = vrot.slane %v71, 4
  %v83 = vrot.slane %v73, 4
  %v86 = vrot.slane %v75, 4
  %v88 = vsel %vm47, %v68, %v77
  %v89 = vsel %vm47, %v70, %v80
  %v90 = vsel %vm47, %v72, %v83
  %v91 = vsel %vm47, %v74, %v86
  %s92 = scalar_lea.vmem %s1, 128
  %v93 = vld [vmem:[%s92] sm:$0xff]
  %v94 = vld [vmem:[%s92 + $0x8] sm:$0xff]
  %v95 = vld [vmem:[%s92 + $0x10] sm:$0xff]
  %v96 = vld [vmem:[%s92 + $0x18] sm:$0xff]
  %v97 = vld [vmem:[%s92 + $0x20] sm:$0xff]
  %v98 = vld [vmem:[%s92 + $0x28] sm:$0xff]
  %v99 = vld [vmem:[%s92 + $0x30] sm:$0xff]
  %v100 = vld [vmem:[%s92 + $0x38] sm:$0xff]
  %v101 = vld [vmem:[%s92 + $0x40] sm:$0xff]
  %v102 = vld [vmem:[%s92 + $0x48] sm:$0xff]
  %v103 = vld [vmem:[%s92 + $0x50] sm:$0xff]
  %v104 = vld [vmem:[%s92 + $0x58] sm:$0xff]
  %v105 = vld [vmem:[%s92 + $0x60] sm:$0xff]
  %v106 = vld [vmem:[%s92 + $0x68] sm:$0xff]
  %v107 = vld [vmem:[%s92 + $0x70] sm:$0xff]
  %v108 = vld [vmem:[%s92 + $0x78] sm:$0xff]
  %109 = vmatprep.subr.mxu0 0.0
  %110 = vmatpush1.msra.mxu0 %v108
  %111 = vmatprep.subr.mxu0 0.0
  %112 = vmatpush1.msra.mxu0 %v107
  %113 = vmatprep.subr.mxu0 0.0
  %114 = vmatpush1.msra.mxu0 %v106
  %115 = vmatprep.subr.mxu0 0.0
  %116 = vmatpush1.msra.mxu0 %v105
  %117 = vmatprep.subr.mxu0 0.0
  %118 = vmatpush1.msra.mxu0 %v104
  %119 = vmatprep.subr.mxu0 0.0
  %120 = vmatpush1.msra.mxu0 %v103
  %121 = vmatprep.subr.mxu0 0.0
  %122 = vmatpush1.msra.mxu0 %v102
  %123 = vmatprep.subr.mxu0 0.0
  %124 = vmatpush1.msra.mxu0 %v101
  %125 = vmatprep.subr.mxu0 0.0
  %126 = vmatpush1.msra.mxu0 %v100
  %127 = vmatprep.subr.mxu0 0.0
  %128 = vmatpush1.msra.mxu0 %v99
  %129 = vmatprep.subr.mxu0 0.0
  %130 = vmatpush1.msra.mxu0 %v98
  %131 = vmatprep.subr.mxu0 0.0
  %132 = vmatpush1.msra.mxu0 %v97
  %133 = vmatprep.subr.mxu0 0.0
  %134 = vmatpush1.msra.mxu0 %v96
  %135 = vmatprep.subr.mxu0 0.0
  %136 = vmatpush1.msra.mxu0 %v95
  %137 = vmatprep.subr.mxu0 0.0
  %138 = vmatpush1.msra.mxu0 %v94
  %139 = vmatprep.subr.mxu0 0.0
  %140 = vmatpush1.msra.mxu0 %v93
  %141 = vmatprep.subr.mxu0 0.0
  %142 = vmatpush2.msra.mxu0 0.0
  %143 = vmatprep.subr.mxu0 0.0
  %144 = vmatpush2.msra.mxu0 0.0
  %145 = vmatprep.subr.mxu0 0.0
  %146 = vmatpush2.msra.mxu0 0.0
  %147 = vmatprep.subr.mxu0 0.0
  %148 = vmatpush2.msra.mxu0 0.0
  %149 = vmatprep.subr.mxu0 0.0
  %150 = vmatpush2.msra.mxu0 0.0
  %151 = vmatprep.subr.mxu0 0.0
  %152 = vmatpush2.msra.mxu0 0.0
  %153 = vmatprep.subr.mxu0 0.0
  %154 = vmatpush2.msra.mxu0 0.0
  %155 = vmatprep.subr.mxu0 0.0
  %156 = vmatpush2.msra.mxu0 0.0
  %157 = vmatprep.subr.mxu0 0.0
  %158 = vmatpush2.msra.mxu0 0.0
  %159 = vmatprep.subr.mxu0 0.0
  %160 = vmatpush2.msra.mxu0 0.0
  %161 = vmatprep.subr.mxu0 0.0
  %162 = vmatpush2.msra.mxu0 0.0
  %163 = vmatprep.subr.mxu0 0.0
  %164 = vmatpush2.msra.mxu0 0.0
  %165 = vmatprep.subr.mxu0 0.0
  %166 = vmatpush2.msra.mxu0 0.0
  %167 = vmatprep.subr.mxu0 0.0
  %168 = vmatpush2.msra.mxu0 0.0
  %169 = vmatprep.subr.mxu0 0.0
  %170 = vmatpush2.msra.mxu0 0.0
  %171 = vmatprep.subr.mxu0 0.0
  %172 = vmatpush2.msra.mxu0 0.0
  %173 = vmatprep.mubr.f32.mxu0 0.0
  %174 = vmatmul.mubr.f32.gmra.mxu0 %v88
  %v175 = vpop.f32.mrf.mxu0
  %v176 = vadd.f32 0.0, %v175
  %v177 = vpop.f32.mrf.mxu0
  %178 = vmatprep.mubr.f32.mxu0 0.0
  %179 = vmatmul.mubr.f32.gmra.mxu0 %v89
  %v180 = vpop.f32.mrf.mxu0
  %v181 = vadd.f32 0.0, %v180
  %v182 = vpop.f32.mrf.mxu0
  %183 = vmatprep.mubr.f32.mxu0 0.0
  %184 = vmatmul.mubr.f32.gmra.mxu0 %v90
  %v185 = vpop.f32.mrf.mxu0
  %v186 = vadd.f32 0.0, %v185
  %v187 = vpop.f32.mrf.mxu0
  %188 = vmatprep.mubr.f32.mxu0 0.0
  %189 = vmatmul.mubr.f32.gmra.mxu0 %v91
  %v190 = vpop.f32.mrf.mxu0
  %v191 = vadd.f32 0.0, %v190
  %v192 = vpop.f32.mrf.mxu0
  %193 = vdwg.mxu0
  %194 = vmatprep.subr.mxu0 0.0
  %195 = vmatpush1.msra.mxu0 %v67
  %196 = vmatprep.subr.mxu0 0.0
  %197 = vmatpush1.msra.mxu0 %v66
  %198 = vmatprep.subr.mxu0 0.0
  %199 = vmatpush1.msra.mxu0 %v65
  %200 = vmatprep.subr.mxu0 0.0
  %201 = vmatpush1.msra.mxu0 %v64
  %202 = vmatprep.subr.mxu0 0.0
  %203 = vmatpush1.msra.mxu0 %v63
  %204 = vmatprep.subr.mxu0 0.0
  %205 = vmatpush1.msra.mxu0 %v62
  %206 = vmatprep.subr.mxu0 0.0
  %207 = vmatpush1.msra.mxu0 %v61
  %208 = vmatprep.subr.mxu0 0.0
  %209 = vmatpush1.msra.mxu0 %v60
  %210 = vmatprep.subr.mxu0 0.0
  %211 = vmatpush1.msra.mxu0 %v59
  %212 = vmatprep.subr.mxu0 0.0
  %213 = vmatpush1.msra.mxu0 %v58
  %214 = vmatprep.subr.mxu0 0.0
  %215 = vmatpush1.msra.mxu0 %v57
  %216 = vmatprep.subr.mxu0 0.0
  %217 = vmatpush1.msra.mxu0 %v56
  %218 = vmatprep.subr.mxu0 0.0
  %219 = vmatpush1.msra.mxu0 %v55
  %220 = vmatprep.subr.mxu0 0.0
  %221 = vmatpush1.msra.mxu0 %v54
  %222 = vmatprep.subr.mxu0 0.0
  %223 = vmatpush1.msra.mxu0 %v53
  %224 = vmatprep.subr.mxu0 0.0
  %225 = vmatpush1.msra.mxu0 %v52
  %226 = vmatprep.subr.mxu0 0.0
  %227 = vmatpush2.msra.mxu0 0.0
  %228 = vmatprep.subr.mxu0 0.0
  %229 = vmatpush2.msra.mxu0 0.0
  %230 = vmatprep.subr.mxu0 0.0
  %231 = vmatpush2.msra.mxu0 0.0
  %232 = vmatprep.subr.mxu0 0.0
  %233 = vmatpush2.msra.mxu0 0.0
  %234 = vmatprep.subr.mxu0 0.0
  %235 = vmatpush2.msra.mxu0 0.0
  %236 = vmatprep.subr.mxu0 0.0
  %237 = vmatpush2.msra.mxu0 0.0
  %238 = vmatprep.subr.mxu0 0.0
  %239 = vmatpush2.msra.mxu0 0.0
  %240 = vmatprep.subr.mxu0 0.0
  %241 = vmatpush2.msra.mxu0 0.0
  %242 = vmatprep.subr.mxu0 0.0
  %243 = vmatpush2.msra.mxu0 0.0
  %244 = vmatprep.subr.mxu0 0.0
  %245 = vmatpush2.msra.mxu0 0.0
  %246 = vmatprep.subr.mxu0 0.0
  %247 = vmatpush2.msra.mxu0 0.0
  %248 = vmatprep.subr.mxu0 0.0
  %249 = vmatpush2.msra.mxu0 0.0
  %250 = vmatprep.subr.mxu0 0.0
  %251 = vmatpush2.msra.mxu0 0.0
  %252 = vmatprep.subr.mxu0 0.0
  %253 = vmatpush2.msra.mxu0 0.0
  %254 = vmatprep.subr.mxu0 0.0
  %255 = vmatpush2.msra.mxu0 0.0
  %256 = vmatprep.subr.mxu0 0.0
  %257 = vmatpush2.msra.mxu0 0.0
  %258 = vmatprep.mubr.f32.mxu0 0.0
  %259 = vmatmul.mubr.f32.gmra.mxu0 %v48
  %v260 = vpop.f32.mrf.mxu0
  %v261 = vadd.f32 %v176, %v260
  %v262 = vpop.f32.mrf.mxu0
  %263 = vmatprep.mubr.f32.mxu0 0.0
  %264 = vmatmul.mubr.f32.gmra.mxu0 %v49
  %v265 = vpop.f32.mrf.mxu0
  %v266 = vadd.f32 %v181, %v265
  %v267 = vpop.f32.mrf.mxu0
  %268 = vmatprep.mubr.f32.mxu0 0.0
  %269 = vmatmul.mubr.f32.gmra.mxu0 %v50
  %v270 = vpop.f32.mrf.mxu0
  %v271 = vadd.f32 %v186, %v270
  %v272 = vpop.f32.mrf.mxu0
  %273 = vmatprep.mubr.f32.mxu0 0.0
  %274 = vmatmul.mubr.f32.gmra.mxu0 %v51
  %v275 = vpop.f32.mrf.mxu0
  %v276 = vadd.f32 %v191, %v275
  %v277 = vpop.f32.mrf.mxu0
  %278 = vdwg.mxu0
  %v279 = vld [vmem:[%s0 + $0x2] sm:$0xf]
  %v280 = vld [vmem:[%s21 + $0x2] sm:$0xf]
  %v281 = vld [vmem:[%s23 + $0x2] sm:$0xf]
  %v282 = vld [vmem:[%s25 + $0x2] sm:$0xf]
  %v283 = vld [vmem:[%s27 + $0x2] sm:$0xf]
  %v284 = vld [vmem:[%s29 + $0x2] sm:$0xf]
  %v285 = vld [vmem:[%s31 + $0x2] sm:$0xf]
  %v286 = vld [vmem:[%s33 + $0x2] sm:$0xf]
  %v288 = vrot.slane %v280, 4
  %v291 = vrot.slane %v282, 4
  %v294 = vrot.slane %v284, 4
  %v297 = vrot.slane %v286, 4
  %v299 = vsel %vm47, %v279, %v288
  %v300 = vsel %vm47, %v281, %v291
  %v301 = vsel %vm47, %v283, %v294
  %v302 = vsel %vm47, %v285, %v297
  %s303 = scalar_lea.vmem %s1, 256
  %v304 = vld [vmem:[%s303] sm:$0xff]
  %v305 = vld [vmem:[%s303 + $0x8] sm:$0xff]
  %v306 = vld [vmem:[%s303 + $0x10] sm:$0xff]
  %v307 = vld [vmem:[%s303 + $0x18] sm:$0xff]
  %v308 = vld [vmem:[%s303 + $0x20] sm:$0xff]
  %v309 = vld [vmem:[%s303 + $0x28] sm:$0xff]
  %v310 = vld [vmem:[%s303 + $0x30] sm:$0xff]
  %v311 = vld [vmem:[%s303 + $0x38] sm:$0xff]
  %v312 = vld [vmem:[%s303 + $0x40] sm:$0xff]
  %v313 = vld [vmem:[%s303 + $0x48] sm:$0xff]
  %v314 = vld [vmem:[%s303 + $0x50] sm:$0xff]
  %v315 = vld [vmem:[%s303 + $0x58] sm:$0xff]
  %v316 = vld [vmem:[%s303 + $0x60] sm:$0xff]
  %v317 = vld [vmem:[%s303 + $0x68] sm:$0xff]
  %v318 = vld [vmem:[%s303 + $0x70] sm:$0xff]
  %v319 = vld [vmem:[%s303 + $0x78] sm:$0xff]
  %320 = vmatprep.subr.mxu0 0.0
  %321 = vmatpush1.msra.mxu0 %v319
  %322 = vmatprep.subr.mxu0 0.0
  %323 = vmatpush1.msra.mxu0 %v318
  %324 = vmatprep.subr.mxu0 0.0
  %325 = vmatpush1.msra.mxu0 %v317
  %326 = vmatprep.subr.mxu0 0.0
  %327 = vmatpush1.msra.mxu0 %v316
  %328 = vmatprep.subr.mxu0 0.0
  %329 = vmatpush1.msra.mxu0 %v315
  %330 = vmatprep.subr.mxu0 0.0
  %331 = vmatpush1.msra.mxu0 %v314
  %332 = vmatprep.subr.mxu0 0.0
  %333 = vmatpush1.msra.mxu0 %v313
  %334 = vmatprep.subr.mxu0 0.0
  %335 = vmatpush1.msra.mxu0 %v312
  %336 = vmatprep.subr.mxu0 0.0
  %337 = vmatpush1.msra.mxu0 %v311
  %338 = vmatprep.subr.mxu0 0.0
  %339 = vmatpush1.msra.mxu0 %v310
  %340 = vmatprep.subr.mxu0 0.0
  %341 = vmatpush1.msra.mxu0 %v309
  %342 = vmatprep.subr.mxu0 0.0
  %343 = vmatpush1.msra.mxu0 %v308
  %344 = vmatprep.subr.mxu0 0.0
  %345 = vmatpush1.msra.mxu0 %v307
  %346 = vmatprep.subr.mxu0 0.0
  %347 = vmatpush1.msra.mxu0 %v306
  %348 = vmatprep.subr.mxu0 0.0
  %349 = vmatpush1.msra.mxu0 %v305
  %350 = vmatprep.subr.mxu0 0.0
  %351 = vmatpush1.msra.mxu0 %v304
  %352 = vmatprep.subr.mxu0 0.0
  %353 = vmatpush2.msra.mxu0 0.0
  %354 = vmatprep.subr.mxu0 0.0
  %355 = vmatpush2.msra.mxu0 0.0
  %356 = vmatprep.subr.mxu0 0.0
  %357 = vmatpush2.msra.mxu0 0.0
  %358 = vmatprep.subr.mxu0 0.0
  %359 = vmatpush2.msra.mxu0 0.0
  %360 = vmatprep.subr.mxu0 0.0
  %361 = vmatpush2.msra.mxu0 0.0
  %362 = vmatprep.subr.mxu0 0.0
  %363 = vmatpush2.msra.mxu0 0.0
  %364 = vmatprep.subr.mxu0 0.0
  %365 = vmatpush2.msra.mxu0 0.0
  %366 = vmatprep.subr.mxu0 0.0
  %367 = vmatpush2.msra.mxu0 0.0
  %368 = vmatprep.subr.mxu0 0.0
  %369 = vmatpush2.msra.mxu0 0.0
  %370 = vmatprep.subr.mxu0 0.0
  %371 = vmatpush2.msra.mxu0 0.0
  %372 = vmatprep.subr.mxu0 0.0
  %373 = vmatpush2.msra.mxu0 0.0
  %374 = vmatprep.subr.mxu0 0.0
  %375 = vmatpush2.msra.mxu0 0.0
  %376 = vmatprep.subr.mxu0 0.0
  %377 = vmatpush2.msra.mxu0 0.0
  %378 = vmatprep.subr.mxu0 0.0
  %379 = vmatpush2.msra.mxu0 0.0
  %380 = vmatprep.subr.mxu0 0.0
  %381 = vmatpush2.msra.mxu0 0.0
  %382 = vmatprep.subr.mxu0 0.0
  %383 = vmatpush2.msra.mxu0 0.0
  %384 = vmatprep.mubr.f32.mxu0 0.0
  %385 = vmatmul.mubr.f32.gmra.mxu0 %v299
  %v386 = vpop.f32.mrf.mxu0
  %v387 = vadd.f32 0.0, %v386
  %v388 = vpop.f32.mrf.mxu0
  %389 = vmatprep.mubr.f32.mxu0 0.0
  %390 = vmatmul.mubr.f32.gmra.mxu0 %v300
  %v391 = vpop.f32.mrf.mxu0
  %v392 = vadd.f32 0.0, %v391
  %v393 = vpop.f32.mrf.mxu0
  %394 = vmatprep.mubr.f32.mxu0 0.0
  %395 = vmatmul.mubr.f32.gmra.mxu0 %v301
  %v396 = vpop.f32.mrf.mxu0
  %v397 = vadd.f32 0.0, %v396
  %v398 = vpop.f32.mrf.mxu0
  %399 = vmatprep.mubr.f32.mxu0 0.0
  %400 = vmatmul.mubr.f32.gmra.mxu0 %v302
  %v401 = vpop.f32.mrf.mxu0
  %v402 = vadd.f32 0.0, %v401
  %v403 = vpop.f32.mrf.mxu0
  %404 = vdwg.mxu0
  %v405 = vadd.f32 %v261, %v387
  %v406 = vadd.f32 %v266, %v392
  %v407 = vadd.f32 %v271, %v397
  %v408 = vadd.f32 %v276, %v402
  %s409 = scalar_lea.vmem %s0, 32
  %v410 = vld [vmem:[%s409] sm:$0xf]
  %s411 = scalar_lea.vmem %s0, 80
  %v412 = vld [vmem:[%s411] sm:$0xf]
  %v414 = vrot.slane %v24, 4
  %v417 = vrot.slane %v410, 4
  %v420 = vrot.slane %v32, 4
  %v423 = vrot.slane %v412, 4
  %v425 = vsel %vm47, %v22, %v414
  %v426 = vsel %vm47, %v26, %v417
  %v427 = vsel %vm47, %v30, %v420
  %v428 = vsel %vm47, %v34, %v423
  %s429 = scalar_lea.vmem %s1, 384
  %v430 = vld [vmem:[%s429] sm:$0xff]
  %v431 = vld [vmem:[%s429 + $0x8] sm:$0xff]
  %v432 = vld [vmem:[%s429 + $0x10] sm:$0xff]
  %v433 = vld [vmem:[%s429 + $0x18] sm:$0xff]
  %v434 = vld [vmem:[%s429 + $0x20] sm:$0xff]
  %v435 = vld [vmem:[%s429 + $0x28] sm:$0xff]
  %v436 = vld [vmem:[%s429 + $0x30] sm:$0xff]
  %v437 = vld [vmem:[%s429 + $0x38] sm:$0xff]
  %v438 = vld [vmem:[%s429 + $0x40] sm:$0xff]
  %v439 = vld [vmem:[%s429 + $0x48] sm:$0xff]
  %v440 = vld [vmem:[%s429 + $0x50] sm:$0xff]
  %v441 = vld [vmem:[%s429 + $0x58] sm:$0xff]
  %v442 = vld [vmem:[%s429 + $0x60] sm:$0xff]
  %v443 = vld [vmem:[%s429 + $0x68] sm:$0xff]
  %v444 = vld [vmem:[%s429 + $0x70] sm:$0xff]
  %v445 = vld [vmem:[%s429 + $0x78] sm:$0xff]
  %446 = vmatprep.subr.mxu0 0.0
  %447 = vmatpush1.msra.mxu0 %v445
  %448 = vmatprep.subr.mxu0 0.0
  %449 = vmatpush1.msra.mxu0 %v444
  %450 = vmatprep.subr.mxu0 0.0
  %451 = vmatpush1.msra.mxu0 %v443
  %452 = vmatprep.subr.mxu0 0.0
  %453 = vmatpush1.msra.mxu0 %v442
  %454 = vmatprep.subr.mxu0 0.0
  %455 = vmatpush1.msra.mxu0 %v441
  %456 = vmatprep.subr.mxu0 0.0
  %457 = vmatpush1.msra.mxu0 %v440
  %458 = vmatprep.subr.mxu0 0.0
  %459 = vmatpush1.msra.mxu0 %v439
  %460 = vmatprep.subr.mxu0 0.0
  %461 = vmatpush1.msra.mxu0 %v438
  %462 = vmatprep.subr.mxu0 0.0
  %463 = vmatpush1.msra.mxu0 %v437
  %464 = vmatprep.subr.mxu0 0.0
  %465 = vmatpush1.msra.mxu0 %v436
  %466 = vmatprep.subr.mxu0 0.0
  %467 = vmatpush1.msra.mxu0 %v435
  %468 = vmatprep.subr.mxu0 0.0
  %469 = vmatpush1.msra.mxu0 %v434
  %470 = vmatprep.subr.mxu0 0.0
  %471 = vmatpush1.msra.mxu0 %v433
  %472 = vmatprep.subr.mxu0 0.0
  %473 = vmatpush1.msra.mxu0 %v432
  %474 = vmatprep.subr.mxu0 0.0
  %475 = vmatpush1.msra.mxu0 %v431
  %476 = vmatprep.subr.mxu0 0.0
  %477 = vmatpush1.msra.mxu0 %v430
  %478 = vmatprep.subr.mxu0 0.0
  %479 = vmatpush2.msra.mxu0 0.0
  %480 = vmatprep.subr.mxu0 0.0
  %481 = vmatpush2.msra.mxu0 0.0
  %482 = vmatprep.subr.mxu0 0.0
  %483 = vmatpush2.msra.mxu0 0.0
  %484 = vmatprep.subr.mxu0 0.0
  %485 = vmatpush2.msra.mxu0 0.0
  %486 = vmatprep.subr.mxu0 0.0
  %487 = vmatpush2.msra.mxu0 0.0
  %488 = vmatprep.subr.mxu0 0.0
  %489 = vmatpush2.msra.mxu0 0.0
  %490 = vmatprep.subr.mxu0 0.0
  %491 = vmatpush2.msra.mxu0 0.0
  %492 = vmatprep.subr.mxu0 0.0
  %493 = vmatpush2.msra.mxu0 0.0
  %494 = vmatprep.subr.mxu0 0.0
  %495 = vmatpush2.msra.mxu0 0.0
  %496 = vmatprep.subr.mxu0 0.0
  %497 = vmatpush2.msra.mxu0 0.0
  %498 = vmatprep.subr.mxu0 0.0
  %499 = vmatpush2.msra.mxu0 0.0
  %500 = vmatprep.subr.mxu0 0.0
  %501 = vmatpush2.msra.mxu0 0.0
  %502 = vmatprep.subr.mxu0 0.0
  %503 = vmatpush2.msra.mxu0 0.0
  %504 = vmatprep.subr.mxu0 0.0
  %505 = vmatpush2.msra.mxu0 0.0
  %506 = vmatprep.subr.mxu0 0.0
  %507 = vmatpush2.msra.mxu0 0.0
  %508 = vmatprep.subr.mxu0 0.0
  %509 = vmatpush2.msra.mxu0 0.0
  %510 = vmatprep.mubr.f32.mxu0 0.0
  %511 = vmatmul.mubr.f32.gmra.mxu0 %v425
  %v512 = vpop.f32.mrf.mxu0
  %v513 = vadd.f32 0.0, %v512
  %v514 = vpop.f32.mrf.mxu0
  %515 = vmatprep.mubr.f32.mxu0 0.0
  %516 = vmatmul.mubr.f32.gmra.mxu0 %v426
  %v517 = vpop.f32.mrf.mxu0
  %v518 = vadd.f32 0.0, %v517
  %v519 = vpop.f32.mrf.mxu0
  %520 = vmatprep.mubr.f32.mxu0 0.0
  %521 = vmatmul.mubr.f32.gmra.mxu0 %v427
  %v522 = vpop.f32.mrf.mxu0
  %v523 = vadd.f32 0.0, %v522
  %v524 = vpop.f32.mrf.mxu0
  %525 = vmatprep.mubr.f32.mxu0 0.0
  %526 = vmatmul.mubr.f32.gmra.mxu0 %v428
  %v527 = vpop.f32.mrf.mxu0
  %v528 = vadd.f32 0.0, %v527
  %v529 = vpop.f32.mrf.mxu0
  %530 = vdwg.mxu0
  %v531 = vadd.f32 %v405, %v513
  %v532 = vadd.f32 %v406, %v518
  %v533 = vadd.f32 %v407, %v523
  %v534 = vadd.f32 %v408, %v528
  %v535 = vld [vmem:[%s409 + $0x1] sm:$0xf]
  %v536 = vld [vmem:[%s411 + $0x1] sm:$0xf]
  %v538 = vrot.slane %v70, 4
  %v541 = vrot.slane %v535, 4
  %v544 = vrot.slane %v74, 4
  %v547 = vrot.slane %v536, 4
  %v549 = vsel %vm47, %v69, %v538
  %v550 = vsel %vm47, %v71, %v541
  %v551 = vsel %vm47, %v73, %v544
  %v552 = vsel %vm47, %v75, %v547
  %s553 = scalar_lea.vmem %s1, 512
  %v554 = vld [vmem:[%s553] sm:$0xff]
  %v555 = vld [vmem:[%s553 + $0x8] sm:$0xff]
  %v556 = vld [vmem:[%s553 + $0x10] sm:$0xff]
  %v557 = vld [vmem:[%s553 + $0x18] sm:$0xff]
  %v558 = vld [vmem:[%s553 + $0x20] sm:$0xff]
  %v559 = vld [vmem:[%s553 + $0x28] sm:$0xff]
  %v560 = vld [vmem:[%s553 + $0x30] sm:$0xff]
  %v561 = vld [vmem:[%s553 + $0x38] sm:$0xff]
  %v562 = vld [vmem:[%s553 + $0x40] sm:$0xff]
  %v563 = vld [vmem:[%s553 + $0x48] sm:$0xff]
  %v564 = vld [vmem:[%s553 + $0x50] sm:$0xff]
  %v565 = vld [vmem:[%s553 + $0x58] sm:$0xff]
  %v566 = vld [vmem:[%s553 + $0x60] sm:$0xff]
  %v567 = vld [vmem:[%s553 + $0x68] sm:$0xff]
  %v568 = vld [vmem:[%s553 + $0x70] sm:$0xff]
  %v569 = vld [vmem:[%s553 + $0x78] sm:$0xff]
  %570 = vmatprep.subr.mxu0 0.0
  %571 = vmatpush1.msra.mxu0 %v569
  %572 = vmatprep.subr.mxu0 0.0
  %573 = vmatpush1.msra.mxu0 %v568
  %574 = vmatprep.subr.mxu0 0.0
  %575 = vmatpush1.msra.mxu0 %v567
  %576 = vmatprep.subr.mxu0 0.0
  %577 = vmatpush1.msra.mxu0 %v566
  %578 = vmatprep.subr.mxu0 0.0
  %579 = vmatpush1.msra.mxu0 %v565
  %580 = vmatprep.subr.mxu0 0.0
  %581 = vmatpush1.msra.mxu0 %v564
  %582 = vmatprep.subr.mxu0 0.0
  %583 = vmatpush1.msra.mxu0 %v563
  %584 = vmatprep.subr.mxu0 0.0
  %585 = vmatpush1.msra.mxu0 %v562
  %586 = vmatprep.subr.mxu0 0.0
  %587 = vmatpush1.msra.mxu0 %v561
  %588 = vmatprep.subr.mxu0 0.0
  %589 = vmatpush1.msra.mxu0 %v560
  %590 = vmatprep.subr.mxu0 0.0
  %591 = vmatpush1.msra.mxu0 %v559
  %592 = vmatprep.subr.mxu0 0.0
  %593 = vmatpush1.msra.mxu0 %v558
  %594 = vmatprep.subr.mxu0 0.0
  %595 = vmatpush1.msra.mxu0 %v557
  %596 = vmatprep.subr.mxu0 0.0
  %597 = vmatpush1.msra.mxu0 %v556
  %598 = vmatprep.subr.mxu0 0.0
  %599 = vmatpush1.msra.mxu0 %v555
  %600 = vmatprep.subr.mxu0 0.0
  %601 = vmatpush1.msra.mxu0 %v554
  %602 = vmatprep.subr.mxu0 0.0
  %603 = vmatpush2.msra.mxu0 0.0
  %604 = vmatprep.subr.mxu0 0.0
  %605 = vmatpush2.msra.mxu0 0.0
  %606 = vmatprep.subr.mxu0 0.0
  %607 = vmatpush2.msra.mxu0 0.0
  %608 = vmatprep.subr.mxu0 0.0
  %609 = vmatpush2.msra.mxu0 0.0
  %610 = vmatprep.subr.mxu0 0.0
  %611 = vmatpush2.msra.mxu0 0.0
  %612 = vmatprep.subr.mxu0 0.0
  %613 = vmatpush2.msra.mxu0 0.0
  %614 = vmatprep.subr.mxu0 0.0
  %615 = vmatpush2.msra.mxu0 0.0
  %616 = vmatprep.subr.mxu0 0.0
  %617 = vmatpush2.msra.mxu0 0.0
  %618 = vmatprep.subr.mxu0 0.0
  %619 = vmatpush2.msra.mxu0 0.0
  %620 = vmatprep.subr.mxu0 0.0
  %621 = vmatpush2.msra.mxu0 0.0
  %622 = vmatprep.subr.mxu0 0.0
  %623 = vmatpush2.msra.mxu0 0.0
  %624 = vmatprep.subr.mxu0 0.0
  %625 = vmatpush2.msra.mxu0 0.0
  %626 = vmatprep.subr.mxu0 0.0
  %627 = vmatpush2.msra.mxu0 0.0
  %628 = vmatprep.subr.mxu0 0.0
  %629 = vmatpush2.msra.mxu0 0.0
  %630 = vmatprep.subr.mxu0 0.0
  %631 = vmatpush2.msra.mxu0 0.0
  %632 = vmatprep.subr.mxu0 0.0
  %633 = vmatpush2.msra.mxu0 0.0
  %634 = vmatprep.mubr.f32.mxu0 0.0
  %635 = vmatmul.mubr.f32.gmra.mxu0 %v549
  %v636 = vpop.f32.mrf.mxu0
  %v637 = vadd.f32 0.0, %v636
  %v638 = vpop.f32.mrf.mxu0
  %639 = vmatprep.mubr.f32.mxu0 0.0
  %640 = vmatmul.mubr.f32.gmra.mxu0 %v550
  %v641 = vpop.f32.mrf.mxu0
  %v642 = vadd.f32 0.0, %v641
  %v643 = vpop.f32.mrf.mxu0
  %644 = vmatprep.mubr.f32.mxu0 0.0
  %645 = vmatmul.mubr.f32.gmra.mxu0 %v551
  %v646 = vpop.f32.mrf.mxu0
  %v647 = vadd.f32 0.0, %v646
  %v648 = vpop.f32.mrf.mxu0
  %649 = vmatprep.mubr.f32.mxu0 0.0
  %650 = vmatmul.mubr.f32.gmra.mxu0 %v552
  %v651 = vpop.f32.mrf.mxu0
  %v652 = vadd.f32 0.0, %v651
  %v653 = vpop.f32.mrf.mxu0
  %654 = vdwg.mxu0
  %v655 = vadd.f32 %v531, %v637
  %v656 = vadd.f32 %v532, %v642
  %v657 = vadd.f32 %v533, %v647
  %v658 = vadd.f32 %v534, %v652
  %v659 = vld [vmem:[%s409 + $0x2] sm:$0xf]
  %v660 = vld [vmem:[%s411 + $0x2] sm:$0xf]
  %v662 = vrot.slane %v281, 4
  %v665 = vrot.slane %v659, 4
  %v668 = vrot.slane %v285, 4
  %v671 = vrot.slane %v660, 4
  %v673 = vsel %vm47, %v280, %v662
  %v674 = vsel %vm47, %v282, %v665
  %v675 = vsel %vm47, %v284, %v668
  %v676 = vsel %vm47, %v286, %v671
  %s677 = scalar_lea.vmem %s1, 640
  %v678 = vld [vmem:[%s677] sm:$0xff]
  %v679 = vld [vmem:[%s677 + $0x8] sm:$0xff]
  %v680 = vld [vmem:[%s677 + $0x10] sm:$0xff]
  %v681 = vld [vmem:[%s677 + $0x18] sm:$0xff]
  %v682 = vld [vmem:[%s677 + $0x20] sm:$0xff]
  %v683 = vld [vmem:[%s677 + $0x28] sm:$0xff]
  %v684 = vld [vmem:[%s677 + $0x30] sm:$0xff]
  %v685 = vld [vmem:[%s677 + $0x38] sm:$0xff]
  %v686 = vld [vmem:[%s677 + $0x40] sm:$0xff]
  %v687 = vld [vmem:[%s677 + $0x48] sm:$0xff]
  %v688 = vld [vmem:[%s677 + $0x50] sm:$0xff]
  %v689 = vld [vmem:[%s677 + $0x58] sm:$0xff]
  %v690 = vld [vmem:[%s677 + $0x60] sm:$0xff]
  %v691 = vld [vmem:[%s677 + $0x68] sm:$0xff]
  %v692 = vld [vmem:[%s677 + $0x70] sm:$0xff]
  %v693 = vld [vmem:[%s677 + $0x78] sm:$0xff]
  %694 = vmatprep.subr.mxu0 0.0
  %695 = vmatpush1.msra.mxu0 %v693
  %696 = vmatprep.subr.mxu0 0.0
  %697 = vmatpush1.msra.mxu0 %v692
  %698 = vmatprep.subr.mxu0 0.0
  %699 = vmatpush1.msra.mxu0 %v691
  %700 = vmatprep.subr.mxu0 0.0
  %701 = vmatpush1.msra.mxu0 %v690
  %702 = vmatprep.subr.mxu0 0.0
  %703 = vmatpush1.msra.mxu0 %v689
  %704 = vmatprep.subr.mxu0 0.0
  %705 = vmatpush1.msra.mxu0 %v688
  %706 = vmatprep.subr.mxu0 0.0
  %707 = vmatpush1.msra.mxu0 %v687
  %708 = vmatprep.subr.mxu0 0.0
  %709 = vmatpush1.msra.mxu0 %v686
  %710 = vmatprep.subr.mxu0 0.0
  %711 = vmatpush1.msra.mxu0 %v685
  %712 = vmatprep.subr.mxu0 0.0
  %713 = vmatpush1.msra.mxu0 %v684
  %714 = vmatprep.subr.mxu0 0.0
  %715 = vmatpush1.msra.mxu0 %v683
  %716 = vmatprep.subr.mxu0 0.0
  %717 = vmatpush1.msra.mxu0 %v682
  %718 = vmatprep.subr.mxu0 0.0
  %719 = vmatpush1.msra.mxu0 %v681
  %720 = vmatprep.subr.mxu0 0.0
  %721 = vmatpush1.msra.mxu0 %v680
  %722 = vmatprep.subr.mxu0 0.0
  %723 = vmatpush1.msra.mxu0 %v679
  %724 = vmatprep.subr.mxu0 0.0
  %725 = vmatpush1.msra.mxu0 %v678
  %726 = vmatprep.subr.mxu0 0.0
  %727 = vmatpush2.msra.mxu0 0.0
  %728 = vmatprep.subr.mxu0 0.0
  %729 = vmatpush2.msra.mxu0 0.0
  %730 = vmatprep.subr.mxu0 0.0
  %731 = vmatpush2.msra.mxu0 0.0
  %732 = vmatprep.subr.mxu0 0.0
  %733 = vmatpush2.msra.mxu0 0.0
  %734 = vmatprep.subr.mxu0 0.0
  %735 = vmatpush2.msra.mxu0 0.0
  %736 = vmatprep.subr.mxu0 0.0
  %737 = vmatpush2.msra.mxu0 0.0
  %738 = vmatprep.subr.mxu0 0.0
  %739 = vmatpush2.msra.mxu0 0.0
  %740 = vmatprep.subr.mxu0 0.0
  %741 = vmatpush2.msra.mxu0 0.0
  %742 = vmatprep.subr.mxu0 0.0
  %743 = vmatpush2.msra.mxu0 0.0
  %744 = vmatprep.subr.mxu0 0.0
  %745 = vmatpush2.msra.mxu0 0.0
  %746 = vmatprep.subr.mxu0 0.0
  %747 = vmatpush2.msra.mxu0 0.0
  %748 = vmatprep.subr.mxu0 0.0
  %749 = vmatpush2.msra.mxu0 0.0
  %750 = vmatprep.subr.mxu0 0.0
  %751 = vmatpush2.msra.mxu0 0.0
  %752 = vmatprep.subr.mxu0 0.0
  %753 = vmatpush2.msra.mxu0 0.0
  %754 = vmatprep.subr.mxu0 0.0
  %755 = vmatpush2.msra.mxu0 0.0
  %756 = vmatprep.subr.mxu0 0.0
  %757 = vmatpush2.msra.mxu0 0.0
  %758 = vmatprep.mubr.f32.mxu0 0.0
  %759 = vmatmul.mubr.f32.gmra.mxu0 %v673
  %v760 = vpop.f32.mrf.mxu0
  %v761 = vadd.f32 0.0, %v760
  %v762 = vpop.f32.mrf.mxu0
  %763 = vmatprep.mubr.f32.mxu0 0.0
  %764 = vmatmul.mubr.f32.gmra.mxu0 %v674
  %v765 = vpop.f32.mrf.mxu0
  %v766 = vadd.f32 0.0, %v765
  %v767 = vpop.f32.mrf.mxu0
  %768 = vmatprep.mubr.f32.mxu0 0.0
  %769 = vmatmul.mubr.f32.gmra.mxu0 %v675
  %v770 = vpop.f32.mrf.mxu0
  %v771 = vadd.f32 0.0, %v770
  %v772 = vpop.f32.mrf.mxu0
  %773 = vmatprep.mubr.f32.mxu0 0.0
  %774 = vmatmul.mubr.f32.gmra.mxu0 %v676
  %v775 = vpop.f32.mrf.mxu0
  %v776 = vadd.f32 0.0, %v775
  %v777 = vpop.f32.mrf.mxu0
  %778 = vdwg.mxu0
  %v779 = vadd.f32 %v655, %v761
  %v780 = vadd.f32 %v656, %v766
  %v781 = vadd.f32 %v657, %v771
  %v782 = vadd.f32 %v658, %v776
  %s783 = scalar_lea.vmem %s0, 40
  %v784 = vld [vmem:[%s783] sm:$0xf]
  %s785 = scalar_lea.vmem %s0, 88
  %v786 = vld [vmem:[%s785] sm:$0xf]
  %v788 = vrot.slane %v784, 4
  %v791 = vrot.slane %v786, 4
  %v793 = vsel %vm47, %v410, %v788
  %v794 = vsel %vm47, %v412, %v791
  %s795 = scalar_lea.vmem %s1, 768
  %v796 = vld [vmem:[%s795] sm:$0xff]
  %v797 = vld [vmem:[%s795 + $0x8] sm:$0xff]
  %v798 = vld [vmem:[%s795 + $0x10] sm:$0xff]
  %v799 = vld [vmem:[%s795 + $0x18] sm:$0xff]
  %v800 = vld [vmem:[%s795 + $0x20] sm:$0xff]
  %v801 = vld [vmem:[%s795 + $0x28] sm:$0xff]
  %v802 = vld [vmem:[%s795 + $0x30] sm:$0xff]
  %v803 = vld [vmem:[%s795 + $0x38] sm:$0xff]
  %v804 = vld [vmem:[%s795 + $0x40] sm:$0xff]
  %v805 = vld [vmem:[%s795 + $0x48] sm:$0xff]
  %v806 = vld [vmem:[%s795 + $0x50] sm:$0xff]
  %v807 = vld [vmem:[%s795 + $0x58] sm:$0xff]
  %v808 = vld [vmem:[%s795 + $0x60] sm:$0xff]
  %v809 = vld [vmem:[%s795 + $0x68] sm:$0xff]
  %v810 = vld [vmem:[%s795 + $0x70] sm:$0xff]
  %v811 = vld [vmem:[%s795 + $0x78] sm:$0xff]
  %812 = vmatprep.subr.mxu0 0.0
  %813 = vmatpush1.msra.mxu0 %v811
  %814 = vmatprep.subr.mxu0 0.0
  %815 = vmatpush1.msra.mxu0 %v810
  %816 = vmatprep.subr.mxu0 0.0
  %817 = vmatpush1.msra.mxu0 %v809
  %818 = vmatprep.subr.mxu0 0.0
  %819 = vmatpush1.msra.mxu0 %v808
  %820 = vmatprep.subr.mxu0 0.0
  %821 = vmatpush1.msra.mxu0 %v807
  %822 = vmatprep.subr.mxu0 0.0
  %823 = vmatpush1.msra.mxu0 %v806
  %824 = vmatprep.subr.mxu0 0.0
  %825 = vmatpush1.msra.mxu0 %v805
  %826 = vmatprep.subr.mxu0 0.0
  %827 = vmatpush1.msra.mxu0 %v804
  %828 = vmatprep.subr.mxu0 0.0
  %829 = vmatpush1.msra.mxu0 %v803
  %830 = vmatprep.subr.mxu0 0.0
  %831 = vmatpush1.msra.mxu0 %v802
  %832 = vmatprep.subr.mxu0 0.0
  %833 = vmatpush1.msra.mxu0 %v801
  %834 = vmatprep.subr.mxu0 0.0
  %835 = vmatpush1.msra.mxu0 %v800
  %836 = vmatprep.subr.mxu0 0.0
  %837 = vmatpush1.msra.mxu0 %v799
  %838 = vmatprep.subr.mxu0 0.0
  %839 = vmatpush1.msra.mxu0 %v798
  %840 = vmatprep.subr.mxu0 0.0
  %841 = vmatpush1.msra.mxu0 %v797
  %842 = vmatprep.subr.mxu0 0.0
  %843 = vmatpush1.msra.mxu0 %v796
  %844 = vmatprep.subr.mxu0 0.0
  %845 = vmatpush2.msra.mxu0 0.0
  %846 = vmatprep.subr.mxu0 0.0
  %847 = vmatpush2.msra.mxu0 0.0
  %848 = vmatprep.subr.mxu0 0.0
  %849 = vmatpush2.msra.mxu0 0.0
  %850 = vmatprep.subr.mxu0 0.0
  %851 = vmatpush2.msra.mxu0 0.0
  %852 = vmatprep.subr.mxu0 0.0
  %853 = vmatpush2.msra.mxu0 0.0
  %854 = vmatprep.subr.mxu0 0.0
  %855 = vmatpush2.msra.mxu0 0.0
  %856 = vmatprep.subr.mxu0 0.0
  %857 = vmatpush2.msra.mxu0 0.0
  %858 = vmatprep.subr.mxu0 0.0
  %859 = vmatpush2.msra.mxu0 0.0
  %860 = vmatprep.subr.mxu0 0.0
  %861 = vmatpush2.msra.mxu0 0.0
  %862 = vmatprep.subr.mxu0 0.0
  %863 = vmatpush2.msra.mxu0 0.0
  %864 = vmatprep.subr.mxu0 0.0
  %865 = vmatpush2.msra.mxu0 0.0
  %866 = vmatprep.subr.mxu0 0.0
  %867 = vmatpush2.msra.mxu0 0.0
  %868 = vmatprep.subr.mxu0 0.0
  %869 = vmatpush2.msra.mxu0 0.0
  %870 = vmatprep.subr.mxu0 0.0
  %871 = vmatpush2.msra.mxu0 0.0
  %872 = vmatprep.subr.mxu0 0.0
  %873 = vmatpush2.msra.mxu0 0.0
  %874 = vmatprep.subr.mxu0 0.0
  %875 = vmatpush2.msra.mxu0 0.0
  %876 = vmatprep.mubr.f32.mxu0 0.0
  %877 = vmatmul.mubr.f32.gmra.mxu0 %v49
  %v878 = vpop.f32.mrf.mxu0
  %v879 = vadd.f32 0.0, %v878
  %v880 = vpop.f32.mrf.mxu0
  %881 = vmatprep.mubr.f32.mxu0 0.0
  %882 = vmatmul.mubr.f32.gmra.mxu0 %v793
  %v883 = vpop.f32.mrf.mxu0
  %v884 = vadd.f32 0.0, %v883
  %v885 = vpop.f32.mrf.mxu0
  %886 = vmatprep.mubr.f32.mxu0 0.0
  %887 = vmatmul.mubr.f32.gmra.mxu0 %v51
  %v888 = vpop.f32.mrf.mxu0
  %v889 = vadd.f32 0.0, %v888
  %v890 = vpop.f32.mrf.mxu0
  %891 = vmatprep.mubr.f32.mxu0 0.0
  %892 = vmatmul.mubr.f32.gmra.mxu0 %v794
  %v893 = vpop.f32.mrf.mxu0
  %v894 = vadd.f32 0.0, %v893
  %v895 = vpop.f32.mrf.mxu0
  %896 = vdwg.mxu0
  %v897 = vadd.f32 %v779, %v879
  %v898 = vadd.f32 %v780, %v884
  %v899 = vadd.f32 %v781, %v889
  %v900 = vadd.f32 %v782, %v894
  %v901 = vld [vmem:[%s783 + $0x1] sm:$0xf]
  %v902 = vld [vmem:[%s785 + $0x1] sm:$0xf]
  %v904 = vrot.slane %v901, 4
  %v907 = vrot.slane %v902, 4
  %v909 = vsel %vm47, %v535, %v904
  %v910 = vsel %vm47, %v536, %v907
  %s911 = scalar_lea.vmem %s1, 896
  %v912 = vld [vmem:[%s911] sm:$0xff]
  %v913 = vld [vmem:[%s911 + $0x8] sm:$0xff]
  %v914 = vld [vmem:[%s911 + $0x10] sm:$0xff]
  %v915 = vld [vmem:[%s911 + $0x18] sm:$0xff]
  %v916 = vld [vmem:[%s911 + $0x20] sm:$0xff]
  %v917 = vld [vmem:[%s911 + $0x28] sm:$0xff]
  %v918 = vld [vmem:[%s911 + $0x30] sm:$0xff]
  %v919 = vld [vmem:[%s911 + $0x38] sm:$0xff]
  %v920 = vld [vmem:[%s911 + $0x40] sm:$0xff]
  %v921 = vld [vmem:[%s911 + $0x48] sm:$0xff]
  %v922 = vld [vmem:[%s911 + $0x50] sm:$0xff]
  %v923 = vld [vmem:[%s911 + $0x58] sm:$0xff]
  %v924 = vld [vmem:[%s911 + $0x60] sm:$0xff]
  %v925 = vld [vmem:[%s911 + $0x68] sm:$0xff]
  %v926 = vld [vmem:[%s911 + $0x70] sm:$0xff]
  %v927 = vld [vmem:[%s911 + $0x78] sm:$0xff]
  %928 = vmatprep.subr.mxu0 0.0
  %929 = vmatpush1.msra.mxu0 %v927
  %930 = vmatprep.subr.mxu0 0.0
  %931 = vmatpush1.msra.mxu0 %v926
  %932 = vmatprep.subr.mxu0 0.0
  %933 = vmatpush1.msra.mxu0 %v925
  %934 = vmatprep.subr.mxu0 0.0
  %935 = vmatpush1.msra.mxu0 %v924
  %936 = vmatprep.subr.mxu0 0.0
  %937 = vmatpush1.msra.mxu0 %v923
  %938 = vmatprep.subr.mxu0 0.0
  %939 = vmatpush1.msra.mxu0 %v922
  %940 = vmatprep.subr.mxu0 0.0
  %941 = vmatpush1.msra.mxu0 %v921
  %942 = vmatprep.subr.mxu0 0.0
  %943 = vmatpush1.msra.mxu0 %v920
  %944 = vmatprep.subr.mxu0 0.0
  %945 = vmatpush1.msra.mxu0 %v919
  %946 = vmatprep.subr.mxu0 0.0
  %947 = vmatpush1.msra.mxu0 %v918
  %948 = vmatprep.subr.mxu0 0.0
  %949 = vmatpush1.msra.mxu0 %v917
  %950 = vmatprep.subr.mxu0 0.0
  %951 = vmatpush1.msra.mxu0 %v916
  %952 = vmatprep.subr.mxu0 0.0
  %953 = vmatpush1.msra.mxu0 %v915
  %954 = vmatprep.subr.mxu0 0.0
  %955 = vmatpush1.msra.mxu0 %v914
  %956 = vmatprep.subr.mxu0 0.0
  %957 = vmatpush1.msra.mxu0 %v913
  %958 = vmatprep.subr.mxu0 0.0
  %959 = vmatpush1.msra.mxu0 %v912
  %960 = vmatprep.subr.mxu0 0.0
  %961 = vmatpush2.msra.mxu0 0.0
  %962 = vmatprep.subr.mxu0 0.0
  %963 = vmatpush2.msra.mxu0 0.0
  %964 = vmatprep.subr.mxu0 0.0
  %965 = vmatpush2.msra.mxu0 0.0
  %966 = vmatprep.subr.mxu0 0.0
  %967 = vmatpush2.msra.mxu0 0.0
  %968 = vmatprep.subr.mxu0 0.0
  %969 = vmatpush2.msra.mxu0 0.0
  %970 = vmatprep.subr.mxu0 0.0
  %971 = vmatpush2.msra.mxu0 0.0
  %972 = vmatprep.subr.mxu0 0.0
  %973 = vmatpush2.msra.mxu0 0.0
  %974 = vmatprep.subr.mxu0 0.0
  %975 = vmatpush2.msra.mxu0 0.0
  %976 = vmatprep.subr.mxu0 0.0
  %977 = vmatpush2.msra.mxu0 0.0
  %978 = vmatprep.subr.mxu0 0.0
  %979 = vmatpush2.msra.mxu0 0.0
  %980 = vmatprep.subr.mxu0 0.0
  %981 = vmatpush2.msra.mxu0 0.0
  %982 = vmatprep.subr.mxu0 0.0
  %983 = vmatpush2.msra.mxu0 0.0
  %984 = vmatprep.subr.mxu0 0.0
  %985 = vmatpush2.msra.mxu0 0.0
  %986 = vmatprep.subr.mxu0 0.0
  %987 = vmatpush2.msra.mxu0 0.0
  %988 = vmatprep.subr.mxu0 0.0
  %989 = vmatpush2.msra.mxu0 0.0
  %990 = vmatprep.subr.mxu0 0.0
  %991 = vmatpush2.msra.mxu0 0.0
  %992 = vmatprep.mubr.f32.mxu0 0.0
  %993 = vmatmul.mubr.f32.gmra.mxu0 %v89
  %v994 = vpop.f32.mrf.mxu0
  %v995 = vadd.f32 0.0, %v994
  %v996 = vpop.f32.mrf.mxu0
  %997 = vmatprep.mubr.f32.mxu0 0.0
  %998 = vmatmul.mubr.f32.gmra.mxu0 %v909
  %v999 = vpop.f32.mrf.mxu0
  %v1000 = vadd.f32 0.0, %v999
  %v1001 = vpop.f32.mrf.mxu0
  %1002 = vmatprep.mubr.f32.mxu0 0.0
  %1003 = vmatmul.mubr.f32.gmra.mxu0 %v91
  %v1004 = vpop.f32.mrf.mxu0
  %v1005 = vadd.f32 0.0, %v1004
  %v1006 = vpop.f32.mrf.mxu0
  %1007 = vmatprep.mubr.f32.mxu0 0.0
  %1008 = vmatmul.mubr.f32.gmra.mxu0 %v910
  %v1009 = vpop.f32.mrf.mxu0
  %v1010 = vadd.f32 0.0, %v1009
  %v1011 = vpop.f32.mrf.mxu0
  %1012 = vdwg.mxu0
  %v1013 = vadd.f32 %v897, %v995
  %v1014 = vadd.f32 %v898, %v1000
  %v1015 = vadd.f32 %v899, %v1005
  %v1016 = vadd.f32 %v900, %v1010
  %v1017 = vld [vmem:[%s783 + $0x2] sm:$0xf]
  %v1018 = vld [vmem:[%s785 + $0x2] sm:$0xf]
  %v1020 = vrot.slane %v1017, 4
  %v1023 = vrot.slane %v1018, 4
  %v1025 = vsel %vm47, %v659, %v1020
  %v1026 = vsel %vm47, %v660, %v1023
  %s1027 = scalar_lea.vmem %s1, 1024
  %v1028 = vld [vmem:[%s1027] sm:$0xff]
  %v1029 = vld [vmem:[%s1027 + $0x8] sm:$0xff]
  %v1030 = vld [vmem:[%s1027 + $0x10] sm:$0xff]
  %v1031 = vld [vmem:[%s1027 + $0x18] sm:$0xff]
  %v1032 = vld [vmem:[%s1027 + $0x20] sm:$0xff]
  %v1033 = vld [vmem:[%s1027 + $0x28] sm:$0xff]
  %v1034 = vld [vmem:[%s1027 + $0x30] sm:$0xff]
  %v1035 = vld [vmem:[%s1027 + $0x38] sm:$0xff]
  %v1036 = vld [vmem:[%s1027 + $0x40] sm:$0xff]
  %v1037 = vld [vmem:[%s1027 + $0x48] sm:$0xff]
  %v1038 = vld [vmem:[%s1027 + $0x50] sm:$0xff]
  %v1039 = vld [vmem:[%s1027 + $0x58] sm:$0xff]
  %v1040 = vld [vmem:[%s1027 + $0x60] sm:$0xff]
  %v1041 = vld [vmem:[%s1027 + $0x68] sm:$0xff]
  %v1042 = vld [vmem:[%s1027 + $0x70] sm:$0xff]
  %v1043 = vld [vmem:[%s1027 + $0x78] sm:$0xff]
  %1044 = vmatprep.subr.mxu0 0.0
  %1045 = vmatpush1.msra.mxu0 %v1043
  %1046 = vmatprep.subr.mxu0 0.0
  %1047 = vmatpush1.msra.mxu0 %v1042
  %1048 = vmatprep.subr.mxu0 0.0
  %1049 = vmatpush1.msra.mxu0 %v1041
  %1050 = vmatprep.subr.mxu0 0.0
  %1051 = vmatpush1.msra.mxu0 %v1040
  %1052 = vmatprep.subr.mxu0 0.0
  %1053 = vmatpush1.msra.mxu0 %v1039
  %1054 = vmatprep.subr.mxu0 0.0
  %1055 = vmatpush1.msra.mxu0 %v1038
  %1056 = vmatprep.subr.mxu0 0.0
  %1057 = vmatpush1.msra.mxu0 %v1037
  %1058 = vmatprep.subr.mxu0 0.0
  %1059 = vmatpush1.msra.mxu0 %v1036
  %1060 = vmatprep.subr.mxu0 0.0
  %1061 = vmatpush1.msra.mxu0 %v1035
  %1062 = vmatprep.subr.mxu0 0.0
  %1063 = vmatpush1.msra.mxu0 %v1034
  %1064 = vmatprep.subr.mxu0 0.0
  %1065 = vmatpush1.msra.mxu0 %v1033
  %1066 = vmatprep.subr.mxu0 0.0
  %1067 = vmatpush1.msra.mxu0 %v1032
  %1068 = vmatprep.subr.mxu0 0.0
  %1069 = vmatpush1.msra.mxu0 %v1031
  %1070 = vmatprep.subr.mxu0 0.0
  %1071 = vmatpush1.msra.mxu0 %v1030
  %1072 = vmatprep.subr.mxu0 0.0
  %1073 = vmatpush1.msra.mxu0 %v1029
  %1074 = vmatprep.subr.mxu0 0.0
  %1075 = vmatpush1.msra.mxu0 %v1028
  %1076 = vmatprep.subr.mxu0 0.0
  %1077 = vmatpush2.msra.mxu0 0.0
  %1078 = vmatprep.subr.mxu0 0.0
  %1079 = vmatpush2.msra.mxu0 0.0
  %1080 = vmatprep.subr.mxu0 0.0
  %1081 = vmatpush2.msra.mxu0 0.0
  %1082 = vmatprep.subr.mxu0 0.0
  %1083 = vmatpush2.msra.mxu0 0.0
  %1084 = vmatprep.subr.mxu0 0.0
  %1085 = vmatpush2.msra.mxu0 0.0
  %1086 = vmatprep.subr.mxu0 0.0
  %1087 = vmatpush2.msra.mxu0 0.0
  %1088 = vmatprep.subr.mxu0 0.0
  %1089 = vmatpush2.msra.mxu0 0.0
  %1090 = vmatprep.subr.mxu0 0.0
  %1091 = vmatpush2.msra.mxu0 0.0
  %1092 = vmatprep.subr.mxu0 0.0
  %1093 = vmatpush2.msra.mxu0 0.0
  %1094 = vmatprep.subr.mxu0 0.0
  %1095 = vmatpush2.msra.mxu0 0.0
  %1096 = vmatprep.subr.mxu0 0.0
  %1097 = vmatpush2.msra.mxu0 0.0
  %1098 = vmatprep.subr.mxu0 0.0
  %1099 = vmatpush2.msra.mxu0 0.0
  %1100 = vmatprep.subr.mxu0 0.0
  %1101 = vmatpush2.msra.mxu0 0.0
  %1102 = vmatprep.subr.mxu0 0.0
  %1103 = vmatpush2.msra.mxu0 0.0
  %1104 = vmatprep.subr.mxu0 0.0
  %1105 = vmatpush2.msra.mxu0 0.0
  %1106 = vmatprep.subr.mxu0 0.0
  %1107 = vmatpush2.msra.mxu0 0.0
  %1108 = vmatprep.mubr.f32.mxu0 0.0
  %1109 = vmatmul.mubr.f32.gmra.mxu0 %v300
  %v1110 = vpop.f32.mrf.mxu0
  %v1111 = vadd.f32 0.0, %v1110
  %v1112 = vpop.f32.mrf.mxu0
  %1113 = vmatprep.mubr.f32.mxu0 0.0
  %1114 = vmatmul.mubr.f32.gmra.mxu0 %v1025
  %v1115 = vpop.f32.mrf.mxu0
  %v1116 = vadd.f32 0.0, %v1115
  %v1117 = vpop.f32.mrf.mxu0
  %1118 = vmatprep.mubr.f32.mxu0 0.0
  %1119 = vmatmul.mubr.f32.gmra.mxu0 %v302
  %v1120 = vpop.f32.mrf.mxu0
  %v1121 = vadd.f32 0.0, %v1120
  %v1122 = vpop.f32.mrf.mxu0
  %1123 = vmatprep.mubr.f32.mxu0 0.0
  %1124 = vmatmul.mubr.f32.gmra.mxu0 %v1026
  %v1125 = vpop.f32.mrf.mxu0
  %v1126 = vadd.f32 0.0, %v1125
  %v1127 = vpop.f32.mrf.mxu0
  %1128 = vdwg.mxu0
  %v1129 = vadd.f32 %v1013, %v1111
  %v1130 = vadd.f32 %v1014, %v1116
  %v1131 = vadd.f32 %v1015, %v1121
  %v1132 = vadd.f32 %v1016, %v1126
  %v1133 = vadd.f32 %v1129, %v1130
  %v1134 = vadd.f32 %v1133, %v1131
  %v1135 = vadd.f32 %v1134, %v1132
  %v1136 = vrot.slane %v1135, 4
  %v1137 = vadd.f32 %v1135, %v1136
  %v1138 = vrot.slane %v1137, 2
  %v1139 = vadd.f32 %v1137, %v1138
  %v1140 = vrot.slane %v1139, 1
  %v1141 = vadd.f32 %v1139, %v1140
  %v1142 = vrcp.pop 32.0
  %v1143 = vmul.f32 %v1141, %v1142
  %v1144 = vmul.f32 %v1129, %v1129
  %v1145 = vmul.f32 %v1130, %v1130
  %v1146 = vmul.f32 %v1131, %v1131
  %v1147 = vmul.f32 %v1132, %v1132
  %v1148 = vadd.f32 %v1144, %v1145
  %v1149 = vadd.f32 %v1148, %v1146
  %v1150 = vadd.f32 %v1149, %v1147
  %v1151 = vrot.slane %v1150, 4
  %v1152 = vadd.f32 %v1150, %v1151
  %v1153 = vrot.slane %v1152, 2
  %v1154 = vadd.f32 %v1152, %v1153
  %v1155 = vrot.slane %v1154, 1
  %v1156 = vadd.f32 %v1154, %v1155
  %v1157 = vmul.f32 %v1156, %v1142
  %v1158 = vmul.f32 %v1143, %v1143
  %v1159 = vsub.f32 %v1157, %v1158
  %v1160 = vmax.f32 %v1159, 0.0
  %v1161 = vadd.f32 %v1160, 1e-05
  %v1162 = vrsqrt.pop %v1161
  %v1163 = vld [vmem:[%s2] sm:$0x1]
  %v1164 = vmul.f32 %v1162, %v1163
  %v1165 = vld [vmem:[%s3] sm:$0x1]
  %v1166 = vmul.f32 %v1143, %v1164
  %v1167 = vsub.f32 %v1165, %v1166
  %v1168 = vlaneseq
  %v1169 = vshrl.u32 %v1168, 7
  %v1170 = vsub.s32 0, %v1169
  %v1171 = vrot.slane %v1164, %v1170
  %v1172 = vmul.f32 %v1129, %v1171
  %v1173 = vmul.f32 %v1130, %v1171
  %v1174 = vmul.f32 %v1131, %v1171
  %v1175 = vmul.f32 %v1132, %v1171
  %v1177 = vlaneseq
  %v1178 = vshrl.u32 %v1177, 7
  %v1179 = vsub.s32 0, %v1178
  %v1180 = vrot.slane %v1167, %v1179
  %v1182 = vadd.f32 %v1172, %v1180
  %v1183 = vadd.f32 %v1173, %v1180
  %v1184 = vadd.f32 %v1174, %v1180
  %v1185 = vadd.f32 %v1175, %v1180
  %v1186 = vld [vmem:[%s4] sm:$0xff]
  %v1187 = vld [vmem:[%s4 + $0x8] sm:$0xff]
  %v1188 = vld [vmem:[%s4 + $0x10] sm:$0xff]
  %v1189 = vld [vmem:[%s4 + $0x18] sm:$0xff]
  %v1190 = vadd.f32 %v1182, %v1186
  %v1191 = vadd.f32 %v1183, %v1187
  %v1192 = vadd.f32 %v1184, %v1188
  %v1193 = vadd.f32 %v1185, %v1189
  %v1194 = vmax.f32 %v1190, 0.0
  %v1195 = vmax.f32 %v1191, 0.0
  %v1196 = vmax.f32 %v1192, 0.0
  %v1197 = vmax.f32 %v1193, 0.0
  %1198 = vst [vmem:[%s5] sm:$0xff] %v1194
  %1199 = vst [vmem:[%s5 + $0x8] sm:$0xff] %v1195
  %1200 = vst [vmem:[%s5 + $0x10] sm:$0xff] %v1196
  %1201 = vst [vmem:[%s5 + $0x18] sm:$0xff] %v1197
  // Predicated region
  $region22: #{resnet_forward.13} parent=0 // pred_check
    _
  $region23: #{resnet_forward.13} parent=0 // pred_check_branch
    %1203 = sbr.rel (0) target = $region25
  $region24: #{resnet_forward.13} parent=0 // pred_region
    _
  $region25: #{resnet_forward.13} parent=0 // pred_fallthru
    _
  // Predicated region
  $region26: #{resnet_forward.13} parent=0 // pred_check
    _
  $region27: #{resnet_forward.13} parent=0 // pred_check_branch
    %1205 = sbr.rel (0) target = $region29
  $region28: #{resnet_forward.13} parent=0 // pred_region
    _
  $region29: #{resnet_forward.13} parent=0 // pred_fallthru
    _

// kernel: resnet_forward.15
$region0: #{resnet_forward.15}
  #allocation0 [shape = 'u32[]', space=smem, size = 0x4, offset = 0x4, fixed_abs, tag = 'smem constant byte address 0x4 - core index']
  #allocation1 [shape = 'u32[144,128]{1,0:T(1,128)}', space=vmem, size = 0x12000, scoped, tag = 'internal scratch']
  %s0 = inlined_call_operand.vmem [shape: f32[2,3,3,128], index: 0, kind: input, shape index: {}]
  %s1 = inlined_call_operand.vmem [shape: f32[2,3,3,128], index: 1, kind: input, shape index: {}]
  %s2 = inlined_call_operand.vmem [shape: f32[2,3,3,128], index: 2, kind: input, shape index: {}]
  %s3 = inlined_call_operand.vmem [shape: f32[2,3,3,128], index: 3, kind: input, shape index: {}]
  %s4 = inlined_call_operand.vmem [shape: f32[9,128,128], index: 4, kind: input, shape index: {}]
  %s5 = inlined_call_operand.vmem [shape: f32[1,128], index: 5, kind: input, shape index: {}]
  %s6 = inlined_call_operand.vmem [shape: f32[1,128], index: 6, kind: input, shape index: {}]
  %s7 = inlined_call_operand.vmem [shape: f32[8,128], index: 7, kind: output, shape index: {}]
  %s8 = sld [smem:[#allocation0]]
  $region38: #{resnet_forward.15} parent=0
    _
  %s10 = ssub.s32 1, %s8
  %s11 = scalar_select 0, %s10, %s8
  // Predicated region
  $region2: #{resnet_forward.15} parent=0 // pred_check
    _
  $region3: #{resnet_forward.15} parent=0 // pred_check_branch
    %13 = sbr.rel (0) target = $region5
  $region4: #{resnet_forward.15} parent=0 // pred_region
    _
  $region5: #{resnet_forward.15} parent=0 // pred_fallthru
    _
  // Predicated region
  $region6: #{resnet_forward.15} parent=0 // pred_check
    _
  $region7: #{resnet_forward.15} parent=0 // pred_check_branch
    %15 = sbr.rel (0) target = $region9
  $region8: #{resnet_forward.15} parent=0 // pred_region
    _
  $region9: #{resnet_forward.15} parent=0 // pred_fallthru
    _
  // Predicated region
  $region10: #{resnet_forward.15} parent=0 // pred_check
    _
  $region11: #{resnet_forward.15} parent=0 // pred_check_branch
    %17 = sbr.rel (0) target = $region13
  $region12: #{resnet_forward.15} parent=0 // pred_region
    _
  $region13: #{resnet_forward.15} parent=0 // pred_fallthru
    _
  // Predicated region
  $region14: #{resnet_forward.15} parent=0 // pred_check
    _
  $region15: #{resnet_forward.15} parent=0 // pred_check_branch
    %19 = sbr.rel (0) target = $region17
  $region16: #{resnet_forward.15} parent=0 // pred_region
    _
  $region17: #{resnet_forward.15} parent=0 // pred_fallthru
    _
  // Predicated region
  $region18: #{resnet_forward.15} parent=0 // pred_check
    _
  $region19: #{resnet_forward.15} parent=0 // pred_check_branch
    %21 = sbr.rel (0) target = $region21
  $region20: #{resnet_forward.15} parent=0 // pred_region
    _
  $region21: #{resnet_forward.15} parent=0 // pred_fallthru
    _
  // Predicated region
  $region22: #{resnet_forward.15} parent=0 // pred_check
    _
  $region23: #{resnet_forward.15} parent=0 // pred_check_branch
    %23 = sbr.rel (0) target = $region25
  $region24: #{resnet_forward.15} parent=0 // pred_region
    _
  $region25: #{resnet_forward.15} parent=0 // pred_fallthru
    _
  // Predicated region
  $region26: #{resnet_forward.15} parent=0 // pred_check
    _
  $region27: #{resnet_forward.15} parent=0 // pred_check_branch
    %25 = sbr.rel (0) target = $region29
  $region28: #{resnet_forward.15} parent=0 // pred_region
    _
  $region29: #{resnet_forward.15} parent=0 // pred_fallthru
    _
  %v26 = vld [vmem:[%s0] sm:$0x3]
  %s27 = scalar_lea.vmem %s0, 4
  %v28 = vld [vmem:[%s27] sm:$0x3]
  %s29 = scalar_lea.vmem %s0, 12
  %v30 = vld [vmem:[%s29] sm:$0x3]
  %s31 = scalar_lea.vmem %s0, 16
  %v32 = vld [vmem:[%s31] sm:$0x3]
  %v34 = vrot.slane %v28, 6
  %v37 = vrot.slane %v30, 4
  %v40 = vrot.slane %v32, 2
  %vm42 = vcmask 1041408
  %v43 = vsel %vm42, %v26, %v34
  %vm44 = vcmask 1043456
  %v45 = vsel %vm44, %v43, %v37
  %vm46 = vcmask 1045504
  %v47 = vsel %vm46, %v45, %v40
  %v48 = vld [vmem:[%s4] sm:$0xff]
  %v49 = vld [vmem:[%s4 + $0x8] sm:$0xff]
  %v50 = vld [vmem:[%s4 + $0x10] sm:$0xff]
  %v51 = vld [vmem:[%s4 + $0x18] sm:$0xff]
  %v52 = vld [vmem:[%s4 + $0x20] sm:$0xff]
  %v53 = vld [vmem:[%s4 + $0x28] sm:$0xff]
  %v54 = vld [vmem:[%s4 + $0x30] sm:$0xff]
  %v55 = vld [vmem:[%s4 + $0x38] sm:$0xff]
  %v56 = vld [vmem:[%s4 + $0x40] sm:$0xff]
  %v57 = vld [vmem:[%s4 + $0x48] sm:$0xff]
  %v58 = vld [vmem:[%s4 + $0x50] sm:$0xff]
  %v59 = vld [vmem:[%s4 + $0x58] sm:$0xff]
  %v60 = vld [vmem:[%s4 + $0x60] sm:$0xff]
  %v61 = vld [vmem:[%s4 + $0x68] sm:$0xff]
  %v62 = vld [vmem:[%s4 + $0x70] sm:$0xff]
  %v63 = vld [vmem:[%s4 + $0x78] sm:$0xff]
  %v64 = vld [vmem:[%s1] sm:$0x3]
  %s65 = scalar_lea.vmem %s1, 4
  %v66 = vld [vmem:[%s65] sm:$0x3]
  %s67 = scalar_lea.vmem %s1, 12
  %v68 = vld [vmem:[%s67] sm:$0x3]
  %s69 = scalar_lea.vmem %s1, 16
  %v70 = vld [vmem:[%s69] sm:$0x3]
  %v72 = vrot.slane %v66, 6
  %v75 = vrot.slane %v68, 4
  %v78 = vrot.slane %v70, 2
  %v80 = vsel %vm42, %v64, %v72
  %v81 = vsel %vm44, %v80, %v75
  %v82 = vsel %vm46, %v81, %v78
  %s83 = scalar_lea.vmem %s4, 128
  %v84 = vld [vmem:[%s83] sm:$0xff]
  %v85 = vld [vmem:[%s83 + $0x8] sm:$0xff]
  %v86 = vld [vmem:[%s83 + $0x10] sm:$0xff]
  %v87 = vld [vmem:[%s83 + $0x18] sm:$0xff]
  %v88 = vld [vmem:[%s83 + $0x20] sm:$0xff]
  %v89 = vld [vmem:[%s83 + $0x28] sm:$0xff]
  %v90 = vld [vmem:[%s83 + $0x30] sm:$0xff]
  %v91 = vld [vmem:[%s83 + $0x38] sm:$0xff]
  %v92 = vld [vmem:[%s83 + $0x40] sm:$0xff]
  %v93 = vld [vmem:[%s83 + $0x48] sm:$0xff]
  %v94 = vld [vmem:[%s83 + $0x50] sm:$0xff]
  %v95 = vld [vmem:[%s83 + $0x58] sm:$0xff]
  %v96 = vld [vmem:[%s83 + $0x60] sm:$0xff]
  %v97 = vld [vmem:[%s83 + $0x68] sm:$0xff]
  %v98 = vld [vmem:[%s83 + $0x70] sm:$0xff]
  %v99 = vld [vmem:[%s83 + $0x78] sm:$0xff]
  %100 = vmatprep.subr.mxu0 0.0
  %101 = vmatpush1.msra.mxu0 %v99
  %102 = vmatprep.subr.mxu0 0.0
  %103 = vmatpush1.msra.mxu0 %v98
  %104 = vmatprep.subr.mxu0 0.0
  %105 = vmatpush1.msra.mxu0 %v97
  %106 = vmatprep.subr.mxu0 0.0
  %107 = vmatpush1.msra.mxu0 %v96
  %108 = vmatprep.subr.mxu0 0.0
  %109 = vmatpush1.msra.mxu0 %v95
  %110 = vmatprep.subr.mxu0 0.0
  %111 = vmatpush1.msra.mxu0 %v94
  %112 = vmatprep.subr.mxu0 0.0
  %113 = vmatpush1.msra.mxu0 %v93
  %114 = vmatprep.subr.mxu0 0.0
  %115 = vmatpush1.msra.mxu0 %v92
  %116 = vmatprep.subr.mxu0 0.0
  %117 = vmatpush1.msra.mxu0 %v91
  %118 = vmatprep.subr.mxu0 0.0
  %119 = vmatpush1.msra.mxu0 %v90
  %120 = vmatprep.subr.mxu0 0.0
  %121 = vmatpush1.msra.mxu0 %v89
  %122 = vmatprep.subr.mxu0 0.0
  %123 = vmatpush1.msra.mxu0 %v88
  %124 = vmatprep.subr.mxu0 0.0
  %125 = vmatpush1.msra.mxu0 %v87
  %126 = vmatprep.subr.mxu0 0.0
  %127 = vmatpush1.msra.mxu0 %v86
  %128 = vmatprep.subr.mxu0 0.0
  %129 = vmatpush1.msra.mxu0 %v85
  %130 = vmatprep.subr.mxu0 0.0
  %131 = vmatpush1.msra.mxu0 %v84
  %132 = vmatprep.subr.mxu0 0.0
  %133 = vmatpush2.msra.mxu0 0.0
  %134 = vmatprep.subr.mxu0 0.0
  %135 = vmatpush2.msra.mxu0 0.0
  %136 = vmatprep.subr.mxu0 0.0
  %137 = vmatpush2.msra.mxu0 0.0
  %138 = vmatprep.subr.mxu0 0.0
  %139 = vmatpush2.msra.mxu0 0.0
  %140 = vmatprep.subr.mxu0 0.0
  %141 = vmatpush2.msra.mxu0 0.0
  %142 = vmatprep.subr.mxu0 0.0
  %143 = vmatpush2.msra.mxu0 0.0
  %144 = vmatprep.subr.mxu0 0.0
  %145 = vmatpush2.msra.mxu0 0.0
  %146 = vmatprep.subr.mxu0 0.0
  %147 = vmatpush2.msra.mxu0 0.0
  %148 = vmatprep.subr.mxu0 0.0
  %149 = vmatpush2.msra.mxu0 0.0
  %150 = vmatprep.subr.mxu0 0.0
  %151 = vmatpush2.msra.mxu0 0.0
  %152 = vmatprep.subr.mxu0 0.0
  %153 = vmatpush2.msra.mxu0 0.0
  %154 = vmatprep.subr.mxu0 0.0
  %155 = vmatpush2.msra.mxu0 0.0
  %156 = vmatprep.subr.mxu0 0.0
  %157 = vmatpush2.msra.mxu0 0.0
  %158 = vmatprep.subr.mxu0 0.0
  %159 = vmatpush2.msra.mxu0 0.0
  %160 = vmatprep.subr.mxu0 0.0
  %161 = vmatpush2.msra.mxu0 0.0
  %162 = vmatprep.subr.mxu0 0.0
  %163 = vmatpush2.msra.mxu0 0.0
  %164 = vmatprep.mubr.f32.mxu0 0.0
  %165 = vmatmul.mubr.f32.gmra.mxu0 %v82
  %v166 = vpop.f32.mrf.mxu0
  %v167 = vadd.f32 0.0, %v166
  %v168 = vpop.f32.mrf.mxu0
  %169 = vdwg.mxu0
  %170 = vmatprep.subr.mxu0 0.0
  %171 = vmatpush1.msra.mxu0 %v63
  %172 = vmatprep.subr.mxu0 0.0
  %173 = vmatpush1.msra.mxu0 %v62
  %174 = vmatprep.subr.mxu0 0.0
  %175 = vmatpush1.msra.mxu0 %v61
  %176 = vmatprep.subr.mxu0 0.0
  %177 = vmatpush1.msra.mxu0 %v60
  %178 = vmatprep.subr.mxu0 0.0
  %179 = vmatpush1.msra.mxu0 %v59
  %180 = vmatprep.subr.mxu0 0.0
  %181 = vmatpush1.msra.mxu0 %v58
  %182 = vmatprep.subr.mxu0 0.0
  %183 = vmatpush1.msra.mxu0 %v57
  %184 = vmatprep.subr.mxu0 0.0
  %185 = vmatpush1.msra.mxu0 %v56
  %186 = vmatprep.subr.mxu0 0.0
  %187 = vmatpush1.msra.mxu0 %v55
  %188 = vmatprep.subr.mxu0 0.0
  %189 = vmatpush1.msra.mxu0 %v54
  %190 = vmatprep.subr.mxu0 0.0
  %191 = vmatpush1.msra.mxu0 %v53
  %192 = vmatprep.subr.mxu0 0.0
  %193 = vmatpush1.msra.mxu0 %v52
  %194 = vmatprep.subr.mxu0 0.0
  %195 = vmatpush1.msra.mxu0 %v51
  %196 = vmatprep.subr.mxu0 0.0
  %197 = vmatpush1.msra.mxu0 %v50
  %198 = vmatprep.subr.mxu0 0.0
  %199 = vmatpush1.msra.mxu0 %v49
  %200 = vmatprep.subr.mxu0 0.0
  %201 = vmatpush1.msra.mxu0 %v48
  %202 = vmatprep.subr.mxu0 0.0
  %203 = vmatpush2.msra.mxu0 0.0
  %204 = vmatprep.subr.mxu0 0.0
  %205 = vmatpush2.msra.mxu0 0.0
  %206 = vmatprep.subr.mxu0 0.0
  %207 = vmatpush2.msra.mxu0 0.0
  %208 = vmatprep.subr.mxu0 0.0
  %209 = vmatpush2.msra.mxu0 0.0
  %210 = vmatprep.subr.mxu0 0.0
  %211 = vmatpush2.msra.mxu0 0.0
  %212 = vmatprep.subr.mxu0 0.0
  %213 = vmatpush2.msra.mxu0 0.0
  %214 = vmatprep.subr.mxu0 0.0
  %215 = vmatpush2.msra.mxu0 0.0
  %216 = vmatprep.subr.mxu0 0.0
  %217 = vmatpush2.msra.mxu0 0.0
  %218 = vmatprep.subr.mxu0 0.0
  %219 = vmatpush2.msra.mxu0 0.0
  %220 = vmatprep.subr.mxu0 0.0
  %221 = vmatpush2.msra.mxu0 0.0
  %222 = vmatprep.subr.mxu0 0.0
  %223 = vmatpush2.msra.mxu0 0.0
  %224 = vmatprep.subr.mxu0 0.0
  %225 = vmatpush2.msra.mxu0 0.0
  %226 = vmatprep.subr.mxu0 0.0
  %227 = vmatpush2.msra.mxu0 0.0
  %228 = vmatprep.subr.mxu0 0.0
  %229 = vmatpush2.msra.mxu0 0.0
  %230 = vmatprep.subr.mxu0 0.0
  %231 = vmatpush2.msra.mxu0 0.0
  %232 = vmatprep.subr.mxu0 0.0
  %233 = vmatpush2.msra.mxu0 0.0
  %234 = vmatprep.mubr.f32.mxu0 0.0
  %235 = vmatmul.mubr.f32.gmra.mxu0 %v47
  %v236 = vpop.f32.mrf.mxu0
  %v237 = vadd.f32 %v167, %v236
  %v238 = vpop.f32.mrf.mxu0
  %239 = vdwg.mxu0
  %v240 = vld [vmem:[%s0 + $0x1] sm:$0x3]
  %v241 = vld [vmem:[%s27 + $0x1] sm:$0x3]
  %v242 = vld [vmem:[%s29 + $0x1] sm:$0x3]
  %v243 = vld [vmem:[%s31 + $0x1] sm:$0x3]
  %v245 = vrot.slane %v241, 6
  %v248 = vrot.slane %v242, 4
  %v251 = vrot.slane %v243, 2
  %v253 = vsel %vm42, %v240, %v245
  %v254 = vsel %vm44, %v253, %v248
  %v255 = vsel %vm46, %v254, %v251
  %s256 = scalar_lea.vmem %s4, 256
  %v257 = vld [vmem:[%s256] sm:$0xff]
  %v258 = vld [vmem:[%s256 + $0x8] sm:$0xff]
  %v259 = vld [vmem:[%s256 + $0x10] sm:$0xff]
  %v260 = vld [vmem:[%s256 + $0x18] sm:$0xff]
  %v261 = vld [vmem:[%s256 + $0x20] sm:$0xff]
  %v262 = vld [vmem:[%s256 + $0x28] sm:$0xff]
  %v263 = vld [vmem:[%s256 + $0x30] sm:$0xff]
  %v264 = vld [vmem:[%s256 + $0x38] sm:$0xff]
  %v265 = vld [vmem:[%s256 + $0x40] sm:$0xff]
  %v266 = vld [vmem:[%s256 + $0x48] sm:$0xff]
  %v267 = vld [vmem:[%s256 + $0x50] sm:$0xff]
  %v268 = vld [vmem:[%s256 + $0x58] sm:$0xff]
  %v269 = vld [vmem:[%s256 + $0x60] sm:$0xff]
  %v270 = vld [vmem:[%s256 + $0x68] sm:$0xff]
  %v271 = vld [vmem:[%s256 + $0x70] sm:$0xff]
  %v272 = vld [vmem:[%s256 + $0x78] sm:$0xff]
  %273 = vmatprep.subr.mxu0 0.0
  %274 = vmatpush1.msra.mxu0 %v272
  %275 = vmatprep.subr.mxu0 0.0
  %276 = vmatpush1.msra.mxu0 %v271
  %277 = vmatprep.subr.mxu0 0.0
  %278 = vmatpush1.msra.mxu0 %v270
  %279 = vmatprep.subr.mxu0 0.0
  %280 = vmatpush1.msra.mxu0 %v269
  %281 = vmatprep.subr.mxu0 0.0
  %282 = vmatpush1.msra.mxu0 %v268
  %283 = vmatprep.subr.mxu0 0.0
  %284 = vmatpush1.msra.mxu0 %v267
  %285 = vmatprep.subr.mxu0 0.0
  %286 = vmatpush1.msra.mxu0 %v266
  %287 = vmatprep.subr.mxu0 0.0
  %288 = vmatpush1.msra.mxu0 %v265
  %289 = vmatprep.subr.mxu0 0.0
  %290 = vmatpush1.msra.mxu0 %v264
  %291 = vmatprep.subr.mxu0 0.0
  %292 = vmatpush1.msra.mxu0 %v263
  %293 = vmatprep.subr.mxu0 0.0
  %294 = vmatpush1.msra.mxu0 %v262
  %295 = vmatprep.subr.mxu0 0.0
  %296 = vmatpush1.msra.mxu0 %v261
  %297 = vmatprep.subr.mxu0 0.0
  %298 = vmatpush1.msra.mxu0 %v260
  %299 = vmatprep.subr.mxu0 0.0
  %300 = vmatpush1.msra.mxu0 %v259
  %301 = vmatprep.subr.mxu0 0.0
  %302 = vmatpush1.msra.mxu0 %v258
  %303 = vmatprep.subr.mxu0 0.0
  %304 = vmatpush1.msra.mxu0 %v257
  %305 = vmatprep.subr.mxu0 0.0
  %306 = vmatpush2.msra.mxu0 0.0
  %307 = vmatprep.subr.mxu0 0.0
  %308 = vmatpush2.msra.mxu0 0.0
  %309 = vmatprep.subr.mxu0 0.0
  %310 = vmatpush2.msra.mxu0 0.0
  %311 = vmatprep.subr.mxu0 0.0
  %312 = vmatpush2.msra.mxu0 0.0
  %313 = vmatprep.subr.mxu0 0.0
  %314 = vmatpush2.msra.mxu0 0.0
  %315 = vmatprep.subr.mxu0 0.0
  %316 = vmatpush2.msra.mxu0 0.0
  %317 = vmatprep.subr.mxu0 0.0
  %318 = vmatpush2.msra.mxu0 0.0
  %319 = vmatprep.subr.mxu0 0.0
  %320 = vmatpush2.msra.mxu0 0.0
  %321 = vmatprep.subr.mxu0 0.0
  %322 = vmatpush2.msra.mxu0 0.0
  %323 = vmatprep.subr.mxu0 0.0
  %324 = vmatpush2.msra.mxu0 0.0
  %325 = vmatprep.subr.mxu0 0.0
  %326 = vmatpush2.msra.mxu0 0.0
  %327 = vmatprep.subr.mxu0 0.0
  %328 = vmatpush2.msra.mxu0 0.0
  %329 = vmatprep.subr.mxu0 0.0
  %330 = vmatpush2.msra.mxu0 0.0
  %331 = vmatprep.subr.mxu0 0.0
  %332 = vmatpush2.msra.mxu0 0.0
  %333 = vmatprep.subr.mxu0 0.0
  %334 = vmatpush2.msra.mxu0 0.0
  %335 = vmatprep.subr.mxu0 0.0
  %336 = vmatpush2.msra.mxu0 0.0
  %337 = vmatprep.mubr.f32.mxu0 0.0
  %338 = vmatmul.mubr.f32.gmra.mxu0 %v255
  %v339 = vpop.f32.mrf.mxu0
  %v340 = vadd.f32 0.0, %v339
  %v341 = vpop.f32.mrf.mxu0
  %342 = vdwg.mxu0
  %v343 = vadd.f32 %v237, %v340
  %v344 = vld [vmem:[%s2] sm:$0x3]
  %s345 = scalar_lea.vmem %s2, 4
  %v346 = vld [vmem:[%s345] sm:$0x3]
  %s347 = scalar_lea.vmem %s2, 12
  %v348 = vld [vmem:[%s347] sm:$0x3]
  %s349 = scalar_lea.vmem %s2, 16
  %v350 = vld [vmem:[%s349] sm:$0x3]
  %v352 = vrot.slane %v346, 6
  %v355 = vrot.slane %v348, 4
  %v358 = vrot.slane %v350, 2
  %v360 = vsel %vm42, %v344, %v352
  %v361 = vsel %vm44, %v360, %v355
  %v362 = vsel %vm46, %v361, %v358
  %s363 = scalar_lea.vmem %s4, 384
  %v364 = vld [vmem:[%s363] sm:$0xff]
  %v365 = vld [vmem:[%s363 + $0x8] sm:$0xff]
  %v366 = vld [vmem:[%s363 + $0x10] sm:$0xff]
  %v367 = vld [vmem:[%s363 + $0x18] sm:$0xff]
  %v368 = vld [vmem:[%s363 + $0x20] sm:$0xff]
  %v369 = vld [vmem:[%s363 + $0x28] sm:$0xff]
  %v370 = vld [vmem:[%s363 + $0x30] sm:$0xff]
  %v371 = vld [vmem:[%s363 + $0x38] sm:$0xff]
  %v372 = vld [vmem:[%s363 + $0x40] sm:$0xff]
  %v373 = vld [vmem:[%s363 + $0x48] sm:$0xff]
  %v374 = vld [vmem:[%s363 + $0x50] sm:$0xff]
  %v375 = vld [vmem:[%s363 + $0x58] sm:$0xff]
  %v376 = vld [vmem:[%s363 + $0x60] sm:$0xff]
  %v377 = vld [vmem:[%s363 + $0x68] sm:$0xff]
  %v378 = vld [vmem:[%s363 + $0x70] sm:$0xff]
  %v379 = vld [vmem:[%s363 + $0x78] sm:$0xff]
  %380 = vmatprep.subr.mxu0 0.0
  %381 = vmatpush1.msra.mxu0 %v379
  %382 = vmatprep.subr.mxu0 0.0
  %383 = vmatpush1.msra.mxu0 %v378
  %384 = vmatprep.subr.mxu0 0.0
  %385 = vmatpush1.msra.mxu0 %v377
  %386 = vmatprep.subr.mxu0 0.0
  %387 = vmatpush1.msra.mxu0 %v376
  %388 = vmatprep.subr.mxu0 0.0
  %389 = vmatpush1.msra.mxu0 %v375
  %390 = vmatprep.subr.mxu0 0.0
  %391 = vmatpush1.msra.mxu0 %v374
  %392 = vmatprep.subr.mxu0 0.0
  %393 = vmatpush1.msra.mxu0 %v373
  %394 = vmatprep.subr.mxu0 0.0
  %395 = vmatpush1.msra.mxu0 %v372
  %396 = vmatprep.subr.mxu0 0.0
  %397 = vmatpush1.msra.mxu0 %v371
  %398 = vmatprep.subr.mxu0 0.0
  %399 = vmatpush1.msra.mxu0 %v370
  %400 = vmatprep.subr.mxu0 0.0
  %401 = vmatpush1.msra.mxu0 %v369
  %402 = vmatprep.subr.mxu0 0.0
  %403 = vmatpush1.msra.mxu0 %v368
  %404 = vmatprep.subr.mxu0 0.0
  %405 = vmatpush1.msra.mxu0 %v367
  %406 = vmatprep.subr.mxu0 0.0
  %407 = vmatpush1.msra.mxu0 %v366
  %408 = vmatprep.subr.mxu0 0.0
  %409 = vmatpush1.msra.mxu0 %v365
  %410 = vmatprep.subr.mxu0 0.0
  %411 = vmatpush1.msra.mxu0 %v364
  %412 = vmatprep.subr.mxu0 0.0
  %413 = vmatpush2.msra.mxu0 0.0
  %414 = vmatprep.subr.mxu0 0.0
  %415 = vmatpush2.msra.mxu0 0.0
  %416 = vmatprep.subr.mxu0 0.0
  %417 = vmatpush2.msra.mxu0 0.0
  %418 = vmatprep.subr.mxu0 0.0
  %419 = vmatpush2.msra.mxu0 0.0
  %420 = vmatprep.subr.mxu0 0.0
  %421 = vmatpush2.msra.mxu0 0.0
  %422 = vmatprep.subr.mxu0 0.0
  %423 = vmatpush2.msra.mxu0 0.0
  %424 = vmatprep.subr.mxu0 0.0
  %425 = vmatpush2.msra.mxu0 0.0
  %426 = vmatprep.subr.mxu0 0.0
  %427 = vmatpush2.msra.mxu0 0.0
  %428 = vmatprep.subr.mxu0 0.0
  %429 = vmatpush2.msra.mxu0 0.0
  %430 = vmatprep.subr.mxu0 0.0
  %431 = vmatpush2.msra.mxu0 0.0
  %432 = vmatprep.subr.mxu0 0.0
  %433 = vmatpush2.msra.mxu0 0.0
  %434 = vmatprep.subr.mxu0 0.0
  %435 = vmatpush2.msra.mxu0 0.0
  %436 = vmatprep.subr.mxu0 0.0
  %437 = vmatpush2.msra.mxu0 0.0
  %438 = vmatprep.subr.mxu0 0.0
  %439 = vmatpush2.msra.mxu0 0.0
  %440 = vmatprep.subr.mxu0 0.0
  %441 = vmatpush2.msra.mxu0 0.0
  %442 = vmatprep.subr.mxu0 0.0
  %443 = vmatpush2.msra.mxu0 0.0
  %444 = vmatprep.mubr.f32.mxu0 0.0
  %445 = vmatmul.mubr.f32.gmra.mxu0 %v362
  %v446 = vpop.f32.mrf.mxu0
  %v447 = vadd.f32 0.0, %v446
  %v448 = vpop.f32.mrf.mxu0
  %449 = vdwg.mxu0
  %v450 = vadd.f32 %v343, %v447
  %v451 = vld [vmem:[%s3] sm:$0x3]
  %s452 = scalar_lea.vmem %s3, 4
  %v453 = vld [vmem:[%s452] sm:$0x3]
  %s454 = scalar_lea.vmem %s3, 12
  %v455 = vld [vmem:[%s454] sm:$0x3]
  %s456 = scalar_lea.vmem %s3, 16
  %v457 = vld [vmem:[%s456] sm:$0x3]
  %v459 = vrot.slane %v453, 6
  %v462 = vrot.slane %v455, 4
  %v465 = vrot.slane %v457, 2
  %v467 = vsel %vm42, %v451, %v459
  %v468 = vsel %vm44, %v467, %v462
  %v469 = vsel %vm46, %v468, %v465
  %s470 = scalar_lea.vmem %s4, 512
  %v471 = vld [vmem:[%s470] sm:$0xff]
  %v472 = vld [vmem:[%s470 + $0x8] sm:$0xff]
  %v473 = vld [vmem:[%s470 + $0x10] sm:$0xff]
  %v474 = vld [vmem:[%s470 + $0x18] sm:$0xff]
  %v475 = vld [vmem:[%s470 + $0x20] sm:$0xff]
  %v476 = vld [vmem:[%s470 + $0x28] sm:$0xff]
  %v477 = vld [vmem:[%s470 + $0x30] sm:$0xff]
  %v478 = vld [vmem:[%s470 + $0x38] sm:$0xff]
  %v479 = vld [vmem:[%s470 + $0x40] sm:$0xff]
  %v480 = vld [vmem:[%s470 + $0x48] sm:$0xff]
  %v481 = vld [vmem:[%s470 + $0x50] sm:$0xff]
  %v482 = vld [vmem:[%s470 + $0x58] sm:$0xff]
  %v483 = vld [vmem:[%s470 + $0x60] sm:$0xff]
  %v484 = vld [vmem:[%s470 + $0x68] sm:$0xff]
  %v485 = vld [vmem:[%s470 + $0x70] sm:$0xff]
  %v486 = vld [vmem:[%s470 + $0x78] sm:$0xff]
  %487 = vmatprep.subr.mxu0 0.0
  %488 = vmatpush1.msra.mxu0 %v486
  %489 = vmatprep.subr.mxu0 0.0
  %490 = vmatpush1.msra.mxu0 %v485
  %491 = vmatprep.subr.mxu0 0.0
  %492 = vmatpush1.msra.mxu0 %v484
  %493 = vmatprep.subr.mxu0 0.0
  %494 = vmatpush1.msra.mxu0 %v483
  %495 = vmatprep.subr.mxu0 0.0
  %496 = vmatpush1.msra.mxu0 %v482
  %497 = vmatprep.subr.mxu0 0.0
  %498 = vmatpush1.msra.mxu0 %v481
  %499 = vmatprep.subr.mxu0 0.0
  %500 = vmatpush1.msra.mxu0 %v480
  %501 = vmatprep.subr.mxu0 0.0
  %502 = vmatpush1.msra.mxu0 %v479
  %503 = vmatprep.subr.mxu0 0.0
  %504 = vmatpush1.msra.mxu0 %v478
  %505 = vmatprep.subr.mxu0 0.0
  %506 = vmatpush1.msra.mxu0 %v477
  %507 = vmatprep.subr.mxu0 0.0
  %508 = vmatpush1.msra.mxu0 %v476
  %509 = vmatprep.subr.mxu0 0.0
  %510 = vmatpush1.msra.mxu0 %v475
  %511 = vmatprep.subr.mxu0 0.0
  %512 = vmatpush1.msra.mxu0 %v474
  %513 = vmatprep.subr.mxu0 0.0
  %514 = vmatpush1.msra.mxu0 %v473
  %515 = vmatprep.subr.mxu0 0.0
  %516 = vmatpush1.msra.mxu0 %v472
  %517 = vmatprep.subr.mxu0 0.0
  %518 = vmatpush1.msra.mxu0 %v471
  %519 = vmatprep.subr.mxu0 0.0
  %520 = vmatpush2.msra.mxu0 0.0
  %521 = vmatprep.subr.mxu0 0.0
  %522 = vmatpush2.msra.mxu0 0.0
  %523 = vmatprep.subr.mxu0 0.0
  %524 = vmatpush2.msra.mxu0 0.0
  %525 = vmatprep.subr.mxu0 0.0
  %526 = vmatpush2.msra.mxu0 0.0
  %527 = vmatprep.subr.mxu0 0.0
  %528 = vmatpush2.msra.mxu0 0.0
  %529 = vmatprep.subr.mxu0 0.0
  %530 = vmatpush2.msra.mxu0 0.0
  %531 = vmatprep.subr.mxu0 0.0
  %532 = vmatpush2.msra.mxu0 0.0
  %533 = vmatprep.subr.mxu0 0.0
  %534 = vmatpush2.msra.mxu0 0.0
  %535 = vmatprep.subr.mxu0 0.0
  %536 = vmatpush2.msra.mxu0 0.0
  %537 = vmatprep.subr.mxu0 0.0
  %538 = vmatpush2.msra.mxu0 0.0
  %539 = vmatprep.subr.mxu0 0.0
  %540 = vmatpush2.msra.mxu0 0.0
  %541 = vmatprep.subr.mxu0 0.0
  %542 = vmatpush2.msra.mxu0 0.0
  %543 = vmatprep.subr.mxu0 0.0
  %544 = vmatpush2.msra.mxu0 0.0
  %545 = vmatprep.subr.mxu0 0.0
  %546 = vmatpush2.msra.mxu0 0.0
  %547 = vmatprep.subr.mxu0 0.0
  %548 = vmatpush2.msra.mxu0 0.0
  %549 = vmatprep.subr.mxu0 0.0
  %550 = vmatpush2.msra.mxu0 0.0
  %551 = vmatprep.mubr.f32.mxu0 0.0
  %552 = vmatmul.mubr.f32.gmra.mxu0 %v469
  %v553 = vpop.f32.mrf.mxu0
  %v554 = vadd.f32 0.0, %v553
  %v555 = vpop.f32.mrf.mxu0
  %556 = vdwg.mxu0
  %v557 = vadd.f32 %v450, %v554
  %v558 = vld [vmem:[%s2 + $0x1] sm:$0x3]
  %v559 = vld [vmem:[%s345 + $0x1] sm:$0x3]
  %v560 = vld [vmem:[%s347 + $0x1] sm:$0x3]
  %v561 = vld [vmem:[%s349 + $0x1] sm:$0x3]
  %v563 = vrot.slane %v559, 6
  %v566 = vrot.slane %v560, 4
  %v569 = vrot.slane %v561, 2
  %v571 = vsel %vm42, %v558, %v563
  %v572 = vsel %vm44, %v571, %v566
  %v573 = vsel %vm46, %v572, %v569
  %s574 = scalar_lea.vmem %s4, 640
  %v575 = vld [vmem:[%s574] sm:$0xff]
  %v576 = vld [vmem:[%s574 + $0x8] sm:$0xff]
  %v577 = vld [vmem:[%s574 + $0x10] sm:$0xff]
  %v578 = vld [vmem:[%s574 + $0x18] sm:$0xff]
  %v579 = vld [vmem:[%s574 + $0x20] sm:$0xff]
  %v580 = vld [vmem:[%s574 + $0x28] sm:$0xff]
  %v581 = vld [vmem:[%s574 + $0x30] sm:$0xff]
  %v582 = vld [vmem:[%s574 + $0x38] sm:$0xff]
  %v583 = vld [vmem:[%s574 + $0x40] sm:$0xff]
  %v584 = vld [vmem:[%s574 + $0x48] sm:$0xff]
  %v585 = vld [vmem:[%s574 + $0x50] sm:$0xff]
  %v586 = vld [vmem:[%s574 + $0x58] sm:$0xff]
  %v587 = vld [vmem:[%s574 + $0x60] sm:$0xff]
  %v588 = vld [vmem:[%s574 + $0x68] sm:$0xff]
  %v589 = vld [vmem:[%s574 + $0x70] sm:$0xff]
  %v590 = vld [vmem:[%s574 + $0x78] sm:$0xff]
  %591 = vmatprep.subr.mxu0 0.0
  %592 = vmatpush1.msra.mxu0 %v590
  %593 = vmatprep.subr.mxu0 0.0
  %594 = vmatpush1.msra.mxu0 %v589
  %595 = vmatprep.subr.mxu0 0.0
  %596 = vmatpush1.msra.mxu0 %v588
  %597 = vmatprep.subr.mxu0 0.0
  %598 = vmatpush1.msra.mxu0 %v587
  %599 = vmatprep.subr.mxu0 0.0
  %600 = vmatpush1.msra.mxu0 %v586
  %601 = vmatprep.subr.mxu0 0.0
  %602 = vmatpush1.msra.mxu0 %v585
  %603 = vmatprep.subr.mxu0 0.0
  %604 = vmatpush1.msra.mxu0 %v584
  %605 = vmatprep.subr.mxu0 0.0
  %606 = vmatpush1.msra.mxu0 %v583
  %607 = vmatprep.subr.mxu0 0.0
  %608 = vmatpush1.msra.mxu0 %v582
  %609 = vmatprep.subr.mxu0 0.0
  %610 = vmatpush1.msra.mxu0 %v581
  %611 = vmatprep.subr.mxu0 0.0
  %612 = vmatpush1.msra.mxu0 %v580
  %613 = vmatprep.subr.mxu0 0.0
  %614 = vmatpush1.msra.mxu0 %v579
  %615 = vmatprep.subr.mxu0 0.0
  %616 = vmatpush1.msra.mxu0 %v578
  %617 = vmatprep.subr.mxu0 0.0
  %618 = vmatpush1.msra.mxu0 %v577
  %619 = vmatprep.subr.mxu0 0.0
  %620 = vmatpush1.msra.mxu0 %v576
  %621 = vmatprep.subr.mxu0 0.0
  %622 = vmatpush1.msra.mxu0 %v575
  %623 = vmatprep.subr.mxu0 0.0
  %624 = vmatpush2.msra.mxu0 0.0
  %625 = vmatprep.subr.mxu0 0.0
  %626 = vmatpush2.msra.mxu0 0.0
  %627 = vmatprep.subr.mxu0 0.0
  %628 = vmatpush2.msra.mxu0 0.0
  %629 = vmatprep.subr.mxu0 0.0
  %630 = vmatpush2.msra.mxu0 0.0
  %631 = vmatprep.subr.mxu0 0.0
  %632 = vmatpush2.msra.mxu0 0.0
  %633 = vmatprep.subr.mxu0 0.0
  %634 = vmatpush2.msra.mxu0 0.0
  %635 = vmatprep.subr.mxu0 0.0
  %636 = vmatpush2.msra.mxu0 0.0
  %637 = vmatprep.subr.mxu0 0.0
  %638 = vmatpush2.msra.mxu0 0.0
  %639 = vmatprep.subr.mxu0 0.0
  %640 = vmatpush2.msra.mxu0 0.0
  %641 = vmatprep.subr.mxu0 0.0
  %642 = vmatpush2.msra.mxu0 0.0
  %643 = vmatprep.subr.mxu0 0.0
  %644 = vmatpush2.msra.mxu0 0.0
  %645 = vmatprep.subr.mxu0 0.0
  %646 = vmatpush2.msra.mxu0 0.0
  %647 = vmatprep.subr.mxu0 0.0
  %648 = vmatpush2.msra.mxu0 0.0
  %649 = vmatprep.subr.mxu0 0.0
  %650 = vmatpush2.msra.mxu0 0.0
  %651 = vmatprep.subr.mxu0 0.0
  %652 = vmatpush2.msra.mxu0 0.0
  %653 = vmatprep.subr.mxu0 0.0
  %654 = vmatpush2.msra.mxu0 0.0
  %655 = vmatprep.mubr.f32.mxu0 0.0
  %656 = vmatmul.mubr.f32.gmra.mxu0 %v573
  %v657 = vpop.f32.mrf.mxu0
  %v658 = vadd.f32 0.0, %v657
  %v659 = vpop.f32.mrf.mxu0
  %660 = vdwg.mxu0
  %v661 = vadd.f32 %v557, %v658
  %s662 = scalar_lea.vmem %s0, 8
  %v663 = vld [vmem:[%s662] sm:$0x3]
  %s664 = scalar_lea.vmem %s0, 20
  %v665 = vld [vmem:[%s664] sm:$0x3]
  %v667 = vrot.slane %v663, 6
  %v669 = vrot.slane %v32, 4
  %v672 = vrot.slane %v665, 2
  %v674 = vsel %vm42, %v28, %v667
  %v675 = vsel %vm44, %v674, %v669
  %v676 = vsel %vm46, %v675, %v672
  %s677 = scalar_lea.vmem %s4, 768
  %v678 = vld [vmem:[%s677] sm:$0xff]
  %v679 = vld [vmem:[%s677 + $0x8] sm:$0xff]
  %v680 = vld [vmem:[%s677 + $0x10] sm:$0xff]
  %v681 = vld [vmem:[%s677 + $0x18] sm:$0xff]
  %v682 = vld [vmem:[%s677 + $0x20] sm:$0xff]
  %v683 = vld [vmem:[%s677 + $0x28] sm:$0xff]
  %v684 = vld [vmem:[%s677 + $0x30] sm:$0xff]
  %v685 = vld [vmem:[%s677 + $0x38] sm:$0xff]
  %v686 = vld [vmem:[%s677 + $0x40] sm:$0xff]
  %v687 = vld [vmem:[%s677 + $0x48] sm:$0xff]
  %v688 = vld [vmem:[%s677 + $0x50] sm:$0xff]
  %v689 = vld [vmem:[%s677 + $0x58] sm:$0xff]
  %v690 = vld [vmem:[%s677 + $0x60] sm:$0xff]
  %v691 = vld [vmem:[%s677 + $0x68] sm:$0xff]
  %v692 = vld [vmem:[%s677 + $0x70] sm:$0xff]
  %v693 = vld [vmem:[%s677 + $0x78] sm:$0xff]
  %694 = vmatprep.subr.mxu0 0.0
  %695 = vmatpush1.msra.mxu0 %v693
  %696 = vmatprep.subr.mxu0 0.0
  %697 = vmatpush1.msra.mxu0 %v692
  %698 = vmatprep.subr.mxu0 0.0
  %699 = vmatpush1.msra.mxu0 %v691
  %700 = vmatprep.subr.mxu0 0.0
  %701 = vmatpush1.msra.mxu0 %v690
  %702 = vmatprep.subr.mxu0 0.0
  %703 = vmatpush1.msra.mxu0 %v689
  %704 = vmatprep.subr.mxu0 0.0
  %705 = vmatpush1.msra.mxu0 %v688
  %706 = vmatprep.subr.mxu0 0.0
  %707 = vmatpush1.msra.mxu0 %v687
  %708 = vmatprep.subr.mxu0 0.0
  %709 = vmatpush1.msra.mxu0 %v686
  %710 = vmatprep.subr.mxu0 0.0
  %711 = vmatpush1.msra.mxu0 %v685
  %712 = vmatprep.subr.mxu0 0.0
  %713 = vmatpush1.msra.mxu0 %v684
  %714 = vmatprep.subr.mxu0 0.0
  %715 = vmatpush1.msra.mxu0 %v683
  %716 = vmatprep.subr.mxu0 0.0
  %717 = vmatpush1.msra.mxu0 %v682
  %718 = vmatprep.subr.mxu0 0.0
  %719 = vmatpush1.msra.mxu0 %v681
  %720 = vmatprep.subr.mxu0 0.0
  %721 = vmatpush1.msra.mxu0 %v680
  %722 = vmatprep.subr.mxu0 0.0
  %723 = vmatpush1.msra.mxu0 %v679
  %724 = vmatprep.subr.mxu0 0.0
  %725 = vmatpush1.msra.mxu0 %v678
  %726 = vmatprep.subr.mxu0 0.0
  %727 = vmatpush2.msra.mxu0 0.0
  %728 = vmatprep.subr.mxu0 0.0
  %729 = vmatpush2.msra.mxu0 0.0
  %730 = vmatprep.subr.mxu0 0.0
  %731 = vmatpush2.msra.mxu0 0.0
  %732 = vmatprep.subr.mxu0 0.0
  %733 = vmatpush2.msra.mxu0 0.0
  %734 = vmatprep.subr.mxu0 0.0
  %735 = vmatpush2.msra.mxu0 0.0
  %736 = vmatprep.subr.mxu0 0.0
  %737 = vmatpush2.msra.mxu0 0.0
  %738 = vmatprep.subr.mxu0 0.0
  %739 = vmatpush2.msra.mxu0 0.0
  %740 = vmatprep.subr.mxu0 0.0
  %741 = vmatpush2.msra.mxu0 0.0
  %742 = vmatprep.subr.mxu0 0.0
  %743 = vmatpush2.msra.mxu0 0.0
  %744 = vmatprep.subr.mxu0 0.0
  %745 = vmatpush2.msra.mxu0 0.0
  %746 = vmatprep.subr.mxu0 0.0
  %747 = vmatpush2.msra.mxu0 0.0
  %748 = vmatprep.subr.mxu0 0.0
  %749 = vmatpush2.msra.mxu0 0.0
  %750 = vmatprep.subr.mxu0 0.0
  %751 = vmatpush2.msra.mxu0 0.0
  %752 = vmatprep.subr.mxu0 0.0
  %753 = vmatpush2.msra.mxu0 0.0
  %754 = vmatprep.subr.mxu0 0.0
  %755 = vmatpush2.msra.mxu0 0.0
  %756 = vmatprep.subr.mxu0 0.0
  %757 = vmatpush2.msra.mxu0 0.0
  %758 = vmatprep.mubr.f32.mxu0 0.0
  %759 = vmatmul.mubr.f32.gmra.mxu0 %v676
  %v760 = vpop.f32.mrf.mxu0
  %v761 = vadd.f32 0.0, %v760
  %v762 = vpop.f32.mrf.mxu0
  %763 = vdwg.mxu0
  %v764 = vadd.f32 %v661, %v761
  %s765 = scalar_lea.vmem %s1, 8
  %v766 = vld [vmem:[%s765] sm:$0x3]
  %s767 = scalar_lea.vmem %s1, 20
  %v768 = vld [vmem:[%s767] sm:$0x3]
  %v770 = vrot.slane %v766, 6
  %v772 = vrot.slane %v70, 4
  %v775 = vrot.slane %v768, 2
  %v777 = vsel %vm42, %v66, %v770
  %v778 = vsel %vm44, %v777, %v772
  %v779 = vsel %vm46, %v778, %v775
  %s780 = scalar_lea.vmem %s4, 896
  %v781 = vld [vmem:[%s780] sm:$0xff]
  %v782 = vld [vmem:[%s780 + $0x8] sm:$0xff]
  %v783 = vld [vmem:[%s780 + $0x10] sm:$0xff]
  %v784 = vld [vmem:[%s780 + $0x18] sm:$0xff]
  %v785 = vld [vmem:[%s780 + $0x20] sm:$0xff]
  %v786 = vld [vmem:[%s780 + $0x28] sm:$0xff]
  %v787 = vld [vmem:[%s780 + $0x30] sm:$0xff]
  %v788 = vld [vmem:[%s780 + $0x38] sm:$0xff]
  %v789 = vld [vmem:[%s780 + $0x40] sm:$0xff]
  %v790 = vld [vmem:[%s780 + $0x48] sm:$0xff]
  %v791 = vld [vmem:[%s780 + $0x50] sm:$0xff]
  %v792 = vld [vmem:[%s780 + $0x58] sm:$0xff]
  %v793 = vld [vmem:[%s780 + $0x60] sm:$0xff]
  %v794 = vld [vmem:[%s780 + $0x68] sm:$0xff]
  %v795 = vld [vmem:[%s780 + $0x70] sm:$0xff]
  %v796 = vld [vmem:[%s780 + $0x78] sm:$0xff]
  %797 = vmatprep.subr.mxu0 0.0
  %798 = vmatpush1.msra.mxu0 %v796
  %799 = vmatprep.subr.mxu0 0.0
  %800 = vmatpush1.msra.mxu0 %v795
  %801 = vmatprep.subr.mxu0 0.0
  %802 = vmatpush1.msra.mxu0 %v794
  %803 = vmatprep.subr.mxu0 0.0
  %804 = vmatpush1.msra.mxu0 %v793
  %805 = vmatprep.subr.mxu0 0.0
  %806 = vmatpush1.msra.mxu0 %v792
  %807 = vmatprep.subr.mxu0 0.0
  %808 = vmatpush1.msra.mxu0 %v791
  %809 = vmatprep.subr.mxu0 0.0
  %810 = vmatpush1.msra.mxu0 %v790
  %811 = vmatprep.subr.mxu0 0.0
  %812 = vmatpush1.msra.mxu0 %v789
  %813 = vmatprep.subr.mxu0 0.0
  %814 = vmatpush1.msra.mxu0 %v788
  %815 = vmatprep.subr.mxu0 0.0
  %816 = vmatpush1.msra.mxu0 %v787
  %817 = vmatprep.subr.mxu0 0.0
  %818 = vmatpush1.msra.mxu0 %v786
  %819 = vmatprep.subr.mxu0 0.0
  %820 = vmatpush1.msra.mxu0 %v785
  %821 = vmatprep.subr.mxu0 0.0
  %822 = vmatpush1.msra.mxu0 %v784
  %823 = vmatprep.subr.mxu0 0.0
  %824 = vmatpush1.msra.mxu0 %v783
  %825 = vmatprep.subr.mxu0 0.0
  %826 = vmatpush1.msra.mxu0 %v782
  %827 = vmatprep.subr.mxu0 0.0
  %828 = vmatpush1.msra.mxu0 %v781
  %829 = vmatprep.subr.mxu0 0.0
  %830 = vmatpush2.msra.mxu0 0.0
  %831 = vmatprep.subr.mxu0 0.0
  %832 = vmatpush2.msra.mxu0 0.0
  %833 = vmatprep.subr.mxu0 0.0
  %834 = vmatpush2.msra.mxu0 0.0
  %835 = vmatprep.subr.mxu0 0.0
  %836 = vmatpush2.msra.mxu0 0.0
  %837 = vmatprep.subr.mxu0 0.0
  %838 = vmatpush2.msra.mxu0 0.0
  %839 = vmatprep.subr.mxu0 0.0
  %840 = vmatpush2.msra.mxu0 0.0
  %841 = vmatprep.subr.mxu0 0.0
  %842 = vmatpush2.msra.mxu0 0.0
  %843 = vmatprep.subr.mxu0 0.0
  %844 = vmatpush2.msra.mxu0 0.0
  %845 = vmatprep.subr.mxu0 0.0
  %846 = vmatpush2.msra.mxu0 0.0
  %847 = vmatprep.subr.mxu0 0.0
  %848 = vmatpush2.msra.mxu0 0.0
  %849 = vmatprep.subr.mxu0 0.0
  %850 = vmatpush2.msra.mxu0 0.0
  %851 = vmatprep.subr.mxu0 0.0
  %852 = vmatpush2.msra.mxu0 0.0
  %853 = vmatprep.subr.mxu0 0.0
  %854 = vmatpush2.msra.mxu0 0.0
  %855 = vmatprep.subr.mxu0 0.0
  %856 = vmatpush2.msra.mxu0 0.0
  %857 = vmatprep.subr.mxu0 0.0
  %858 = vmatpush2.msra.mxu0 0.0
  %859 = vmatprep.subr.mxu0 0.0
  %860 = vmatpush2.msra.mxu0 0.0
  %861 = vmatprep.mubr.f32.mxu0 0.0
  %862 = vmatmul.mubr.f32.gmra.mxu0 %v779
  %v863 = vpop.f32.mrf.mxu0
  %v864 = vadd.f32 0.0, %v863
  %v865 = vpop.f32.mrf.mxu0
  %866 = vdwg.mxu0
  %v867 = vadd.f32 %v764, %v864
  %v868 = vld [vmem:[%s662 + $0x1] sm:$0x3]
  %v869 = vld [vmem:[%s664 + $0x1] sm:$0x3]
  %v871 = vrot.slane %v868, 6
  %v873 = vrot.slane %v243, 4
  %v876 = vrot.slane %v869, 2
  %v878 = vsel %vm42, %v241, %v871
  %v879 = vsel %vm44, %v878, %v873
  %v880 = vsel %vm46, %v879, %v876
  %s881 = scalar_lea.vmem %s4, 1024
  %v882 = vld [vmem:[%s881] sm:$0xff]
  %v883 = vld [vmem:[%s881 + $0x8] sm:$0xff]
  %v884 = vld [vmem:[%s881 + $0x10] sm:$0xff]
  %v885 = vld [vmem:[%s881 + $0x18] sm:$0xff]
  %v886 = vld [vmem:[%s881 + $0x20] sm:$0xff]
  %v887 = vld [vmem:[%s881 + $0x28] sm:$0xff]
  %v888 = vld [vmem:[%s881 + $0x30] sm:$0xff]
  %v889 = vld [vmem:[%s881 + $0x38] sm:$0xff]
  %v890 = vld [vmem:[%s881 + $0x40] sm:$0xff]
  %v891 = vld [vmem:[%s881 + $0x48] sm:$0xff]
  %v892 = vld [vmem:[%s881 + $0x50] sm:$0xff]
  %v893 = vld [vmem:[%s881 + $0x58] sm:$0xff]
  %v894 = vld [vmem:[%s881 + $0x60] sm:$0xff]
  %v895 = vld [vmem:[%s881 + $0x68] sm:$0xff]
  %v896 = vld [vmem:[%s881 + $0x70] sm:$0xff]
  %v897 = vld [vmem:[%s881 + $0x78] sm:$0xff]
  %898 = vmatprep.subr.mxu0 0.0
  %899 = vmatpush1.msra.mxu0 %v897
  %900 = vmatprep.subr.mxu0 0.0
  %901 = vmatpush1.msra.mxu0 %v896
  %902 = vmatprep.subr.mxu0 0.0
  %903 = vmatpush1.msra.mxu0 %v895
  %904 = vmatprep.subr.mxu0 0.0
  %905 = vmatpush1.msra.mxu0 %v894
  %906 = vmatprep.subr.mxu0 0.0
  %907 = vmatpush1.msra.mxu0 %v893
  %908 = vmatprep.subr.mxu0 0.0
  %909 = vmatpush1.msra.mxu0 %v892
  %910 = vmatprep.subr.mxu0 0.0
  %911 = vmatpush1.msra.mxu0 %v891
  %912 = vmatprep.subr.mxu0 0.0
  %913 = vmatpush1.msra.mxu0 %v890
  %914 = vmatprep.subr.mxu0 0.0
  %915 = vmatpush1.msra.mxu0 %v889
  %916 = vmatprep.subr.mxu0 0.0
  %917 = vmatpush1.msra.mxu0 %v888
  %918 = vmatprep.subr.mxu0 0.0
  %919 = vmatpush1.msra.mxu0 %v887
  %920 = vmatprep.subr.mxu0 0.0
  %921 = vmatpush1.msra.mxu0 %v886
  %922 = vmatprep.subr.mxu0 0.0
  %923 = vmatpush1.msra.mxu0 %v885
  %924 = vmatprep.subr.mxu0 0.0
  %925 = vmatpush1.msra.mxu0 %v884
  %926 = vmatprep.subr.mxu0 0.0
  %927 = vmatpush1.msra.mxu0 %v883
  %928 = vmatprep.subr.mxu0 0.0
  %929 = vmatpush1.msra.mxu0 %v882
  %930 = vmatprep.subr.mxu0 0.0
  %931 = vmatpush2.msra.mxu0 0.0
  %932 = vmatprep.subr.mxu0 0.0
  %933 = vmatpush2.msra.mxu0 0.0
  %934 = vmatprep.subr.mxu0 0.0
  %935 = vmatpush2.msra.mxu0 0.0
  %936 = vmatprep.subr.mxu0 0.0
  %937 = vmatpush2.msra.mxu0 0.0
  %938 = vmatprep.subr.mxu0 0.0
  %939 = vmatpush2.msra.mxu0 0.0
  %940 = vmatprep.subr.mxu0 0.0
  %941 = vmatpush2.msra.mxu0 0.0
  %942 = vmatprep.subr.mxu0 0.0
  %943 = vmatpush2.msra.mxu0 0.0
  %944 = vmatprep.subr.mxu0 0.0
  %945 = vmatpush2.msra.mxu0 0.0
  %946 = vmatprep.subr.mxu0 0.0
  %947 = vmatpush2.msra.mxu0 0.0
  %948 = vmatprep.subr.mxu0 0.0
  %949 = vmatpush2.msra.mxu0 0.0
  %950 = vmatprep.subr.mxu0 0.0
  %951 = vmatpush2.msra.mxu0 0.0
  %952 = vmatprep.subr.mxu0 0.0
  %953 = vmatpush2.msra.mxu0 0.0
  %954 = vmatprep.subr.mxu0 0.0
  %955 = vmatpush2.msra.mxu0 0.0
  %956 = vmatprep.subr.mxu0 0.0
  %957 = vmatpush2.msra.mxu0 0.0
  %958 = vmatprep.subr.mxu0 0.0
  %959 = vmatpush2.msra.mxu0 0.0
  %960 = vmatprep.subr.mxu0 0.0
  %961 = vmatpush2.msra.mxu0 0.0
  %962 = vmatprep.mubr.f32.mxu0 0.0
  %963 = vmatmul.mubr.f32.gmra.mxu0 %v880
  %v964 = vpop.f32.mrf.mxu0
  %v965 = vadd.f32 0.0, %v964
  %v966 = vpop.f32.mrf.mxu0
  %967 = vdwg.mxu0
  %v968 = vadd.f32 %v867, %v965
  %v969 = vrot.slane %v968, 4
  %v970 = vadd.f32 %v968, %v969
  %v971 = vrot.slane %v970, 2
  %v972 = vadd.f32 %v970, %v971
  %v973 = vrot.slane %v972, 1
  %v974 = vadd.f32 %v972, %v973
  %v975 = vrcp.pop 8.0
  %v976 = vmul.f32 %v974, %v975
  %v977 = vmul.f32 %v968, %v968
  %v978 = vrot.slane %v977, 4
  %v979 = vadd.f32 %v977, %v978
  %v980 = vrot.slane %v979, 2
  %v981 = vadd.f32 %v979, %v980
  %v982 = vrot.slane %v981, 1
  %v983 = vadd.f32 %v981, %v982
  %v984 = vmul.f32 %v983, %v975
  %v985 = vmul.f32 %v976, %v976
  %v986 = vsub.f32 %v984, %v985
  %v987 = vmax.f32 %v986, 0.0
  %v988 = vadd.f32 %v987, 1e-05
  %v989 = vrsqrt.pop %v988
  %v990 = vld [vmem:[%s5] sm:$0x1]
  %v991 = vmul.f32 %v989, %v990
  %v992 = vld [vmem:[%s6] sm:$0x1]
  %v993 = vmul.f32 %v976, %v991
  %v994 = vsub.f32 %v992, %v993
  %v995 = vlaneseq
  %v996 = vshrl.u32 %v995, 7
  %v997 = vsub.s32 0, %v996
  %v998 = vrot.slane %v991, %v997
  %v999 = vmul.f32 %v968, %v998
  %v1001 = vlaneseq
  %v1002 = vshrl.u32 %v1001, 7
  %v1003 = vsub.s32 0, %v1002
  %v1004 = vrot.slane %v994, %v1003
  %v1006 = vadd.f32 %v999, %v1004
  %v1007 = vmax.f32 %v1006, 0.0
  %1008 = vst [vmem:[%s7] sm:$0xff] %v1007
  // Predicated region
  $region30: #{resnet_forward.15} parent=0 // pred_check
    _
  $region31: #{resnet_forward.15} parent=0 // pred_check_branch
    %1010 = sbr.rel (0) target = $region33
  $region32: #{resnet_forward.15} parent=0 // pred_region
    _
  $region33: #{resnet_forward.15} parent=0 // pred_fallthru
    _
  // Predicated region
  $region34: #{resnet_forward.15} parent=0 // pred_check
    _
  $region35: #{resnet_forward.15} parent=0 // pred_check_branch
    %1012 = sbr.rel (0) target = $region37
  $region36: #{resnet_forward.15} parent=0 // pred_region
    _
  $region37: #{resnet_forward.15} parent=0 // pred_fallthru
    _

// kernel: resnet_forward.14
$region0: #{resnet_forward.14}
  #allocation0 [shape = 'u32[]', space=smem, size = 0x4, offset = 0x4, fixed_abs, tag = 'smem constant byte address 0x4 - core index']
  #allocation1 [shape = 'u32[144,128]{1,0:T(1,128)}', space=vmem, size = 0x12000, scoped, tag = 'internal scratch']
  %s0 = inlined_call_operand.vmem [shape: f32[2,2,2,128], index: 0, kind: input, shape index: {}]
  %s1 = inlined_call_operand.vmem [shape: f32[1,128,128], index: 1, kind: input, shape index: {}]
  %s2 = inlined_call_operand.vmem [shape: f32[1,128], index: 2, kind: input, shape index: {}]
  %s3 = inlined_call_operand.vmem [shape: f32[1,128], index: 3, kind: input, shape index: {}]
  %s4 = inlined_call_operand.vmem [shape: f32[8,128], index: 4, kind: output, shape index: {}]
  %s5 = sld [smem:[#allocation0]]
  $region26: #{resnet_forward.14} parent=0
    _
  %s7 = ssub.s32 1, %s5
  %s8 = scalar_select 0, %s7, %s5
  // Predicated region
  $region2: #{resnet_forward.14} parent=0 // pred_check
    _
  $region3: #{resnet_forward.14} parent=0 // pred_check_branch
    %10 = sbr.rel (0) target = $region5
  $region4: #{resnet_forward.14} parent=0 // pred_region
    _
  $region5: #{resnet_forward.14} parent=0 // pred_fallthru
    _
  // Predicated region
  $region6: #{resnet_forward.14} parent=0 // pred_check
    _
  $region7: #{resnet_forward.14} parent=0 // pred_check_branch
    %12 = sbr.rel (0) target = $region9
  $region8: #{resnet_forward.14} parent=0 // pred_region
    _
  $region9: #{resnet_forward.14} parent=0 // pred_fallthru
    _
  // Predicated region
  $region10: #{resnet_forward.14} parent=0 // pred_check
    _
  $region11: #{resnet_forward.14} parent=0 // pred_check_branch
    %14 = sbr.rel (0) target = $region13
  $region12: #{resnet_forward.14} parent=0 // pred_region
    _
  $region13: #{resnet_forward.14} parent=0 // pred_fallthru
    _
  // Predicated region
  $region14: #{resnet_forward.14} parent=0 // pred_check
    _
  $region15: #{resnet_forward.14} parent=0 // pred_check_branch
    %16 = sbr.rel (0) target = $region17
  $region16: #{resnet_forward.14} parent=0 // pred_region
    _
  $region17: #{resnet_forward.14} parent=0 // pred_fallthru
    _
  %v17 = vld [vmem:[%s0] sm:$0x3]
  %s18 = scalar_lea.vmem %s0, 2
  %v19 = vld [vmem:[%s18] sm:$0x3]
  %s20 = scalar_lea.vmem %s0, 4
  %v21 = vld [vmem:[%s20] sm:$0x3]
  %s22 = scalar_lea.vmem %s0, 6
  %v23 = vld [vmem:[%s22] sm:$0x3]
  %v25 = vrot.slane %v19, 6
  %v28 = vrot.slane %v21, 4
  %v31 = vrot.slane %v23, 2
  %vm33 = vcmask 1041408
  %v34 = vsel %vm33, %v17, %v25
  %vm35 = vcmask 1043456
  %v36 = vsel %vm35, %v34, %v28
  %vm37 = vcmask 1045504
  %v38 = vsel %vm37, %v36, %v31
  %v39 = vld [vmem:[%s1] sm:$0xff]
  %v40 = vld [vmem:[%s1 + $0x8] sm:$0xff]
  %v41 = vld [vmem:[%s1 + $0x10] sm:$0xff]
  %v42 = vld [vmem:[%s1 + $0x18] sm:$0xff]
  %v43 = vld [vmem:[%s1 + $0x20] sm:$0xff]
  %v44 = vld [vmem:[%s1 + $0x28] sm:$0xff]
  %v45 = vld [vmem:[%s1 + $0x30] sm:$0xff]
  %v46 = vld [vmem:[%s1 + $0x38] sm:$0xff]
  %v47 = vld [vmem:[%s1 + $0x40] sm:$0xff]
  %v48 = vld [vmem:[%s1 + $0x48] sm:$0xff]
  %v49 = vld [vmem:[%s1 + $0x50] sm:$0xff]
  %v50 = vld [vmem:[%s1 + $0x58] sm:$0xff]
  %v51 = vld [vmem:[%s1 + $0x60] sm:$0xff]
  %v52 = vld [vmem:[%s1 + $0x68] sm:$0xff]
  %v53 = vld [vmem:[%s1 + $0x70] sm:$0xff]
  %v54 = vld [vmem:[%s1 + $0x78] sm:$0xff]
  %55 = vmatprep.subr.mxu0 0.0
  %56 = vmatpush1.msra.mxu0 %v54
  %57 = vmatprep.subr.mxu0 0.0
  %58 = vmatpush1.msra.mxu0 %v53
  %59 = vmatprep.subr.mxu0 0.0
  %60 = vmatpush1.msra.mxu0 %v52
  %61 = vmatprep.subr.mxu0 0.0
  %62 = vmatpush1.msra.mxu0 %v51
  %63 = vmatprep.subr.mxu0 0.0
  %64 = vmatpush1.msra.mxu0 %v50
  %65 = vmatprep.subr.mxu0 0.0
  %66 = vmatpush1.msra.mxu0 %v49
  %67 = vmatprep.subr.mxu0 0.0
  %68 = vmatpush1.msra.mxu0 %v48
  %69 = vmatprep.subr.mxu0 0.0
  %70 = vmatpush1.msra.mxu0 %v47
  %71 = vmatprep.subr.mxu0 0.0
  %72 = vmatpush1.msra.mxu0 %v46
  %73 = vmatprep.subr.mxu0 0.0
  %74 = vmatpush1.msra.mxu0 %v45
  %75 = vmatprep.subr.mxu0 0.0
  %76 = vmatpush1.msra.mxu0 %v44
  %77 = vmatprep.subr.mxu0 0.0
  %78 = vmatpush1.msra.mxu0 %v43
  %79 = vmatprep.subr.mxu0 0.0
  %80 = vmatpush1.msra.mxu0 %v42
  %81 = vmatprep.subr.mxu0 0.0
  %82 = vmatpush1.msra.mxu0 %v41
  %83 = vmatprep.subr.mxu0 0.0
  %84 = vmatpush1.msra.mxu0 %v40
  %85 = vmatprep.subr.mxu0 0.0
  %86 = vmatpush1.msra.mxu0 %v39
  %87 = vmatprep.subr.mxu0 0.0
  %88 = vmatpush2.msra.mxu0 0.0
  %89 = vmatprep.subr.mxu0 0.0
  %90 = vmatpush2.msra.mxu0 0.0
  %91 = vmatprep.subr.mxu0 0.0
  %92 = vmatpush2.msra.mxu0 0.0
  %93 = vmatprep.subr.mxu0 0.0
  %94 = vmatpush2.msra.mxu0 0.0
  %95 = vmatprep.subr.mxu0 0.0
  %96 = vmatpush2.msra.mxu0 0.0
  %97 = vmatprep.subr.mxu0 0.0
  %98 = vmatpush2.msra.mxu0 0.0
  %99 = vmatprep.subr.mxu0 0.0
  %100 = vmatpush2.msra.mxu0 0.0
  %101 = vmatprep.subr.mxu0 0.0
  %102 = vmatpush2.msra.mxu0 0.0
  %103 = vmatprep.subr.mxu0 0.0
  %104 = vmatpush2.msra.mxu0 0.0
  %105 = vmatprep.subr.mxu0 0.0
  %106 = vmatpush2.msra.mxu0 0.0
  %107 = vmatprep.subr.mxu0 0.0
  %108 = vmatpush2.msra.mxu0 0.0
  %109 = vmatprep.subr.mxu0 0.0
  %110 = vmatpush2.msra.mxu0 0.0
  %111 = vmatprep.subr.mxu0 0.0
  %112 = vmatpush2.msra.mxu0 0.0
  %113 = vmatprep.subr.mxu0 0.0
  %114 = vmatpush2.msra.mxu0 0.0
  %115 = vmatprep.subr.mxu0 0.0
  %116 = vmatpush2.msra.mxu0 0.0
  %117 = vmatprep.subr.mxu0 0.0
  %118 = vmatpush2.msra.mxu0 0.0
  %119 = vmatprep.mubr.f32.mxu0 0.0
  %120 = vmatmul.mubr.f32.gmra.mxu0 %v38
  %v121 = vpop.f32.mrf.mxu0
  %v122 = vadd.f32 0.0, %v121
  %v123 = vpop.f32.mrf.mxu0
  %124 = vdwg.mxu0
  %v125 = vrot.slane %v122, 4
  %v126 = vadd.f32 %v122, %v125
  %v127 = vrot.slane %v126, 2
  %v128 = vadd.f32 %v126, %v127
  %v129 = vrot.slane %v128, 1
  %v130 = vadd.f32 %v128, %v129
  %v131 = vrcp.pop 8.0
  %v132 = vmul.f32 %v130, %v131
  %v133 = vmul.f32 %v122, %v122
  %v134 = vrot.slane %v133, 4
  %v135 = vadd.f32 %v133, %v134
  %v136 = vrot.slane %v135, 2
  %v137 = vadd.f32 %v135, %v136
  %v138 = vrot.slane %v137, 1
  %v139 = vadd.f32 %v137, %v138
  %v140 = vmul.f32 %v139, %v131
  %v141 = vmul.f32 %v132, %v132
  %v142 = vsub.f32 %v140, %v141
  %v143 = vmax.f32 %v142, 0.0
  %v144 = vadd.f32 %v143, 1e-05
  %v145 = vrsqrt.pop %v144
  %v146 = vld [vmem:[%s2] sm:$0x1]
  %v147 = vmul.f32 %v145, %v146
  %v148 = vld [vmem:[%s3] sm:$0x1]
  %v149 = vmul.f32 %v132, %v147
  %v150 = vsub.f32 %v148, %v149
  %v151 = vlaneseq
  %v152 = vshrl.u32 %v151, 7
  %v153 = vsub.s32 0, %v152
  %v154 = vrot.slane %v147, %v153
  %v155 = vmul.f32 %v122, %v154
  %v157 = vlaneseq
  %v158 = vshrl.u32 %v157, 7
  %v159 = vsub.s32 0, %v158
  %v160 = vrot.slane %v150, %v159
  %v162 = vadd.f32 %v155, %v160
  %163 = vst [vmem:[%s4] sm:$0xff] %v162
  // Predicated region
  $region18: #{resnet_forward.14} parent=0 // pred_check
    _
  $region19: #{resnet_forward.14} parent=0 // pred_check_branch
    %165 = sbr.rel (0) target = $region21
  $region20: #{resnet_forward.14} parent=0 // pred_region
    _
  $region21: #{resnet_forward.14} parent=0 // pred_fallthru
    _
  // Predicated region
  $region22: #{resnet_forward.14} parent=0 // pred_check
    _
  $region23: #{resnet_forward.14} parent=0 // pred_check_branch
    %167 = sbr.rel (0) target = $region25
  $region24: #{resnet_forward.14} parent=0 // pred_region
    _
  $region25: #{resnet_forward.14} parent=0 // pred_fallthru
    _

// kernel: resnet_forward.17
$region0: #{resnet_forward.17}
  #allocation0 [shape = 'u32[]', space=smem, size = 0x4, offset = 0x4, fixed_abs, tag = 'smem constant byte address 0x4 - core index']
  #allocation1 [shape = 'u32[144,128]{1,0:T(1,128)}', space=vmem, size = 0x12000, scoped, tag = 'internal scratch']
  %s0 = inlined_call_operand.vmem [shape: f32[2,4,128], index: 0, kind: input, shape index: {}]
  %s1 = inlined_call_operand.hbm [shape: f32[2,1,128], index: 1, kind: output, shape index: {}]
  %s2 = sld [smem:[#allocation0]]
  $region14: #{resnet_forward.17} parent=0
    _
  %s4 = ssub.s32 1, %s2
  %s5 = scalar_select 0, %s4, %s2
  $region1: #{resnet_forward.17} parent=0
    #allocation2 [shape = 'u8[1024]{0}', space=vmem, size = 0x400, scoped, tag = 'output window, operand 0, single buffered']
    #allocation3 [shape = 's32[1]{0}', space=sflag, size = 0x4, scoped, tag = 'scoped memory for resnet_forward.17']
    %6 = vsyncpa [#allocation3], 0
    // Predicated region
    $region2: #{resnet_forward.17} parent=1 // pred_check
      _
    $region3: #{resnet_forward.17} parent=1 // pred_check_branch
      %8 = sbr.rel (0) target = $region5
    $region4: #{resnet_forward.17} parent=1 // pred_region
      _
    $region5: #{resnet_forward.17} parent=1 // pred_fallthru
      _
    %v9 = vld [vmem:[%s0] sm:$0xf]
    %v10 = vld [vmem:[%s0 + $0x4] sm:$0xf]
    %vm11 = vcmask 1043456
    %v12 = vsel %vm11, %v9, 0.0
    %v13 = vrot.slane %v12, 4
    %v14 = vadd.f32 %v12, %v13
    %v15 = vrot.slane %v14, 2
    %v16 = vadd.f32 %v14, %v15
    %v17 = vrot.slane %v16, 1
    %v18 = vadd.f32 %v16, %v17
    %v19 = vsel %vm11, %v10, 0.0
    %v20 = vrot.slane %v19, 4
    %v21 = vadd.f32 %v19, %v20
    %v22 = vrot.slane %v21, 2
    %v23 = vadd.f32 %v21, %v22
    %v24 = vrot.slane %v23, 1
    %v25 = vadd.f32 %v23, %v24
    %v26 = vrcp.pop 4.0
    %v27 = vmul.f32 %v18, %v26
    %v28 = vmul.f32 %v25, %v26
    %29 = vst [vmem:[#allocation2] sm:$0x1] %v27
    %30 = vst [vmem:[#allocation2 + $0x1] sm:$0x1] %v28
    // Predicated region
    $region6: #{resnet_forward.17} parent=1 // pred_check
      _
    $region7: #{resnet_forward.17} parent=1 // pred_check_branch
      %32 = sbr.rel (0) target = $region9
    $region8: #{resnet_forward.17} parent=1 // pred_region
      %s34 = ssub.s32 32, 32
      %35 = vsyncadd [#allocation3], %s34
      %s36 = sshll.u32 [#allocation2], 4
      %s37 = int_to_ptr.vmem [resolvable:$true] %s36
      %42 = dma.vmem_to_hbm [thread:$0]  %s37, 32, %s1, [#allocation3], 16, 16, 1
    $region9: #{resnet_forward.17} parent=1 // pred_fallthru
      _
    // Predicated region
    $region10: #{resnet_forward.17} parent=1 // pred_check
      _
    $region11: #{resnet_forward.17} parent=1 // pred_check_branch
      %44 = sbr.rel (0) target = $region13
    $region12: #{resnet_forward.17} parent=1 // pred_region
      %45 = dma.done [#allocation3], 32
    $region13: #{resnet_forward.17} parent=1 // pred_fallthru
      _
    %46 = vsyncpa [#allocation3], 1

// kernel: resnet_forward.16
$region0: #{resnet_forward.16}
  #allocation0 [shape = 'u32[]', space=smem, size = 0x4, offset = 0x4, fixed_abs, tag = 'smem constant byte address 0x4 - core index']
  #allocation1 [shape = 'u32[144,128]{1,0:T(1,128)}', space=vmem, size = 0x12000, scoped, tag = 'internal scratch']
  %s0 = inlined_call_operand.vmem [shape: f32[2,4,4,128], index: 0, kind: input, shape index: {}]
  %s1 = inlined_call_operand.vmem [shape: f32[9,128,128], index: 1, kind: input, shape index: {}]
  %s2 = inlined_call_operand.vmem [shape: f32[1,128], index: 2, kind: input, shape index: {}, may-alias: {2,3}]
  %s3 = inlined_call_operand.vmem [shape: f32[1,128], index: 3, kind: input, shape index: {}, may-alias: {2,3}]
  %s4 = inlined_call_operand.vmem [shape: f32[8,128], index: 4, kind: input, shape index: {}]
  %s5 = inlined_call_operand.vmem [shape: f32[8,128], index: 5, kind: output, shape index: {}]
  %s6 = sld [smem:[#allocation0]]
  $region30: #{resnet_forward.16} parent=0
    _
  %s8 = ssub.s32 1, %s6
  %s9 = scalar_select 0, %s8, %s6
  // Predicated region
  $region2: #{resnet_forward.16} parent=0 // pred_check
    _
  $region3: #{resnet_forward.16} parent=0 // pred_check_branch
    %11 = sbr.rel (0) target = $region5
  $region4: #{resnet_forward.16} parent=0 // pred_region
    _
  $region5: #{resnet_forward.16} parent=0 // pred_fallthru
    _
  // Predicated region
  $region6: #{resnet_forward.16} parent=0 // pred_check
    _
  $region7: #{resnet_forward.16} parent=0 // pred_check_branch
    %13 = sbr.rel (0) target = $region9
  $region8: #{resnet_forward.16} parent=0 // pred_region
    _
  $region9: #{resnet_forward.16} parent=0 // pred_fallthru
    _
  // Predicated region
  $region10: #{resnet_forward.16} parent=0 // pred_check
    _
  $region11: #{resnet_forward.16} parent=0 // pred_check_branch
    %15 = sbr.rel (0) target = $region13
  $region12: #{resnet_forward.16} parent=0 // pred_region
    _
  $region13: #{resnet_forward.16} parent=0 // pred_fallthru
    _
  // Predicated region
  $region14: #{resnet_forward.16} parent=0 // pred_check
    _
  $region15: #{resnet_forward.16} parent=0 // pred_check_branch
    %17 = sbr.rel (0) target = $region17
  $region16: #{resnet_forward.16} parent=0 // pred_region
    _
  $region17: #{resnet_forward.16} parent=0 // pred_fallthru
    _
  // Predicated region
  $region18: #{resnet_forward.16} parent=0 // pred_check
    _
  $region19: #{resnet_forward.16} parent=0 // pred_check_branch
    %19 = sbr.rel (0) target = $region21
  $region20: #{resnet_forward.16} parent=0 // pred_region
    _
  $region21: #{resnet_forward.16} parent=0 // pred_fallthru
    _
  %v20 = vld [vmem:[%s0] sm:$0x3]
  %s21 = scalar_lea.vmem %s0, 4
  %v22 = vld [vmem:[%s21] sm:$0x3]
  %s23 = scalar_lea.vmem %s0, 16
  %v24 = vld [vmem:[%s23] sm:$0x3]
  %s25 = scalar_lea.vmem %s0, 20
  %v26 = vld [vmem:[%s25] sm:$0x3]
  %v28 = vrot.slane %v22, 6
  %v31 = vrot.slane %v24, 4
  %v34 = vrot.slane %v26, 2
  %vm36 = vcmask 1041408
  %v37 = vsel %vm36, %v20, %v28
  %vm38 = vcmask 1043456
  %v39 = vsel %vm38, %v37, %v31
  %vm40 = vcmask 1045504
  %v41 = vsel %vm40, %v39, %v34
  %v42 = vld [vmem:[%s1] sm:$0xff]
  %v43 = vld [vmem:[%s1 + $0x8] sm:$0xff]
  %v44 = vld [vmem:[%s1 + $0x10] sm:$0xff]
  %v45 = vld [vmem:[%s1 + $0x18] sm:$0xff]
  %v46 = vld [vmem:[%s1 + $0x20] sm:$0xff]
  %v47 = vld [vmem:[%s1 + $0x28] sm:$0xff]
  %v48 = vld [vmem:[%s1 + $0x30] sm:$0xff]
  %v49 = vld [vmem:[%s1 + $0x38] sm:$0xff]
  %v50 = vld [vmem:[%s1 + $0x40] sm:$0xff]
  %v51 = vld [vmem:[%s1 + $0x48] sm:$0xff]
  %v52 = vld [vmem:[%s1 + $0x50] sm:$0xff]
  %v53 = vld [vmem:[%s1 + $0x58] sm:$0xff]
  %v54 = vld [vmem:[%s1 + $0x60] sm:$0xff]
  %v55 = vld [vmem:[%s1 + $0x68] sm:$0xff]
  %v56 = vld [vmem:[%s1 + $0x70] sm:$0xff]
  %v57 = vld [vmem:[%s1 + $0x78] sm:$0xff]
  %v58 = vld [vmem:[%s0 + $0x1] sm:$0x3]
  %v59 = vld [vmem:[%s21 + $0x1] sm:$0x3]
  %v60 = vld [vmem:[%s23 + $0x1] sm:$0x3]
  %v61 = vld [vmem:[%s25 + $0x1] sm:$0x3]
  %v63 = vrot.slane %v59, 6
  %v66 = vrot.slane %v60, 4
  %v69 = vrot.slane %v61, 2
  %v71 = vsel %vm36, %v58, %v63
  %v72 = vsel %vm38, %v71, %v66
  %v73 = vsel %vm40, %v72, %v69
  %s74 = scalar_lea.vmem %s1, 128
  %v75 = vld [vmem:[%s74] sm:$0xff]
  %v76 = vld [vmem:[%s74 + $0x8] sm:$0xff]
  %v77 = vld [vmem:[%s74 + $0x10] sm:$0xff]
  %v78 = vld [vmem:[%s74 + $0x18] sm:$0xff]
  %v79 = vld [vmem:[%s74 + $0x20] sm:$0xff]
  %v80 = vld [vmem:[%s74 + $0x28] sm:$0xff]
  %v81 = vld [vmem:[%s74 + $0x30] sm:$0xff]
  %v82 = vld [vmem:[%s74 + $0x38] sm:$0xff]
  %v83 = vld [vmem:[%s74 + $0x40] sm:$0xff]
  %v84 = vld [vmem:[%s74 + $0x48] sm:$0xff]
  %v85 = vld [vmem:[%s74 + $0x50] sm:$0xff]
  %v86 = vld [vmem:[%s74 + $0x58] sm:$0xff]
  %v87 = vld [vmem:[%s74 + $0x60] sm:$0xff]
  %v88 = vld [vmem:[%s74 + $0x68] sm:$0xff]
  %v89 = vld [vmem:[%s74 + $0x70] sm:$0xff]
  %v90 = vld [vmem:[%s74 + $0x78] sm:$0xff]
  %91 = vmatprep.subr.mxu0 0.0
  %92 = vmatpush1.msra.mxu0 %v90
  %93 = vmatprep.subr.mxu0 0.0
  %94 = vmatpush1.msra.mxu0 %v89
  %95 = vmatprep.subr.mxu0 0.0
  %96 = vmatpush1.msra.mxu0 %v88
  %97 = vmatprep.subr.mxu0 0.0
  %98 = vmatpush1.msra.mxu0 %v87
  %99 = vmatprep.subr.mxu0 0.0
  %100 = vmatpush1.msra.mxu0 %v86
  %101 = vmatprep.subr.mxu0 0.0
  %102 = vmatpush1.msra.mxu0 %v85
  %103 = vmatprep.subr.mxu0 0.0
  %104 = vmatpush1.msra.mxu0 %v84
  %105 = vmatprep.subr.mxu0 0.0
  %106 = vmatpush1.msra.mxu0 %v83
  %107 = vmatprep.subr.mxu0 0.0
  %108 = vmatpush1.msra.mxu0 %v82
  %109 = vmatprep.subr.mxu0 0.0
  %110 = vmatpush1.msra.mxu0 %v81
  %111 = vmatprep.subr.mxu0 0.0
  %112 = vmatpush1.msra.mxu0 %v80
  %113 = vmatprep.subr.mxu0 0.0
  %114 = vmatpush1.msra.mxu0 %v79
  %115 = vmatprep.subr.mxu0 0.0
  %116 = vmatpush1.msra.mxu0 %v78
  %117 = vmatprep.subr.mxu0 0.0
  %118 = vmatpush1.msra.mxu0 %v77
  %119 = vmatprep.subr.mxu0 0.0
  %120 = vmatpush1.msra.mxu0 %v76
  %121 = vmatprep.subr.mxu0 0.0
  %122 = vmatpush1.msra.mxu0 %v75
  %123 = vmatprep.subr.mxu0 0.0
  %124 = vmatpush2.msra.mxu0 0.0
  %125 = vmatprep.subr.mxu0 0.0
  %126 = vmatpush2.msra.mxu0 0.0
  %127 = vmatprep.subr.mxu0 0.0
  %128 = vmatpush2.msra.mxu0 0.0
  %129 = vmatprep.subr.mxu0 0.0
  %130 = vmatpush2.msra.mxu0 0.0
  %131 = vmatprep.subr.mxu0 0.0
  %132 = vmatpush2.msra.mxu0 0.0
  %133 = vmatprep.subr.mxu0 0.0
  %134 = vmatpush2.msra.mxu0 0.0
  %135 = vmatprep.subr.mxu0 0.0
  %136 = vmatpush2.msra.mxu0 0.0
  %137 = vmatprep.subr.mxu0 0.0
  %138 = vmatpush2.msra.mxu0 0.0
  %139 = vmatprep.subr.mxu0 0.0
  %140 = vmatpush2.msra.mxu0 0.0
  %141 = vmatprep.subr.mxu0 0.0
  %142 = vmatpush2.msra.mxu0 0.0
  %143 = vmatprep.subr.mxu0 0.0
  %144 = vmatpush2.msra.mxu0 0.0
  %145 = vmatprep.subr.mxu0 0.0
  %146 = vmatpush2.msra.mxu0 0.0
  %147 = vmatprep.subr.mxu0 0.0
  %148 = vmatpush2.msra.mxu0 0.0
  %149 = vmatprep.subr.mxu0 0.0
  %150 = vmatpush2.msra.mxu0 0.0
  %151 = vmatprep.subr.mxu0 0.0
  %152 = vmatpush2.msra.mxu0 0.0
  %153 = vmatprep.subr.mxu0 0.0
  %154 = vmatpush2.msra.mxu0 0.0
  %155 = vmatprep.mubr.f32.mxu0 0.0
  %156 = vmatmul.mubr.f32.gmra.mxu0 %v73
  %v157 = vpop.f32.mrf.mxu0
  %v158 = vadd.f32 0.0, %v157
  %v159 = vpop.f32.mrf.mxu0
  %160 = vdwg.mxu0
  %161 = vmatprep.subr.mxu0 0.0
  %162 = vmatpush1.msra.mxu0 %v57
  %163 = vmatprep.subr.mxu0 0.0
  %164 = vmatpush1.msra.mxu0 %v56
  %165 = vmatprep.subr.mxu0 0.0
  %166 = vmatpush1.msra.mxu0 %v55
  %167 = vmatprep.subr.mxu0 0.0
  %168 = vmatpush1.msra.mxu0 %v54
  %169 = vmatprep.subr.mxu0 0.0
  %170 = vmatpush1.msra.mxu0 %v53
  %171 = vmatprep.subr.mxu0 0.0
  %172 = vmatpush1.msra.mxu0 %v52
  %173 = vmatprep.subr.mxu0 0.0
  %174 = vmatpush1.msra.mxu0 %v51
  %175 = vmatprep.subr.mxu0 0.0
  %176 = vmatpush1.msra.mxu0 %v50
  %177 = vmatprep.subr.mxu0 0.0
  %178 = vmatpush1.msra.mxu0 %v49
  %179 = vmatprep.subr.mxu0 0.0
  %180 = vmatpush1.msra.mxu0 %v48
  %181 = vmatprep.subr.mxu0 0.0
  %182 = vmatpush1.msra.mxu0 %v47
  %183 = vmatprep.subr.mxu0 0.0
  %184 = vmatpush1.msra.mxu0 %v46
  %185 = vmatprep.subr.mxu0 0.0
  %186 = vmatpush1.msra.mxu0 %v45
  %187 = vmatprep.subr.mxu0 0.0
  %188 = vmatpush1.msra.mxu0 %v44
  %189 = vmatprep.subr.mxu0 0.0
  %190 = vmatpush1.msra.mxu0 %v43
  %191 = vmatprep.subr.mxu0 0.0
  %192 = vmatpush1.msra.mxu0 %v42
  %193 = vmatprep.subr.mxu0 0.0
  %194 = vmatpush2.msra.mxu0 0.0
  %195 = vmatprep.subr.mxu0 0.0
  %196 = vmatpush2.msra.mxu0 0.0
  %197 = vmatprep.subr.mxu0 0.0
  %198 = vmatpush2.msra.mxu0 0.0
  %199 = vmatprep.subr.mxu0 0.0
  %200 = vmatpush2.msra.mxu0 0.0
  %201 = vmatprep.subr.mxu0 0.0
  %202 = vmatpush2.msra.mxu0 0.0
  %203 = vmatprep.subr.mxu0 0.0
  %204 = vmatpush2.msra.mxu0 0.0
  %205 = vmatprep.subr.mxu0 0.0
  %206 = vmatpush2.msra.mxu0 0.0
  %207 = vmatprep.subr.mxu0 0.0
  %208 = vmatpush2.msra.mxu0 0.0
  %209 = vmatprep.subr.mxu0 0.0
  %210 = vmatpush2.msra.mxu0 0.0
  %211 = vmatprep.subr.mxu0 0.0
  %212 = vmatpush2.msra.mxu0 0.0
  %213 = vmatprep.subr.mxu0 0.0
  %214 = vmatpush2.msra.mxu0 0.0
  %215 = vmatprep.subr.mxu0 0.0
  %216 = vmatpush2.msra.mxu0 0.0
  %217 = vmatprep.subr.mxu0 0.0
  %218 = vmatpush2.msra.mxu0 0.0
  %219 = vmatprep.subr.mxu0 0.0
  %220 = vmatpush2.msra.mxu0 0.0
  %221 = vmatprep.subr.mxu0 0.0
  %222 = vmatpush2.msra.mxu0 0.0
  %223 = vmatprep.subr.mxu0 0.0
  %224 = vmatpush2.msra.mxu0 0.0
  %225 = vmatprep.mubr.f32.mxu0 0.0
  %226 = vmatmul.mubr.f32.gmra.mxu0 %v41
  %v227 = vpop.f32.mrf.mxu0
  %v228 = vadd.f32 %v158, %v227
  %v229 = vpop.f32.mrf.mxu0
  %230 = vdwg.mxu0
  %v231 = vld [vmem:[%s0 + $0x2] sm:$0x3]
  %v232 = vld [vmem:[%s21 + $0x2] sm:$0x3]
  %v233 = vld [vmem:[%s23 + $0x2] sm:$0x3]
  %v234 = vld [vmem:[%s25 + $0x2] sm:$0x3]
  %v236 = vrot.slane %v232, 6
  %v239 = vrot.slane %v233, 4
  %v242 = vrot.slane %v234, 2
  %v244 = vsel %vm36, %v231, %v236
  %v245 = vsel %vm38, %v244, %v239
  %v246 = vsel %vm40, %v245, %v242
  %s247 = scalar_lea.vmem %s1, 256
  %v248 = vld [vmem:[%s247] sm:$0xff]
  %v249 = vld [vmem:[%s247 + $0x8] sm:$0xff]
  %v250 = vld [vmem:[%s247 + $0x10] sm:$0xff]
  %v251 = vld [vmem:[%s247 + $0x18] sm:$0xff]
  %v252 = vld [vmem:[%s247 + $0x20] sm:$0xff]
  %v253 = vld [vmem:[%s247 + $0x28] sm:$0xff]
  %v254 = vld [vmem:[%s247 + $0x30] sm:$0xff]
  %v255 = vld [vmem:[%s247 + $0x38] sm:$0xff]
  %v256 = vld [vmem:[%s247 + $0x40] sm:$0xff]
  %v257 = vld [vmem:[%s247 + $0x48] sm:$0xff]
  %v258 = vld [vmem:[%s247 + $0x50] sm:$0xff]
  %v259 = vld [vmem:[%s247 + $0x58] sm:$0xff]
  %v260 = vld [vmem:[%s247 + $0x60] sm:$0xff]
  %v261 = vld [vmem:[%s247 + $0x68] sm:$0xff]
  %v262 = vld [vmem:[%s247 + $0x70] sm:$0xff]
  %v263 = vld [vmem:[%s247 + $0x78] sm:$0xff]
  %264 = vmatprep.subr.mxu0 0.0
  %265 = vmatpush1.msra.mxu0 %v263
  %266 = vmatprep.subr.mxu0 0.0
  %267 = vmatpush1.msra.mxu0 %v262
  %268 = vmatprep.subr.mxu0 0.0
  %269 = vmatpush1.msra.mxu0 %v261
  %270 = vmatprep.subr.mxu0 0.0
  %271 = vmatpush1.msra.mxu0 %v260
  %272 = vmatprep.subr.mxu0 0.0
  %273 = vmatpush1.msra.mxu0 %v259
  %274 = vmatprep.subr.mxu0 0.0
  %275 = vmatpush1.msra.mxu0 %v258
  %276 = vmatprep.subr.mxu0 0.0
  %277 = vmatpush1.msra.mxu0 %v257
  %278 = vmatprep.subr.mxu0 0.0
  %279 = vmatpush1.msra.mxu0 %v256
  %280 = vmatprep.subr.mxu0 0.0
  %281 = vmatpush1.msra.mxu0 %v255
  %282 = vmatprep.subr.mxu0 0.0
  %283 = vmatpush1.msra.mxu0 %v254
  %284 = vmatprep.subr.mxu0 0.0
  %285 = vmatpush1.msra.mxu0 %v253
  %286 = vmatprep.subr.mxu0 0.0
  %287 = vmatpush1.msra.mxu0 %v252
  %288 = vmatprep.subr.mxu0 0.0
  %289 = vmatpush1.msra.mxu0 %v251
  %290 = vmatprep.subr.mxu0 0.0
  %291 = vmatpush1.msra.mxu0 %v250
  %292 = vmatprep.subr.mxu0 0.0
  %293 = vmatpush1.msra.mxu0 %v249
  %294 = vmatprep.subr.mxu0 0.0
  %295 = vmatpush1.msra.mxu0 %v248
  %296 = vmatprep.subr.mxu0 0.0
  %297 = vmatpush2.msra.mxu0 0.0
  %298 = vmatprep.subr.mxu0 0.0
  %299 = vmatpush2.msra.mxu0 0.0
  %300 = vmatprep.subr.mxu0 0.0
  %301 = vmatpush2.msra.mxu0 0.0
  %302 = vmatprep.subr.mxu0 0.0
  %303 = vmatpush2.msra.mxu0 0.0
  %304 = vmatprep.subr.mxu0 0.0
  %305 = vmatpush2.msra.mxu0 0.0
  %306 = vmatprep.subr.mxu0 0.0
  %307 = vmatpush2.msra.mxu0 0.0
  %308 = vmatprep.subr.mxu0 0.0
  %309 = vmatpush2.msra.mxu0 0.0
  %310 = vmatprep.subr.mxu0 0.0
  %311 = vmatpush2.msra.mxu0 0.0
  %312 = vmatprep.subr.mxu0 0.0
  %313 = vmatpush2.msra.mxu0 0.0
  %314 = vmatprep.subr.mxu0 0.0
  %315 = vmatpush2.msra.mxu0 0.0
  %316 = vmatprep.subr.mxu0 0.0
  %317 = vmatpush2.msra.mxu0 0.0
  %318 = vmatprep.subr.mxu0 0.0
  %319 = vmatpush2.msra.mxu0 0.0
  %320 = vmatprep.subr.mxu0 0.0
  %321 = vmatpush2.msra.mxu0 0.0
  %322 = vmatprep.subr.mxu0 0.0
  %323 = vmatpush2.msra.mxu0 0.0
  %324 = vmatprep.subr.mxu0 0.0
  %325 = vmatpush2.msra.mxu0 0.0
  %326 = vmatprep.subr.mxu0 0.0
  %327 = vmatpush2.msra.mxu0 0.0
  %328 = vmatprep.mubr.f32.mxu0 0.0
  %329 = vmatmul.mubr.f32.gmra.mxu0 %v246
  %v330 = vpop.f32.mrf.mxu0
  %v331 = vadd.f32 0.0, %v330
  %v332 = vpop.f32.mrf.mxu0
  %333 = vdwg.mxu0
  %v334 = vadd.f32 %v228, %v331
  %s335 = scalar_lea.vmem %s0, 8
  %v336 = vld [vmem:[%s335] sm:$0x3]
  %s337 = scalar_lea.vmem %s0, 24
  %v338 = vld [vmem:[%s337] sm:$0x3]
  %v340 = vrot.slane %v336, 6
  %v342 = vrot.slane %v26, 4
  %v345 = vrot.slane %v338, 2
  %v347 = vsel %vm36, %v22, %v340
  %v348 = vsel %vm38, %v347, %v342
  %v349 = vsel %vm40, %v348, %v345
  %s350 = scalar_lea.vmem %s1, 384
  %v351 = vld [vmem:[%s350] sm:$0xff]
  %v352 = vld [vmem:[%s350 + $0x8] sm:$0xff]
  %v353 = vld [vmem:[%s350 + $0x10] sm:$0xff]
  %v354 = vld [vmem:[%s350 + $0x18] sm:$0xff]
  %v355 = vld [vmem:[%s350 + $0x20] sm:$0xff]
  %v356 = vld [vmem:[%s350 + $0x28] sm:$0xff]
  %v357 = vld [vmem:[%s350 + $0x30] sm:$0xff]
  %v358 = vld [vmem:[%s350 + $0x38] sm:$0xff]
  %v359 = vld [vmem:[%s350 + $0x40] sm:$0xff]
  %v360 = vld [vmem:[%s350 + $0x48] sm:$0xff]
  %v361 = vld [vmem:[%s350 + $0x50] sm:$0xff]
  %v362 = vld [vmem:[%s350 + $0x58] sm:$0xff]
  %v363 = vld [vmem:[%s350 + $0x60] sm:$0xff]
  %v364 = vld [vmem:[%s350 + $0x68] sm:$0xff]
  %v365 = vld [vmem:[%s350 + $0x70] sm:$0xff]
  %v366 = vld [vmem:[%s350 + $0x78] sm:$0xff]
  %367 = vmatprep.subr.mxu0 0.0
  %368 = vmatpush1.msra.mxu0 %v366
  %369 = vmatprep.subr.mxu0 0.0
  %370 = vmatpush1.msra.mxu0 %v365
  %371 = vmatprep.subr.mxu0 0.0
  %372 = vmatpush1.msra.mxu0 %v364
  %373 = vmatprep.subr.mxu0 0.0
  %374 = vmatpush1.msra.mxu0 %v363
  %375 = vmatprep.subr.mxu0 0.0
  %376 = vmatpush1.msra.mxu0 %v362
  %377 = vmatprep.subr.mxu0 0.0
  %378 = vmatpush1.msra.mxu0 %v361
  %379 = vmatprep.subr.mxu0 0.0
  %380 = vmatpush1.msra.mxu0 %v360
  %381 = vmatprep.subr.mxu0 0.0
  %382 = vmatpush1.msra.mxu0 %v359
  %383 = vmatprep.subr.mxu0 0.0
  %384 = vmatpush1.msra.mxu0 %v358
  %385 = vmatprep.subr.mxu0 0.0
  %386 = vmatpush1.msra.mxu0 %v357
  %387 = vmatprep.subr.mxu0 0.0
  %388 = vmatpush1.msra.mxu0 %v356
  %389 = vmatprep.subr.mxu0 0.0
  %390 = vmatpush1.msra.mxu0 %v355
  %391 = vmatprep.subr.mxu0 0.0
  %392 = vmatpush1.msra.mxu0 %v354
  %393 = vmatprep.subr.mxu0 0.0
  %394 = vmatpush1.msra.mxu0 %v353
  %395 = vmatprep.subr.mxu0 0.0
  %396 = vmatpush1.msra.mxu0 %v352
  %397 = vmatprep.subr.mxu0 0.0
  %398 = vmatpush1.msra.mxu0 %v351
  %399 = vmatprep.subr.mxu0 0.0
  %400 = vmatpush2.msra.mxu0 0.0
  %401 = vmatprep.subr.mxu0 0.0
  %402 = vmatpush2.msra.mxu0 0.0
  %403 = vmatprep.subr.mxu0 0.0
  %404 = vmatpush2.msra.mxu0 0.0
  %405 = vmatprep.subr.mxu0 0.0
  %406 = vmatpush2.msra.mxu0 0.0
  %407 = vmatprep.subr.mxu0 0.0
  %408 = vmatpush2.msra.mxu0 0.0
  %409 = vmatprep.subr.mxu0 0.0
  %410 = vmatpush2.msra.mxu0 0.0
  %411 = vmatprep.subr.mxu0 0.0
  %412 = vmatpush2.msra.mxu0 0.0
  %413 = vmatprep.subr.mxu0 0.0
  %414 = vmatpush2.msra.mxu0 0.0
  %415 = vmatprep.subr.mxu0 0.0
  %416 = vmatpush2.msra.mxu0 0.0
  %417 = vmatprep.subr.mxu0 0.0
  %418 = vmatpush2.msra.mxu0 0.0
  %419 = vmatprep.subr.mxu0 0.0
  %420 = vmatpush2.msra.mxu0 0.0
  %421 = vmatprep.subr.mxu0 0.0
  %422 = vmatpush2.msra.mxu0 0.0
  %423 = vmatprep.subr.mxu0 0.0
  %424 = vmatpush2.msra.mxu0 0.0
  %425 = vmatprep.subr.mxu0 0.0
  %426 = vmatpush2.msra.mxu0 0.0
  %427 = vmatprep.subr.mxu0 0.0
  %428 = vmatpush2.msra.mxu0 0.0
  %429 = vmatprep.subr.mxu0 0.0
  %430 = vmatpush2.msra.mxu0 0.0
  %431 = vmatprep.mubr.f32.mxu0 0.0
  %432 = vmatmul.mubr.f32.gmra.mxu0 %v349
  %v433 = vpop.f32.mrf.mxu0
  %v434 = vadd.f32 0.0, %v433
  %v435 = vpop.f32.mrf.mxu0
  %436 = vdwg.mxu0
  %v437 = vadd.f32 %v334, %v434
  %v438 = vld [vmem:[%s335 + $0x1] sm:$0x3]
  %v439 = vld [vmem:[%s337 + $0x1] sm:$0x3]
  %v441 = vrot.slane %v438, 6
  %v443 = vrot.slane %v61, 4
  %v446 = vrot.slane %v439, 2
  %v448 = vsel %vm36, %v59, %v441
  %v449 = vsel %vm38, %v448, %v443
  %v450 = vsel %vm40, %v449, %v446
  %s451 = scalar_lea.vmem %s1, 512
  %v452 = vld [vmem:[%s451] sm:$0xff]
  %v453 = vld [vmem:[%s451 + $0x8] sm:$0xff]
  %v454 = vld [vmem:[%s451 + $0x10] sm:$0xff]
  %v455 = vld [vmem:[%s451 + $0x18] sm:$0xff]
  %v456 = vld [vmem:[%s451 + $0x20] sm:$0xff]
  %v457 = vld [vmem:[%s451 + $0x28] sm:$0xff]
  %v458 = vld [vmem:[%s451 + $0x30] sm:$0xff]
  %v459 = vld [vmem:[%s451 + $0x38] sm:$0xff]
  %v460 = vld [vmem:[%s451 + $0x40] sm:$0xff]
  %v461 = vld [vmem:[%s451 + $0x48] sm:$0xff]
  %v462 = vld [vmem:[%s451 + $0x50] sm:$0xff]
  %v463 = vld [vmem:[%s451 + $0x58] sm:$0xff]
  %v464 = vld [vmem:[%s451 + $0x60] sm:$0xff]
  %v465 = vld [vmem:[%s451 + $0x68] sm:$0xff]
  %v466 = vld [vmem:[%s451 + $0x70] sm:$0xff]
  %v467 = vld [vmem:[%s451 + $0x78] sm:$0xff]
  %468 = vmatprep.subr.mxu0 0.0
  %469 = vmatpush1.msra.mxu0 %v467
  %470 = vmatprep.subr.mxu0 0.0
  %471 = vmatpush1.msra.mxu0 %v466
  %472 = vmatprep.subr.mxu0 0.0
  %473 = vmatpush1.msra.mxu0 %v465
  %474 = vmatprep.subr.mxu0 0.0
  %475 = vmatpush1.msra.mxu0 %v464
  %476 = vmatprep.subr.mxu0 0.0
  %477 = vmatpush1.msra.mxu0 %v463
  %478 = vmatprep.subr.mxu0 0.0
  %479 = vmatpush1.msra.mxu0 %v462
  %480 = vmatprep.subr.mxu0 0.0
  %481 = vmatpush1.msra.mxu0 %v461
  %482 = vmatprep.subr.mxu0 0.0
  %483 = vmatpush1.msra.mxu0 %v460
  %484 = vmatprep.subr.mxu0 0.0
  %485 = vmatpush1.msra.mxu0 %v459
  %486 = vmatprep.subr.mxu0 0.0
  %487 = vmatpush1.msra.mxu0 %v458
  %488 = vmatprep.subr.mxu0 0.0
  %489 = vmatpush1.msra.mxu0 %v457
  %490 = vmatprep.subr.mxu0 0.0
  %491 = vmatpush1.msra.mxu0 %v456
  %492 = vmatprep.subr.mxu0 0.0
  %493 = vmatpush1.msra.mxu0 %v455
  %494 = vmatprep.subr.mxu0 0.0
  %495 = vmatpush1.msra.mxu0 %v454
  %496 = vmatprep.subr.mxu0 0.0
  %497 = vmatpush1.msra.mxu0 %v453
  %498 = vmatprep.subr.mxu0 0.0
  %499 = vmatpush1.msra.mxu0 %v452
  %500 = vmatprep.subr.mxu0 0.0
  %501 = vmatpush2.msra.mxu0 0.0
  %502 = vmatprep.subr.mxu0 0.0
  %503 = vmatpush2.msra.mxu0 0.0
  %504 = vmatprep.subr.mxu0 0.0
  %505 = vmatpush2.msra.mxu0 0.0
  %506 = vmatprep.subr.mxu0 0.0
  %507 = vmatpush2.msra.mxu0 0.0
  %508 = vmatprep.subr.mxu0 0.0
  %509 = vmatpush2.msra.mxu0 0.0
  %510 = vmatprep.subr.mxu0 0.0
  %511 = vmatpush2.msra.mxu0 0.0
  %512 = vmatprep.subr.mxu0 0.0
  %513 = vmatpush2.msra.mxu0 0.0
  %514 = vmatprep.subr.mxu0 0.0
  %515 = vmatpush2.msra.mxu0 0.0
  %516 = vmatprep.subr.mxu0 0.0
  %517 = vmatpush2.msra.mxu0 0.0
  %518 = vmatprep.subr.mxu0 0.0
  %519 = vmatpush2.msra.mxu0 0.0
  %520 = vmatprep.subr.mxu0 0.0
  %521 = vmatpush2.msra.mxu0 0.0
  %522 = vmatprep.subr.mxu0 0.0
  %523 = vmatpush2.msra.mxu0 0.0
  %524 = vmatprep.subr.mxu0 0.0
  %525 = vmatpush2.msra.mxu0 0.0
  %526 = vmatprep.subr.mxu0 0.0
  %527 = vmatpush2.msra.mxu0 0.0
  %528 = vmatprep.subr.mxu0 0.0
  %529 = vmatpush2.msra.mxu0 0.0
  %530 = vmatprep.subr.mxu0 0.0
  %531 = vmatpush2.msra.mxu0 0.0
  %532 = vmatprep.mubr.f32.mxu0 0.0
  %533 = vmatmul.mubr.f32.gmra.mxu0 %v450
  %v534 = vpop.f32.mrf.mxu0
  %v535 = vadd.f32 0.0, %v534
  %v536 = vpop.f32.mrf.mxu0
  %537 = vdwg.mxu0
  %v538 = vadd.f32 %v437, %v535
  %v539 = vld [vmem:[%s335 + $0x2] sm:$0x3]
  %v540 = vld [vmem:[%s337 + $0x2] sm:$0x3]
  %v542 = vrot.slane %v539, 6
  %v544 = vrot.slane %v234, 4
  %v547 = vrot.slane %v540, 2
  %v549 = vsel %vm36, %v232, %v542
  %v550 = vsel %vm38, %v549, %v544
  %v551 = vsel %vm40, %v550, %v547
  %s552 = scalar_lea.vmem %s1, 640
  %v553 = vld [vmem:[%s552] sm:$0xff]
  %v554 = vld [vmem:[%s552 + $0x8] sm:$0xff]
  %v555 = vld [vmem:[%s552 + $0x10] sm:$0xff]
  %v556 = vld [vmem:[%s552 + $0x18] sm:$0xff]
  %v557 = vld [vmem:[%s552 + $0x20] sm:$0xff]
  %v558 = vld [vmem:[%s552 + $0x28] sm:$0xff]
  %v559 = vld [vmem:[%s552 + $0x30] sm:$0xff]
  %v560 = vld [vmem:[%s552 + $0x38] sm:$0xff]
  %v561 = vld [vmem:[%s552 + $0x40] sm:$0xff]
  %v562 = vld [vmem:[%s552 + $0x48] sm:$0xff]
  %v563 = vld [vmem:[%s552 + $0x50] sm:$0xff]
  %v564 = vld [vmem:[%s552 + $0x58] sm:$0xff]
  %v565 = vld [vmem:[%s552 + $0x60] sm:$0xff]
  %v566 = vld [vmem:[%s552 + $0x68] sm:$0xff]
  %v567 = vld [vmem:[%s552 + $0x70] sm:$0xff]
  %v568 = vld [vmem:[%s552 + $0x78] sm:$0xff]
  %569 = vmatprep.subr.mxu0 0.0
  %570 = vmatpush1.msra.mxu0 %v568
  %571 = vmatprep.subr.mxu0 0.0
  %572 = vmatpush1.msra.mxu0 %v567
  %573 = vmatprep.subr.mxu0 0.0
  %574 = vmatpush1.msra.mxu0 %v566
  %575 = vmatprep.subr.mxu0 0.0
  %576 = vmatpush1.msra.mxu0 %v565
  %577 = vmatprep.subr.mxu0 0.0
  %578 = vmatpush1.msra.mxu0 %v564
  %579 = vmatprep.subr.mxu0 0.0
  %580 = vmatpush1.msra.mxu0 %v563
  %581 = vmatprep.subr.mxu0 0.0
  %582 = vmatpush1.msra.mxu0 %v562
  %583 = vmatprep.subr.mxu0 0.0
  %584 = vmatpush1.msra.mxu0 %v561
  %585 = vmatprep.subr.mxu0 0.0
  %586 = vmatpush1.msra.mxu0 %v560
  %587 = vmatprep.subr.mxu0 0.0
  %588 = vmatpush1.msra.mxu0 %v559
  %589 = vmatprep.subr.mxu0 0.0
  %590 = vmatpush1.msra.mxu0 %v558
  %591 = vmatprep.subr.mxu0 0.0
  %592 = vmatpush1.msra.mxu0 %v557
  %593 = vmatprep.subr.mxu0 0.0
  %594 = vmatpush1.msra.mxu0 %v556
  %595 = vmatprep.subr.mxu0 0.0
  %596 = vmatpush1.msra.mxu0 %v555
  %597 = vmatprep.subr.mxu0 0.0
  %598 = vmatpush1.msra.mxu0 %v554
  %599 = vmatprep.subr.mxu0 0.0
  %600 = vmatpush1.msra.mxu0 %v553
  %601 = vmatprep.subr.mxu0 0.0
  %602 = vmatpush2.msra.mxu0 0.0
  %603 = vmatprep.subr.mxu0 0.0
  %604 = vmatpush2.msra.mxu0 0.0
  %605 = vmatprep.subr.mxu0 0.0
  %606 = vmatpush2.msra.mxu0 0.0
  %607 = vmatprep.subr.mxu0 0.0
  %608 = vmatpush2.msra.mxu0 0.0
  %609 = vmatprep.subr.mxu0 0.0
  %610 = vmatpush2.msra.mxu0 0.0
  %611 = vmatprep.subr.mxu0 0.0
  %612 = vmatpush2.msra.mxu0 0.0
  %613 = vmatprep.subr.mxu0 0.0
  %614 = vmatpush2.msra.mxu0 0.0
  %615 = vmatprep.subr.mxu0 0.0
  %616 = vmatpush2.msra.mxu0 0.0
  %617 = vmatprep.subr.mxu0 0.0
  %618 = vmatpush2.msra.mxu0 0.0
  %619 = vmatprep.subr.mxu0 0.0
  %620 = vmatpush2.msra.mxu0 0.0
  %621 = vmatprep.subr.mxu0 0.0
  %622 = vmatpush2.msra.mxu0 0.0
  %623 = vmatprep.subr.mxu0 0.0
  %624 = vmatpush2.msra.mxu0 0.0
  %625 = vmatprep.subr.mxu0 0.0
  %626 = vmatpush2.msra.mxu0 0.0
  %627 = vmatprep.subr.mxu0 0.0
  %628 = vmatpush2.msra.mxu0 0.0
  %629 = vmatprep.subr.mxu0 0.0
  %630 = vmatpush2.msra.mxu0 0.0
  %631 = vmatprep.subr.mxu0 0.0
  %632 = vmatpush2.msra.mxu0 0.0
  %633 = vmatprep.mubr.f32.mxu0 0.0
  %634 = vmatmul.mubr.f32.gmra.mxu0 %v551
  %v635 = vpop.f32.mrf.mxu0
  %v636 = vadd.f32 0.0, %v635
  %v637 = vpop.f32.mrf.mxu0
  %638 = vdwg.mxu0
  %v639 = vadd.f32 %v538, %v636
  %s640 = scalar_lea.vmem %s0, 12
  %v641 = vld [vmem:[%s640] sm:$0x3]
  %s642 = scalar_lea.vmem %s0, 28
  %v643 = vld [vmem:[%s642] sm:$0x3]
  %v645 = vrot.slane %v641, 6
  %v647 = vrot.slane %v338, 4
  %v650 = vrot.slane %v643, 2
  %v652 = vsel %vm36, %v336, %v645
  %v653 = vsel %vm38, %v652, %v647
  %v654 = vsel %vm40, %v653, %v650
  %s655 = scalar_lea.vmem %s1, 768
  %v656 = vld [vmem:[%s655] sm:$0xff]
  %v657 = vld [vmem:[%s655 + $0x8] sm:$0xff]
  %v658 = vld [vmem:[%s655 + $0x10] sm:$0xff]
  %v659 = vld [vmem:[%s655 + $0x18] sm:$0xff]
  %v660 = vld [vmem:[%s655 + $0x20] sm:$0xff]
  %v661 = vld [vmem:[%s655 + $0x28] sm:$0xff]
  %v662 = vld [vmem:[%s655 + $0x30] sm:$0xff]
  %v663 = vld [vmem:[%s655 + $0x38] sm:$0xff]
  %v664 = vld [vmem:[%s655 + $0x40] sm:$0xff]
  %v665 = vld [vmem:[%s655 + $0x48] sm:$0xff]
  %v666 = vld [vmem:[%s655 + $0x50] sm:$0xff]
  %v667 = vld [vmem:[%s655 + $0x58] sm:$0xff]
  %v668 = vld [vmem:[%s655 + $0x60] sm:$0xff]
  %v669 = vld [vmem:[%s655 + $0x68] sm:$0xff]
  %v670 = vld [vmem:[%s655 + $0x70] sm:$0xff]
  %v671 = vld [vmem:[%s655 + $0x78] sm:$0xff]
  %672 = vmatprep.subr.mxu0 0.0
  %673 = vmatpush1.msra.mxu0 %v671
  %674 = vmatprep.subr.mxu0 0.0
  %675 = vmatpush1.msra.mxu0 %v670
  %676 = vmatprep.subr.mxu0 0.0
  %677 = vmatpush1.msra.mxu0 %v669
  %678 = vmatprep.subr.mxu0 0.0
  %679 = vmatpush1.msra.mxu0 %v668
  %680 = vmatprep.subr.mxu0 0.0
  %681 = vmatpush1.msra.mxu0 %v667
  %682 = vmatprep.subr.mxu0 0.0
  %683 = vmatpush1.msra.mxu0 %v666
  %684 = vmatprep.subr.mxu0 0.0
  %685 = vmatpush1.msra.mxu0 %v665
  %686 = vmatprep.subr.mxu0 0.0
  %687 = vmatpush1.msra.mxu0 %v664
  %688 = vmatprep.subr.mxu0 0.0
  %689 = vmatpush1.msra.mxu0 %v663
  %690 = vmatprep.subr.mxu0 0.0
  %691 = vmatpush1.msra.mxu0 %v662
  %692 = vmatprep.subr.mxu0 0.0
  %693 = vmatpush1.msra.mxu0 %v661
  %694 = vmatprep.subr.mxu0 0.0
  %695 = vmatpush1.msra.mxu0 %v660
  %696 = vmatprep.subr.mxu0 0.0
  %697 = vmatpush1.msra.mxu0 %v659
  %698 = vmatprep.subr.mxu0 0.0
  %699 = vmatpush1.msra.mxu0 %v658
  %700 = vmatprep.subr.mxu0 0.0
  %701 = vmatpush1.msra.mxu0 %v657
  %702 = vmatprep.subr.mxu0 0.0
  %703 = vmatpush1.msra.mxu0 %v656
  %704 = vmatprep.subr.mxu0 0.0
  %705 = vmatpush2.msra.mxu0 0.0
  %706 = vmatprep.subr.mxu0 0.0
  %707 = vmatpush2.msra.mxu0 0.0
  %708 = vmatprep.subr.mxu0 0.0
  %709 = vmatpush2.msra.mxu0 0.0
  %710 = vmatprep.subr.mxu0 0.0
  %711 = vmatpush2.msra.mxu0 0.0
  %712 = vmatprep.subr.mxu0 0.0
  %713 = vmatpush2.msra.mxu0 0.0
  %714 = vmatprep.subr.mxu0 0.0
  %715 = vmatpush2.msra.mxu0 0.0
  %716 = vmatprep.subr.mxu0 0.0
  %717 = vmatpush2.msra.mxu0 0.0
  %718 = vmatprep.subr.mxu0 0.0
  %719 = vmatpush2.msra.mxu0 0.0
  %720 = vmatprep.subr.mxu0 0.0
  %721 = vmatpush2.msra.mxu0 0.0
  %722 = vmatprep.subr.mxu0 0.0
  %723 = vmatpush2.msra.mxu0 0.0
  %724 = vmatprep.subr.mxu0 0.0
  %725 = vmatpush2.msra.mxu0 0.0
  %726 = vmatprep.subr.mxu0 0.0
  %727 = vmatpush2.msra.mxu0 0.0
  %728 = vmatprep.subr.mxu0 0.0
  %729 = vmatpush2.msra.mxu0 0.0
  %730 = vmatprep.subr.mxu0 0.0
  %731 = vmatpush2.msra.mxu0 0.0
  %732 = vmatprep.subr.mxu0 0.0
  %733 = vmatpush2.msra.mxu0 0.0
  %734 = vmatprep.subr.mxu0 0.0
  %735 = vmatpush2.msra.mxu0 0.0
  %736 = vmatprep.mubr.f32.mxu0 0.0
  %737 = vmatmul.mubr.f32.gmra.mxu0 %v654
  %v738 = vpop.f32.mrf.mxu0
  %v739 = vadd.f32 0.0, %v738
  %v740 = vpop.f32.mrf.mxu0
  %741 = vdwg.mxu0
  %v742 = vadd.f32 %v639, %v739
  %v743 = vld [vmem:[%s640 + $0x1] sm:$0x3]
  %v744 = vld [vmem:[%s642 + $0x1] sm:$0x3]
  %v746 = vrot.slane %v743, 6
  %v748 = vrot.slane %v439, 4
  %v751 = vrot.slane %v744, 2
  %v753 = vsel %vm36, %v438, %v746
  %v754 = vsel %vm38, %v753, %v748
  %v755 = vsel %vm40, %v754, %v751
  %s756 = scalar_lea.vmem %s1, 896
  %v757 = vld [vmem:[%s756] sm:$0xff]
  %v758 = vld [vmem:[%s756 + $0x8] sm:$0xff]
  %v759 = vld [vmem:[%s756 + $0x10] sm:$0xff]
  %v760 = vld [vmem:[%s756 + $0x18] sm:$0xff]
  %v761 = vld [vmem:[%s756 + $0x20] sm:$0xff]
  %v762 = vld [vmem:[%s756 + $0x28] sm:$0xff]
  %v763 = vld [vmem:[%s756 + $0x30] sm:$0xff]
  %v764 = vld [vmem:[%s756 + $0x38] sm:$0xff]
  %v765 = vld [vmem:[%s756 + $0x40] sm:$0xff]
  %v766 = vld [vmem:[%s756 + $0x48] sm:$0xff]
  %v767 = vld [vmem:[%s756 + $0x50] sm:$0xff]
  %v768 = vld [vmem:[%s756 + $0x58] sm:$0xff]
  %v769 = vld [vmem:[%s756 + $0x60] sm:$0xff]
  %v770 = vld [vmem:[%s756 + $0x68] sm:$0xff]
  %v771 = vld [vmem:[%s756 + $0x70] sm:$0xff]
  %v772 = vld [vmem:[%s756 + $0x78] sm:$0xff]
  %773 = vmatprep.subr.mxu0 0.0
  %774 = vmatpush1.msra.mxu0 %v772
  %775 = vmatprep.subr.mxu0 0.0
  %776 = vmatpush1.msra.mxu0 %v771
  %777 = vmatprep.subr.mxu0 0.0
  %778 = vmatpush1.msra.mxu0 %v770
  %779 = vmatprep.subr.mxu0 0.0
  %780 = vmatpush1.msra.mxu0 %v769
  %781 = vmatprep.subr.mxu0 0.0
  %782 = vmatpush1.msra.mxu0 %v768
  %783 = vmatprep.subr.mxu0 0.0
  %784 = vmatpush1.msra.mxu0 %v767
  %785 = vmatprep.subr.mxu0 0.0
  %786 = vmatpush1.msra.mxu0 %v766
  %787 = vmatprep.subr.mxu0 0.0
  %788 = vmatpush1.msra.mxu0 %v765
  %789 = vmatprep.subr.mxu0 0.0
  %790 = vmatpush1.msra.mxu0 %v764
  %791 = vmatprep.subr.mxu0 0.0
  %792 = vmatpush1.msra.mxu0 %v763
  %793 = vmatprep.subr.mxu0 0.0
  %794 = vmatpush1.msra.mxu0 %v762
  %795 = vmatprep.subr.mxu0 0.0
  %796 = vmatpush1.msra.mxu0 %v761
  %797 = vmatprep.subr.mxu0 0.0
  %798 = vmatpush1.msra.mxu0 %v760
  %799 = vmatprep.subr.mxu0 0.0
  %800 = vmatpush1.msra.mxu0 %v759
  %801 = vmatprep.subr.mxu0 0.0
  %802 = vmatpush1.msra.mxu0 %v758
  %803 = vmatprep.subr.mxu0 0.0
  %804 = vmatpush1.msra.mxu0 %v757
  %805 = vmatprep.subr.mxu0 0.0
  %806 = vmatpush2.msra.mxu0 0.0
  %807 = vmatprep.subr.mxu0 0.0
  %808 = vmatpush2.msra.mxu0 0.0
  %809 = vmatprep.subr.mxu0 0.0
  %810 = vmatpush2.msra.mxu0 0.0
  %811 = vmatprep.subr.mxu0 0.0
  %812 = vmatpush2.msra.mxu0 0.0
  %813 = vmatprep.subr.mxu0 0.0
  %814 = vmatpush2.msra.mxu0 0.0
  %815 = vmatprep.subr.mxu0 0.0
  %816 = vmatpush2.msra.mxu0 0.0
  %817 = vmatprep.subr.mxu0 0.0
  %818 = vmatpush2.msra.mxu0 0.0
  %819 = vmatprep.subr.mxu0 0.0
  %820 = vmatpush2.msra.mxu0 0.0
  %821 = vmatprep.subr.mxu0 0.0
  %822 = vmatpush2.msra.mxu0 0.0
  %823 = vmatprep.subr.mxu0 0.0
  %824 = vmatpush2.msra.mxu0 0.0
  %825 = vmatprep.subr.mxu0 0.0
  %826 = vmatpush2.msra.mxu0 0.0
  %827 = vmatprep.subr.mxu0 0.0
  %828 = vmatpush2.msra.mxu0 0.0
  %829 = vmatprep.subr.mxu0 0.0
  %830 = vmatpush2.msra.mxu0 0.0
  %831 = vmatprep.subr.mxu0 0.0
  %832 = vmatpush2.msra.mxu0 0.0
  %833 = vmatprep.subr.mxu0 0.0
  %834 = vmatpush2.msra.mxu0 0.0
  %835 = vmatprep.subr.mxu0 0.0
  %836 = vmatpush2.msra.mxu0 0.0
  %837 = vmatprep.mubr.f32.mxu0 0.0
  %838 = vmatmul.mubr.f32.gmra.mxu0 %v755
  %v839 = vpop.f32.mrf.mxu0
  %v840 = vadd.f32 0.0, %v839
  %v841 = vpop.f32.mrf.mxu0
  %842 = vdwg.mxu0
  %v843 = vadd.f32 %v742, %v840
  %v844 = vld [vmem:[%s640 + $0x2] sm:$0x3]
  %v845 = vld [vmem:[%s642 + $0x2] sm:$0x3]
  %v847 = vrot.slane %v844, 6
  %v849 = vrot.slane %v540, 4
  %v852 = vrot.slane %v845, 2
  %v854 = vsel %vm36, %v539, %v847
  %v855 = vsel %vm38, %v854, %v849
  %v856 = vsel %vm40, %v855, %v852
  %s857 = scalar_lea.vmem %s1, 1024
  %v858 = vld [vmem:[%s857] sm:$0xff]
  %v859 = vld [vmem:[%s857 + $0x8] sm:$0xff]
  %v860 = vld [vmem:[%s857 + $0x10] sm:$0xff]
  %v861 = vld [vmem:[%s857 + $0x18] sm:$0xff]
  %v862 = vld [vmem:[%s857 + $0x20] sm:$0xff]
  %v863 = vld [vmem:[%s857 + $0x28] sm:$0xff]
  %v864 = vld [vmem:[%s857 + $0x30] sm:$0xff]
  %v865 = vld [vmem:[%s857 + $0x38] sm:$0xff]
  %v866 = vld [vmem:[%s857 + $0x40] sm:$0xff]
  %v867 = vld [vmem:[%s857 + $0x48] sm:$0xff]
  %v868 = vld [vmem:[%s857 + $0x50] sm:$0xff]
  %v869 = vld [vmem:[%s857 + $0x58] sm:$0xff]
  %v870 = vld [vmem:[%s857 + $0x60] sm:$0xff]
  %v871 = vld [vmem:[%s857 + $0x68] sm:$0xff]
  %v872 = vld [vmem:[%s857 + $0x70] sm:$0xff]
  %v873 = vld [vmem:[%s857 + $0x78] sm:$0xff]
  %874 = vmatprep.subr.mxu0 0.0
  %875 = vmatpush1.msra.mxu0 %v873
  %876 = vmatprep.subr.mxu0 0.0
  %877 = vmatpush1.msra.mxu0 %v872
  %878 = vmatprep.subr.mxu0 0.0
  %879 = vmatpush1.msra.mxu0 %v871
  %880 = vmatprep.subr.mxu0 0.0
  %881 = vmatpush1.msra.mxu0 %v870
  %882 = vmatprep.subr.mxu0 0.0
  %883 = vmatpush1.msra.mxu0 %v869
  %884 = vmatprep.subr.mxu0 0.0
  %885 = vmatpush1.msra.mxu0 %v868
  %886 = vmatprep.subr.mxu0 0.0
  %887 = vmatpush1.msra.mxu0 %v867
  %888 = vmatprep.subr.mxu0 0.0
  %889 = vmatpush1.msra.mxu0 %v866
  %890 = vmatprep.subr.mxu0 0.0
  %891 = vmatpush1.msra.mxu0 %v865
  %892 = vmatprep.subr.mxu0 0.0
  %893 = vmatpush1.msra.mxu0 %v864
  %894 = vmatprep.subr.mxu0 0.0
  %895 = vmatpush1.msra.mxu0 %v863
  %896 = vmatprep.subr.mxu0 0.0
  %897 = vmatpush1.msra.mxu0 %v862
  %898 = vmatprep.subr.mxu0 0.0
  %899 = vmatpush1.msra.mxu0 %v861
  %900 = vmatprep.subr.mxu0 0.0
  %901 = vmatpush1.msra.mxu0 %v860
  %902 = vmatprep.subr.mxu0 0.0
  %903 = vmatpush1.msra.mxu0 %v859
  %904 = vmatprep.subr.mxu0 0.0
  %905 = vmatpush1.msra.mxu0 %v858
  %906 = vmatprep.subr.mxu0 0.0
  %907 = vmatpush2.msra.mxu0 0.0
  %908 = vmatprep.subr.mxu0 0.0
  %909 = vmatpush2.msra.mxu0 0.0
  %910 = vmatprep.subr.mxu0 0.0
  %911 = vmatpush2.msra.mxu0 0.0
  %912 = vmatprep.subr.mxu0 0.0
  %913 = vmatpush2.msra.mxu0 0.0
  %914 = vmatprep.subr.mxu0 0.0
  %915 = vmatpush2.msra.mxu0 0.0
  %916 = vmatprep.subr.mxu0 0.0
  %917 = vmatpush2.msra.mxu0 0.0
  %918 = vmatprep.subr.mxu0 0.0
  %919 = vmatpush2.msra.mxu0 0.0
  %920 = vmatprep.subr.mxu0 0.0
  %921 = vmatpush2.msra.mxu0 0.0
  %922 = vmatprep.subr.mxu0 0.0
  %923 = vmatpush2.msra.mxu0 0.0
  %924 = vmatprep.subr.mxu0 0.0
  %925 = vmatpush2.msra.mxu0 0.0
  %926 = vmatprep.subr.mxu0 0.0
  %927 = vmatpush2.msra.mxu0 0.0
  %928 = vmatprep.subr.mxu0 0.0
  %929 = vmatpush2.msra.mxu0 0.0
  %930 = vmatprep.subr.mxu0 0.0
  %931 = vmatpush2.msra.mxu0 0.0
  %932 = vmatprep.subr.mxu0 0.0
  %933 = vmatpush2.msra.mxu0 0.0
  %934 = vmatprep.subr.mxu0 0.0
  %935 = vmatpush2.msra.mxu0 0.0
  %936 = vmatprep.subr.mxu0 0.0
  %937 = vmatpush2.msra.mxu0 0.0
  %938 = vmatprep.mubr.f32.mxu0 0.0
  %939 = vmatmul.mubr.f32.gmra.mxu0 %v856
  %v940 = vpop.f32.mrf.mxu0
  %v941 = vadd.f32 0.0, %v940
  %v942 = vpop.f32.mrf.mxu0
  %943 = vdwg.mxu0
  %v944 = vadd.f32 %v843, %v941
  %v945 = vrot.slane %v944, 4
  %v946 = vadd.f32 %v944, %v945
  %v947 = vrot.slane %v946, 2
  %v948 = vadd.f32 %v946, %v947
  %v949 = vrot.slane %v948, 1
  %v950 = vadd.f32 %v948, %v949
  %v951 = vrcp.pop 8.0
  %v952 = vmul.f32 %v950, %v951
  %v953 = vmul.f32 %v944, %v944
  %v954 = vrot.slane %v953, 4
  %v955 = vadd.f32 %v953, %v954
  %v956 = vrot.slane %v955, 2
  %v957 = vadd.f32 %v955, %v956
  %v958 = vrot.slane %v957, 1
  %v959 = vadd.f32 %v957, %v958
  %v960 = vmul.f32 %v959, %v951
  %v961 = vmul.f32 %v952, %v952
  %v962 = vsub.f32 %v960, %v961
  %v963 = vmax.f32 %v962, 0.0
  %v964 = vadd.f32 %v963, 1e-05
  %v965 = vrsqrt.pop %v964
  %v966 = vld [vmem:[%s2] sm:$0x1]
  %v967 = vmul.f32 %v965, %v966
  %v968 = vld [vmem:[%s3] sm:$0x1]
  %v969 = vmul.f32 %v952, %v967
  %v970 = vsub.f32 %v968, %v969
  %v971 = vlaneseq
  %v972 = vshrl.u32 %v971, 7
  %v973 = vsub.s32 0, %v972
  %v974 = vrot.slane %v967, %v973
  %v975 = vmul.f32 %v944, %v974
  %v977 = vlaneseq
  %v978 = vshrl.u32 %v977, 7
  %v979 = vsub.s32 0, %v978
  %v980 = vrot.slane %v970, %v979
  %v982 = vadd.f32 %v975, %v980
  %v983 = vld [vmem:[%s4] sm:$0xff]
  %v984 = vadd.f32 %v982, %v983
  %v985 = vmax.f32 %v984, 0.0
  %986 = vst [vmem:[%s5] sm:$0xff] %v985
  // Predicated region
  $region22: #{resnet_forward.16} parent=0 // pred_check
    _
  $region23: #{resnet_forward.16} parent=0 // pred_check_branch
    %988 = sbr.rel (0) target = $region25
  $region24: #{resnet_forward.16} parent=0 // pred_region
    _
  $region25: #{resnet_forward.16} parent=0 // pred_fallthru
    _
  // Predicated region
  $region26: #{resnet_forward.16} parent=0 // pred_check
    _
  $region27: #{resnet_forward.16} parent=0 // pred_check_branch
    %990 = sbr.rel (0) target = $region29
  $region28: #{resnet_forward.16} parent=0 // pred_region
    _
  $region29: #{resnet_forward.16} parent=0 // pred_fallthru
    _

</llo_original>
